<compile_context>
chip_gen: v6e
topology: v6e:2x2x1
jax: 0.10.0
libtpu: 0.0.40
codegen_flags: <defaults>
</compile_context>

<pallas_src>
import jax
import jax.numpy as jnp
from jax.experimental import pallas as pl
from jax.experimental.pallas import tpu as pltpu

# ---- configuration mirroring TripletHDML.__init__ ---------------------------
N_MID = 1024            # n_mid
EMB = 128               # embedding_size
N_CLASS = 99            # n_class
BETA = 10000.0
LMD = 0.5
SOFTMAX_FACTOR = 10000.0
ALPHA = 90.0            # TripletPulling alpha
TRIPLET_MARGIN = 1.0    # assumed margin for loss.TripletLoss
BN_EPS = 1e-5
PD_EPS = 1e-6           # F.pairwise_distance eps
NEG_BIAS = -1e9         # bias for padded (fake) class columns

# ---- backbone stand-in / example sizes --------------------------------------
C_IN = 3
C_STEM = 128            # lane-dense stem width
H = W = 8
B = 24                  # 8 anchors | 8 positives | 8 negatives (thirds are 8-aligned)


# ------------------------------------------------------------ fused kernel ---
def hdml_fused_kernel(
    # inputs
    sc_ref, lab_ref, patches_ref,
    conv_w_ref, conv_b_ref, proj_w_ref, proj_b_ref,
    bn1_g_ref, bn1_b_ref, fc1_w_hbm, fc1_b_ref,
    g1_w_hbm, g1_b_ref, gbn_g_ref, gbn_b_ref, g2_w_hbm, g2_b_ref,
    c2_g_ref, c2_bta_ref, c2_w_hbm, c2_b_ref, smx_w_hbm, smx_b_ref,
    # outputs
    losses_ref, z_ref,
    # scratch (VMEM landing buffers for async weight DMA + semaphores)
    fc1_w_vmem, g1_w_vmem, g2_w_vmem, c2_w_vmem, smx_w_vmem, dma_sems):

  f32 = jnp.float32
  bsz = lab_ref.shape[0]
  hw = patches_ref.shape[0] // bsz
  cstem = conv_w_ref.shape[1]
  ncls_pad = smx_w_vmem.shape[1]
  n3 = bsz // 3

  # Scalar controls: read from SMEM before any DMA wait.
  javg = sc_ref[0]
  jgen_in = sc_ref[1]

  # Kick off DMA of the late-stage weights; they stream in behind the
  # conv / GAP / BN compute below (inputs are raw HBM refs via pl.ANY).
  cp_fc1 = pltpu.make_async_copy(fc1_w_hbm, fc1_w_vmem, dma_sems.at[0])
  cp_g1 = pltpu.make_async_copy(g1_w_hbm, g1_w_vmem, dma_sems.at[1])
  cp_g2 = pltpu.make_async_copy(g2_w_hbm, g2_w_vmem, dma_sems.at[2])
  cp_c2 = pltpu.make_async_copy(c2_w_hbm, c2_w_vmem, dma_sems.at[3])
  cp_smx = pltpu.make_async_copy(smx_w_hbm, smx_w_vmem, dma_sems.at[4])
  cp_fc1.start(); cp_g1.start(); cp_g2.start(); cp_c2.start(); cp_smx.start()

  def batchnorm(h, gamma, beta):
    # training-mode batch stats; var clamped >= 0 to avoid f32 cancellation NaN.
    mean = jnp.mean(h, axis=0, keepdims=True)
    ex2 = jnp.mean(h * h, axis=0, keepdims=True)
    var = jnp.maximum(ex2 - mean * mean, 0.0)
    return (h - mean) * jax.lax.rsqrt(var + BN_EPS) * gamma + beta

  def linear(h, w_ref, b_ref):
    return jnp.dot(h, w_ref[...], preferred_element_type=f32) + b_ref[...]

  def triplet_loss(zz):
    a, p, ng = zz[:n3], zz[n3:2 * n3], zz[2 * n3:]
    d_ap = jnp.sum(jnp.square(a - p), axis=-1, keepdims=True)
    d_an = jnp.sum(jnp.square(a - ng), axis=-1, keepdims=True)
    return jnp.mean(jnp.maximum(d_ap - d_an + TRIPLET_MARGIN, 0.0), keepdims=True)

  # ---- backbone stand-in: im2col conv (one K=32 MXU pass) + GAP + projection
  feat = jnp.maximum(linear(patches_ref[...], conv_w_ref, conv_b_ref), 0.0)  # (B*HW, C)
  pooled = jnp.mean(feat.reshape(bsz, hw, cstem), axis=1)                    # (B, C) sublane mean
  y_orig = linear(pooled, proj_w_ref, proj_b_ref)                            # (B, 1024)

  # ---- classifier1 head: BN(1024) -> Linear(1024,128) -> triplet loss ----
  cp_fc1.wait()
  z = linear(batchnorm(y_orig, bn1_g_ref[...], bn1_b_ref[...]),
             fc1_w_vmem, fc1_b_ref)                                          # (B, 128)
  z_ref[...] = z
  jm_base = triplet_loss(z)                                                  # (1, 1)

  # ---- TripletPulling(z, javg) ----
  a, p, ng = z[:n3], z[n3:2 * n3], z[2 * n3:]
  e_pull = jnp.exp(jnp.full((1, 1), -ALPHA, f32) / javg)                     # (1, 1)
  d_pos = jnp.sqrt(jnp.sum(jnp.square(a - p + PD_EPS), -1, keepdims=True))   # (n, 1)
  d_neg = jnp.sqrt(jnp.sum(jnp.square(a - ng + PD_EPS), -1, keepdims=True))
  r = (d_pos + (d_neg - d_pos) * e_pull) / d_neg
  neg2 = a + (ng - a) * r
  neg_hat = jnp.where(d_pos >= d_neg, ng, neg2)
  z_quta = jnp.concatenate([a, p, neg_hat], axis=0)                          # (B, 128)

  # ---- Generator on cat([z, z_quta]) ----
  zc = jnp.concatenate([z, z_quta], axis=0)                                  # (2B, 128)
  cp_g1.wait()
  g = jnp.maximum(linear(zc, g1_w_vmem, g1_b_ref), 0.0)                      # (2B, 512)
  g = batchnorm(g, gbn_g_ref[...], gbn_b_ref[...])
  cp_g2.wait()
  gen_out = linear(g, g2_w_vmem, g2_b_ref)                                   # (2B, 1024)
  yp = gen_out[:bsz]
  yq = gen_out[bsz:]

  # ---- classifier2 on yq: BN(1024) + Linear(1024,128) ----
  cp_c2.wait()
  zq2 = linear(batchnorm(yq, c2_g_ref[...], c2_bta_ref[...]),
               c2_w_vmem, c2_b_ref)                                          # (B, 128)
  jsyn_base = triplet_loss(zq2)

  # ---- scalar mixing ----
  e_bj = jnp.exp(jnp.full((1, 1), -BETA, f32) / jgen_in)                     # (1, 1)
  jsyn = (1.0 - e_bj) * jsyn_base
  jm_scaled = e_bj * jm_base
  jmetric = jm_scaled + jsyn

  # ---- softmax classifier: one merged matmul over [y_orig; yq] ----
  cp_smx.wait()
  logits = linear(jnp.concatenate([y_orig, yq], axis=0),
                  smx_w_vmem, smx_b_ref)                                     # (2B, 128)
  onehot = (jax.lax.broadcasted_iota(jnp.int32, (bsz, ncls_pad), 1)
            == lab_ref[...]).astype(f32)                                     # (B, 128)
  onehot2 = jnp.concatenate([onehot, onehot], axis=0)                        # (2B, 128)
  m = jnp.max(logits, axis=-1, keepdims=True)
  lse = m + jnp.log(jnp.sum(jnp.exp(logits - m), axis=-1, keepdims=True))
  nll = lse - jnp.sum(onehot2 * logits, axis=-1, keepdims=True)              # (2B, 1)
  ce = jnp.mean(nll[:bsz], keepdims=True)                                    # (1, 1)
  ce_q = jnp.mean(nll[bsz:], keepdims=True)

  jrecon = (1.0 - LMD) * jnp.sum(jnp.square(yp - y_orig), keepdims=True)
  jgen_out = jrecon + SOFTMAX_FACTOR * LMD * ce_q

  # ---- pack the four scalar losses into one (1, 8) output ----
  lane = jax.lax.broadcasted_iota(jnp.int32, (1, 8), 1)
  losses_ref[...] = (jnp.where(lane == 0, jgen_out, 0.0)
                     + jnp.where(lane == 1, jmetric, 0.0)
                     + jnp.where(lane == 2, jm_scaled, 0.0)
                     + jnp.where(lane == 3, ce, 0.0))


# ------------------------------------------------------------------ wrapper --
def init_params(key):
  ks = jax.random.split(key, 7)
  f32 = jnp.float32
  inv = lambda n: 1.0 / jnp.sqrt(jnp.float32(n))
  return {
      # googlenet stand-in
      "conv_w": jax.random.normal(ks[0], (3, 3, C_IN, C_STEM), f32) * 0.1,
      "conv_b": jnp.zeros((1, C_STEM), f32),
      "proj_w": jax.random.normal(ks[1], (C_STEM, N_MID), f32) * inv(C_STEM),
      "proj_b": jnp.zeros((1, N_MID), f32),
      # classifier1: bn1 + fc1
      "bn1_gamma": jnp.ones((1, N_MID), f32),
      "bn1_beta": jnp.zeros((1, N_MID), f32),
      "fc1_w": jax.random.normal(ks[2], (N_MID, EMB), f32) * inv(N_MID),
      "fc1_b": jnp.zeros((1, EMB), f32),
      # generator
      "gen_fc1_w": jax.random.normal(ks[3], (EMB, N_MID // 2), f32) * inv(EMB),
      "gen_fc1_b": jnp.zeros((1, N_MID // 2), f32),
      "gen_bn_gamma": jnp.ones((1, N_MID // 2), f32),
      "gen_bn_beta": jnp.zeros((1, N_MID // 2), f32),
      "gen_fc2_w": jax.random.normal(ks[4], (N_MID // 2, N_MID), f32) * inv(N_MID // 2),
      "gen_fc2_b": jnp.zeros((1, N_MID), f32),
      # classifier2
      "c2_bn_gamma": jnp.ones((1, N_MID), f32),
      "c2_bn_beta": jnp.zeros((1, N_MID), f32),
      "c2_w": jax.random.normal(ks[5], (N_MID, EMB), f32) * inv(N_MID),
      "c2_b": jnp.zeros((1, EMB), f32),
      # softmax classifier
      "sc_w": jax.random.normal(ks[6], (N_MID, N_CLASS), f32) * inv(N_MID),
      "sc_b": jnp.zeros((1, N_CLASS), f32),
  }


@jax.jit
def triplet_hdml_forward(x_nchw, t, javg, jgen, params):
  bsz, cin, hh, ww = x_nchw.shape
  assert bsz % 3 == 0 and (bsz // 3) % 8 == 0, \
      "batch thirds (anchor|positive|negative) must be multiples of 8"

  # layout: NCHW -> NHWC; im2col wrapper-side so the conv is one matmul.
  x = jnp.transpose(x_nchw, (0, 2, 3, 1)).astype(jnp.float32)
  xp = jnp.pad(x, ((0, 0), (1, 1), (1, 1), (0, 0)))
  patches = jnp.stack(
      [xp[:, dy:dy + hh, dx:dx + ww, :] for dy in range(3) for dx in range(3)],
      axis=3)                                          # (B, H, W, 9, Cin)
  k_raw = 9 * cin
  k_pad = ((k_raw + 31) // 32) * 32                    # lane-friendlier contraction dim
  patches = patches.reshape(bsz * hh * ww, k_raw)      # (B*HW, 27)
  patches = jnp.pad(patches, ((0, 0), (0, k_pad - k_raw)))
  conv_w = params["conv_w"].reshape(k_raw, -1)         # (27, Cstem), matches patch order
  conv_w = jnp.pad(conv_w, ((0, k_pad - k_raw), (0, 0)))

  # pad classes to a full lane tile; padded columns get a huge negative bias so
  # they vanish from the logsumexp (unbiased CE).
  nclass = params["sc_w"].shape[1]
  ncls_pad = ((nclass + 127) // 128) * 128
  sc_w_pad = jnp.pad(params["sc_w"], ((0, 0), (0, ncls_pad - nclass)))
  sc_b_pad = jnp.pad(params["sc_b"], ((0, 0), (0, ncls_pad - nclass)),
                     constant_values=NEG_BIAS)

  labels = t.reshape(bsz, 1).astype(jnp.int32)
  scalars = jnp.stack([javg, jgen]).astype(jnp.float32)  # SMEM: [javg, jgen]

  cstem = conv_w.shape[1]
  n_mid = params["proj_w"].shape[1]
  emb = params["fc1_w"].shape[1]
  bhw = bsz * hh * ww

  flops = 2 * (bhw * k_pad * cstem                 # conv
               + bsz * cstem * n_mid               # projection
               + 2 * bsz * n_mid * emb             # fc1 + classifier2 fc
               + 2 * bsz * emb * (n_mid // 2)      # generator fc1
               + 2 * bsz * (n_mid // 2) * n_mid    # generator fc2
               + 2 * bsz * n_mid * ncls_pad)       # merged softmax classifier
  bytes_accessed = 4 * (int(patches.size) + int(labels.size) + 2
                        + int(conv_w.size) + int(sc_w_pad.size) + int(sc_b_pad.size)
                        + sum(int(v.size) for k, v in params.items()
                              if k not in ("conv_w", "sc_w", "sc_b"))
                        + bsz * emb + 8)
  cost = pl.CostEstimate(flops=flops,
                         transcendentals=2 * bsz * ncls_pad + 16,
                         bytes_accessed=bytes_accessed)

  vmem = pl.BlockSpec(memory_space=pltpu.MemorySpace.VMEM)
  smem = pl.BlockSpec(memory_space=pltpu.MemorySpace.SMEM)
  hbm = pl.BlockSpec(memory_space=pl.ANY)   # late weights: manual async DMA in-kernel

  in_specs = [
      smem,        # scalars [javg, jgen]
      vmem,        # labels
      vmem,        # patches
      vmem, vmem,  # conv_w, conv_b
      vmem, vmem,  # proj_w, proj_b
      vmem, vmem,  # bn1_gamma, bn1_beta
      hbm,  vmem,  # fc1_w (async), fc1_b
      hbm,  vmem,  # gen_fc1_w (async), gen_fc1_b
      vmem, vmem,  # gen_bn_gamma, gen_bn_beta
      hbm,  vmem,  # gen_fc2_w (async), gen_fc2_b
      vmem, vmem,  # c2_bn_gamma, c2_bn_beta
      hbm,  vmem,  # c2_w (async), c2_b
      hbm,  vmem,  # sc_w (async), sc_b
  ]

  out_shape = (
      jax.ShapeDtypeStruct((1, 8), jnp.float32),       # [jgen, jmetric, jm, ce, 0...]
      jax.ShapeDtypeStruct((bsz, emb), jnp.float32),   # embedding_z
  )

  scratch_shapes = [
      pltpu.VMEM(params["fc1_w"].shape, jnp.float32),
      pltpu.VMEM(params["gen_fc1_w"].shape, jnp.float32),
      pltpu.VMEM(params["gen_fc2_w"].shape, jnp.float32),
      pltpu.VMEM(params["c2_w"].shape, jnp.float32),
      pltpu.VMEM(sc_w_pad.shape, jnp.float32),
      pltpu.SemaphoreType.DMA((5,)),
  ]

  losses, z = pl.pallas_call(
      hdml_fused_kernel,
      out_shape=out_shape,
      in_specs=in_specs,
      out_specs=(vmem, vmem),
      scratch_shapes=scratch_shapes,
      compiler_params=pltpu.CompilerParams(vmem_limit_bytes=32 * 1024 * 1024),
      cost_estimate=cost,
  )(scalars, labels, patches,
    conv_w, params["conv_b"], params["proj_w"], params["proj_b"],
    params["bn1_gamma"], params["bn1_beta"], params["fc1_w"], params["fc1_b"],
    params["gen_fc1_w"], params["gen_fc1_b"],
    params["gen_bn_gamma"], params["gen_bn_beta"],
    params["gen_fc2_w"], params["gen_fc2_b"],
    params["c2_bn_gamma"], params["c2_bn_beta"],
    params["c2_w"], params["c2_b"],
    sc_w_pad, sc_b_pad)

  return losses[0, 0], losses[0, 1], losses[0, 2], losses[0, 3], z


if __name__ == "__main__":
  key = jax.random.PRNGKey(0)
  pkey, xkey, tkey = jax.random.split(key, 3)
  params = init_params(pkey)

  x = jax.random.normal(xkey, (B, C_IN, H, W), jnp.float32)        # NCHW like PyTorch
  t = jax.random.randint(tkey, (B, 1), 0, N_CLASS, dtype=jnp.int32)
  javg = jnp.float32(80.0)
  jgen = jnp.float32(5000.0)

  jgen_o, jmetric, jm, ce, z = triplet_hdml_forward(x, t, javg, jgen, params)
  jax.block_until_ready((jgen_o, jmetric, jm, ce, z))

  assert jgen_o.shape == () and jmetric.shape == ()
  assert jm.shape == () and ce.shape == ()
  assert z.shape == (B, EMB)
  assert bool(jnp.isfinite(jgen_o)) and bool(jnp.isfinite(jmetric))
  assert bool(jnp.isfinite(jm)) and bool(jnp.isfinite(ce))
  assert bool(jnp.all(jnp.isfinite(z)))
  print("KERNEL_OK")
</pallas_src>

<mosaic_0001>
module attributes {stable_mosaic.version = 11 : i64} {
  func.func @hdml_fused_kernel(%arg0: memref<2xf32, #tpu.memory_space<smem>>, %arg1: memref<24x1xi32, #tpu.memory_space<vmem>>, %arg2: memref<1536x32xf32, #tpu.memory_space<vmem>>, %arg3: memref<32x128xf32, #tpu.memory_space<vmem>>, %arg4: memref<1x128xf32, #tpu.memory_space<vmem>>, %arg5: memref<128x1024xf32, #tpu.memory_space<vmem>>, %arg6: memref<1x1024xf32, #tpu.memory_space<vmem>>, %arg7: memref<1x1024xf32, #tpu.memory_space<vmem>>, %arg8: memref<1x1024xf32, #tpu.memory_space<vmem>>, %arg9: memref<1024x128xf32, #tpu.memory_space<any>>, %arg10: memref<1x128xf32, #tpu.memory_space<vmem>>, %arg11: memref<128x512xf32, #tpu.memory_space<any>>, %arg12: memref<1x512xf32, #tpu.memory_space<vmem>>, %arg13: memref<1x512xf32, #tpu.memory_space<vmem>>, %arg14: memref<1x512xf32, #tpu.memory_space<vmem>>, %arg15: memref<512x1024xf32, #tpu.memory_space<any>>, %arg16: memref<1x1024xf32, #tpu.memory_space<vmem>>, %arg17: memref<1x1024xf32, #tpu.memory_space<vmem>>, %arg18: memref<1x1024xf32, #tpu.memory_space<vmem>>, %arg19: memref<1024x128xf32, #tpu.memory_space<any>>, %arg20: memref<1x128xf32, #tpu.memory_space<vmem>>, %arg21: memref<1024x128xf32, #tpu.memory_space<any>>, %arg22: memref<1x128xf32, #tpu.memory_space<vmem>>, %arg23: memref<1x8xf32, #tpu.memory_space<vmem>>, %arg24: memref<24x128xf32, #tpu.memory_space<vmem>>, %arg25: memref<1024x128xf32, #tpu.memory_space<vmem>>, %arg26: memref<128x512xf32, #tpu.memory_space<vmem>>, %arg27: memref<512x1024xf32, #tpu.memory_space<vmem>>, %arg28: memref<1024x128xf32, #tpu.memory_space<vmem>>, %arg29: memref<1024x128xf32, #tpu.memory_space<vmem>>, %arg30: memref<5x!tpu.dma_semaphore, #tpu.memory_space<semaphore_mem>>) attributes {dimension_semantics = [], scalar_prefetch = 0 : i64, scratch_operands = 6 : i64, tpu.core_type = #tpu.core_type<tc>} {
    %c0 = arith.constant 0 : index
    %0 = memref.load %arg0[%c0] : memref<2xf32, #tpu.memory_space<smem>>
    %c1 = arith.constant 1 : index
    %1 = memref.load %arg0[%c1] : memref<2xf32, #tpu.memory_space<smem>>
    %c0_i32 = arith.constant 0 : i32
    %2 = tpu.memref_slice %arg30[%c0_i32] : memref<5x!tpu.dma_semaphore, #tpu.memory_space<semaphore_mem>> -> memref<1x!tpu.dma_semaphore, #tpu.memory_space<semaphore_mem>>
    %3 = tpu.memref_squeeze %2 : memref<1x!tpu.dma_semaphore, #tpu.memory_space<semaphore_mem>> -> memref<!tpu.dma_semaphore, #tpu.memory_space<semaphore_mem>>
    tpu.enqueue_dma source(%arg9 : memref<1024x128xf32, #tpu.memory_space<any>>) target(%arg25 : memref<1024x128xf32, #tpu.memory_space<vmem>>) target_semaphore(%3 : memref<!tpu.dma_semaphore, #tpu.memory_space<semaphore_mem>>)
    %c1_i32 = arith.constant 1 : i32
    %4 = tpu.memref_slice %arg30[%c1_i32] : memref<5x!tpu.dma_semaphore, #tpu.memory_space<semaphore_mem>> -> memref<1x!tpu.dma_semaphore, #tpu.memory_space<semaphore_mem>>
    %5 = tpu.memref_squeeze %4 : memref<1x!tpu.dma_semaphore, #tpu.memory_space<semaphore_mem>> -> memref<!tpu.dma_semaphore, #tpu.memory_space<semaphore_mem>>
    tpu.enqueue_dma source(%arg11 : memref<128x512xf32, #tpu.memory_space<any>>) target(%arg26 : memref<128x512xf32, #tpu.memory_space<vmem>>) target_semaphore(%5 : memref<!tpu.dma_semaphore, #tpu.memory_space<semaphore_mem>>)
    %c2_i32 = arith.constant 2 : i32
    %6 = tpu.memref_slice %arg30[%c2_i32] : memref<5x!tpu.dma_semaphore, #tpu.memory_space<semaphore_mem>> -> memref<1x!tpu.dma_semaphore, #tpu.memory_space<semaphore_mem>>
    %7 = tpu.memref_squeeze %6 : memref<1x!tpu.dma_semaphore, #tpu.memory_space<semaphore_mem>> -> memref<!tpu.dma_semaphore, #tpu.memory_space<semaphore_mem>>
    tpu.enqueue_dma source(%arg15 : memref<512x1024xf32, #tpu.memory_space<any>>) target(%arg27 : memref<512x1024xf32, #tpu.memory_space<vmem>>) target_semaphore(%7 : memref<!tpu.dma_semaphore, #tpu.memory_space<semaphore_mem>>)
    %c3_i32 = arith.constant 3 : i32
    %8 = tpu.memref_slice %arg30[%c3_i32] : memref<5x!tpu.dma_semaphore, #tpu.memory_space<semaphore_mem>> -> memref<1x!tpu.dma_semaphore, #tpu.memory_space<semaphore_mem>>
    %9 = tpu.memref_squeeze %8 : memref<1x!tpu.dma_semaphore, #tpu.memory_space<semaphore_mem>> -> memref<!tpu.dma_semaphore, #tpu.memory_space<semaphore_mem>>
    tpu.enqueue_dma source(%arg19 : memref<1024x128xf32, #tpu.memory_space<any>>) target(%arg28 : memref<1024x128xf32, #tpu.memory_space<vmem>>) target_semaphore(%9 : memref<!tpu.dma_semaphore, #tpu.memory_space<semaphore_mem>>)
    %c4_i32 = arith.constant 4 : i32
    %10 = tpu.memref_slice %arg30[%c4_i32] : memref<5x!tpu.dma_semaphore, #tpu.memory_space<semaphore_mem>> -> memref<1x!tpu.dma_semaphore, #tpu.memory_space<semaphore_mem>>
    %11 = tpu.memref_squeeze %10 : memref<1x!tpu.dma_semaphore, #tpu.memory_space<semaphore_mem>> -> memref<!tpu.dma_semaphore, #tpu.memory_space<semaphore_mem>>
    tpu.enqueue_dma source(%arg21 : memref<1024x128xf32, #tpu.memory_space<any>>) target(%arg29 : memref<1024x128xf32, #tpu.memory_space<vmem>>) target_semaphore(%11 : memref<!tpu.dma_semaphore, #tpu.memory_space<semaphore_mem>>)
    %c0_0 = arith.constant 0 : index
    %c0_1 = arith.constant 0 : index
    %12 = vector.load %arg2[%c0_0, %c0_1] : memref<1536x32xf32, #tpu.memory_space<vmem>>, vector<1536x32xf32>
    %c0_2 = arith.constant 0 : index
    %c0_3 = arith.constant 0 : index
    %13 = vector.load %arg3[%c0_2, %c0_3] : memref<32x128xf32, #tpu.memory_space<vmem>>, vector<32x128xf32>
    %cst = arith.constant dense<0.000000e+00> : vector<1536x128xf32>
    %14 = tpu.matmul %12, %13, %cst {dimension_numbers = #tpu.dot_dimension_numbers<[1], [0], [0], [1], [0, 0, 1, 1], [], []>} : vector<1536x32xf32>, vector<32x128xf32>, vector<1536x128xf32> -> vector<1536x128xf32>
    %c0_4 = arith.constant 0 : index
    %c0_5 = arith.constant 0 : index
    %15 = vector.load %arg4[%c0_4, %c0_5] : memref<1x128xf32, #tpu.memory_space<vmem>>, vector<1x128xf32>
    %16 = vector.broadcast %15 : vector<1x128xf32> to vector<1536x128xf32>
    %17 = arith.addf %14, %16 : vector<1536x128xf32>
    %cst_6 = arith.constant 0.000000e+00 : f32
    %18 = vector.broadcast %cst_6 : f32 to vector<1536x128xf32>
    %19 = arith.maximumf %17, %18 : vector<1536x128xf32>
    %20 = vector.shape_cast %19 : vector<1536x128xf32> to vector<24x64x128xf32>
    %cst_7 = arith.constant dense<0.000000e+00> : vector<24x128xf32>
    %21 = vector.multi_reduction <add>, %20, %cst_7 [1] : vector<24x64x128xf32> to vector<24x128xf32>
    %cst_8 = arith.constant 6.400000e+01 : f32
    %22 = vector.broadcast %cst_8 : f32 to vector<24x128xf32>
    %23 = arith.divf %21, %22 : vector<24x128xf32>
    %c0_9 = arith.constant 0 : index
    %c0_10 = arith.constant 0 : index
    %24 = vector.load %arg5[%c0_9, %c0_10] : memref<128x1024xf32, #tpu.memory_space<vmem>>, vector<128x1024xf32>
    %cst_11 = arith.constant dense<0.000000e+00> : vector<24x1024xf32>
    %25 = tpu.matmul %23, %24, %cst_11 {dimension_numbers = #tpu.dot_dimension_numbers<[1], [0], [0], [1], [0, 0, 1, 1], [], []>} : vector<24x128xf32>, vector<128x1024xf32>, vector<24x1024xf32> -> vector<24x1024xf32>
    %c0_12 = arith.constant 0 : index
    %c0_13 = arith.constant 0 : index
    %26 = vector.load %arg6[%c0_12, %c0_13] : memref<1x1024xf32, #tpu.memory_space<vmem>>, vector<1x1024xf32>
    %27 = vector.broadcast %26 : vector<1x1024xf32> to vector<24x1024xf32>
    %28 = arith.addf %25, %27 : vector<24x1024xf32>
    %c0_i32_14 = arith.constant 0 : i32
    %29 = tpu.memref_slice %arg30[%c0_i32_14] : memref<5x!tpu.dma_semaphore, #tpu.memory_space<semaphore_mem>> -> memref<1x!tpu.dma_semaphore, #tpu.memory_space<semaphore_mem>>
    %30 = tpu.memref_squeeze %29 : memref<1x!tpu.dma_semaphore, #tpu.memory_space<semaphore_mem>> -> memref<!tpu.dma_semaphore, #tpu.memory_space<semaphore_mem>>
    tpu.wait_dma2 semaphore(%30 : memref<!tpu.dma_semaphore, #tpu.memory_space<semaphore_mem>>) src(%arg9 : memref<1024x128xf32, #tpu.memory_space<any>>) dst(%arg25 : memref<1024x128xf32, #tpu.memory_space<vmem>>)
    %c0_15 = arith.constant 0 : index
    %c0_16 = arith.constant 0 : index
    %31 = vector.load %arg7[%c0_15, %c0_16] : memref<1x1024xf32, #tpu.memory_space<vmem>>, vector<1x1024xf32>
    %c0_17 = arith.constant 0 : index
    %c0_18 = arith.constant 0 : index
    %32 = vector.load %arg8[%c0_17, %c0_18] : memref<1x1024xf32, #tpu.memory_space<vmem>>, vector<1x1024xf32>
    %cst_19 = arith.constant dense<0.000000e+00> : vector<1024xf32>
    %33 = vector.multi_reduction <add>, %28, %cst_19 [0] : vector<24x1024xf32> to vector<1024xf32>
    %34 = vector.shape_cast %33 : vector<1024xf32> to vector<1x1024xf32>
    %cst_20 = arith.constant 2.400000e+01 : f32
    %35 = vector.broadcast %cst_20 : f32 to vector<1x1024xf32>
    %36 = arith.divf %34, %35 : vector<1x1024xf32>
    %37 = arith.mulf %28, %28 : vector<24x1024xf32>
    %cst_21 = arith.constant dense<0.000000e+00> : vector<1024xf32>
    %38 = vector.multi_reduction <add>, %37, %cst_21 [0] : vector<24x1024xf32> to vector<1024xf32>
    %39 = vector.shape_cast %38 : vector<1024xf32> to vector<1x1024xf32>
    %cst_22 = arith.constant 2.400000e+01 : f32
    %40 = vector.broadcast %cst_22 : f32 to vector<1x1024xf32>
    %41 = arith.divf %39, %40 : vector<1x1024xf32>
    %42 = arith.mulf %36, %36 : vector<1x1024xf32>
    %43 = arith.subf %41, %42 : vector<1x1024xf32>
    %cst_23 = arith.constant 0.000000e+00 : f32
    %44 = vector.broadcast %cst_23 : f32 to vector<1x1024xf32>
    %45 = arith.maximumf %43, %44 : vector<1x1024xf32>
    %46 = vector.broadcast %36 : vector<1x1024xf32> to vector<24x1024xf32>
    %47 = arith.subf %28, %46 : vector<24x1024xf32>
    %cst_24 = arith.constant 9.99999974E-6 : f32
    %48 = vector.broadcast %cst_24 : f32 to vector<1x1024xf32>
    %49 = arith.addf %45, %48 : vector<1x1024xf32>
    %50 = math.rsqrt %49 : vector<1x1024xf32>
    %51 = vector.broadcast %50 : vector<1x1024xf32> to vector<24x1024xf32>
    %52 = arith.mulf %47, %51 : vector<24x1024xf32>
    %53 = vector.broadcast %31 : vector<1x1024xf32> to vector<24x1024xf32>
    %54 = arith.mulf %52, %53 : vector<24x1024xf32>
    %55 = vector.broadcast %32 : vector<1x1024xf32> to vector<24x1024xf32>
    %56 = arith.addf %54, %55 : vector<24x1024xf32>
    %c0_25 = arith.constant 0 : index
    %c0_26 = arith.constant 0 : index
    %57 = vector.load %arg25[%c0_25, %c0_26] : memref<1024x128xf32, #tpu.memory_space<vmem>>, vector<1024x128xf32>
    %cst_27 = arith.constant dense<0.000000e+00> : vector<24x128xf32>
    %58 = tpu.matmul %56, %57, %cst_27 {dimension_numbers = #tpu.dot_dimension_numbers<[1], [0], [0], [1], [0, 0, 1, 1], [], []>} : vector<24x1024xf32>, vector<1024x128xf32>, vector<24x128xf32> -> vector<24x128xf32>
    %c0_28 = arith.constant 0 : index
    %c0_29 = arith.constant 0 : index
    %59 = vector.load %arg10[%c0_28, %c0_29] : memref<1x128xf32, #tpu.memory_space<vmem>>, vector<1x128xf32>
    %60 = vector.broadcast %59 : vector<1x128xf32> to vector<24x128xf32>
    %61 = arith.addf %58, %60 : vector<24x128xf32>
    %c0_30 = arith.constant 0 : index
    %c0_31 = arith.constant 0 : index
    %62 = vector.load %arg24[%c0_30, %c0_31] : memref<24x128xf32, #tpu.memory_space<vmem>>, vector<24x128xf32>
    tpu.vector_store %arg24[%c0_30, %c0_31], %61 {strides = array<i32>} : memref<24x128xf32, #tpu.memory_space<vmem>>, vector<24x128xf32>,
    %63 = vector.extract_strided_slice %61 {offsets = [0, 0], sizes = [8, 128], strides = [1, 1]} : vector<24x128xf32> to vector<8x128xf32>
    %64 = vector.extract_strided_slice %61 {offsets = [8, 0], sizes = [8, 128], strides = [1, 1]} : vector<24x128xf32> to vector<8x128xf32>
    %65 = vector.extract_strided_slice %61 {offsets = [16, 0], sizes = [8, 128], strides = [1, 1]} : vector<24x128xf32> to vector<8x128xf32>
    %66 = arith.subf %63, %64 : vector<8x128xf32>
    %67 = arith.mulf %66, %66 : vector<8x128xf32>
    %cst_32 = arith.constant dense<0.000000e+00> : vector<8xf32>
    %68 = vector.multi_reduction <add>, %67, %cst_32 [1] : vector<8x128xf32> to vector<8xf32>
    %69 = vector.shape_cast %68 : vector<8xf32> to vector<8x1xf32>
    %70 = arith.subf %63, %65 : vector<8x128xf32>
    %71 = arith.mulf %70, %70 : vector<8x128xf32>
    %cst_33 = arith.constant dense<0.000000e+00> : vector<8xf32>
    %72 = vector.multi_reduction <add>, %71, %cst_33 [1] : vector<8x128xf32> to vector<8xf32>
    %73 = vector.shape_cast %72 : vector<8xf32> to vector<8x1xf32>
    %74 = arith.subf %69, %73 : vector<8x1xf32>
    %cst_34 = arith.constant 1.000000e+00 : f32
    %75 = vector.broadcast %cst_34 : f32 to vector<8x1xf32>
    %76 = arith.addf %74, %75 : vector<8x1xf32>
    %cst_35 = arith.constant 0.000000e+00 : f32
    %77 = vector.broadcast %cst_35 : f32 to vector<8x1xf32>
    %78 = arith.maximumf %76, %77 : vector<8x1xf32>
    %79 = vector.shape_cast %78 : vector<8x1xf32> to vector<1x8x1xf32>
    %cst_36 = arith.constant dense<0.000000e+00> : vector<1xf32>
    %80 = vector.multi_reduction <add>, %79, %cst_36 [1, 2] : vector<1x8x1xf32> to vector<1xf32>
    %81 = vector.shape_cast %80 : vector<1xf32> to vector<1x1x1xf32>
    %82 = vector.extract %81[0, 0, 0] : f32 from vector<1x1x1xf32>
    %83 = vector.broadcast %82 : f32 to vector<1x1xf32>
    %cst_37 = arith.constant 8.000000e+00 : f32
    %84 = vector.broadcast %cst_37 : f32 to vector<1x1xf32>
    %85 = arith.divf %83, %84 : vector<1x1xf32>
    %86 = vector.extract_strided_slice %61 {offsets = [0, 0], sizes = [8, 128], strides = [1, 1]} : vector<24x128xf32> to vector<8x128xf32>
    %87 = vector.extract_strided_slice %61 {offsets = [8, 0], sizes = [8, 128], strides = [1, 1]} : vector<24x128xf32> to vector<8x128xf32>
    %88 = vector.extract_strided_slice %61 {offsets = [16, 0], sizes = [8, 128], strides = [1, 1]} : vector<24x128xf32> to vector<8x128xf32>
    %cst_38 = arith.constant -9.000000e+01 : f32
    %89 = vector.broadcast %cst_38 : f32 to vector<1x1xf32>
    %90 = vector.broadcast %0 : f32 to vector<1x1xf32>
    %91 = arith.divf %89, %90 : vector<1x1xf32>
    %92 = math.exp %91 : vector<1x1xf32>
    %93 = arith.subf %86, %87 : vector<8x128xf32>
    %cst_39 = arith.constant 9.99999997E-7 : f32
    %94 = vector.broadcast %cst_39 : f32 to vector<8x128xf32>
    %95 = arith.addf %93, %94 : vector<8x128xf32>
    %96 = arith.mulf %95, %95 : vector<8x128xf32>
    %cst_40 = arith.constant dense<0.000000e+00> : vector<8xf32>
    %97 = vector.multi_reduction <add>, %96, %cst_40 [1] : vector<8x128xf32> to vector<8xf32>
    %98 = vector.shape_cast %97 : vector<8xf32> to vector<8x1xf32>
    %99 = math.sqrt %98 : vector<8x1xf32>
    %100 = arith.subf %86, %88 : vector<8x128xf32>
    %cst_41 = arith.constant 9.99999997E-7 : f32
    %101 = vector.broadcast %cst_41 : f32 to vector<8x128xf32>
    %102 = arith.addf %100, %101 : vector<8x128xf32>
    %103 = arith.mulf %102, %102 : vector<8x128xf32>
    %cst_42 = arith.constant dense<0.000000e+00> : vector<8xf32>
    %104 = vector.multi_reduction <add>, %103, %cst_42 [1] : vector<8x128xf32> to vector<8xf32>
    %105 = vector.shape_cast %104 : vector<8xf32> to vector<8x1xf32>
    %106 = math.sqrt %105 : vector<8x1xf32>
    %107 = arith.subf %106, %99 : vector<8x1xf32>
    %108 = vector.broadcast %92 : vector<1x1xf32> to vector<8x1xf32>
    %109 = arith.mulf %107, %108 : vector<8x1xf32>
    %110 = arith.addf %99, %109 : vector<8x1xf32>
    %111 = arith.divf %110, %106 : vector<8x1xf32>
    %112 = arith.subf %88, %86 : vector<8x128xf32>
    %113 = vector.broadcast %111 : vector<8x1xf32> to vector<8x128xf32>
    %114 = arith.mulf %112, %113 : vector<8x128xf32>
    %115 = arith.addf %86, %114 : vector<8x128xf32>
    %116 = arith.cmpf oge, %99, %106 : vector<8x1xf32>
    %117 = vector.shape_cast %116 : vector<8x1xi1> to vector<8x1xi1>
    %118 = vector.broadcast %117 : vector<8x1xi1> to vector<8x128xi1>
    %119 = arith.select %118, %88, %115 : vector<8x128xi1>, vector<8x128xf32>
    %120 = tpu.concatenate %86, %87, %119 in 0 : vector<8x128xf32>, vector<8x128xf32>, vector<8x128xf32> -> vector<24x128xf32>
    %121 = tpu.concatenate %61, %120 in 0 : vector<24x128xf32>, vector<24x128xf32> -> vector<48x128xf32>
    %c1_i32_43 = arith.constant 1 : i32
    %122 = tpu.memref_slice %arg30[%c1_i32_43] : memref<5x!tpu.dma_semaphore, #tpu.memory_space<semaphore_mem>> -> memref<1x!tpu.dma_semaphore, #tpu.memory_space<semaphore_mem>>
    %123 = tpu.memref_squeeze %122 : memref<1x!tpu.dma_semaphore, #tpu.memory_space<semaphore_mem>> -> memref<!tpu.dma_semaphore, #tpu.memory_space<semaphore_mem>>
    tpu.wait_dma2 semaphore(%123 : memref<!tpu.dma_semaphore, #tpu.memory_space<semaphore_mem>>) src(%arg11 : memref<128x512xf32, #tpu.memory_space<any>>) dst(%arg26 : memref<128x512xf32, #tpu.memory_space<vmem>>)
    %c0_44 = arith.constant 0 : index
    %c0_45 = arith.constant 0 : index
    %124 = vector.load %arg26[%c0_44, %c0_45] : memref<128x512xf32, #tpu.memory_space<vmem>>, vector<128x512xf32>
    %cst_46 = arith.constant dense<0.000000e+00> : vector<48x512xf32>
    %125 = tpu.matmul %121, %124, %cst_46 {dimension_numbers = #tpu.dot_dimension_numbers<[1], [0], [0], [1], [0, 0, 1, 1], [], []>} : vector<48x128xf32>, vector<128x512xf32>, vector<48x512xf32> -> vector<48x512xf32>
    %c0_47 = arith.constant 0 : index
    %c0_48 = arith.constant 0 : index
    %126 = vector.load %arg12[%c0_47, %c0_48] : memref<1x512xf32, #tpu.memory_space<vmem>>, vector<1x512xf32>
    %127 = vector.broadcast %126 : vector<1x512xf32> to vector<48x512xf32>
    %128 = arith.addf %125, %127 : vector<48x512xf32>
    %cst_49 = arith.constant 0.000000e+00 : f32
    %129 = vector.broadcast %cst_49 : f32 to vector<48x512xf32>
    %130 = arith.maximumf %128, %129 : vector<48x512xf32>
    %c0_50 = arith.constant 0 : index
    %c0_51 = arith.constant 0 : index
    %131 = vector.load %arg13[%c0_50, %c0_51] : memref<1x512xf32, #tpu.memory_space<vmem>>, vector<1x512xf32>
    %c0_52 = arith.constant 0 : index
    %c0_53 = arith.constant 0 : index
    %132 = vector.load %arg14[%c0_52, %c0_53] : memref<1x512xf32, #tpu.memory_space<vmem>>, vector<1x512xf32>
    %cst_54 = arith.constant dense<0.000000e+00> : vector<512xf32>
    %133 = vector.multi_reduction <add>, %130, %cst_54 [0] : vector<48x512xf32> to vector<512xf32>
    %134 = vector.shape_cast %133 : vector<512xf32> to vector<1x512xf32>
    %cst_55 = arith.constant 4.800000e+01 : f32
    %135 = vector.broadcast %cst_55 : f32 to vector<1x512xf32>
    %136 = arith.divf %134, %135 : vector<1x512xf32>
    %137 = arith.mulf %130, %130 : vector<48x512xf32>
    %cst_56 = arith.constant dense<0.000000e+00> : vector<512xf32>
    %138 = vector.multi_reduction <add>, %137, %cst_56 [0] : vector<48x512xf32> to vector<512xf32>
    %139 = vector.shape_cast %138 : vector<512xf32> to vector<1x512xf32>
    %cst_57 = arith.constant 4.800000e+01 : f32
    %140 = vector.broadcast %cst_57 : f32 to vector<1x512xf32>
    %141 = arith.divf %139, %140 : vector<1x512xf32>
    %142 = arith.mulf %136, %136 : vector<1x512xf32>
    %143 = arith.subf %141, %142 : vector<1x512xf32>
    %cst_58 = arith.constant 0.000000e+00 : f32
    %144 = vector.broadcast %cst_58 : f32 to vector<1x512xf32>
    %145 = arith.maximumf %143, %144 : vector<1x512xf32>
    %146 = vector.broadcast %136 : vector<1x512xf32> to vector<48x512xf32>
    %147 = arith.subf %130, %146 : vector<48x512xf32>
    %cst_59 = arith.constant 9.99999974E-6 : f32
    %148 = vector.broadcast %cst_59 : f32 to vector<1x512xf32>
    %149 = arith.addf %145, %148 : vector<1x512xf32>
    %150 = math.rsqrt %149 : vector<1x512xf32>
    %151 = vector.broadcast %150 : vector<1x512xf32> to vector<48x512xf32>
    %152 = arith.mulf %147, %151 : vector<48x512xf32>
    %153 = vector.broadcast %131 : vector<1x512xf32> to vector<48x512xf32>
    %154 = arith.mulf %152, %153 : vector<48x512xf32>
    %155 = vector.broadcast %132 : vector<1x512xf32> to vector<48x512xf32>
    %156 = arith.addf %154, %155 : vector<48x512xf32>
    %c2_i32_60 = arith.constant 2 : i32
    %157 = tpu.memref_slice %arg30[%c2_i32_60] : memref<5x!tpu.dma_semaphore, #tpu.memory_space<semaphore_mem>> -> memref<1x!tpu.dma_semaphore, #tpu.memory_space<semaphore_mem>>
    %158 = tpu.memref_squeeze %157 : memref<1x!tpu.dma_semaphore, #tpu.memory_space<semaphore_mem>> -> memref<!tpu.dma_semaphore, #tpu.memory_space<semaphore_mem>>
    tpu.wait_dma2 semaphore(%158 : memref<!tpu.dma_semaphore, #tpu.memory_space<semaphore_mem>>) src(%arg15 : memref<512x1024xf32, #tpu.memory_space<any>>) dst(%arg27 : memref<512x1024xf32, #tpu.memory_space<vmem>>)
    %c0_61 = arith.constant 0 : index
    %c0_62 = arith.constant 0 : index
    %159 = vector.load %arg27[%c0_61, %c0_62] : memref<512x1024xf32, #tpu.memory_space<vmem>>, vector<512x1024xf32>
    %cst_63 = arith.constant dense<0.000000e+00> : vector<48x1024xf32>
    %160 = tpu.matmul %156, %159, %cst_63 {dimension_numbers = #tpu.dot_dimension_numbers<[1], [0], [0], [1], [0, 0, 1, 1], [], []>} : vector<48x512xf32>, vector<512x1024xf32>, vector<48x1024xf32> -> vector<48x1024xf32>
    %c0_64 = arith.constant 0 : index
    %c0_65 = arith.constant 0 : index
    %161 = vector.load %arg16[%c0_64, %c0_65] : memref<1x1024xf32, #tpu.memory_space<vmem>>, vector<1x1024xf32>
    %162 = vector.broadcast %161 : vector<1x1024xf32> to vector<48x1024xf32>
    %163 = arith.addf %160, %162 : vector<48x1024xf32>
    %164 = vector.extract_strided_slice %163 {offsets = [0, 0], sizes = [24, 1024], strides = [1, 1]} : vector<48x1024xf32> to vector<24x1024xf32>
    %165 = vector.extract_strided_slice %163 {offsets = [24, 0], sizes = [24, 1024], strides = [1, 1]} : vector<48x1024xf32> to vector<24x1024xf32>
    %c3_i32_66 = arith.constant 3 : i32
    %166 = tpu.memref_slice %arg30[%c3_i32_66] : memref<5x!tpu.dma_semaphore, #tpu.memory_space<semaphore_mem>> -> memref<1x!tpu.dma_semaphore, #tpu.memory_space<semaphore_mem>>
    %167 = tpu.memref_squeeze %166 : memref<1x!tpu.dma_semaphore, #tpu.memory_space<semaphore_mem>> -> memref<!tpu.dma_semaphore, #tpu.memory_space<semaphore_mem>>
    tpu.wait_dma2 semaphore(%167 : memref<!tpu.dma_semaphore, #tpu.memory_space<semaphore_mem>>) src(%arg19 : memref<1024x128xf32, #tpu.memory_space<any>>) dst(%arg28 : memref<1024x128xf32, #tpu.memory_space<vmem>>)
    %c0_67 = arith.constant 0 : index
    %c0_68 = arith.constant 0 : index
    %168 = vector.load %arg17[%c0_67, %c0_68] : memref<1x1024xf32, #tpu.memory_space<vmem>>, vector<1x1024xf32>
    %c0_69 = arith.constant 0 : index
    %c0_70 = arith.constant 0 : index
    %169 = vector.load %arg18[%c0_69, %c0_70] : memref<1x1024xf32, #tpu.memory_space<vmem>>, vector<1x1024xf32>
    %cst_71 = arith.constant dense<0.000000e+00> : vector<1024xf32>
    %170 = vector.multi_reduction <add>, %165, %cst_71 [0] : vector<24x1024xf32> to vector<1024xf32>
    %171 = vector.shape_cast %170 : vector<1024xf32> to vector<1x1024xf32>
    %cst_72 = arith.constant 2.400000e+01 : f32
    %172 = vector.broadcast %cst_72 : f32 to vector<1x1024xf32>
    %173 = arith.divf %171, %172 : vector<1x1024xf32>
    %174 = arith.mulf %165, %165 : vector<24x1024xf32>
    %cst_73 = arith.constant dense<0.000000e+00> : vector<1024xf32>
    %175 = vector.multi_reduction <add>, %174, %cst_73 [0] : vector<24x1024xf32> to vector<1024xf32>
    %176 = vector.shape_cast %175 : vector<1024xf32> to vector<1x1024xf32>
    %cst_74 = arith.constant 2.400000e+01 : f32
    %177 = vector.broadcast %cst_74 : f32 to vector<1x1024xf32>
    %178 = arith.divf %176, %177 : vector<1x1024xf32>
    %179 = arith.mulf %173, %173 : vector<1x1024xf32>
    %180 = arith.subf %178, %179 : vector<1x1024xf32>
    %cst_75 = arith.constant 0.000000e+00 : f32
    %181 = vector.broadcast %cst_75 : f32 to vector<1x1024xf32>
    %182 = arith.maximumf %180, %181 : vector<1x1024xf32>
    %183 = vector.broadcast %173 : vector<1x1024xf32> to vector<24x1024xf32>
    %184 = arith.subf %165, %183 : vector<24x1024xf32>
    %cst_76 = arith.constant 9.99999974E-6 : f32
    %185 = vector.broadcast %cst_76 : f32 to vector<1x1024xf32>
    %186 = arith.addf %182, %185 : vector<1x1024xf32>
    %187 = math.rsqrt %186 : vector<1x1024xf32>
    %188 = vector.broadcast %187 : vector<1x1024xf32> to vector<24x1024xf32>
    %189 = arith.mulf %184, %188 : vector<24x1024xf32>
    %190 = vector.broadcast %168 : vector<1x1024xf32> to vector<24x1024xf32>
    %191 = arith.mulf %189, %190 : vector<24x1024xf32>
    %192 = vector.broadcast %169 : vector<1x1024xf32> to vector<24x1024xf32>
    %193 = arith.addf %191, %192 : vector<24x1024xf32>
    %c0_77 = arith.constant 0 : index
    %c0_78 = arith.constant 0 : index
    %194 = vector.load %arg28[%c0_77, %c0_78] : memref<1024x128xf32, #tpu.memory_space<vmem>>, vector<1024x128xf32>
    %cst_79 = arith.constant dense<0.000000e+00> : vector<24x128xf32>
    %195 = tpu.matmul %193, %194, %cst_79 {dimension_numbers = #tpu.dot_dimension_numbers<[1], [0], [0], [1], [0, 0, 1, 1], [], []>} : vector<24x1024xf32>, vector<1024x128xf32>, vector<24x128xf32> -> vector<24x128xf32>
    %c0_80 = arith.constant 0 : index
    %c0_81 = arith.constant 0 : index
    %196 = vector.load %arg20[%c0_80, %c0_81] : memref<1x128xf32, #tpu.memory_space<vmem>>, vector<1x128xf32>
    %197 = vector.broadcast %196 : vector<1x128xf32> to vector<24x128xf32>
    %198 = arith.addf %195, %197 : vector<24x128xf32>
    %199 = vector.extract_strided_slice %198 {offsets = [0, 0], sizes = [8, 128], strides = [1, 1]} : vector<24x128xf32> to vector<8x128xf32>
    %200 = vector.extract_strided_slice %198 {offsets = [8, 0], sizes = [8, 128], strides = [1, 1]} : vector<24x128xf32> to vector<8x128xf32>
    %201 = vector.extract_strided_slice %198 {offsets = [16, 0], sizes = [8, 128], strides = [1, 1]} : vector<24x128xf32> to vector<8x128xf32>
    %202 = arith.subf %199, %200 : vector<8x128xf32>
    %203 = arith.mulf %202, %202 : vector<8x128xf32>
    %cst_82 = arith.constant dense<0.000000e+00> : vector<8xf32>
    %204 = vector.multi_reduction <add>, %203, %cst_82 [1] : vector<8x128xf32> to vector<8xf32>
    %205 = vector.shape_cast %204 : vector<8xf32> to vector<8x1xf32>
    %206 = arith.subf %199, %201 : vector<8x128xf32>
    %207 = arith.mulf %206, %206 : vector<8x128xf32>
    %cst_83 = arith.constant dense<0.000000e+00> : vector<8xf32>
    %208 = vector.multi_reduction <add>, %207, %cst_83 [1] : vector<8x128xf32> to vector<8xf32>
    %209 = vector.shape_cast %208 : vector<8xf32> to vector<8x1xf32>
    %210 = arith.subf %205, %209 : vector<8x1xf32>
    %cst_84 = arith.constant 1.000000e+00 : f32
    %211 = vector.broadcast %cst_84 : f32 to vector<8x1xf32>
    %212 = arith.addf %210, %211 : vector<8x1xf32>
    %cst_85 = arith.constant 0.000000e+00 : f32
    %213 = vector.broadcast %cst_85 : f32 to vector<8x1xf32>
    %214 = arith.maximumf %212, %213 : vector<8x1xf32>
    %215 = vector.shape_cast %214 : vector<8x1xf32> to vector<1x8x1xf32>
    %cst_86 = arith.constant dense<0.000000e+00> : vector<1xf32>
    %216 = vector.multi_reduction <add>, %215, %cst_86 [1, 2] : vector<1x8x1xf32> to vector<1xf32>
    %217 = vector.shape_cast %216 : vector<1xf32> to vector<1x1x1xf32>
    %218 = vector.extract %217[0, 0, 0] : f32 from vector<1x1x1xf32>
    %219 = vector.broadcast %218 : f32 to vector<1x1xf32>
    %cst_87 = arith.constant 8.000000e+00 : f32
    %220 = vector.broadcast %cst_87 : f32 to vector<1x1xf32>
    %221 = arith.divf %219, %220 : vector<1x1xf32>
    %cst_88 = arith.constant -1.000000e+04 : f32
    %222 = vector.broadcast %cst_88 : f32 to vector<1x1xf32>
    %223 = vector.broadcast %1 : f32 to vector<1x1xf32>
    %224 = arith.divf %222, %223 : vector<1x1xf32>
    %225 = math.exp %224 : vector<1x1xf32>
    %cst_89 = arith.constant 1.000000e+00 : f32
    %226 = vector.broadcast %cst_89 : f32 to vector<1x1xf32>
    %227 = arith.subf %226, %225 : vector<1x1xf32>
    %228 = arith.mulf %227, %221 : vector<1x1xf32>
    %229 = arith.mulf %225, %85 : vector<1x1xf32>
    %230 = arith.addf %229, %228 : vector<1x1xf32>
    %c4_i32_90 = arith.constant 4 : i32
    %231 = tpu.memref_slice %arg30[%c4_i32_90] : memref<5x!tpu.dma_semaphore, #tpu.memory_space<semaphore_mem>> -> memref<1x!tpu.dma_semaphore, #tpu.memory_space<semaphore_mem>>
    %232 = tpu.memref_squeeze %231 : memref<1x!tpu.dma_semaphore, #tpu.memory_space<semaphore_mem>> -> memref<!tpu.dma_semaphore, #tpu.memory_space<semaphore_mem>>
    tpu.wait_dma2 semaphore(%232 : memref<!tpu.dma_semaphore, #tpu.memory_space<semaphore_mem>>) src(%arg21 : memref<1024x128xf32, #tpu.memory_space<any>>) dst(%arg29 : memref<1024x128xf32, #tpu.memory_space<vmem>>)
    %233 = tpu.concatenate %28, %165 in 0 : vector<24x1024xf32>, vector<24x1024xf32> -> vector<48x1024xf32>
    %c0_91 = arith.constant 0 : index
    %c0_92 = arith.constant 0 : index
    %234 = vector.load %arg29[%c0_91, %c0_92] : memref<1024x128xf32, #tpu.memory_space<vmem>>, vector<1024x128xf32>
    %cst_93 = arith.constant dense<0.000000e+00> : vector<48x128xf32>
    %235 = tpu.matmul %233, %234, %cst_93 {dimension_numbers = #tpu.dot_dimension_numbers<[1], [0], [0], [1], [0, 0, 1, 1], [], []>} : vector<48x1024xf32>, vector<1024x128xf32>, vector<48x128xf32> -> vector<48x128xf32>
    %c0_94 = arith.constant 0 : index
    %c0_95 = arith.constant 0 : index
    %236 = vector.load %arg22[%c0_94, %c0_95] : memref<1x128xf32, #tpu.memory_space<vmem>>, vector<1x128xf32>
    %237 = vector.broadcast %236 : vector<1x128xf32> to vector<48x128xf32>
    %238 = arith.addf %235, %237 : vector<48x128xf32>
    %239 = tpu.iota {dimensions = array<i32: 1>} : vector<24x128xi32>
    %c0_96 = arith.constant 0 : index
    %c0_97 = arith.constant 0 : index
    %240 = vector.load %arg1[%c0_96, %c0_97] : memref<24x1xi32, #tpu.memory_space<vmem>>, vector<24x1xi32>
    %241 = vector.broadcast %240 : vector<24x1xi32> to vector<24x128xi32>
    %242 = arith.cmpi eq, %239, %241 : vector<24x128xi32>
    %243 = arith.extui %242 : vector<24x128xi1> to vector<24x128xi32>
    %244 = arith.sitofp %243 : vector<24x128xi32> to vector<24x128xf32>
    %245 = tpu.concatenate %244, %244 in 0 : vector<24x128xf32>, vector<24x128xf32> -> vector<48x128xf32>
    %cst_98 = arith.constant dense<0xFF800000> : vector<48xf32>
    %246 = vector.multi_reduction <maximumf>, %238, %cst_98 [1] : vector<48x128xf32> to vector<48xf32>
    %247 = vector.shape_cast %246 : vector<48xf32> to vector<48x1xf32>
    %248 = vector.broadcast %247 : vector<48x1xf32> to vector<48x128xf32>
    %249 = arith.subf %238, %248 : vector<48x128xf32>
    %250 = math.exp %249 : vector<48x128xf32>
    %cst_99 = arith.constant dense<0.000000e+00> : vector<48xf32>
    %251 = vector.multi_reduction <add>, %250, %cst_99 [1] : vector<48x128xf32> to vector<48xf32>
    %252 = vector.shape_cast %251 : vector<48xf32> to vector<48x1xf32>
    %253 = math.log %252 : vector<48x1xf32>
    %254 = arith.addf %247, %253 : vector<48x1xf32>
    %255 = arith.mulf %245, %238 : vector<48x128xf32>
    %cst_100 = arith.constant dense<0.000000e+00> : vector<48xf32>
    %256 = vector.multi_reduction <add>, %255, %cst_100 [1] : vector<48x128xf32> to vector<48xf32>
    %257 = vector.shape_cast %256 : vector<48xf32> to vector<48x1xf32>
    %258 = arith.subf %254, %257 : vector<48x1xf32>
    %259 = vector.extract_strided_slice %258 {offsets = [0, 0], sizes = [24, 1], strides = [1, 1]} : vector<48x1xf32> to vector<24x1xf32>
    %260 = vector.shape_cast %259 : vector<24x1xf32> to vector<1x24x1xf32>
    %cst_101 = arith.constant dense<0.000000e+00> : vector<1xf32>
    %261 = vector.multi_reduction <add>, %260, %cst_101 [1, 2] : vector<1x24x1xf32> to vector<1xf32>
    %262 = vector.shape_cast %261 : vector<1xf32> to vector<1x1x1xf32>
    %263 = vector.extract %262[0, 0, 0] : f32 from vector<1x1x1xf32>
    %264 = vector.broadcast %263 : f32 to vector<1x1xf32>
    %cst_102 = arith.constant 2.400000e+01 : f32
    %265 = vector.broadcast %cst_102 : f32 to vector<1x1xf32>
    %266 = arith.divf %264, %265 : vector<1x1xf32>
    %267 = vector.extract_strided_slice %258 {offsets = [24, 0], sizes = [24, 1], strides = [1, 1]} : vector<48x1xf32> to vector<24x1xf32>
    %268 = vector.shape_cast %267 : vector<24x1xf32> to vector<1x24x1xf32>
    %cst_103 = arith.constant dense<0.000000e+00> : vector<1xf32>
    %269 = vector.multi_reduction <add>, %268, %cst_103 [1, 2] : vector<1x24x1xf32> to vector<1xf32>
    %270 = vector.shape_cast %269 : vector<1xf32> to vector<1x1x1xf32>
    %271 = vector.extract %270[0, 0, 0] : f32 from vector<1x1x1xf32>
    %272 = vector.broadcast %271 : f32 to vector<1x1xf32>
    %cst_104 = arith.constant 2.400000e+01 : f32
    %273 = vector.broadcast %cst_104 : f32 to vector<1x1xf32>
    %274 = arith.divf %272, %273 : vector<1x1xf32>
    %275 = arith.subf %164, %28 : vector<24x1024xf32>
    %276 = arith.mulf %275, %275 : vector<24x1024xf32>
    %277 = vector.shape_cast %276 : vector<24x1024xf32> to vector<1x24x1024xf32>
    %cst_105 = arith.constant dense<0.000000e+00> : vector<1xf32>
    %278 = vector.multi_reduction <add>, %277, %cst_105 [1, 2] : vector<1x24x1024xf32> to vector<1xf32>
    %279 = vector.shape_cast %278 : vector<1xf32> to vector<1x1x1xf32>
    %280 = vector.extract %279[0, 0, 0] : f32 from vector<1x1x1xf32>
    %281 = vector.broadcast %280 : f32 to vector<1x1xf32>
    %cst_106 = arith.constant 5.000000e-01 : f32
    %282 = vector.broadcast %cst_106 : f32 to vector<1x1xf32>
    %283 = arith.mulf %282, %281 : vector<1x1xf32>
    %cst_107 = arith.constant 5.000000e+03 : f32
    %284 = vector.broadcast %cst_107 : f32 to vector<1x1xf32>
    %285 = arith.mulf %284, %274 : vector<1x1xf32>
    %286 = arith.addf %283, %285 : vector<1x1xf32>
    %287 = tpu.iota {dimensions = array<i32: 1>} : vector<1x8xi32>
    %c0_i32_108 = arith.constant 0 : i32
    %288 = vector.broadcast %c0_i32_108 : i32 to vector<1x8xi32>
    %289 = arith.cmpi eq, %287, %288 : vector<1x8xi32>
    %cst_109 = arith.constant 0.000000e+00 : f32
    %290 = vector.shape_cast %286 : vector<1x1xf32> to vector<1x1xf32>
    %291 = vector.broadcast %290 : vector<1x1xf32> to vector<1x8xf32>
    %292 = vector.broadcast %cst_109 : f32 to vector<1x8xf32>
    %293 = arith.select %289, %291, %292 : vector<1x8xi1>, vector<1x8xf32>
    %c1_i32_110 = arith.constant 1 : i32
    %294 = vector.broadcast %c1_i32_110 : i32 to vector<1x8xi32>
    %295 = arith.cmpi eq, %287, %294 : vector<1x8xi32>
    %cst_111 = arith.constant 0.000000e+00 : f32
    %296 = vector.shape_cast %230 : vector<1x1xf32> to vector<1x1xf32>
    %297 = vector.broadcast %296 : vector<1x1xf32> to vector<1x8xf32>
    %298 = vector.broadcast %cst_111 : f32 to vector<1x8xf32>
    %299 = arith.select %295, %297, %298 : vector<1x8xi1>, vector<1x8xf32>
    %300 = arith.addf %293, %299 : vector<1x8xf32>
    %c2_i32_112 = arith.constant 2 : i32
    %301 = vector.broadcast %c2_i32_112 : i32 to vector<1x8xi32>
    %302 = arith.cmpi eq, %287, %301 : vector<1x8xi32>
    %cst_113 = arith.constant 0.000000e+00 : f32
    %303 = vector.shape_cast %229 : vector<1x1xf32> to vector<1x1xf32>
    %304 = vector.broadcast %303 : vector<1x1xf32> to vector<1x8xf32>
    %305 = vector.broadcast %cst_113 : f32 to vector<1x8xf32>
    %306 = arith.select %302, %304, %305 : vector<1x8xi1>, vector<1x8xf32>
    %307 = arith.addf %300, %306 : vector<1x8xf32>
    %c3_i32_114 = arith.constant 3 : i32
    %308 = vector.broadcast %c3_i32_114 : i32 to vector<1x8xi32>
    %309 = arith.cmpi eq, %287, %308 : vector<1x8xi32>
    %cst_115 = arith.constant 0.000000e+00 : f32
    %310 = vector.shape_cast %266 : vector<1x1xf32> to vector<1x1xf32>
    %311 = vector.broadcast %310 : vector<1x1xf32> to vector<1x8xf32>
    %312 = vector.broadcast %cst_115 : f32 to vector<1x8xf32>
    %313 = arith.select %309, %311, %312 : vector<1x8xi1>, vector<1x8xf32>
    %314 = arith.addf %307, %313 : vector<1x8xf32>
    %c0_116 = arith.constant 0 : index
    %c0_117 = arith.constant 0 : index
    %315 = vector.load %arg23[%c0_116, %c0_117] : memref<1x8xf32, #tpu.memory_space<vmem>>, vector<1x8xf32>
    tpu.vector_store %arg23[%c0_116, %c0_117], %314 {strides = array<i32>} : memref<1x8xf32, #tpu.memory_space<vmem>>, vector<1x8xf32>,
    return
  }
}

</mosaic_0001>

<llo_original>
// kernel: triplet_hdml_forward.1
$region0: #{triplet_hdml_forward.1}
  #allocation0 [shape = 'u32[]', space=smem, size = 0x4, offset = 0x4, fixed_abs, tag = 'smem constant byte address 0x4 - core index']
  #allocation1 [shape = 'u32[144,128]{1,0:T(1,128)}', space=vmem, size = 0x12000, scoped, tag = 'internal scratch']
  #allocation2 [shape = 'f32[1024,128]{1,0:T(8,128)}', space=vmem, size = 0x80000, scoped, tag = 'scratch operand']
  #allocation3 [shape = 'f32[128,512]{1,0:T(8,128)}', space=vmem, size = 0x40000, scoped, tag = 'scratch operand']
  #allocation4 [shape = 'f32[512,1024]{1,0:T(8,128)}', space=vmem, size = 0x200000, scoped, tag = 'scratch operand']
  #allocation5 [shape = 'f32[1024,128]{1,0:T(8,128)}', space=vmem, size = 0x80000, scoped, tag = 'scratch operand']
  #allocation6 [shape = 'f32[1024,128]{1,0:T(8,128)}', space=vmem, size = 0x80000, scoped, tag = 'scratch operand']
  #allocation7 [shape = 's32[5]{0}', space=sflag, size = 0x14, scoped, tag = 'scratch operand']
  #allocation12 [shape = 's32[]', space=sflag, size = 0x4, offset = 0, fixed_abs, tag = 'sflag constant byte address 0x0 - dummy sync flag']
  #allocation13 [shape = 's32[]', space=sflag, size = 0x4, offset = 0, fixed_abs, tag = 'sflag constant byte address 0x0 - dummy sync flag']
  #allocation14 [shape = 's32[]', space=sflag, size = 0x4, offset = 0, fixed_abs, tag = 'sflag constant byte address 0x0 - dummy sync flag']
  #allocation15 [shape = 's32[]', space=sflag, size = 0x4, offset = 0, fixed_abs, tag = 'sflag constant byte address 0x0 - dummy sync flag']
  #allocation16 [shape = 's32[]', space=sflag, size = 0x4, offset = 0, fixed_abs, tag = 'sflag constant byte address 0x0 - dummy sync flag']
  %s0 = inlined_call_operand.vmem [shape: f32[2], index: 0, kind: input, shape index: {}]
  %s1 = inlined_call_operand.vmem [shape: s32[24,1], index: 1, kind: input, shape index: {}]
  %s2 = inlined_call_operand.vmem [shape: f32[1536,32], index: 2, kind: input, shape index: {}]
  %s3 = inlined_call_operand.vmem [shape: f32[32,128], index: 3, kind: input, shape index: {}]
  %s4 = inlined_call_operand.vmem [shape: f32[1,128], index: 4, kind: input, shape index: {}]
  %s5 = inlined_call_operand.vmem [shape: f32[128,1024], index: 5, kind: input, shape index: {}]
  %s6 = inlined_call_operand.vmem [shape: f32[1,1024], index: 6, kind: input, shape index: {}]
  %s7 = inlined_call_operand.vmem [shape: f32[1,1024], index: 7, kind: input, shape index: {}]
  %s8 = inlined_call_operand.vmem [shape: f32[1,1024], index: 8, kind: input, shape index: {}]
  %s9 = inlined_call_operand.vmem [shape: f32[1024,128], index: 9, kind: input, shape index: {}]
  %s10 = inlined_call_operand.vmem [shape: f32[1,128], index: 10, kind: input, shape index: {}]
  %s11 = inlined_call_operand.vmem [shape: f32[128,512], index: 11, kind: input, shape index: {}]
  %s12 = inlined_call_operand.vmem [shape: f32[1,512], index: 12, kind: input, shape index: {}]
  %s13 = inlined_call_operand.vmem [shape: f32[1,512], index: 13, kind: input, shape index: {}]
  %s14 = inlined_call_operand.vmem [shape: f32[1,512], index: 14, kind: input, shape index: {}]
  %s15 = inlined_call_operand.vmem [shape: f32[512,1024], index: 15, kind: input, shape index: {}]
  %s16 = inlined_call_operand.vmem [shape: f32[1,1024], index: 16, kind: input, shape index: {}]
  %s17 = inlined_call_operand.vmem [shape: f32[1,1024], index: 17, kind: input, shape index: {}]
  %s18 = inlined_call_operand.vmem [shape: f32[1,1024], index: 18, kind: input, shape index: {}]
  %s19 = inlined_call_operand.vmem [shape: f32[1024,128], index: 19, kind: input, shape index: {}]
  %s20 = inlined_call_operand.vmem [shape: f32[1,128], index: 20, kind: input, shape index: {}]
  %s21 = inlined_call_operand.vmem [shape: f32[1024,128], index: 21, kind: input, shape index: {}]
  %s22 = inlined_call_operand.vmem [shape: f32[1,128], index: 22, kind: input, shape index: {}]
  %s23 = inlined_call_operand.vmem [shape: f32[1,8], index: 23, kind: output, shape index: {0}]
  %s24 = inlined_call_operand.hbm [shape: f32[24,128], index: 24, kind: output, shape index: {1}]
  %25 = xla_tuple %s23, %s24
  %s26 = sld [smem:[#allocation0]]
  $region264: #{triplet_hdml_forward.1} parent=0
    _
  %s28 = ssub.s32 1, %s26
  %s29 = scalar_select 0, %s28, %s26
  $region1: #{triplet_hdml_forward.1} parent=0
    #allocation8 [shape = 'u8[512]{0}', space=smem, size = 0x200, scoped, tag = 'input window, operand 0, single buffered']
    #allocation9 [shape = 's32[1]{0}', space=sflag, size = 0x4, scoped, tag = 'scoped memory for triplet_hdml_forward.1']
    #allocation10 [shape = 's32[1]{0}', space=sflag, size = 0x4, scoped, tag = 'scoped memory for triplet_hdml_forward.1']
    #allocation11 [shape = 'u8[12288]{0}', space=vmem, size = 0x3000, scoped, tag = 'output window, operand 1, single buffered']
    %30 = vsyncpa [#allocation10], 0
    %31 = vsyncpa [#allocation9], 0
    // Predicated region
    $region2: #{triplet_hdml_forward.1} parent=1 // pred_check
      _
    $region3: #{triplet_hdml_forward.1} parent=1 // pred_check_branch
      %33 = sbr.rel (0) target = $region5
    $region4: #{triplet_hdml_forward.1} parent=1 // pred_region
      %s35 = ssub.s32 16, 16
      %36 = vsyncadd [#allocation10], %s35
      %s38 = sshll.u32 %s0, 4
      %s39 = int_to_ptr.vmem [resolvable:$true] %s38
      %41 = dma.vmem_to_smem %s39, 16, [#allocation8], [#allocation10]
    $region5: #{triplet_hdml_forward.1} parent=1 // pred_fallthru
      _
    // Predicated region
    $region6: #{triplet_hdml_forward.1} parent=1 // pred_check
      _
    $region7: #{triplet_hdml_forward.1} parent=1 // pred_check_branch
      %43 = sbr.rel (0) target = $region9
    $region8: #{triplet_hdml_forward.1} parent=1 // pred_region
      _
    $region9: #{triplet_hdml_forward.1} parent=1 // pred_fallthru
      _
    // Predicated region
    $region10: #{triplet_hdml_forward.1} parent=1 // pred_check
      _
    $region11: #{triplet_hdml_forward.1} parent=1 // pred_check_branch
      %45 = sbr.rel (0) target = $region13
    $region12: #{triplet_hdml_forward.1} parent=1 // pred_region
      _
    $region13: #{triplet_hdml_forward.1} parent=1 // pred_fallthru
      _
    // Predicated region
    $region14: #{triplet_hdml_forward.1} parent=1 // pred_check
      _
    $region15: #{triplet_hdml_forward.1} parent=1 // pred_check_branch
      %47 = sbr.rel (0) target = $region17
    $region16: #{triplet_hdml_forward.1} parent=1 // pred_region
      _
    $region17: #{triplet_hdml_forward.1} parent=1 // pred_fallthru
      _
    // Predicated region
    $region18: #{triplet_hdml_forward.1} parent=1 // pred_check
      _
    $region19: #{triplet_hdml_forward.1} parent=1 // pred_check_branch
      %49 = sbr.rel (0) target = $region21
    $region20: #{triplet_hdml_forward.1} parent=1 // pred_region
      _
    $region21: #{triplet_hdml_forward.1} parent=1 // pred_fallthru
      _
    // Predicated region
    $region22: #{triplet_hdml_forward.1} parent=1 // pred_check
      _
    $region23: #{triplet_hdml_forward.1} parent=1 // pred_check_branch
      %51 = sbr.rel (0) target = $region25
    $region24: #{triplet_hdml_forward.1} parent=1 // pred_region
      _
    $region25: #{triplet_hdml_forward.1} parent=1 // pred_fallthru
      _
    // Predicated region
    $region26: #{triplet_hdml_forward.1} parent=1 // pred_check
      _
    $region27: #{triplet_hdml_forward.1} parent=1 // pred_check_branch
      %53 = sbr.rel (0) target = $region29
    $region28: #{triplet_hdml_forward.1} parent=1 // pred_region
      _
    $region29: #{triplet_hdml_forward.1} parent=1 // pred_fallthru
      _
    // Predicated region
    $region30: #{triplet_hdml_forward.1} parent=1 // pred_check
      _
    $region31: #{triplet_hdml_forward.1} parent=1 // pred_check_branch
      %55 = sbr.rel (0) target = $region33
    $region32: #{triplet_hdml_forward.1} parent=1 // pred_region
      _
    $region33: #{triplet_hdml_forward.1} parent=1 // pred_fallthru
      _
    // Predicated region
    $region34: #{triplet_hdml_forward.1} parent=1 // pred_check
      _
    $region35: #{triplet_hdml_forward.1} parent=1 // pred_check_branch
      %57 = sbr.rel (0) target = $region37
    $region36: #{triplet_hdml_forward.1} parent=1 // pred_region
      _
    $region37: #{triplet_hdml_forward.1} parent=1 // pred_fallthru
      _
    // Predicated region
    $region38: #{triplet_hdml_forward.1} parent=1 // pred_check
      _
    $region39: #{triplet_hdml_forward.1} parent=1 // pred_check_branch
      %59 = sbr.rel (0) target = $region41
    $region40: #{triplet_hdml_forward.1} parent=1 // pred_region
      _
    $region41: #{triplet_hdml_forward.1} parent=1 // pred_fallthru
      _
    // Predicated region
    $region42: #{triplet_hdml_forward.1} parent=1 // pred_check
      _
    $region43: #{triplet_hdml_forward.1} parent=1 // pred_check_branch
      %61 = sbr.rel (0) target = $region45
    $region44: #{triplet_hdml_forward.1} parent=1 // pred_region
      _
    $region45: #{triplet_hdml_forward.1} parent=1 // pred_fallthru
      _
    // Predicated region
    $region46: #{triplet_hdml_forward.1} parent=1 // pred_check
      _
    $region47: #{triplet_hdml_forward.1} parent=1 // pred_check_branch
      %63 = sbr.rel (0) target = $region49
    $region48: #{triplet_hdml_forward.1} parent=1 // pred_region
      _
    $region49: #{triplet_hdml_forward.1} parent=1 // pred_fallthru
      _
    // Predicated region
    $region50: #{triplet_hdml_forward.1} parent=1 // pred_check
      _
    $region51: #{triplet_hdml_forward.1} parent=1 // pred_check_branch
      %65 = sbr.rel (0) target = $region53
    $region52: #{triplet_hdml_forward.1} parent=1 // pred_region
      _
    $region53: #{triplet_hdml_forward.1} parent=1 // pred_fallthru
      _
    // Predicated region
    $region54: #{triplet_hdml_forward.1} parent=1 // pred_check
      _
    $region55: #{triplet_hdml_forward.1} parent=1 // pred_check_branch
      %67 = sbr.rel (0) target = $region57
    $region56: #{triplet_hdml_forward.1} parent=1 // pred_region
      _
    $region57: #{triplet_hdml_forward.1} parent=1 // pred_fallthru
      _
    // Predicated region
    $region58: #{triplet_hdml_forward.1} parent=1 // pred_check
      _
    $region59: #{triplet_hdml_forward.1} parent=1 // pred_check_branch
      %69 = sbr.rel (0) target = $region61
    $region60: #{triplet_hdml_forward.1} parent=1 // pred_region
      _
    $region61: #{triplet_hdml_forward.1} parent=1 // pred_fallthru
      _
    // Predicated region
    $region62: #{triplet_hdml_forward.1} parent=1 // pred_check
      _
    $region63: #{triplet_hdml_forward.1} parent=1 // pred_check_branch
      %71 = sbr.rel (0) target = $region65
    $region64: #{triplet_hdml_forward.1} parent=1 // pred_region
      _
    $region65: #{triplet_hdml_forward.1} parent=1 // pred_fallthru
      _
    // Predicated region
    $region66: #{triplet_hdml_forward.1} parent=1 // pred_check
      _
    $region67: #{triplet_hdml_forward.1} parent=1 // pred_check_branch
      %73 = sbr.rel (0) target = $region69
    $region68: #{triplet_hdml_forward.1} parent=1 // pred_region
      _
    $region69: #{triplet_hdml_forward.1} parent=1 // pred_fallthru
      _
    // Predicated region
    $region70: #{triplet_hdml_forward.1} parent=1 // pred_check
      _
    $region71: #{triplet_hdml_forward.1} parent=1 // pred_check_branch
      %75 = sbr.rel (0) target = $region73
    $region72: #{triplet_hdml_forward.1} parent=1 // pred_region
      _
    $region73: #{triplet_hdml_forward.1} parent=1 // pred_fallthru
      _
    // Predicated region
    $region74: #{triplet_hdml_forward.1} parent=1 // pred_check
      _
    $region75: #{triplet_hdml_forward.1} parent=1 // pred_check_branch
      %77 = sbr.rel (0) target = $region77
    $region76: #{triplet_hdml_forward.1} parent=1 // pred_region
      %78 = dma.done [#allocation10], 16
    $region77: #{triplet_hdml_forward.1} parent=1 // pred_fallthru
      _
    %79 = sfence
    %s80 = sld [smem:[#allocation8]]
    %s81 = sld [smem:[#allocation8 + $0x1]]
    %p83 = scmp.lt.u32.totalorder 1024, 8
    %p84 = pneg %p83
    // Predicated region
    $region78: #{triplet_hdml_forward.1} parent=1 // pred_check
      _
    $region79: #{triplet_hdml_forward.1} parent=1 // pred_check_branch
      %86 = sbr.rel (%p83) target = $region81
    $region80: #{triplet_hdml_forward.1} parent=1 // pred_region
      %s102 = sand.u32 1024, 7
      %p103 = scmp.eq.s32.totalorder %s102, 0
      // Predicated region
      $region93: #{triplet_hdml_forward.1} parent=80 // pred_check
        %p104 = pneg %p103
      $region94: #{triplet_hdml_forward.1} parent=80 // pred_check_branch
        %106 = sbr.rel (%p104) target = $region96
      $region95: #{triplet_hdml_forward.1} parent=80 // pred_region
        loop: start=0, step=1, limit=1
        $region97: #{triplet_hdml_forward.1} parent=95 // loop_pre_header
          _
        $region98: #{triplet_hdml_forward.1} parent=95 // loop_header
          %s108 = sphi 0, %s112
          %p109 = scmp.ge.s32.totalorder %s108, 1
          %s113 = sphi %s9, %s9
          %s114 = sphi [#allocation2], [#allocation2]
        $region99: #{triplet_hdml_forward.1} parent=95 // loop_header_branch
          %111 = sbr.rel (%p109) target = $region103
        $region100: #{triplet_hdml_forward.1} parent=95 // loop_body
          %v115 = vld [vmem:[%s113] sm:$0xff]
          %116 = vst [vmem:[%s114] sm:$0xff] %v115
          %v117 = vld [vmem:[%s113 + $0x8] sm:$0xff]
          %118 = vst [vmem:[%s114 + $0x8] sm:$0xff] %v117
          %v119 = vld [vmem:[%s113 + $0x10] sm:$0xff]
          %120 = vst [vmem:[%s114 + $0x10] sm:$0xff] %v119
          %v121 = vld [vmem:[%s113 + $0x18] sm:$0xff]
          %122 = vst [vmem:[%s114 + $0x18] sm:$0xff] %v121
          %v123 = vld [vmem:[%s113 + $0x20] sm:$0xff]
          %124 = vst [vmem:[%s114 + $0x20] sm:$0xff] %v123
          %v125 = vld [vmem:[%s113 + $0x28] sm:$0xff]
          %126 = vst [vmem:[%s114 + $0x28] sm:$0xff] %v125
          %v127 = vld [vmem:[%s113 + $0x30] sm:$0xff]
          %128 = vst [vmem:[%s114 + $0x30] sm:$0xff] %v127
          %v129 = vld [vmem:[%s113 + $0x38] sm:$0xff]
          %130 = vst [vmem:[%s114 + $0x38] sm:$0xff] %v129
          %v131 = vld [vmem:[%s113 + $0x40] sm:$0xff]
          %132 = vst [vmem:[%s114 + $0x40] sm:$0xff] %v131
          %v133 = vld [vmem:[%s113 + $0x48] sm:$0xff]
          %134 = vst [vmem:[%s114 + $0x48] sm:$0xff] %v133
          %v135 = vld [vmem:[%s113 + $0x50] sm:$0xff]
          %136 = vst [vmem:[%s114 + $0x50] sm:$0xff] %v135
          %v137 = vld [vmem:[%s113 + $0x58] sm:$0xff]
          %138 = vst [vmem:[%s114 + $0x58] sm:$0xff] %v137
          %v139 = vld [vmem:[%s113 + $0x60] sm:$0xff]
          %140 = vst [vmem:[%s114 + $0x60] sm:$0xff] %v139
          %v141 = vld [vmem:[%s113 + $0x68] sm:$0xff]
          %142 = vst [vmem:[%s114 + $0x68] sm:$0xff] %v141
          %v143 = vld [vmem:[%s113 + $0x70] sm:$0xff]
          %144 = vst [vmem:[%s114 + $0x70] sm:$0xff] %v143
          %v145 = vld [vmem:[%s113 + $0x78] sm:$0xff]
          %146 = vst [vmem:[%s114 + $0x78] sm:$0xff] %v145
          %v147 = vld [vmem:[%s113 + $0x80] sm:$0xff]
          %148 = vst [vmem:[%s114 + $0x80] sm:$0xff] %v147
          %v149 = vld [vmem:[%s113 + $0x88] sm:$0xff]
          %150 = vst [vmem:[%s114 + $0x88] sm:$0xff] %v149
          %v151 = vld [vmem:[%s113 + $0x90] sm:$0xff]
          %152 = vst [vmem:[%s114 + $0x90] sm:$0xff] %v151
          %v153 = vld [vmem:[%s113 + $0x98] sm:$0xff]
          %154 = vst [vmem:[%s114 + $0x98] sm:$0xff] %v153
          %v155 = vld [vmem:[%s113 + $0xa0] sm:$0xff]
          %156 = vst [vmem:[%s114 + $0xa0] sm:$0xff] %v155
          %v157 = vld [vmem:[%s113 + $0xa8] sm:$0xff]
          %158 = vst [vmem:[%s114 + $0xa8] sm:$0xff] %v157
          %v159 = vld [vmem:[%s113 + $0xb0] sm:$0xff]
          %160 = vst [vmem:[%s114 + $0xb0] sm:$0xff] %v159
          %v161 = vld [vmem:[%s113 + $0xb8] sm:$0xff]
          %162 = vst [vmem:[%s114 + $0xb8] sm:$0xff] %v161
          %v163 = vld [vmem:[%s113 + $0xc0] sm:$0xff]
          %164 = vst [vmem:[%s114 + $0xc0] sm:$0xff] %v163
          %v165 = vld [vmem:[%s113 + $0xc8] sm:$0xff]
          %166 = vst [vmem:[%s114 + $0xc8] sm:$0xff] %v165
          %v167 = vld [vmem:[%s113 + $0xd0] sm:$0xff]
          %168 = vst [vmem:[%s114 + $0xd0] sm:$0xff] %v167
          %v169 = vld [vmem:[%s113 + $0xd8] sm:$0xff]
          %170 = vst [vmem:[%s114 + $0xd8] sm:$0xff] %v169
          %v171 = vld [vmem:[%s113 + $0xe0] sm:$0xff]
          %172 = vst [vmem:[%s114 + $0xe0] sm:$0xff] %v171
          %v173 = vld [vmem:[%s113 + $0xe8] sm:$0xff]
          %174 = vst [vmem:[%s114 + $0xe8] sm:$0xff] %v173
          %v175 = vld [vmem:[%s113 + $0xf0] sm:$0xff]
          %176 = vst [vmem:[%s114 + $0xf0] sm:$0xff] %v175
          %v177 = vld [vmem:[%s113 + $0xf8] sm:$0xff]
          %178 = vst [vmem:[%s114 + $0xf8] sm:$0xff] %v177
          %v179 = vld [vmem:[%s113 + $0x100] sm:$0xff]
          %180 = vst [vmem:[%s114 + $0x100] sm:$0xff] %v179
          %v181 = vld [vmem:[%s113 + $0x108] sm:$0xff]
          %182 = vst [vmem:[%s114 + $0x108] sm:$0xff] %v181
          %v183 = vld [vmem:[%s113 + $0x110] sm:$0xff]
          %184 = vst [vmem:[%s114 + $0x110] sm:$0xff] %v183
          %v185 = vld [vmem:[%s113 + $0x118] sm:$0xff]
          %186 = vst [vmem:[%s114 + $0x118] sm:$0xff] %v185
          %v187 = vld [vmem:[%s113 + $0x120] sm:$0xff]
          %188 = vst [vmem:[%s114 + $0x120] sm:$0xff] %v187
          %v189 = vld [vmem:[%s113 + $0x128] sm:$0xff]
          %190 = vst [vmem:[%s114 + $0x128] sm:$0xff] %v189
          %v191 = vld [vmem:[%s113 + $0x130] sm:$0xff]
          %192 = vst [vmem:[%s114 + $0x130] sm:$0xff] %v191
          %v193 = vld [vmem:[%s113 + $0x138] sm:$0xff]
          %194 = vst [vmem:[%s114 + $0x138] sm:$0xff] %v193
          %v195 = vld [vmem:[%s113 + $0x140] sm:$0xff]
          %196 = vst [vmem:[%s114 + $0x140] sm:$0xff] %v195
          %v197 = vld [vmem:[%s113 + $0x148] sm:$0xff]
          %198 = vst [vmem:[%s114 + $0x148] sm:$0xff] %v197
          %v199 = vld [vmem:[%s113 + $0x150] sm:$0xff]
          %200 = vst [vmem:[%s114 + $0x150] sm:$0xff] %v199
          %v201 = vld [vmem:[%s113 + $0x158] sm:$0xff]
          %202 = vst [vmem:[%s114 + $0x158] sm:$0xff] %v201
          %v203 = vld [vmem:[%s113 + $0x160] sm:$0xff]
          %204 = vst [vmem:[%s114 + $0x160] sm:$0xff] %v203
          %v205 = vld [vmem:[%s113 + $0x168] sm:$0xff]
          %206 = vst [vmem:[%s114 + $0x168] sm:$0xff] %v205
          %v207 = vld [vmem:[%s113 + $0x170] sm:$0xff]
          %208 = vst [vmem:[%s114 + $0x170] sm:$0xff] %v207
          %v209 = vld [vmem:[%s113 + $0x178] sm:$0xff]
          %210 = vst [vmem:[%s114 + $0x178] sm:$0xff] %v209
          %v211 = vld [vmem:[%s113 + $0x180] sm:$0xff]
          %212 = vst [vmem:[%s114 + $0x180] sm:$0xff] %v211
          %v213 = vld [vmem:[%s113 + $0x188] sm:$0xff]
          %214 = vst [vmem:[%s114 + $0x188] sm:$0xff] %v213
          %v215 = vld [vmem:[%s113 + $0x190] sm:$0xff]
          %216 = vst [vmem:[%s114 + $0x190] sm:$0xff] %v215
          %v217 = vld [vmem:[%s113 + $0x198] sm:$0xff]
          %218 = vst [vmem:[%s114 + $0x198] sm:$0xff] %v217
          %v219 = vld [vmem:[%s113 + $0x1a0] sm:$0xff]
          %220 = vst [vmem:[%s114 + $0x1a0] sm:$0xff] %v219
          %v221 = vld [vmem:[%s113 + $0x1a8] sm:$0xff]
          %222 = vst [vmem:[%s114 + $0x1a8] sm:$0xff] %v221
          %v223 = vld [vmem:[%s113 + $0x1b0] sm:$0xff]
          %224 = vst [vmem:[%s114 + $0x1b0] sm:$0xff] %v223
          %v225 = vld [vmem:[%s113 + $0x1b8] sm:$0xff]
          %226 = vst [vmem:[%s114 + $0x1b8] sm:$0xff] %v225
          %v227 = vld [vmem:[%s113 + $0x1c0] sm:$0xff]
          %228 = vst [vmem:[%s114 + $0x1c0] sm:$0xff] %v227
          %v229 = vld [vmem:[%s113 + $0x1c8] sm:$0xff]
          %230 = vst [vmem:[%s114 + $0x1c8] sm:$0xff] %v229
          %v231 = vld [vmem:[%s113 + $0x1d0] sm:$0xff]
          %232 = vst [vmem:[%s114 + $0x1d0] sm:$0xff] %v231
          %v233 = vld [vmem:[%s113 + $0x1d8] sm:$0xff]
          %234 = vst [vmem:[%s114 + $0x1d8] sm:$0xff] %v233
          %v235 = vld [vmem:[%s113 + $0x1e0] sm:$0xff]
          %236 = vst [vmem:[%s114 + $0x1e0] sm:$0xff] %v235
          %v237 = vld [vmem:[%s113 + $0x1e8] sm:$0xff]
          %238 = vst [vmem:[%s114 + $0x1e8] sm:$0xff] %v237
          %v239 = vld [vmem:[%s113 + $0x1f0] sm:$0xff]
          %240 = vst [vmem:[%s114 + $0x1f0] sm:$0xff] %v239
          %v241 = vld [vmem:[%s113 + $0x1f8] sm:$0xff]
          %242 = vst [vmem:[%s114 + $0x1f8] sm:$0xff] %v241
          %v243 = vld [vmem:[%s113 + $0x200] sm:$0xff]
          %244 = vst [vmem:[%s114 + $0x200] sm:$0xff] %v243
          %v245 = vld [vmem:[%s113 + $0x208] sm:$0xff]
          %246 = vst [vmem:[%s114 + $0x208] sm:$0xff] %v245
          %v247 = vld [vmem:[%s113 + $0x210] sm:$0xff]
          %248 = vst [vmem:[%s114 + $0x210] sm:$0xff] %v247
          %v249 = vld [vmem:[%s113 + $0x218] sm:$0xff]
          %250 = vst [vmem:[%s114 + $0x218] sm:$0xff] %v249
          %v251 = vld [vmem:[%s113 + $0x220] sm:$0xff]
          %252 = vst [vmem:[%s114 + $0x220] sm:$0xff] %v251
          %v253 = vld [vmem:[%s113 + $0x228] sm:$0xff]
          %254 = vst [vmem:[%s114 + $0x228] sm:$0xff] %v253
          %v255 = vld [vmem:[%s113 + $0x230] sm:$0xff]
          %256 = vst [vmem:[%s114 + $0x230] sm:$0xff] %v255
          %v257 = vld [vmem:[%s113 + $0x238] sm:$0xff]
          %258 = vst [vmem:[%s114 + $0x238] sm:$0xff] %v257
          %v259 = vld [vmem:[%s113 + $0x240] sm:$0xff]
          %260 = vst [vmem:[%s114 + $0x240] sm:$0xff] %v259
          %v261 = vld [vmem:[%s113 + $0x248] sm:$0xff]
          %262 = vst [vmem:[%s114 + $0x248] sm:$0xff] %v261
          %v263 = vld [vmem:[%s113 + $0x250] sm:$0xff]
          %264 = vst [vmem:[%s114 + $0x250] sm:$0xff] %v263
          %v265 = vld [vmem:[%s113 + $0x258] sm:$0xff]
          %266 = vst [vmem:[%s114 + $0x258] sm:$0xff] %v265
          %v267 = vld [vmem:[%s113 + $0x260] sm:$0xff]
          %268 = vst [vmem:[%s114 + $0x260] sm:$0xff] %v267
          %v269 = vld [vmem:[%s113 + $0x268] sm:$0xff]
          %270 = vst [vmem:[%s114 + $0x268] sm:$0xff] %v269
          %v271 = vld [vmem:[%s113 + $0x270] sm:$0xff]
          %272 = vst [vmem:[%s114 + $0x270] sm:$0xff] %v271
          %v273 = vld [vmem:[%s113 + $0x278] sm:$0xff]
          %274 = vst [vmem:[%s114 + $0x278] sm:$0xff] %v273
          %v275 = vld [vmem:[%s113 + $0x280] sm:$0xff]
          %276 = vst [vmem:[%s114 + $0x280] sm:$0xff] %v275
          %v277 = vld [vmem:[%s113 + $0x288] sm:$0xff]
          %278 = vst [vmem:[%s114 + $0x288] sm:$0xff] %v277
          %v279 = vld [vmem:[%s113 + $0x290] sm:$0xff]
          %280 = vst [vmem:[%s114 + $0x290] sm:$0xff] %v279
          %v281 = vld [vmem:[%s113 + $0x298] sm:$0xff]
          %282 = vst [vmem:[%s114 + $0x298] sm:$0xff] %v281
          %v283 = vld [vmem:[%s113 + $0x2a0] sm:$0xff]
          %284 = vst [vmem:[%s114 + $0x2a0] sm:$0xff] %v283
          %v285 = vld [vmem:[%s113 + $0x2a8] sm:$0xff]
          %286 = vst [vmem:[%s114 + $0x2a8] sm:$0xff] %v285
          %v287 = vld [vmem:[%s113 + $0x2b0] sm:$0xff]
          %288 = vst [vmem:[%s114 + $0x2b0] sm:$0xff] %v287
          %v289 = vld [vmem:[%s113 + $0x2b8] sm:$0xff]
          %290 = vst [vmem:[%s114 + $0x2b8] sm:$0xff] %v289
          %v291 = vld [vmem:[%s113 + $0x2c0] sm:$0xff]
          %292 = vst [vmem:[%s114 + $0x2c0] sm:$0xff] %v291
          %v293 = vld [vmem:[%s113 + $0x2c8] sm:$0xff]
          %294 = vst [vmem:[%s114 + $0x2c8] sm:$0xff] %v293
          %v295 = vld [vmem:[%s113 + $0x2d0] sm:$0xff]
          %296 = vst [vmem:[%s114 + $0x2d0] sm:$0xff] %v295
          %v297 = vld [vmem:[%s113 + $0x2d8] sm:$0xff]
          %298 = vst [vmem:[%s114 + $0x2d8] sm:$0xff] %v297
          %v299 = vld [vmem:[%s113 + $0x2e0] sm:$0xff]
          %300 = vst [vmem:[%s114 + $0x2e0] sm:$0xff] %v299
          %v301 = vld [vmem:[%s113 + $0x2e8] sm:$0xff]
          %302 = vst [vmem:[%s114 + $0x2e8] sm:$0xff] %v301
          %v303 = vld [vmem:[%s113 + $0x2f0] sm:$0xff]
          %304 = vst [vmem:[%s114 + $0x2f0] sm:$0xff] %v303
          %v305 = vld [vmem:[%s113 + $0x2f8] sm:$0xff]
          %306 = vst [vmem:[%s114 + $0x2f8] sm:$0xff] %v305
          %v307 = vld [vmem:[%s113 + $0x300] sm:$0xff]
          %308 = vst [vmem:[%s114 + $0x300] sm:$0xff] %v307
          %v309 = vld [vmem:[%s113 + $0x308] sm:$0xff]
          %310 = vst [vmem:[%s114 + $0x308] sm:$0xff] %v309
          %v311 = vld [vmem:[%s113 + $0x310] sm:$0xff]
          %312 = vst [vmem:[%s114 + $0x310] sm:$0xff] %v311
          %v313 = vld [vmem:[%s113 + $0x318] sm:$0xff]
          %314 = vst [vmem:[%s114 + $0x318] sm:$0xff] %v313
          %v315 = vld [vmem:[%s113 + $0x320] sm:$0xff]
          %316 = vst [vmem:[%s114 + $0x320] sm:$0xff] %v315
          %v317 = vld [vmem:[%s113 + $0x328] sm:$0xff]
          %318 = vst [vmem:[%s114 + $0x328] sm:$0xff] %v317
          %v319 = vld [vmem:[%s113 + $0x330] sm:$0xff]
          %320 = vst [vmem:[%s114 + $0x330] sm:$0xff] %v319
          %v321 = vld [vmem:[%s113 + $0x338] sm:$0xff]
          %322 = vst [vmem:[%s114 + $0x338] sm:$0xff] %v321
          %v323 = vld [vmem:[%s113 + $0x340] sm:$0xff]
          %324 = vst [vmem:[%s114 + $0x340] sm:$0xff] %v323
          %v325 = vld [vmem:[%s113 + $0x348] sm:$0xff]
          %326 = vst [vmem:[%s114 + $0x348] sm:$0xff] %v325
          %v327 = vld [vmem:[%s113 + $0x350] sm:$0xff]
          %328 = vst [vmem:[%s114 + $0x350] sm:$0xff] %v327
          %v329 = vld [vmem:[%s113 + $0x358] sm:$0xff]
          %330 = vst [vmem:[%s114 + $0x358] sm:$0xff] %v329
          %v331 = vld [vmem:[%s113 + $0x360] sm:$0xff]
          %332 = vst [vmem:[%s114 + $0x360] sm:$0xff] %v331
          %v333 = vld [vmem:[%s113 + $0x368] sm:$0xff]
          %334 = vst [vmem:[%s114 + $0x368] sm:$0xff] %v333
          %v335 = vld [vmem:[%s113 + $0x370] sm:$0xff]
          %336 = vst [vmem:[%s114 + $0x370] sm:$0xff] %v335
          %v337 = vld [vmem:[%s113 + $0x378] sm:$0xff]
          %338 = vst [vmem:[%s114 + $0x378] sm:$0xff] %v337
          %v339 = vld [vmem:[%s113 + $0x380] sm:$0xff]
          %340 = vst [vmem:[%s114 + $0x380] sm:$0xff] %v339
          %v341 = vld [vmem:[%s113 + $0x388] sm:$0xff]
          %342 = vst [vmem:[%s114 + $0x388] sm:$0xff] %v341
          %v343 = vld [vmem:[%s113 + $0x390] sm:$0xff]
          %344 = vst [vmem:[%s114 + $0x390] sm:$0xff] %v343
          %v345 = vld [vmem:[%s113 + $0x398] sm:$0xff]
          %346 = vst [vmem:[%s114 + $0x398] sm:$0xff] %v345
          %v347 = vld [vmem:[%s113 + $0x3a0] sm:$0xff]
          %348 = vst [vmem:[%s114 + $0x3a0] sm:$0xff] %v347
          %v349 = vld [vmem:[%s113 + $0x3a8] sm:$0xff]
          %350 = vst [vmem:[%s114 + $0x3a8] sm:$0xff] %v349
          %v351 = vld [vmem:[%s113 + $0x3b0] sm:$0xff]
          %352 = vst [vmem:[%s114 + $0x3b0] sm:$0xff] %v351
          %v353 = vld [vmem:[%s113 + $0x3b8] sm:$0xff]
          %354 = vst [vmem:[%s114 + $0x3b8] sm:$0xff] %v353
          %v355 = vld [vmem:[%s113 + $0x3c0] sm:$0xff]
          %356 = vst [vmem:[%s114 + $0x3c0] sm:$0xff] %v355
          %v357 = vld [vmem:[%s113 + $0x3c8] sm:$0xff]
          %358 = vst [vmem:[%s114 + $0x3c8] sm:$0xff] %v357
          %v359 = vld [vmem:[%s113 + $0x3d0] sm:$0xff]
          %360 = vst [vmem:[%s114 + $0x3d0] sm:$0xff] %v359
          %v361 = vld [vmem:[%s113 + $0x3d8] sm:$0xff]
          %362 = vst [vmem:[%s114 + $0x3d8] sm:$0xff] %v361
          %v363 = vld [vmem:[%s113 + $0x3e0] sm:$0xff]
          %364 = vst [vmem:[%s114 + $0x3e0] sm:$0xff] %v363
          %v365 = vld [vmem:[%s113 + $0x3e8] sm:$0xff]
          %366 = vst [vmem:[%s114 + $0x3e8] sm:$0xff] %v365
          %v367 = vld [vmem:[%s113 + $0x3f0] sm:$0xff]
          %368 = vst [vmem:[%s114 + $0x3f0] sm:$0xff] %v367
          %v369 = vld [vmem:[%s113 + $0x3f8] sm:$0xff]
          %370 = vst [vmem:[%s114 + $0x3f8] sm:$0xff] %v369
        $region101: #{triplet_hdml_forward.1} parent=95 // loop_footer
          %s112 = sadd.s32 1, %s108
        $region102: #{triplet_hdml_forward.1} parent=95 // loop_footer_branch
          %107 = sbr.rel target = $region98
        $region103: #{triplet_hdml_forward.1} parent=95 // loop_exit
          _
      $region96: #{triplet_hdml_forward.1} parent=80 // pred_fallthru
        _
      %p371 = pneg %p103
      // Predicated region
      $region104: #{triplet_hdml_forward.1} parent=80 // pred_check
        _
      $region105: #{triplet_hdml_forward.1} parent=80 // pred_check_branch
        %373 = sbr.rel (%p103) target = $region107
      $region106: #{triplet_hdml_forward.1} parent=80 // pred_region
        %s374 = sand.u32 1024, 7
      $region107: #{triplet_hdml_forward.1} parent=80 // pred_fallthru
        _
    $region81: #{triplet_hdml_forward.1} parent=1 // pred_fallthru
      _
    // Predicated region
    $region82: #{triplet_hdml_forward.1} parent=1 // pred_check
      %p87 = pneg %p83
    $region83: #{triplet_hdml_forward.1} parent=1 // pred_check_branch
      %89 = sbr.rel (%p87) target = $region85
    $region84: #{triplet_hdml_forward.1} parent=1 // pred_region
      %s90 = sshll.u32 1, 1024
      %s91 = ssub.s32 %s90, 1
      loop: start=0, step=1, limit=1
      $region86: #{triplet_hdml_forward.1} parent=84 // loop_pre_header
        _
      $region87: #{triplet_hdml_forward.1} parent=84 // loop_header
        %s93 = sphi 0, %s97
        %p94 = scmp.ge.s32.totalorder %s93, 1
        %s98 = sphi %s9, %s9
        %s99 = sphi [#allocation2], [#allocation2]
      $region88: #{triplet_hdml_forward.1} parent=84 // loop_header_branch
        %96 = sbr.rel (%p94) target = $region92
      $region89: #{triplet_hdml_forward.1} parent=84 // loop_body
        %v100 = vld [vmem:[%s98] sm:%s91]
        %101 = vst [vmem:[%s99] sm:%s91] %v100
      $region90: #{triplet_hdml_forward.1} parent=84 // loop_footer
        %s97 = sadd.s32 1, %s93
      $region91: #{triplet_hdml_forward.1} parent=84 // loop_footer_branch
        %92 = sbr.rel target = $region87
      $region92: #{triplet_hdml_forward.1} parent=84 // loop_exit
        _
    $region85: #{triplet_hdml_forward.1} parent=1 // pred_fallthru
      _
    // Predicated region
    $region108: #{triplet_hdml_forward.1} parent=1 // pred_check
      _
    $region109: #{triplet_hdml_forward.1} parent=1 // pred_check_branch
      %377 = sbr.rel (0) target = $region111
    $region110: #{triplet_hdml_forward.1} parent=1 // pred_region
      %378 = vsyncadd [#allocation7], 16384
    $region111: #{triplet_hdml_forward.1} parent=1 // pred_fallthru
      _
    %s379 = scalar_lea.sflag [#allocation7], 1
    %p381 = scmp.lt.u32.totalorder 512, 8
    %p382 = pneg %p381
    // Predicated region
    $region112: #{triplet_hdml_forward.1} parent=1 // pred_check
      _
    $region113: #{triplet_hdml_forward.1} parent=1 // pred_check_branch
      %384 = sbr.rel (%p381) target = $region115
    $region114: #{triplet_hdml_forward.1} parent=1 // pred_region
      %s400 = sand.u32 512, 7
      %p401 = scmp.eq.s32.totalorder %s400, 0
      // Predicated region
      $region127: #{triplet_hdml_forward.1} parent=114 // pred_check
        %p402 = pneg %p401
      $region128: #{triplet_hdml_forward.1} parent=114 // pred_check_branch
        %404 = sbr.rel (%p402) target = $region130
      $region129: #{triplet_hdml_forward.1} parent=114 // pred_region
        loop: start=0, step=1, limit=1
        $region131: #{triplet_hdml_forward.1} parent=129 // loop_pre_header
          _
        $region132: #{triplet_hdml_forward.1} parent=129 // loop_header
          %s406 = sphi 0, %s410
          %p407 = scmp.ge.s32.totalorder %s406, 1
          %s411 = sphi %s11, %s11
          %s412 = sphi [#allocation3], [#allocation3]
        $region133: #{triplet_hdml_forward.1} parent=129 // loop_header_branch
          %409 = sbr.rel (%p407) target = $region137
        $region134: #{triplet_hdml_forward.1} parent=129 // loop_body
          %v413 = vld [vmem:[%s411] sm:$0xff]
          %414 = vst [vmem:[%s412] sm:$0xff] %v413
          %v415 = vld [vmem:[%s411 + $0x8] sm:$0xff]
          %416 = vst [vmem:[%s412 + $0x8] sm:$0xff] %v415
          %v417 = vld [vmem:[%s411 + $0x10] sm:$0xff]
          %418 = vst [vmem:[%s412 + $0x10] sm:$0xff] %v417
          %v419 = vld [vmem:[%s411 + $0x18] sm:$0xff]
          %420 = vst [vmem:[%s412 + $0x18] sm:$0xff] %v419
          %v421 = vld [vmem:[%s411 + $0x20] sm:$0xff]
          %422 = vst [vmem:[%s412 + $0x20] sm:$0xff] %v421
          %v423 = vld [vmem:[%s411 + $0x28] sm:$0xff]
          %424 = vst [vmem:[%s412 + $0x28] sm:$0xff] %v423
          %v425 = vld [vmem:[%s411 + $0x30] sm:$0xff]
          %426 = vst [vmem:[%s412 + $0x30] sm:$0xff] %v425
          %v427 = vld [vmem:[%s411 + $0x38] sm:$0xff]
          %428 = vst [vmem:[%s412 + $0x38] sm:$0xff] %v427
          %v429 = vld [vmem:[%s411 + $0x40] sm:$0xff]
          %430 = vst [vmem:[%s412 + $0x40] sm:$0xff] %v429
          %v431 = vld [vmem:[%s411 + $0x48] sm:$0xff]
          %432 = vst [vmem:[%s412 + $0x48] sm:$0xff] %v431
          %v433 = vld [vmem:[%s411 + $0x50] sm:$0xff]
          %434 = vst [vmem:[%s412 + $0x50] sm:$0xff] %v433
          %v435 = vld [vmem:[%s411 + $0x58] sm:$0xff]
          %436 = vst [vmem:[%s412 + $0x58] sm:$0xff] %v435
          %v437 = vld [vmem:[%s411 + $0x60] sm:$0xff]
          %438 = vst [vmem:[%s412 + $0x60] sm:$0xff] %v437
          %v439 = vld [vmem:[%s411 + $0x68] sm:$0xff]
          %440 = vst [vmem:[%s412 + $0x68] sm:$0xff] %v439
          %v441 = vld [vmem:[%s411 + $0x70] sm:$0xff]
          %442 = vst [vmem:[%s412 + $0x70] sm:$0xff] %v441
          %v443 = vld [vmem:[%s411 + $0x78] sm:$0xff]
          %444 = vst [vmem:[%s412 + $0x78] sm:$0xff] %v443
          %v445 = vld [vmem:[%s411 + $0x80] sm:$0xff]
          %446 = vst [vmem:[%s412 + $0x80] sm:$0xff] %v445
          %v447 = vld [vmem:[%s411 + $0x88] sm:$0xff]
          %448 = vst [vmem:[%s412 + $0x88] sm:$0xff] %v447
          %v449 = vld [vmem:[%s411 + $0x90] sm:$0xff]
          %450 = vst [vmem:[%s412 + $0x90] sm:$0xff] %v449
          %v451 = vld [vmem:[%s411 + $0x98] sm:$0xff]
          %452 = vst [vmem:[%s412 + $0x98] sm:$0xff] %v451
          %v453 = vld [vmem:[%s411 + $0xa0] sm:$0xff]
          %454 = vst [vmem:[%s412 + $0xa0] sm:$0xff] %v453
          %v455 = vld [vmem:[%s411 + $0xa8] sm:$0xff]
          %456 = vst [vmem:[%s412 + $0xa8] sm:$0xff] %v455
          %v457 = vld [vmem:[%s411 + $0xb0] sm:$0xff]
          %458 = vst [vmem:[%s412 + $0xb0] sm:$0xff] %v457
          %v459 = vld [vmem:[%s411 + $0xb8] sm:$0xff]
          %460 = vst [vmem:[%s412 + $0xb8] sm:$0xff] %v459
          %v461 = vld [vmem:[%s411 + $0xc0] sm:$0xff]
          %462 = vst [vmem:[%s412 + $0xc0] sm:$0xff] %v461
          %v463 = vld [vmem:[%s411 + $0xc8] sm:$0xff]
          %464 = vst [vmem:[%s412 + $0xc8] sm:$0xff] %v463
          %v465 = vld [vmem:[%s411 + $0xd0] sm:$0xff]
          %466 = vst [vmem:[%s412 + $0xd0] sm:$0xff] %v465
          %v467 = vld [vmem:[%s411 + $0xd8] sm:$0xff]
          %468 = vst [vmem:[%s412 + $0xd8] sm:$0xff] %v467
          %v469 = vld [vmem:[%s411 + $0xe0] sm:$0xff]
          %470 = vst [vmem:[%s412 + $0xe0] sm:$0xff] %v469
          %v471 = vld [vmem:[%s411 + $0xe8] sm:$0xff]
          %472 = vst [vmem:[%s412 + $0xe8] sm:$0xff] %v471
          %v473 = vld [vmem:[%s411 + $0xf0] sm:$0xff]
          %474 = vst [vmem:[%s412 + $0xf0] sm:$0xff] %v473
          %v475 = vld [vmem:[%s411 + $0xf8] sm:$0xff]
          %476 = vst [vmem:[%s412 + $0xf8] sm:$0xff] %v475
          %v477 = vld [vmem:[%s411 + $0x100] sm:$0xff]
          %478 = vst [vmem:[%s412 + $0x100] sm:$0xff] %v477
          %v479 = vld [vmem:[%s411 + $0x108] sm:$0xff]
          %480 = vst [vmem:[%s412 + $0x108] sm:$0xff] %v479
          %v481 = vld [vmem:[%s411 + $0x110] sm:$0xff]
          %482 = vst [vmem:[%s412 + $0x110] sm:$0xff] %v481
          %v483 = vld [vmem:[%s411 + $0x118] sm:$0xff]
          %484 = vst [vmem:[%s412 + $0x118] sm:$0xff] %v483
          %v485 = vld [vmem:[%s411 + $0x120] sm:$0xff]
          %486 = vst [vmem:[%s412 + $0x120] sm:$0xff] %v485
          %v487 = vld [vmem:[%s411 + $0x128] sm:$0xff]
          %488 = vst [vmem:[%s412 + $0x128] sm:$0xff] %v487
          %v489 = vld [vmem:[%s411 + $0x130] sm:$0xff]
          %490 = vst [vmem:[%s412 + $0x130] sm:$0xff] %v489
          %v491 = vld [vmem:[%s411 + $0x138] sm:$0xff]
          %492 = vst [vmem:[%s412 + $0x138] sm:$0xff] %v491
          %v493 = vld [vmem:[%s411 + $0x140] sm:$0xff]
          %494 = vst [vmem:[%s412 + $0x140] sm:$0xff] %v493
          %v495 = vld [vmem:[%s411 + $0x148] sm:$0xff]
          %496 = vst [vmem:[%s412 + $0x148] sm:$0xff] %v495
          %v497 = vld [vmem:[%s411 + $0x150] sm:$0xff]
          %498 = vst [vmem:[%s412 + $0x150] sm:$0xff] %v497
          %v499 = vld [vmem:[%s411 + $0x158] sm:$0xff]
          %500 = vst [vmem:[%s412 + $0x158] sm:$0xff] %v499
          %v501 = vld [vmem:[%s411 + $0x160] sm:$0xff]
          %502 = vst [vmem:[%s412 + $0x160] sm:$0xff] %v501
          %v503 = vld [vmem:[%s411 + $0x168] sm:$0xff]
          %504 = vst [vmem:[%s412 + $0x168] sm:$0xff] %v503
          %v505 = vld [vmem:[%s411 + $0x170] sm:$0xff]
          %506 = vst [vmem:[%s412 + $0x170] sm:$0xff] %v505
          %v507 = vld [vmem:[%s411 + $0x178] sm:$0xff]
          %508 = vst [vmem:[%s412 + $0x178] sm:$0xff] %v507
          %v509 = vld [vmem:[%s411 + $0x180] sm:$0xff]
          %510 = vst [vmem:[%s412 + $0x180] sm:$0xff] %v509
          %v511 = vld [vmem:[%s411 + $0x188] sm:$0xff]
          %512 = vst [vmem:[%s412 + $0x188] sm:$0xff] %v511
          %v513 = vld [vmem:[%s411 + $0x190] sm:$0xff]
          %514 = vst [vmem:[%s412 + $0x190] sm:$0xff] %v513
          %v515 = vld [vmem:[%s411 + $0x198] sm:$0xff]
          %516 = vst [vmem:[%s412 + $0x198] sm:$0xff] %v515
          %v517 = vld [vmem:[%s411 + $0x1a0] sm:$0xff]
          %518 = vst [vmem:[%s412 + $0x1a0] sm:$0xff] %v517
          %v519 = vld [vmem:[%s411 + $0x1a8] sm:$0xff]
          %520 = vst [vmem:[%s412 + $0x1a8] sm:$0xff] %v519
          %v521 = vld [vmem:[%s411 + $0x1b0] sm:$0xff]
          %522 = vst [vmem:[%s412 + $0x1b0] sm:$0xff] %v521
          %v523 = vld [vmem:[%s411 + $0x1b8] sm:$0xff]
          %524 = vst [vmem:[%s412 + $0x1b8] sm:$0xff] %v523
          %v525 = vld [vmem:[%s411 + $0x1c0] sm:$0xff]
          %526 = vst [vmem:[%s412 + $0x1c0] sm:$0xff] %v525
          %v527 = vld [vmem:[%s411 + $0x1c8] sm:$0xff]
          %528 = vst [vmem:[%s412 + $0x1c8] sm:$0xff] %v527
          %v529 = vld [vmem:[%s411 + $0x1d0] sm:$0xff]
          %530 = vst [vmem:[%s412 + $0x1d0] sm:$0xff] %v529
          %v531 = vld [vmem:[%s411 + $0x1d8] sm:$0xff]
          %532 = vst [vmem:[%s412 + $0x1d8] sm:$0xff] %v531
          %v533 = vld [vmem:[%s411 + $0x1e0] sm:$0xff]
          %534 = vst [vmem:[%s412 + $0x1e0] sm:$0xff] %v533
          %v535 = vld [vmem:[%s411 + $0x1e8] sm:$0xff]
          %536 = vst [vmem:[%s412 + $0x1e8] sm:$0xff] %v535
          %v537 = vld [vmem:[%s411 + $0x1f0] sm:$0xff]
          %538 = vst [vmem:[%s412 + $0x1f0] sm:$0xff] %v537
          %v539 = vld [vmem:[%s411 + $0x1f8] sm:$0xff]
          %540 = vst [vmem:[%s412 + $0x1f8] sm:$0xff] %v539
        $region135: #{triplet_hdml_forward.1} parent=129 // loop_footer
          %s410 = sadd.s32 1, %s406
        $region136: #{triplet_hdml_forward.1} parent=129 // loop_footer_branch
          %405 = sbr.rel target = $region132
        $region137: #{triplet_hdml_forward.1} parent=129 // loop_exit
          _
      $region130: #{triplet_hdml_forward.1} parent=114 // pred_fallthru
        _
      %p541 = pneg %p401
      // Predicated region
      $region138: #{triplet_hdml_forward.1} parent=114 // pred_check
        _
      $region139: #{triplet_hdml_forward.1} parent=114 // pred_check_branch
        %543 = sbr.rel (%p401) target = $region141
      $region140: #{triplet_hdml_forward.1} parent=114 // pred_region
        %s544 = sand.u32 512, 7
      $region141: #{triplet_hdml_forward.1} parent=114 // pred_fallthru
        _
    $region115: #{triplet_hdml_forward.1} parent=1 // pred_fallthru
      _
    // Predicated region
    $region116: #{triplet_hdml_forward.1} parent=1 // pred_check
      %p385 = pneg %p381
    $region117: #{triplet_hdml_forward.1} parent=1 // pred_check_branch
      %387 = sbr.rel (%p385) target = $region119
    $region118: #{triplet_hdml_forward.1} parent=1 // pred_region
      %s388 = sshll.u32 1, 512
      %s389 = ssub.s32 %s388, 1
      loop: start=0, step=1, limit=1
      $region120: #{triplet_hdml_forward.1} parent=118 // loop_pre_header
        _
      $region121: #{triplet_hdml_forward.1} parent=118 // loop_header
        %s391 = sphi 0, %s395
        %p392 = scmp.ge.s32.totalorder %s391, 1
        %s396 = sphi %s11, %s11
        %s397 = sphi [#allocation3], [#allocation3]
      $region122: #{triplet_hdml_forward.1} parent=118 // loop_header_branch
        %394 = sbr.rel (%p392) target = $region126
      $region123: #{triplet_hdml_forward.1} parent=118 // loop_body
        %v398 = vld [vmem:[%s396] sm:%s389]
        %399 = vst [vmem:[%s397] sm:%s389] %v398
      $region124: #{triplet_hdml_forward.1} parent=118 // loop_footer
        %s395 = sadd.s32 1, %s391
      $region125: #{triplet_hdml_forward.1} parent=118 // loop_footer_branch
        %390 = sbr.rel target = $region121
      $region126: #{triplet_hdml_forward.1} parent=118 // loop_exit
        _
    $region119: #{triplet_hdml_forward.1} parent=1 // pred_fallthru
      _
    // Predicated region
    $region142: #{triplet_hdml_forward.1} parent=1 // pred_check
      _
    $region143: #{triplet_hdml_forward.1} parent=1 // pred_check_branch
      %547 = sbr.rel (0) target = $region145
    $region144: #{triplet_hdml_forward.1} parent=1 // pred_region
      %548 = vsyncadd %s379, 8192
    $region145: #{triplet_hdml_forward.1} parent=1 // pred_fallthru
      _
    %s549 = scalar_lea.sflag [#allocation7], 2
    %p551 = scmp.lt.u32.totalorder 4096, 8
    %p552 = pneg %p551
    // Predicated region
    $region146: #{triplet_hdml_forward.1} parent=1 // pred_check
      _
    $region147: #{triplet_hdml_forward.1} parent=1 // pred_check_branch
      %554 = sbr.rel (%p551) target = $region149
    $region148: #{triplet_hdml_forward.1} parent=1 // pred_region
      %s570 = sand.u32 4096, 7
      %p571 = scmp.eq.s32.totalorder %s570, 0
      // Predicated region
      $region161: #{triplet_hdml_forward.1} parent=148 // pred_check
        %p572 = pneg %p571
      $region162: #{triplet_hdml_forward.1} parent=148 // pred_check_branch
        %574 = sbr.rel (%p572) target = $region164
      $region163: #{triplet_hdml_forward.1} parent=148 // pred_region
        loop: start=0, step=1, limit=1
        $region165: #{triplet_hdml_forward.1} parent=163 // loop_pre_header
          _
        $region166: #{triplet_hdml_forward.1} parent=163 // loop_header
          %s576 = sphi 0, %s580
          %p577 = scmp.ge.s32.totalorder %s576, 1
          %s581 = sphi %s15, %s15
          %s582 = sphi [#allocation4], [#allocation4]
        $region167: #{triplet_hdml_forward.1} parent=163 // loop_header_branch
          %579 = sbr.rel (%p577) target = $region171
        $region168: #{triplet_hdml_forward.1} parent=163 // loop_body
          %v583 = vld [vmem:[%s581] sm:$0xff]
          %584 = vst [vmem:[%s582] sm:$0xff] %v583
          %v585 = vld [vmem:[%s581 + $0x8] sm:$0xff]
          %586 = vst [vmem:[%s582 + $0x8] sm:$0xff] %v585
          %v587 = vld [vmem:[%s581 + $0x10] sm:$0xff]
          %588 = vst [vmem:[%s582 + $0x10] sm:$0xff] %v587
          %v589 = vld [vmem:[%s581 + $0x18] sm:$0xff]
          %590 = vst [vmem:[%s582 + $0x18] sm:$0xff] %v589
          %v591 = vld [vmem:[%s581 + $0x20] sm:$0xff]
          %592 = vst [vmem:[%s582 + $0x20] sm:$0xff] %v591
          %v593 = vld [vmem:[%s581 + $0x28] sm:$0xff]
          %594 = vst [vmem:[%s582 + $0x28] sm:$0xff] %v593
          %v595 = vld [vmem:[%s581 + $0x30] sm:$0xff]
          %596 = vst [vmem:[%s582 + $0x30] sm:$0xff] %v595
          %v597 = vld [vmem:[%s581 + $0x38] sm:$0xff]
          %598 = vst [vmem:[%s582 + $0x38] sm:$0xff] %v597
          %v599 = vld [vmem:[%s581 + $0x40] sm:$0xff]
          %600 = vst [vmem:[%s582 + $0x40] sm:$0xff] %v599
          %v601 = vld [vmem:[%s581 + $0x48] sm:$0xff]
          %602 = vst [vmem:[%s582 + $0x48] sm:$0xff] %v601
          %v603 = vld [vmem:[%s581 + $0x50] sm:$0xff]
          %604 = vst [vmem:[%s582 + $0x50] sm:$0xff] %v603
          %v605 = vld [vmem:[%s581 + $0x58] sm:$0xff]
          %606 = vst [vmem:[%s582 + $0x58] sm:$0xff] %v605
          %v607 = vld [vmem:[%s581 + $0x60] sm:$0xff]
          %608 = vst [vmem:[%s582 + $0x60] sm:$0xff] %v607
          %v609 = vld [vmem:[%s581 + $0x68] sm:$0xff]
          %610 = vst [vmem:[%s582 + $0x68] sm:$0xff] %v609
          %v611 = vld [vmem:[%s581 + $0x70] sm:$0xff]
          %612 = vst [vmem:[%s582 + $0x70] sm:$0xff] %v611
          %v613 = vld [vmem:[%s581 + $0x78] sm:$0xff]
          %614 = vst [vmem:[%s582 + $0x78] sm:$0xff] %v613
          %v615 = vld [vmem:[%s581 + $0x80] sm:$0xff]
          %616 = vst [vmem:[%s582 + $0x80] sm:$0xff] %v615
          %v617 = vld [vmem:[%s581 + $0x88] sm:$0xff]
          %618 = vst [vmem:[%s582 + $0x88] sm:$0xff] %v617
          %v619 = vld [vmem:[%s581 + $0x90] sm:$0xff]
          %620 = vst [vmem:[%s582 + $0x90] sm:$0xff] %v619
          %v621 = vld [vmem:[%s581 + $0x98] sm:$0xff]
          %622 = vst [vmem:[%s582 + $0x98] sm:$0xff] %v621
          %v623 = vld [vmem:[%s581 + $0xa0] sm:$0xff]
          %624 = vst [vmem:[%s582 + $0xa0] sm:$0xff] %v623
          %v625 = vld [vmem:[%s581 + $0xa8] sm:$0xff]
          %626 = vst [vmem:[%s582 + $0xa8] sm:$0xff] %v625
          %v627 = vld [vmem:[%s581 + $0xb0] sm:$0xff]
          %628 = vst [vmem:[%s582 + $0xb0] sm:$0xff] %v627
          %v629 = vld [vmem:[%s581 + $0xb8] sm:$0xff]
          %630 = vst [vmem:[%s582 + $0xb8] sm:$0xff] %v629
          %v631 = vld [vmem:[%s581 + $0xc0] sm:$0xff]
          %632 = vst [vmem:[%s582 + $0xc0] sm:$0xff] %v631
          %v633 = vld [vmem:[%s581 + $0xc8] sm:$0xff]
          %634 = vst [vmem:[%s582 + $0xc8] sm:$0xff] %v633
          %v635 = vld [vmem:[%s581 + $0xd0] sm:$0xff]
          %636 = vst [vmem:[%s582 + $0xd0] sm:$0xff] %v635
          %v637 = vld [vmem:[%s581 + $0xd8] sm:$0xff]
          %638 = vst [vmem:[%s582 + $0xd8] sm:$0xff] %v637
          %v639 = vld [vmem:[%s581 + $0xe0] sm:$0xff]
          %640 = vst [vmem:[%s582 + $0xe0] sm:$0xff] %v639
          %v641 = vld [vmem:[%s581 + $0xe8] sm:$0xff]
          %642 = vst [vmem:[%s582 + $0xe8] sm:$0xff] %v641
          %v643 = vld [vmem:[%s581 + $0xf0] sm:$0xff]
          %644 = vst [vmem:[%s582 + $0xf0] sm:$0xff] %v643
          %v645 = vld [vmem:[%s581 + $0xf8] sm:$0xff]
          %646 = vst [vmem:[%s582 + $0xf8] sm:$0xff] %v645
          %v647 = vld [vmem:[%s581 + $0x100] sm:$0xff]
          %648 = vst [vmem:[%s582 + $0x100] sm:$0xff] %v647
          %v649 = vld [vmem:[%s581 + $0x108] sm:$0xff]
          %650 = vst [vmem:[%s582 + $0x108] sm:$0xff] %v649
          %v651 = vld [vmem:[%s581 + $0x110] sm:$0xff]
          %652 = vst [vmem:[%s582 + $0x110] sm:$0xff] %v651
          %v653 = vld [vmem:[%s581 + $0x118] sm:$0xff]
          %654 = vst [vmem:[%s582 + $0x118] sm:$0xff] %v653
          %v655 = vld [vmem:[%s581 + $0x120] sm:$0xff]
          %656 = vst [vmem:[%s582 + $0x120] sm:$0xff] %v655
          %v657 = vld [vmem:[%s581 + $0x128] sm:$0xff]
          %658 = vst [vmem:[%s582 + $0x128] sm:$0xff] %v657
          %v659 = vld [vmem:[%s581 + $0x130] sm:$0xff]
          %660 = vst [vmem:[%s582 + $0x130] sm:$0xff] %v659
          %v661 = vld [vmem:[%s581 + $0x138] sm:$0xff]
          %662 = vst [vmem:[%s582 + $0x138] sm:$0xff] %v661
          %v663 = vld [vmem:[%s581 + $0x140] sm:$0xff]
          %664 = vst [vmem:[%s582 + $0x140] sm:$0xff] %v663
          %v665 = vld [vmem:[%s581 + $0x148] sm:$0xff]
          %666 = vst [vmem:[%s582 + $0x148] sm:$0xff] %v665
          %v667 = vld [vmem:[%s581 + $0x150] sm:$0xff]
          %668 = vst [vmem:[%s582 + $0x150] sm:$0xff] %v667
          %v669 = vld [vmem:[%s581 + $0x158] sm:$0xff]
          %670 = vst [vmem:[%s582 + $0x158] sm:$0xff] %v669
          %v671 = vld [vmem:[%s581 + $0x160] sm:$0xff]
          %672 = vst [vmem:[%s582 + $0x160] sm:$0xff] %v671
          %v673 = vld [vmem:[%s581 + $0x168] sm:$0xff]
          %674 = vst [vmem:[%s582 + $0x168] sm:$0xff] %v673
          %v675 = vld [vmem:[%s581 + $0x170] sm:$0xff]
          %676 = vst [vmem:[%s582 + $0x170] sm:$0xff] %v675
          %v677 = vld [vmem:[%s581 + $0x178] sm:$0xff]
          %678 = vst [vmem:[%s582 + $0x178] sm:$0xff] %v677
          %v679 = vld [vmem:[%s581 + $0x180] sm:$0xff]
          %680 = vst [vmem:[%s582 + $0x180] sm:$0xff] %v679
          %v681 = vld [vmem:[%s581 + $0x188] sm:$0xff]
          %682 = vst [vmem:[%s582 + $0x188] sm:$0xff] %v681
          %v683 = vld [vmem:[%s581 + $0x190] sm:$0xff]
          %684 = vst [vmem:[%s582 + $0x190] sm:$0xff] %v683
          %v685 = vld [vmem:[%s581 + $0x198] sm:$0xff]
          %686 = vst [vmem:[%s582 + $0x198] sm:$0xff] %v685
          %v687 = vld [vmem:[%s581 + $0x1a0] sm:$0xff]
          %688 = vst [vmem:[%s582 + $0x1a0] sm:$0xff] %v687
          %v689 = vld [vmem:[%s581 + $0x1a8] sm:$0xff]
          %690 = vst [vmem:[%s582 + $0x1a8] sm:$0xff] %v689
          %v691 = vld [vmem:[%s581 + $0x1b0] sm:$0xff]
          %692 = vst [vmem:[%s582 + $0x1b0] sm:$0xff] %v691
          %v693 = vld [vmem:[%s581 + $0x1b8] sm:$0xff]
          %694 = vst [vmem:[%s582 + $0x1b8] sm:$0xff] %v693
          %v695 = vld [vmem:[%s581 + $0x1c0] sm:$0xff]
          %696 = vst [vmem:[%s582 + $0x1c0] sm:$0xff] %v695
          %v697 = vld [vmem:[%s581 + $0x1c8] sm:$0xff]
          %698 = vst [vmem:[%s582 + $0x1c8] sm:$0xff] %v697
          %v699 = vld [vmem:[%s581 + $0x1d0] sm:$0xff]
          %700 = vst [vmem:[%s582 + $0x1d0] sm:$0xff] %v699
          %v701 = vld [vmem:[%s581 + $0x1d8] sm:$0xff]
          %702 = vst [vmem:[%s582 + $0x1d8] sm:$0xff] %v701
          %v703 = vld [vmem:[%s581 + $0x1e0] sm:$0xff]
          %704 = vst [vmem:[%s582 + $0x1e0] sm:$0xff] %v703
          %v705 = vld [vmem:[%s581 + $0x1e8] sm:$0xff]
          %706 = vst [vmem:[%s582 + $0x1e8] sm:$0xff] %v705
          %v707 = vld [vmem:[%s581 + $0x1f0] sm:$0xff]
          %708 = vst [vmem:[%s582 + $0x1f0] sm:$0xff] %v707
          %v709 = vld [vmem:[%s581 + $0x1f8] sm:$0xff]
          %710 = vst [vmem:[%s582 + $0x1f8] sm:$0xff] %v709
          %v711 = vld [vmem:[%s581 + $0x200] sm:$0xff]
          %712 = vst [vmem:[%s582 + $0x200] sm:$0xff] %v711
          %v713 = vld [vmem:[%s581 + $0x208] sm:$0xff]
          %714 = vst [vmem:[%s582 + $0x208] sm:$0xff] %v713
          %v715 = vld [vmem:[%s581 + $0x210] sm:$0xff]
          %716 = vst [vmem:[%s582 + $0x210] sm:$0xff] %v715
          %v717 = vld [vmem:[%s581 + $0x218] sm:$0xff]
          %718 = vst [vmem:[%s582 + $0x218] sm:$0xff] %v717
          %v719 = vld [vmem:[%s581 + $0x220] sm:$0xff]
          %720 = vst [vmem:[%s582 + $0x220] sm:$0xff] %v719
          %v721 = vld [vmem:[%s581 + $0x228] sm:$0xff]
          %722 = vst [vmem:[%s582 + $0x228] sm:$0xff] %v721
          %v723 = vld [vmem:[%s581 + $0x230] sm:$0xff]
          %724 = vst [vmem:[%s582 + $0x230] sm:$0xff] %v723
          %v725 = vld [vmem:[%s581 + $0x238] sm:$0xff]
          %726 = vst [vmem:[%s582 + $0x238] sm:$0xff] %v725
          %v727 = vld [vmem:[%s581 + $0x240] sm:$0xff]
          %728 = vst [vmem:[%s582 + $0x240] sm:$0xff] %v727
          %v729 = vld [vmem:[%s581 + $0x248] sm:$0xff]
          %730 = vst [vmem:[%s582 + $0x248] sm:$0xff] %v729
          %v731 = vld [vmem:[%s581 + $0x250] sm:$0xff]
          %732 = vst [vmem:[%s582 + $0x250] sm:$0xff] %v731
          %v733 = vld [vmem:[%s581 + $0x258] sm:$0xff]
          %734 = vst [vmem:[%s582 + $0x258] sm:$0xff] %v733
          %v735 = vld [vmem:[%s581 + $0x260] sm:$0xff]
          %736 = vst [vmem:[%s582 + $0x260] sm:$0xff] %v735
          %v737 = vld [vmem:[%s581 + $0x268] sm:$0xff]
          %738 = vst [vmem:[%s582 + $0x268] sm:$0xff] %v737
          %v739 = vld [vmem:[%s581 + $0x270] sm:$0xff]
          %740 = vst [vmem:[%s582 + $0x270] sm:$0xff] %v739
          %v741 = vld [vmem:[%s581 + $0x278] sm:$0xff]
          %742 = vst [vmem:[%s582 + $0x278] sm:$0xff] %v741
          %v743 = vld [vmem:[%s581 + $0x280] sm:$0xff]
          %744 = vst [vmem:[%s582 + $0x280] sm:$0xff] %v743
          %v745 = vld [vmem:[%s581 + $0x288] sm:$0xff]
          %746 = vst [vmem:[%s582 + $0x288] sm:$0xff] %v745
          %v747 = vld [vmem:[%s581 + $0x290] sm:$0xff]
          %748 = vst [vmem:[%s582 + $0x290] sm:$0xff] %v747
          %v749 = vld [vmem:[%s581 + $0x298] sm:$0xff]
          %750 = vst [vmem:[%s582 + $0x298] sm:$0xff] %v749
          %v751 = vld [vmem:[%s581 + $0x2a0] sm:$0xff]
          %752 = vst [vmem:[%s582 + $0x2a0] sm:$0xff] %v751
          %v753 = vld [vmem:[%s581 + $0x2a8] sm:$0xff]
          %754 = vst [vmem:[%s582 + $0x2a8] sm:$0xff] %v753
          %v755 = vld [vmem:[%s581 + $0x2b0] sm:$0xff]
          %756 = vst [vmem:[%s582 + $0x2b0] sm:$0xff] %v755
          %v757 = vld [vmem:[%s581 + $0x2b8] sm:$0xff]
          %758 = vst [vmem:[%s582 + $0x2b8] sm:$0xff] %v757
          %v759 = vld [vmem:[%s581 + $0x2c0] sm:$0xff]
          %760 = vst [vmem:[%s582 + $0x2c0] sm:$0xff] %v759
          %v761 = vld [vmem:[%s581 + $0x2c8] sm:$0xff]
          %762 = vst [vmem:[%s582 + $0x2c8] sm:$0xff] %v761
          %v763 = vld [vmem:[%s581 + $0x2d0] sm:$0xff]
          %764 = vst [vmem:[%s582 + $0x2d0] sm:$0xff] %v763
          %v765 = vld [vmem:[%s581 + $0x2d8] sm:$0xff]
          %766 = vst [vmem:[%s582 + $0x2d8] sm:$0xff] %v765
          %v767 = vld [vmem:[%s581 + $0x2e0] sm:$0xff]
          %768 = vst [vmem:[%s582 + $0x2e0] sm:$0xff] %v767
          %v769 = vld [vmem:[%s581 + $0x2e8] sm:$0xff]
          %770 = vst [vmem:[%s582 + $0x2e8] sm:$0xff] %v769
          %v771 = vld [vmem:[%s581 + $0x2f0] sm:$0xff]
          %772 = vst [vmem:[%s582 + $0x2f0] sm:$0xff] %v771
          %v773 = vld [vmem:[%s581 + $0x2f8] sm:$0xff]
          %774 = vst [vmem:[%s582 + $0x2f8] sm:$0xff] %v773
          %v775 = vld [vmem:[%s581 + $0x300] sm:$0xff]
          %776 = vst [vmem:[%s582 + $0x300] sm:$0xff] %v775
          %v777 = vld [vmem:[%s581 + $0x308] sm:$0xff]
          %778 = vst [vmem:[%s582 + $0x308] sm:$0xff] %v777
          %v779 = vld [vmem:[%s581 + $0x310] sm:$0xff]
          %780 = vst [vmem:[%s582 + $0x310] sm:$0xff] %v779
          %v781 = vld [vmem:[%s581 + $0x318] sm:$0xff]
          %782 = vst [vmem:[%s582 + $0x318] sm:$0xff] %v781
          %v783 = vld [vmem:[%s581 + $0x320] sm:$0xff]
          %784 = vst [vmem:[%s582 + $0x320] sm:$0xff] %v783
          %v785 = vld [vmem:[%s581 + $0x328] sm:$0xff]
          %786 = vst [vmem:[%s582 + $0x328] sm:$0xff] %v785
          %v787 = vld [vmem:[%s581 + $0x330] sm:$0xff]
          %788 = vst [vmem:[%s582 + $0x330] sm:$0xff] %v787
          %v789 = vld [vmem:[%s581 + $0x338] sm:$0xff]
          %790 = vst [vmem:[%s582 + $0x338] sm:$0xff] %v789
          %v791 = vld [vmem:[%s581 + $0x340] sm:$0xff]
          %792 = vst [vmem:[%s582 + $0x340] sm:$0xff] %v791
          %v793 = vld [vmem:[%s581 + $0x348] sm:$0xff]
          %794 = vst [vmem:[%s582 + $0x348] sm:$0xff] %v793
          %v795 = vld [vmem:[%s581 + $0x350] sm:$0xff]
          %796 = vst [vmem:[%s582 + $0x350] sm:$0xff] %v795
          %v797 = vld [vmem:[%s581 + $0x358] sm:$0xff]
          %798 = vst [vmem:[%s582 + $0x358] sm:$0xff] %v797
          %v799 = vld [vmem:[%s581 + $0x360] sm:$0xff]
          %800 = vst [vmem:[%s582 + $0x360] sm:$0xff] %v799
          %v801 = vld [vmem:[%s581 + $0x368] sm:$0xff]
          %802 = vst [vmem:[%s582 + $0x368] sm:$0xff] %v801
          %v803 = vld [vmem:[%s581 + $0x370] sm:$0xff]
          %804 = vst [vmem:[%s582 + $0x370] sm:$0xff] %v803
          %v805 = vld [vmem:[%s581 + $0x378] sm:$0xff]
          %806 = vst [vmem:[%s582 + $0x378] sm:$0xff] %v805
          %v807 = vld [vmem:[%s581 + $0x380] sm:$0xff]
          %808 = vst [vmem:[%s582 + $0x380] sm:$0xff] %v807
          %v809 = vld [vmem:[%s581 + $0x388] sm:$0xff]
          %810 = vst [vmem:[%s582 + $0x388] sm:$0xff] %v809
          %v811 = vld [vmem:[%s581 + $0x390] sm:$0xff]
          %812 = vst [vmem:[%s582 + $0x390] sm:$0xff] %v811
          %v813 = vld [vmem:[%s581 + $0x398] sm:$0xff]
          %814 = vst [vmem:[%s582 + $0x398] sm:$0xff] %v813
          %v815 = vld [vmem:[%s581 + $0x3a0] sm:$0xff]
          %816 = vst [vmem:[%s582 + $0x3a0] sm:$0xff] %v815
          %v817 = vld [vmem:[%s581 + $0x3a8] sm:$0xff]
          %818 = vst [vmem:[%s582 + $0x3a8] sm:$0xff] %v817
          %v819 = vld [vmem:[%s581 + $0x3b0] sm:$0xff]
          %820 = vst [vmem:[%s582 + $0x3b0] sm:$0xff] %v819
          %v821 = vld [vmem:[%s581 + $0x3b8] sm:$0xff]
          %822 = vst [vmem:[%s582 + $0x3b8] sm:$0xff] %v821
          %v823 = vld [vmem:[%s581 + $0x3c0] sm:$0xff]
          %824 = vst [vmem:[%s582 + $0x3c0] sm:$0xff] %v823
          %v825 = vld [vmem:[%s581 + $0x3c8] sm:$0xff]
          %826 = vst [vmem:[%s582 + $0x3c8] sm:$0xff] %v825
          %v827 = vld [vmem:[%s581 + $0x3d0] sm:$0xff]
          %828 = vst [vmem:[%s582 + $0x3d0] sm:$0xff] %v827
          %v829 = vld [vmem:[%s581 + $0x3d8] sm:$0xff]
          %830 = vst [vmem:[%s582 + $0x3d8] sm:$0xff] %v829
          %v831 = vld [vmem:[%s581 + $0x3e0] sm:$0xff]
          %832 = vst [vmem:[%s582 + $0x3e0] sm:$0xff] %v831
          %v833 = vld [vmem:[%s581 + $0x3e8] sm:$0xff]
          %834 = vst [vmem:[%s582 + $0x3e8] sm:$0xff] %v833
          %v835 = vld [vmem:[%s581 + $0x3f0] sm:$0xff]
          %836 = vst [vmem:[%s582 + $0x3f0] sm:$0xff] %v835
          %v837 = vld [vmem:[%s581 + $0x3f8] sm:$0xff]
          %838 = vst [vmem:[%s582 + $0x3f8] sm:$0xff] %v837
          %v839 = vld [vmem:[%s581 + $0x400] sm:$0xff]
          %840 = vst [vmem:[%s582 + $0x400] sm:$0xff] %v839
          %v841 = vld [vmem:[%s581 + $0x408] sm:$0xff]
          %842 = vst [vmem:[%s582 + $0x408] sm:$0xff] %v841
          %v843 = vld [vmem:[%s581 + $0x410] sm:$0xff]
          %844 = vst [vmem:[%s582 + $0x410] sm:$0xff] %v843
          %v845 = vld [vmem:[%s581 + $0x418] sm:$0xff]
          %846 = vst [vmem:[%s582 + $0x418] sm:$0xff] %v845
          %v847 = vld [vmem:[%s581 + $0x420] sm:$0xff]
          %848 = vst [vmem:[%s582 + $0x420] sm:$0xff] %v847
          %v849 = vld [vmem:[%s581 + $0x428] sm:$0xff]
          %850 = vst [vmem:[%s582 + $0x428] sm:$0xff] %v849
          %v851 = vld [vmem:[%s581 + $0x430] sm:$0xff]
          %852 = vst [vmem:[%s582 + $0x430] sm:$0xff] %v851
          %v853 = vld [vmem:[%s581 + $0x438] sm:$0xff]
          %854 = vst [vmem:[%s582 + $0x438] sm:$0xff] %v853
          %v855 = vld [vmem:[%s581 + $0x440] sm:$0xff]
          %856 = vst [vmem:[%s582 + $0x440] sm:$0xff] %v855
          %v857 = vld [vmem:[%s581 + $0x448] sm:$0xff]
          %858 = vst [vmem:[%s582 + $0x448] sm:$0xff] %v857
          %v859 = vld [vmem:[%s581 + $0x450] sm:$0xff]
          %860 = vst [vmem:[%s582 + $0x450] sm:$0xff] %v859
          %v861 = vld [vmem:[%s581 + $0x458] sm:$0xff]
          %862 = vst [vmem:[%s582 + $0x458] sm:$0xff] %v861
          %v863 = vld [vmem:[%s581 + $0x460] sm:$0xff]
          %864 = vst [vmem:[%s582 + $0x460] sm:$0xff] %v863
          %v865 = vld [vmem:[%s581 + $0x468] sm:$0xff]
          %866 = vst [vmem:[%s582 + $0x468] sm:$0xff] %v865
          %v867 = vld [vmem:[%s581 + $0x470] sm:$0xff]
          %868 = vst [vmem:[%s582 + $0x470] sm:$0xff] %v867
          %v869 = vld [vmem:[%s581 + $0x478] sm:$0xff]
          %870 = vst [vmem:[%s582 + $0x478] sm:$0xff] %v869
          %v871 = vld [vmem:[%s581 + $0x480] sm:$0xff]
          %872 = vst [vmem:[%s582 + $0x480] sm:$0xff] %v871
          %v873 = vld [vmem:[%s581 + $0x488] sm:$0xff]
          %874 = vst [vmem:[%s582 + $0x488] sm:$0xff] %v873
          %v875 = vld [vmem:[%s581 + $0x490] sm:$0xff]
          %876 = vst [vmem:[%s582 + $0x490] sm:$0xff] %v875
          %v877 = vld [vmem:[%s581 + $0x498] sm:$0xff]
          %878 = vst [vmem:[%s582 + $0x498] sm:$0xff] %v877
          %v879 = vld [vmem:[%s581 + $0x4a0] sm:$0xff]
          %880 = vst [vmem:[%s582 + $0x4a0] sm:$0xff] %v879
          %v881 = vld [vmem:[%s581 + $0x4a8] sm:$0xff]
          %882 = vst [vmem:[%s582 + $0x4a8] sm:$0xff] %v881
          %v883 = vld [vmem:[%s581 + $0x4b0] sm:$0xff]
          %884 = vst [vmem:[%s582 + $0x4b0] sm:$0xff] %v883
          %v885 = vld [vmem:[%s581 + $0x4b8] sm:$0xff]
          %886 = vst [vmem:[%s582 + $0x4b8] sm:$0xff] %v885
          %v887 = vld [vmem:[%s581 + $0x4c0] sm:$0xff]
          %888 = vst [vmem:[%s582 + $0x4c0] sm:$0xff] %v887
          %v889 = vld [vmem:[%s581 + $0x4c8] sm:$0xff]
          %890 = vst [vmem:[%s582 + $0x4c8] sm:$0xff] %v889
          %v891 = vld [vmem:[%s581 + $0x4d0] sm:$0xff]
          %892 = vst [vmem:[%s582 + $0x4d0] sm:$0xff] %v891
          %v893 = vld [vmem:[%s581 + $0x4d8] sm:$0xff]
          %894 = vst [vmem:[%s582 + $0x4d8] sm:$0xff] %v893
          %v895 = vld [vmem:[%s581 + $0x4e0] sm:$0xff]
          %896 = vst [vmem:[%s582 + $0x4e0] sm:$0xff] %v895
          %v897 = vld [vmem:[%s581 + $0x4e8] sm:$0xff]
          %898 = vst [vmem:[%s582 + $0x4e8] sm:$0xff] %v897
          %v899 = vld [vmem:[%s581 + $0x4f0] sm:$0xff]
          %900 = vst [vmem:[%s582 + $0x4f0] sm:$0xff] %v899
          %v901 = vld [vmem:[%s581 + $0x4f8] sm:$0xff]
          %902 = vst [vmem:[%s582 + $0x4f8] sm:$0xff] %v901
          %v903 = vld [vmem:[%s581 + $0x500] sm:$0xff]
          %904 = vst [vmem:[%s582 + $0x500] sm:$0xff] %v903
          %v905 = vld [vmem:[%s581 + $0x508] sm:$0xff]
          %906 = vst [vmem:[%s582 + $0x508] sm:$0xff] %v905
          %v907 = vld [vmem:[%s581 + $0x510] sm:$0xff]
          %908 = vst [vmem:[%s582 + $0x510] sm:$0xff] %v907
          %v909 = vld [vmem:[%s581 + $0x518] sm:$0xff]
          %910 = vst [vmem:[%s582 + $0x518] sm:$0xff] %v909
          %v911 = vld [vmem:[%s581 + $0x520] sm:$0xff]
          %912 = vst [vmem:[%s582 + $0x520] sm:$0xff] %v911
          %v913 = vld [vmem:[%s581 + $0x528] sm:$0xff]
          %914 = vst [vmem:[%s582 + $0x528] sm:$0xff] %v913
          %v915 = vld [vmem:[%s581 + $0x530] sm:$0xff]
          %916 = vst [vmem:[%s582 + $0x530] sm:$0xff] %v915
          %v917 = vld [vmem:[%s581 + $0x538] sm:$0xff]
          %918 = vst [vmem:[%s582 + $0x538] sm:$0xff] %v917
          %v919 = vld [vmem:[%s581 + $0x540] sm:$0xff]
          %920 = vst [vmem:[%s582 + $0x540] sm:$0xff] %v919
          %v921 = vld [vmem:[%s581 + $0x548] sm:$0xff]
          %922 = vst [vmem:[%s582 + $0x548] sm:$0xff] %v921
          %v923 = vld [vmem:[%s581 + $0x550] sm:$0xff]
          %924 = vst [vmem:[%s582 + $0x550] sm:$0xff] %v923
          %v925 = vld [vmem:[%s581 + $0x558] sm:$0xff]
          %926 = vst [vmem:[%s582 + $0x558] sm:$0xff] %v925
          %v927 = vld [vmem:[%s581 + $0x560] sm:$0xff]
          %928 = vst [vmem:[%s582 + $0x560] sm:$0xff] %v927
          %v929 = vld [vmem:[%s581 + $0x568] sm:$0xff]
          %930 = vst [vmem:[%s582 + $0x568] sm:$0xff] %v929
          %v931 = vld [vmem:[%s581 + $0x570] sm:$0xff]
          %932 = vst [vmem:[%s582 + $0x570] sm:$0xff] %v931
          %v933 = vld [vmem:[%s581 + $0x578] sm:$0xff]
          %934 = vst [vmem:[%s582 + $0x578] sm:$0xff] %v933
          %v935 = vld [vmem:[%s581 + $0x580] sm:$0xff]
          %936 = vst [vmem:[%s582 + $0x580] sm:$0xff] %v935
          %v937 = vld [vmem:[%s581 + $0x588] sm:$0xff]
          %938 = vst [vmem:[%s582 + $0x588] sm:$0xff] %v937
          %v939 = vld [vmem:[%s581 + $0x590] sm:$0xff]
          %940 = vst [vmem:[%s582 + $0x590] sm:$0xff] %v939
          %v941 = vld [vmem:[%s581 + $0x598] sm:$0xff]
          %942 = vst [vmem:[%s582 + $0x598] sm:$0xff] %v941
          %v943 = vld [vmem:[%s581 + $0x5a0] sm:$0xff]
          %944 = vst [vmem:[%s582 + $0x5a0] sm:$0xff] %v943
          %v945 = vld [vmem:[%s581 + $0x5a8] sm:$0xff]
          %946 = vst [vmem:[%s582 + $0x5a8] sm:$0xff] %v945
          %v947 = vld [vmem:[%s581 + $0x5b0] sm:$0xff]
          %948 = vst [vmem:[%s582 + $0x5b0] sm:$0xff] %v947
          %v949 = vld [vmem:[%s581 + $0x5b8] sm:$0xff]
          %950 = vst [vmem:[%s582 + $0x5b8] sm:$0xff] %v949
          %v951 = vld [vmem:[%s581 + $0x5c0] sm:$0xff]
          %952 = vst [vmem:[%s582 + $0x5c0] sm:$0xff] %v951
          %v953 = vld [vmem:[%s581 + $0x5c8] sm:$0xff]
          %954 = vst [vmem:[%s582 + $0x5c8] sm:$0xff] %v953
          %v955 = vld [vmem:[%s581 + $0x5d0] sm:$0xff]
          %956 = vst [vmem:[%s582 + $0x5d0] sm:$0xff] %v955
          %v957 = vld [vmem:[%s581 + $0x5d8] sm:$0xff]
          %958 = vst [vmem:[%s582 + $0x5d8] sm:$0xff] %v957
          %v959 = vld [vmem:[%s581 + $0x5e0] sm:$0xff]
          %960 = vst [vmem:[%s582 + $0x5e0] sm:$0xff] %v959
          %v961 = vld [vmem:[%s581 + $0x5e8] sm:$0xff]
          %962 = vst [vmem:[%s582 + $0x5e8] sm:$0xff] %v961
          %v963 = vld [vmem:[%s581 + $0x5f0] sm:$0xff]
          %964 = vst [vmem:[%s582 + $0x5f0] sm:$0xff] %v963
          %v965 = vld [vmem:[%s581 + $0x5f8] sm:$0xff]
          %966 = vst [vmem:[%s582 + $0x5f8] sm:$0xff] %v965
          %v967 = vld [vmem:[%s581 + $0x600] sm:$0xff]
          %968 = vst [vmem:[%s582 + $0x600] sm:$0xff] %v967
          %v969 = vld [vmem:[%s581 + $0x608] sm:$0xff]
          %970 = vst [vmem:[%s582 + $0x608] sm:$0xff] %v969
          %v971 = vld [vmem:[%s581 + $0x610] sm:$0xff]
          %972 = vst [vmem:[%s582 + $0x610] sm:$0xff] %v971
          %v973 = vld [vmem:[%s581 + $0x618] sm:$0xff]
          %974 = vst [vmem:[%s582 + $0x618] sm:$0xff] %v973
          %v975 = vld [vmem:[%s581 + $0x620] sm:$0xff]
          %976 = vst [vmem:[%s582 + $0x620] sm:$0xff] %v975
          %v977 = vld [vmem:[%s581 + $0x628] sm:$0xff]
          %978 = vst [vmem:[%s582 + $0x628] sm:$0xff] %v977
          %v979 = vld [vmem:[%s581 + $0x630] sm:$0xff]
          %980 = vst [vmem:[%s582 + $0x630] sm:$0xff] %v979
          %v981 = vld [vmem:[%s581 + $0x638] sm:$0xff]
          %982 = vst [vmem:[%s582 + $0x638] sm:$0xff] %v981
          %v983 = vld [vmem:[%s581 + $0x640] sm:$0xff]
          %984 = vst [vmem:[%s582 + $0x640] sm:$0xff] %v983
          %v985 = vld [vmem:[%s581 + $0x648] sm:$0xff]
          %986 = vst [vmem:[%s582 + $0x648] sm:$0xff] %v985
          %v987 = vld [vmem:[%s581 + $0x650] sm:$0xff]
          %988 = vst [vmem:[%s582 + $0x650] sm:$0xff] %v987
          %v989 = vld [vmem:[%s581 + $0x658] sm:$0xff]
          %990 = vst [vmem:[%s582 + $0x658] sm:$0xff] %v989
          %v991 = vld [vmem:[%s581 + $0x660] sm:$0xff]
          %992 = vst [vmem:[%s582 + $0x660] sm:$0xff] %v991
          %v993 = vld [vmem:[%s581 + $0x668] sm:$0xff]
          %994 = vst [vmem:[%s582 + $0x668] sm:$0xff] %v993
          %v995 = vld [vmem:[%s581 + $0x670] sm:$0xff]
          %996 = vst [vmem:[%s582 + $0x670] sm:$0xff] %v995
          %v997 = vld [vmem:[%s581 + $0x678] sm:$0xff]
          %998 = vst [vmem:[%s582 + $0x678] sm:$0xff] %v997
          %v999 = vld [vmem:[%s581 + $0x680] sm:$0xff]
          %1000 = vst [vmem:[%s582 + $0x680] sm:$0xff] %v999
          %v1001 = vld [vmem:[%s581 + $0x688] sm:$0xff]
          %1002 = vst [vmem:[%s582 + $0x688] sm:$0xff] %v1001
          %v1003 = vld [vmem:[%s581 + $0x690] sm:$0xff]
          %1004 = vst [vmem:[%s582 + $0x690] sm:$0xff] %v1003
          %v1005 = vld [vmem:[%s581 + $0x698] sm:$0xff]
          %1006 = vst [vmem:[%s582 + $0x698] sm:$0xff] %v1005
          %v1007 = vld [vmem:[%s581 + $0x6a0] sm:$0xff]
          %1008 = vst [vmem:[%s582 + $0x6a0] sm:$0xff] %v1007
          %v1009 = vld [vmem:[%s581 + $0x6a8] sm:$0xff]
          %1010 = vst [vmem:[%s582 + $0x6a8] sm:$0xff] %v1009
          %v1011 = vld [vmem:[%s581 + $0x6b0] sm:$0xff]
          %1012 = vst [vmem:[%s582 + $0x6b0] sm:$0xff] %v1011
          %v1013 = vld [vmem:[%s581 + $0x6b8] sm:$0xff]
          %1014 = vst [vmem:[%s582 + $0x6b8] sm:$0xff] %v1013
          %v1015 = vld [vmem:[%s581 + $0x6c0] sm:$0xff]
          %1016 = vst [vmem:[%s582 + $0x6c0] sm:$0xff] %v1015
          %v1017 = vld [vmem:[%s581 + $0x6c8] sm:$0xff]
          %1018 = vst [vmem:[%s582 + $0x6c8] sm:$0xff] %v1017
          %v1019 = vld [vmem:[%s581 + $0x6d0] sm:$0xff]
          %1020 = vst [vmem:[%s582 + $0x6d0] sm:$0xff] %v1019
          %v1021 = vld [vmem:[%s581 + $0x6d8] sm:$0xff]
          %1022 = vst [vmem:[%s582 + $0x6d8] sm:$0xff] %v1021
          %v1023 = vld [vmem:[%s581 + $0x6e0] sm:$0xff]
          %1024 = vst [vmem:[%s582 + $0x6e0] sm:$0xff] %v1023
          %v1025 = vld [vmem:[%s581 + $0x6e8] sm:$0xff]
          %1026 = vst [vmem:[%s582 + $0x6e8] sm:$0xff] %v1025
          %v1027 = vld [vmem:[%s581 + $0x6f0] sm:$0xff]
          %1028 = vst [vmem:[%s582 + $0x6f0] sm:$0xff] %v1027
          %v1029 = vld [vmem:[%s581 + $0x6f8] sm:$0xff]
          %1030 = vst [vmem:[%s582 + $0x6f8] sm:$0xff] %v1029
          %v1031 = vld [vmem:[%s581 + $0x700] sm:$0xff]
          %1032 = vst [vmem:[%s582 + $0x700] sm:$0xff] %v1031
          %v1033 = vld [vmem:[%s581 + $0x708] sm:$0xff]
          %1034 = vst [vmem:[%s582 + $0x708] sm:$0xff] %v1033
          %v1035 = vld [vmem:[%s581 + $0x710] sm:$0xff]
          %1036 = vst [vmem:[%s582 + $0x710] sm:$0xff] %v1035
          %v1037 = vld [vmem:[%s581 + $0x718] sm:$0xff]
          %1038 = vst [vmem:[%s582 + $0x718] sm:$0xff] %v1037
          %v1039 = vld [vmem:[%s581 + $0x720] sm:$0xff]
          %1040 = vst [vmem:[%s582 + $0x720] sm:$0xff] %v1039
          %v1041 = vld [vmem:[%s581 + $0x728] sm:$0xff]
          %1042 = vst [vmem:[%s582 + $0x728] sm:$0xff] %v1041
          %v1043 = vld [vmem:[%s581 + $0x730] sm:$0xff]
          %1044 = vst [vmem:[%s582 + $0x730] sm:$0xff] %v1043
          %v1045 = vld [vmem:[%s581 + $0x738] sm:$0xff]
          %1046 = vst [vmem:[%s582 + $0x738] sm:$0xff] %v1045
          %v1047 = vld [vmem:[%s581 + $0x740] sm:$0xff]
          %1048 = vst [vmem:[%s582 + $0x740] sm:$0xff] %v1047
          %v1049 = vld [vmem:[%s581 + $0x748] sm:$0xff]
          %1050 = vst [vmem:[%s582 + $0x748] sm:$0xff] %v1049
          %v1051 = vld [vmem:[%s581 + $0x750] sm:$0xff]
          %1052 = vst [vmem:[%s582 + $0x750] sm:$0xff] %v1051
          %v1053 = vld [vmem:[%s581 + $0x758] sm:$0xff]
          %1054 = vst [vmem:[%s582 + $0x758] sm:$0xff] %v1053
          %v1055 = vld [vmem:[%s581 + $0x760] sm:$0xff]
          %1056 = vst [vmem:[%s582 + $0x760] sm:$0xff] %v1055
          %v1057 = vld [vmem:[%s581 + $0x768] sm:$0xff]
          %1058 = vst [vmem:[%s582 + $0x768] sm:$0xff] %v1057
          %v1059 = vld [vmem:[%s581 + $0x770] sm:$0xff]
          %1060 = vst [vmem:[%s582 + $0x770] sm:$0xff] %v1059
          %v1061 = vld [vmem:[%s581 + $0x778] sm:$0xff]
          %1062 = vst [vmem:[%s582 + $0x778] sm:$0xff] %v1061
          %v1063 = vld [vmem:[%s581 + $0x780] sm:$0xff]
          %1064 = vst [vmem:[%s582 + $0x780] sm:$0xff] %v1063
          %v1065 = vld [vmem:[%s581 + $0x788] sm:$0xff]
          %1066 = vst [vmem:[%s582 + $0x788] sm:$0xff] %v1065
          %v1067 = vld [vmem:[%s581 + $0x790] sm:$0xff]
          %1068 = vst [vmem:[%s582 + $0x790] sm:$0xff] %v1067
          %v1069 = vld [vmem:[%s581 + $0x798] sm:$0xff]
          %1070 = vst [vmem:[%s582 + $0x798] sm:$0xff] %v1069
          %v1071 = vld [vmem:[%s581 + $0x7a0] sm:$0xff]
          %1072 = vst [vmem:[%s582 + $0x7a0] sm:$0xff] %v1071
          %v1073 = vld [vmem:[%s581 + $0x7a8] sm:$0xff]
          %1074 = vst [vmem:[%s582 + $0x7a8] sm:$0xff] %v1073
          %v1075 = vld [vmem:[%s581 + $0x7b0] sm:$0xff]
          %1076 = vst [vmem:[%s582 + $0x7b0] sm:$0xff] %v1075
          %v1077 = vld [vmem:[%s581 + $0x7b8] sm:$0xff]
          %1078 = vst [vmem:[%s582 + $0x7b8] sm:$0xff] %v1077
          %v1079 = vld [vmem:[%s581 + $0x7c0] sm:$0xff]
          %1080 = vst [vmem:[%s582 + $0x7c0] sm:$0xff] %v1079
          %v1081 = vld [vmem:[%s581 + $0x7c8] sm:$0xff]
          %1082 = vst [vmem:[%s582 + $0x7c8] sm:$0xff] %v1081
          %v1083 = vld [vmem:[%s581 + $0x7d0] sm:$0xff]
          %1084 = vst [vmem:[%s582 + $0x7d0] sm:$0xff] %v1083
          %v1085 = vld [vmem:[%s581 + $0x7d8] sm:$0xff]
          %1086 = vst [vmem:[%s582 + $0x7d8] sm:$0xff] %v1085
          %v1087 = vld [vmem:[%s581 + $0x7e0] sm:$0xff]
          %1088 = vst [vmem:[%s582 + $0x7e0] sm:$0xff] %v1087
          %v1089 = vld [vmem:[%s581 + $0x7e8] sm:$0xff]
          %1090 = vst [vmem:[%s582 + $0x7e8] sm:$0xff] %v1089
          %v1091 = vld [vmem:[%s581 + $0x7f0] sm:$0xff]
          %1092 = vst [vmem:[%s582 + $0x7f0] sm:$0xff] %v1091
          %v1093 = vld [vmem:[%s581 + $0x7f8] sm:$0xff]
          %1094 = vst [vmem:[%s582 + $0x7f8] sm:$0xff] %v1093
          %v1095 = vld [vmem:[%s581 + $0x800] sm:$0xff]
          %1096 = vst [vmem:[%s582 + $0x800] sm:$0xff] %v1095
          %v1097 = vld [vmem:[%s581 + $0x808] sm:$0xff]
          %1098 = vst [vmem:[%s582 + $0x808] sm:$0xff] %v1097
          %v1099 = vld [vmem:[%s581 + $0x810] sm:$0xff]
          %1100 = vst [vmem:[%s582 + $0x810] sm:$0xff] %v1099
          %v1101 = vld [vmem:[%s581 + $0x818] sm:$0xff]
          %1102 = vst [vmem:[%s582 + $0x818] sm:$0xff] %v1101
          %v1103 = vld [vmem:[%s581 + $0x820] sm:$0xff]
          %1104 = vst [vmem:[%s582 + $0x820] sm:$0xff] %v1103
          %v1105 = vld [vmem:[%s581 + $0x828] sm:$0xff]
          %1106 = vst [vmem:[%s582 + $0x828] sm:$0xff] %v1105
          %v1107 = vld [vmem:[%s581 + $0x830] sm:$0xff]
          %1108 = vst [vmem:[%s582 + $0x830] sm:$0xff] %v1107
          %v1109 = vld [vmem:[%s581 + $0x838] sm:$0xff]
          %1110 = vst [vmem:[%s582 + $0x838] sm:$0xff] %v1109
          %v1111 = vld [vmem:[%s581 + $0x840] sm:$0xff]
          %1112 = vst [vmem:[%s582 + $0x840] sm:$0xff] %v1111
          %v1113 = vld [vmem:[%s581 + $0x848] sm:$0xff]
          %1114 = vst [vmem:[%s582 + $0x848] sm:$0xff] %v1113
          %v1115 = vld [vmem:[%s581 + $0x850] sm:$0xff]
          %1116 = vst [vmem:[%s582 + $0x850] sm:$0xff] %v1115
          %v1117 = vld [vmem:[%s581 + $0x858] sm:$0xff]
          %1118 = vst [vmem:[%s582 + $0x858] sm:$0xff] %v1117
          %v1119 = vld [vmem:[%s581 + $0x860] sm:$0xff]
          %1120 = vst [vmem:[%s582 + $0x860] sm:$0xff] %v1119
          %v1121 = vld [vmem:[%s581 + $0x868] sm:$0xff]
          %1122 = vst [vmem:[%s582 + $0x868] sm:$0xff] %v1121
          %v1123 = vld [vmem:[%s581 + $0x870] sm:$0xff]
          %1124 = vst [vmem:[%s582 + $0x870] sm:$0xff] %v1123
          %v1125 = vld [vmem:[%s581 + $0x878] sm:$0xff]
          %1126 = vst [vmem:[%s582 + $0x878] sm:$0xff] %v1125
          %v1127 = vld [vmem:[%s581 + $0x880] sm:$0xff]
          %1128 = vst [vmem:[%s582 + $0x880] sm:$0xff] %v1127
          %v1129 = vld [vmem:[%s581 + $0x888] sm:$0xff]
          %1130 = vst [vmem:[%s582 + $0x888] sm:$0xff] %v1129
          %v1131 = vld [vmem:[%s581 + $0x890] sm:$0xff]
          %1132 = vst [vmem:[%s582 + $0x890] sm:$0xff] %v1131
          %v1133 = vld [vmem:[%s581 + $0x898] sm:$0xff]
          %1134 = vst [vmem:[%s582 + $0x898] sm:$0xff] %v1133
          %v1135 = vld [vmem:[%s581 + $0x8a0] sm:$0xff]
          %1136 = vst [vmem:[%s582 + $0x8a0] sm:$0xff] %v1135
          %v1137 = vld [vmem:[%s581 + $0x8a8] sm:$0xff]
          %1138 = vst [vmem:[%s582 + $0x8a8] sm:$0xff] %v1137
          %v1139 = vld [vmem:[%s581 + $0x8b0] sm:$0xff]
          %1140 = vst [vmem:[%s582 + $0x8b0] sm:$0xff] %v1139
          %v1141 = vld [vmem:[%s581 + $0x8b8] sm:$0xff]
          %1142 = vst [vmem:[%s582 + $0x8b8] sm:$0xff] %v1141
          %v1143 = vld [vmem:[%s581 + $0x8c0] sm:$0xff]
          %1144 = vst [vmem:[%s582 + $0x8c0] sm:$0xff] %v1143
          %v1145 = vld [vmem:[%s581 + $0x8c8] sm:$0xff]
          %1146 = vst [vmem:[%s582 + $0x8c8] sm:$0xff] %v1145
          %v1147 = vld [vmem:[%s581 + $0x8d0] sm:$0xff]
          %1148 = vst [vmem:[%s582 + $0x8d0] sm:$0xff] %v1147
          %v1149 = vld [vmem:[%s581 + $0x8d8] sm:$0xff]
          %1150 = vst [vmem:[%s582 + $0x8d8] sm:$0xff] %v1149
          %v1151 = vld [vmem:[%s581 + $0x8e0] sm:$0xff]
          %1152 = vst [vmem:[%s582 + $0x8e0] sm:$0xff] %v1151
          %v1153 = vld [vmem:[%s581 + $0x8e8] sm:$0xff]
          %1154 = vst [vmem:[%s582 + $0x8e8] sm:$0xff] %v1153
          %v1155 = vld [vmem:[%s581 + $0x8f0] sm:$0xff]
          %1156 = vst [vmem:[%s582 + $0x8f0] sm:$0xff] %v1155
          %v1157 = vld [vmem:[%s581 + $0x8f8] sm:$0xff]
          %1158 = vst [vmem:[%s582 + $0x8f8] sm:$0xff] %v1157
          %v1159 = vld [vmem:[%s581 + $0x900] sm:$0xff]
          %1160 = vst [vmem:[%s582 + $0x900] sm:$0xff] %v1159
          %v1161 = vld [vmem:[%s581 + $0x908] sm:$0xff]
          %1162 = vst [vmem:[%s582 + $0x908] sm:$0xff] %v1161
          %v1163 = vld [vmem:[%s581 + $0x910] sm:$0xff]
          %1164 = vst [vmem:[%s582 + $0x910] sm:$0xff] %v1163
          %v1165 = vld [vmem:[%s581 + $0x918] sm:$0xff]
          %1166 = vst [vmem:[%s582 + $0x918] sm:$0xff] %v1165
          %v1167 = vld [vmem:[%s581 + $0x920] sm:$0xff]
          %1168 = vst [vmem:[%s582 + $0x920] sm:$0xff] %v1167
          %v1169 = vld [vmem:[%s581 + $0x928] sm:$0xff]
          %1170 = vst [vmem:[%s582 + $0x928] sm:$0xff] %v1169
          %v1171 = vld [vmem:[%s581 + $0x930] sm:$0xff]
          %1172 = vst [vmem:[%s582 + $0x930] sm:$0xff] %v1171
          %v1173 = vld [vmem:[%s581 + $0x938] sm:$0xff]
          %1174 = vst [vmem:[%s582 + $0x938] sm:$0xff] %v1173
          %v1175 = vld [vmem:[%s581 + $0x940] sm:$0xff]
          %1176 = vst [vmem:[%s582 + $0x940] sm:$0xff] %v1175
          %v1177 = vld [vmem:[%s581 + $0x948] sm:$0xff]
          %1178 = vst [vmem:[%s582 + $0x948] sm:$0xff] %v1177
          %v1179 = vld [vmem:[%s581 + $0x950] sm:$0xff]
          %1180 = vst [vmem:[%s582 + $0x950] sm:$0xff] %v1179
          %v1181 = vld [vmem:[%s581 + $0x958] sm:$0xff]
          %1182 = vst [vmem:[%s582 + $0x958] sm:$0xff] %v1181
          %v1183 = vld [vmem:[%s581 + $0x960] sm:$0xff]
          %1184 = vst [vmem:[%s582 + $0x960] sm:$0xff] %v1183
          %v1185 = vld [vmem:[%s581 + $0x968] sm:$0xff]
          %1186 = vst [vmem:[%s582 + $0x968] sm:$0xff] %v1185
          %v1187 = vld [vmem:[%s581 + $0x970] sm:$0xff]
          %1188 = vst [vmem:[%s582 + $0x970] sm:$0xff] %v1187
          %v1189 = vld [vmem:[%s581 + $0x978] sm:$0xff]
          %1190 = vst [vmem:[%s582 + $0x978] sm:$0xff] %v1189
          %v1191 = vld [vmem:[%s581 + $0x980] sm:$0xff]
          %1192 = vst [vmem:[%s582 + $0x980] sm:$0xff] %v1191
          %v1193 = vld [vmem:[%s581 + $0x988] sm:$0xff]
          %1194 = vst [vmem:[%s582 + $0x988] sm:$0xff] %v1193
          %v1195 = vld [vmem:[%s581 + $0x990] sm:$0xff]
          %1196 = vst [vmem:[%s582 + $0x990] sm:$0xff] %v1195
          %v1197 = vld [vmem:[%s581 + $0x998] sm:$0xff]
          %1198 = vst [vmem:[%s582 + $0x998] sm:$0xff] %v1197
          %v1199 = vld [vmem:[%s581 + $0x9a0] sm:$0xff]
          %1200 = vst [vmem:[%s582 + $0x9a0] sm:$0xff] %v1199
          %v1201 = vld [vmem:[%s581 + $0x9a8] sm:$0xff]
          %1202 = vst [vmem:[%s582 + $0x9a8] sm:$0xff] %v1201
          %v1203 = vld [vmem:[%s581 + $0x9b0] sm:$0xff]
          %1204 = vst [vmem:[%s582 + $0x9b0] sm:$0xff] %v1203
          %v1205 = vld [vmem:[%s581 + $0x9b8] sm:$0xff]
          %1206 = vst [vmem:[%s582 + $0x9b8] sm:$0xff] %v1205
          %v1207 = vld [vmem:[%s581 + $0x9c0] sm:$0xff]
          %1208 = vst [vmem:[%s582 + $0x9c0] sm:$0xff] %v1207
          %v1209 = vld [vmem:[%s581 + $0x9c8] sm:$0xff]
          %1210 = vst [vmem:[%s582 + $0x9c8] sm:$0xff] %v1209
          %v1211 = vld [vmem:[%s581 + $0x9d0] sm:$0xff]
          %1212 = vst [vmem:[%s582 + $0x9d0] sm:$0xff] %v1211
          %v1213 = vld [vmem:[%s581 + $0x9d8] sm:$0xff]
          %1214 = vst [vmem:[%s582 + $0x9d8] sm:$0xff] %v1213
          %v1215 = vld [vmem:[%s581 + $0x9e0] sm:$0xff]
          %1216 = vst [vmem:[%s582 + $0x9e0] sm:$0xff] %v1215
          %v1217 = vld [vmem:[%s581 + $0x9e8] sm:$0xff]
          %1218 = vst [vmem:[%s582 + $0x9e8] sm:$0xff] %v1217
          %v1219 = vld [vmem:[%s581 + $0x9f0] sm:$0xff]
          %1220 = vst [vmem:[%s582 + $0x9f0] sm:$0xff] %v1219
          %v1221 = vld [vmem:[%s581 + $0x9f8] sm:$0xff]
          %1222 = vst [vmem:[%s582 + $0x9f8] sm:$0xff] %v1221
          %v1223 = vld [vmem:[%s581 + $0xa00] sm:$0xff]
          %1224 = vst [vmem:[%s582 + $0xa00] sm:$0xff] %v1223
          %v1225 = vld [vmem:[%s581 + $0xa08] sm:$0xff]
          %1226 = vst [vmem:[%s582 + $0xa08] sm:$0xff] %v1225
          %v1227 = vld [vmem:[%s581 + $0xa10] sm:$0xff]
          %1228 = vst [vmem:[%s582 + $0xa10] sm:$0xff] %v1227
          %v1229 = vld [vmem:[%s581 + $0xa18] sm:$0xff]
          %1230 = vst [vmem:[%s582 + $0xa18] sm:$0xff] %v1229
          %v1231 = vld [vmem:[%s581 + $0xa20] sm:$0xff]
          %1232 = vst [vmem:[%s582 + $0xa20] sm:$0xff] %v1231
          %v1233 = vld [vmem:[%s581 + $0xa28] sm:$0xff]
          %1234 = vst [vmem:[%s582 + $0xa28] sm:$0xff] %v1233
          %v1235 = vld [vmem:[%s581 + $0xa30] sm:$0xff]
          %1236 = vst [vmem:[%s582 + $0xa30] sm:$0xff] %v1235
          %v1237 = vld [vmem:[%s581 + $0xa38] sm:$0xff]
          %1238 = vst [vmem:[%s582 + $0xa38] sm:$0xff] %v1237
          %v1239 = vld [vmem:[%s581 + $0xa40] sm:$0xff]
          %1240 = vst [vmem:[%s582 + $0xa40] sm:$0xff] %v1239
          %v1241 = vld [vmem:[%s581 + $0xa48] sm:$0xff]
          %1242 = vst [vmem:[%s582 + $0xa48] sm:$0xff] %v1241
          %v1243 = vld [vmem:[%s581 + $0xa50] sm:$0xff]
          %1244 = vst [vmem:[%s582 + $0xa50] sm:$0xff] %v1243
          %v1245 = vld [vmem:[%s581 + $0xa58] sm:$0xff]
          %1246 = vst [vmem:[%s582 + $0xa58] sm:$0xff] %v1245
          %v1247 = vld [vmem:[%s581 + $0xa60] sm:$0xff]
          %1248 = vst [vmem:[%s582 + $0xa60] sm:$0xff] %v1247
          %v1249 = vld [vmem:[%s581 + $0xa68] sm:$0xff]
          %1250 = vst [vmem:[%s582 + $0xa68] sm:$0xff] %v1249
          %v1251 = vld [vmem:[%s581 + $0xa70] sm:$0xff]
          %1252 = vst [vmem:[%s582 + $0xa70] sm:$0xff] %v1251
          %v1253 = vld [vmem:[%s581 + $0xa78] sm:$0xff]
          %1254 = vst [vmem:[%s582 + $0xa78] sm:$0xff] %v1253
          %v1255 = vld [vmem:[%s581 + $0xa80] sm:$0xff]
          %1256 = vst [vmem:[%s582 + $0xa80] sm:$0xff] %v1255
          %v1257 = vld [vmem:[%s581 + $0xa88] sm:$0xff]
          %1258 = vst [vmem:[%s582 + $0xa88] sm:$0xff] %v1257
          %v1259 = vld [vmem:[%s581 + $0xa90] sm:$0xff]
          %1260 = vst [vmem:[%s582 + $0xa90] sm:$0xff] %v1259
          %v1261 = vld [vmem:[%s581 + $0xa98] sm:$0xff]
          %1262 = vst [vmem:[%s582 + $0xa98] sm:$0xff] %v1261
          %v1263 = vld [vmem:[%s581 + $0xaa0] sm:$0xff]
          %1264 = vst [vmem:[%s582 + $0xaa0] sm:$0xff] %v1263
          %v1265 = vld [vmem:[%s581 + $0xaa8] sm:$0xff]
          %1266 = vst [vmem:[%s582 + $0xaa8] sm:$0xff] %v1265
          %v1267 = vld [vmem:[%s581 + $0xab0] sm:$0xff]
          %1268 = vst [vmem:[%s582 + $0xab0] sm:$0xff] %v1267
          %v1269 = vld [vmem:[%s581 + $0xab8] sm:$0xff]
          %1270 = vst [vmem:[%s582 + $0xab8] sm:$0xff] %v1269
          %v1271 = vld [vmem:[%s581 + $0xac0] sm:$0xff]
          %1272 = vst [vmem:[%s582 + $0xac0] sm:$0xff] %v1271
          %v1273 = vld [vmem:[%s581 + $0xac8] sm:$0xff]
          %1274 = vst [vmem:[%s582 + $0xac8] sm:$0xff] %v1273
          %v1275 = vld [vmem:[%s581 + $0xad0] sm:$0xff]
          %1276 = vst [vmem:[%s582 + $0xad0] sm:$0xff] %v1275
          %v1277 = vld [vmem:[%s581 + $0xad8] sm:$0xff]
          %1278 = vst [vmem:[%s582 + $0xad8] sm:$0xff] %v1277
          %v1279 = vld [vmem:[%s581 + $0xae0] sm:$0xff]
          %1280 = vst [vmem:[%s582 + $0xae0] sm:$0xff] %v1279
          %v1281 = vld [vmem:[%s581 + $0xae8] sm:$0xff]
          %1282 = vst [vmem:[%s582 + $0xae8] sm:$0xff] %v1281
          %v1283 = vld [vmem:[%s581 + $0xaf0] sm:$0xff]
          %1284 = vst [vmem:[%s582 + $0xaf0] sm:$0xff] %v1283
          %v1285 = vld [vmem:[%s581 + $0xaf8] sm:$0xff]
          %1286 = vst [vmem:[%s582 + $0xaf8] sm:$0xff] %v1285
          %v1287 = vld [vmem:[%s581 + $0xb00] sm:$0xff]
          %1288 = vst [vmem:[%s582 + $0xb00] sm:$0xff] %v1287
          %v1289 = vld [vmem:[%s581 + $0xb08] sm:$0xff]
          %1290 = vst [vmem:[%s582 + $0xb08] sm:$0xff] %v1289
          %v1291 = vld [vmem:[%s581 + $0xb10] sm:$0xff]
          %1292 = vst [vmem:[%s582 + $0xb10] sm:$0xff] %v1291
          %v1293 = vld [vmem:[%s581 + $0xb18] sm:$0xff]
          %1294 = vst [vmem:[%s582 + $0xb18] sm:$0xff] %v1293
          %v1295 = vld [vmem:[%s581 + $0xb20] sm:$0xff]
          %1296 = vst [vmem:[%s582 + $0xb20] sm:$0xff] %v1295
          %v1297 = vld [vmem:[%s581 + $0xb28] sm:$0xff]
          %1298 = vst [vmem:[%s582 + $0xb28] sm:$0xff] %v1297
          %v1299 = vld [vmem:[%s581 + $0xb30] sm:$0xff]
          %1300 = vst [vmem:[%s582 + $0xb30] sm:$0xff] %v1299
          %v1301 = vld [vmem:[%s581 + $0xb38] sm:$0xff]
          %1302 = vst [vmem:[%s582 + $0xb38] sm:$0xff] %v1301
          %v1303 = vld [vmem:[%s581 + $0xb40] sm:$0xff]
          %1304 = vst [vmem:[%s582 + $0xb40] sm:$0xff] %v1303
          %v1305 = vld [vmem:[%s581 + $0xb48] sm:$0xff]
          %1306 = vst [vmem:[%s582 + $0xb48] sm:$0xff] %v1305
          %v1307 = vld [vmem:[%s581 + $0xb50] sm:$0xff]
          %1308 = vst [vmem:[%s582 + $0xb50] sm:$0xff] %v1307
          %v1309 = vld [vmem:[%s581 + $0xb58] sm:$0xff]
          %1310 = vst [vmem:[%s582 + $0xb58] sm:$0xff] %v1309
          %v1311 = vld [vmem:[%s581 + $0xb60] sm:$0xff]
          %1312 = vst [vmem:[%s582 + $0xb60] sm:$0xff] %v1311
          %v1313 = vld [vmem:[%s581 + $0xb68] sm:$0xff]
          %1314 = vst [vmem:[%s582 + $0xb68] sm:$0xff] %v1313
          %v1315 = vld [vmem:[%s581 + $0xb70] sm:$0xff]
          %1316 = vst [vmem:[%s582 + $0xb70] sm:$0xff] %v1315
          %v1317 = vld [vmem:[%s581 + $0xb78] sm:$0xff]
          %1318 = vst [vmem:[%s582 + $0xb78] sm:$0xff] %v1317
          %v1319 = vld [vmem:[%s581 + $0xb80] sm:$0xff]
          %1320 = vst [vmem:[%s582 + $0xb80] sm:$0xff] %v1319
          %v1321 = vld [vmem:[%s581 + $0xb88] sm:$0xff]
          %1322 = vst [vmem:[%s582 + $0xb88] sm:$0xff] %v1321
          %v1323 = vld [vmem:[%s581 + $0xb90] sm:$0xff]
          %1324 = vst [vmem:[%s582 + $0xb90] sm:$0xff] %v1323
          %v1325 = vld [vmem:[%s581 + $0xb98] sm:$0xff]
          %1326 = vst [vmem:[%s582 + $0xb98] sm:$0xff] %v1325
          %v1327 = vld [vmem:[%s581 + $0xba0] sm:$0xff]
          %1328 = vst [vmem:[%s582 + $0xba0] sm:$0xff] %v1327
          %v1329 = vld [vmem:[%s581 + $0xba8] sm:$0xff]
          %1330 = vst [vmem:[%s582 + $0xba8] sm:$0xff] %v1329
          %v1331 = vld [vmem:[%s581 + $0xbb0] sm:$0xff]
          %1332 = vst [vmem:[%s582 + $0xbb0] sm:$0xff] %v1331
          %v1333 = vld [vmem:[%s581 + $0xbb8] sm:$0xff]
          %1334 = vst [vmem:[%s582 + $0xbb8] sm:$0xff] %v1333
          %v1335 = vld [vmem:[%s581 + $0xbc0] sm:$0xff]
          %1336 = vst [vmem:[%s582 + $0xbc0] sm:$0xff] %v1335
          %v1337 = vld [vmem:[%s581 + $0xbc8] sm:$0xff]
          %1338 = vst [vmem:[%s582 + $0xbc8] sm:$0xff] %v1337
          %v1339 = vld [vmem:[%s581 + $0xbd0] sm:$0xff]
          %1340 = vst [vmem:[%s582 + $0xbd0] sm:$0xff] %v1339
          %v1341 = vld [vmem:[%s581 + $0xbd8] sm:$0xff]
          %1342 = vst [vmem:[%s582 + $0xbd8] sm:$0xff] %v1341
          %v1343 = vld [vmem:[%s581 + $0xbe0] sm:$0xff]
          %1344 = vst [vmem:[%s582 + $0xbe0] sm:$0xff] %v1343
          %v1345 = vld [vmem:[%s581 + $0xbe8] sm:$0xff]
          %1346 = vst [vmem:[%s582 + $0xbe8] sm:$0xff] %v1345
          %v1347 = vld [vmem:[%s581 + $0xbf0] sm:$0xff]
          %1348 = vst [vmem:[%s582 + $0xbf0] sm:$0xff] %v1347
          %v1349 = vld [vmem:[%s581 + $0xbf8] sm:$0xff]
          %1350 = vst [vmem:[%s582 + $0xbf8] sm:$0xff] %v1349
          %v1351 = vld [vmem:[%s581 + $0xc00] sm:$0xff]
          %1352 = vst [vmem:[%s582 + $0xc00] sm:$0xff] %v1351
          %v1353 = vld [vmem:[%s581 + $0xc08] sm:$0xff]
          %1354 = vst [vmem:[%s582 + $0xc08] sm:$0xff] %v1353
          %v1355 = vld [vmem:[%s581 + $0xc10] sm:$0xff]
          %1356 = vst [vmem:[%s582 + $0xc10] sm:$0xff] %v1355
          %v1357 = vld [vmem:[%s581 + $0xc18] sm:$0xff]
          %1358 = vst [vmem:[%s582 + $0xc18] sm:$0xff] %v1357
          %v1359 = vld [vmem:[%s581 + $0xc20] sm:$0xff]
          %1360 = vst [vmem:[%s582 + $0xc20] sm:$0xff] %v1359
          %v1361 = vld [vmem:[%s581 + $0xc28] sm:$0xff]
          %1362 = vst [vmem:[%s582 + $0xc28] sm:$0xff] %v1361
          %v1363 = vld [vmem:[%s581 + $0xc30] sm:$0xff]
          %1364 = vst [vmem:[%s582 + $0xc30] sm:$0xff] %v1363
          %v1365 = vld [vmem:[%s581 + $0xc38] sm:$0xff]
          %1366 = vst [vmem:[%s582 + $0xc38] sm:$0xff] %v1365
          %v1367 = vld [vmem:[%s581 + $0xc40] sm:$0xff]
          %1368 = vst [vmem:[%s582 + $0xc40] sm:$0xff] %v1367
          %v1369 = vld [vmem:[%s581 + $0xc48] sm:$0xff]
          %1370 = vst [vmem:[%s582 + $0xc48] sm:$0xff] %v1369
          %v1371 = vld [vmem:[%s581 + $0xc50] sm:$0xff]
          %1372 = vst [vmem:[%s582 + $0xc50] sm:$0xff] %v1371
          %v1373 = vld [vmem:[%s581 + $0xc58] sm:$0xff]
          %1374 = vst [vmem:[%s582 + $0xc58] sm:$0xff] %v1373
          %v1375 = vld [vmem:[%s581 + $0xc60] sm:$0xff]
          %1376 = vst [vmem:[%s582 + $0xc60] sm:$0xff] %v1375
          %v1377 = vld [vmem:[%s581 + $0xc68] sm:$0xff]
          %1378 = vst [vmem:[%s582 + $0xc68] sm:$0xff] %v1377
          %v1379 = vld [vmem:[%s581 + $0xc70] sm:$0xff]
          %1380 = vst [vmem:[%s582 + $0xc70] sm:$0xff] %v1379
          %v1381 = vld [vmem:[%s581 + $0xc78] sm:$0xff]
          %1382 = vst [vmem:[%s582 + $0xc78] sm:$0xff] %v1381
          %v1383 = vld [vmem:[%s581 + $0xc80] sm:$0xff]
          %1384 = vst [vmem:[%s582 + $0xc80] sm:$0xff] %v1383
          %v1385 = vld [vmem:[%s581 + $0xc88] sm:$0xff]
          %1386 = vst [vmem:[%s582 + $0xc88] sm:$0xff] %v1385
          %v1387 = vld [vmem:[%s581 + $0xc90] sm:$0xff]
          %1388 = vst [vmem:[%s582 + $0xc90] sm:$0xff] %v1387
          %v1389 = vld [vmem:[%s581 + $0xc98] sm:$0xff]
          %1390 = vst [vmem:[%s582 + $0xc98] sm:$0xff] %v1389
          %v1391 = vld [vmem:[%s581 + $0xca0] sm:$0xff]
          %1392 = vst [vmem:[%s582 + $0xca0] sm:$0xff] %v1391
          %v1393 = vld [vmem:[%s581 + $0xca8] sm:$0xff]
          %1394 = vst [vmem:[%s582 + $0xca8] sm:$0xff] %v1393
          %v1395 = vld [vmem:[%s581 + $0xcb0] sm:$0xff]
          %1396 = vst [vmem:[%s582 + $0xcb0] sm:$0xff] %v1395
          %v1397 = vld [vmem:[%s581 + $0xcb8] sm:$0xff]
          %1398 = vst [vmem:[%s582 + $0xcb8] sm:$0xff] %v1397
          %v1399 = vld [vmem:[%s581 + $0xcc0] sm:$0xff]
          %1400 = vst [vmem:[%s582 + $0xcc0] sm:$0xff] %v1399
          %v1401 = vld [vmem:[%s581 + $0xcc8] sm:$0xff]
          %1402 = vst [vmem:[%s582 + $0xcc8] sm:$0xff] %v1401
          %v1403 = vld [vmem:[%s581 + $0xcd0] sm:$0xff]
          %1404 = vst [vmem:[%s582 + $0xcd0] sm:$0xff] %v1403
          %v1405 = vld [vmem:[%s581 + $0xcd8] sm:$0xff]
          %1406 = vst [vmem:[%s582 + $0xcd8] sm:$0xff] %v1405
          %v1407 = vld [vmem:[%s581 + $0xce0] sm:$0xff]
          %1408 = vst [vmem:[%s582 + $0xce0] sm:$0xff] %v1407
          %v1409 = vld [vmem:[%s581 + $0xce8] sm:$0xff]
          %1410 = vst [vmem:[%s582 + $0xce8] sm:$0xff] %v1409
          %v1411 = vld [vmem:[%s581 + $0xcf0] sm:$0xff]
          %1412 = vst [vmem:[%s582 + $0xcf0] sm:$0xff] %v1411
          %v1413 = vld [vmem:[%s581 + $0xcf8] sm:$0xff]
          %1414 = vst [vmem:[%s582 + $0xcf8] sm:$0xff] %v1413
          %v1415 = vld [vmem:[%s581 + $0xd00] sm:$0xff]
          %1416 = vst [vmem:[%s582 + $0xd00] sm:$0xff] %v1415
          %v1417 = vld [vmem:[%s581 + $0xd08] sm:$0xff]
          %1418 = vst [vmem:[%s582 + $0xd08] sm:$0xff] %v1417
          %v1419 = vld [vmem:[%s581 + $0xd10] sm:$0xff]
          %1420 = vst [vmem:[%s582 + $0xd10] sm:$0xff] %v1419
          %v1421 = vld [vmem:[%s581 + $0xd18] sm:$0xff]
          %1422 = vst [vmem:[%s582 + $0xd18] sm:$0xff] %v1421
          %v1423 = vld [vmem:[%s581 + $0xd20] sm:$0xff]
          %1424 = vst [vmem:[%s582 + $0xd20] sm:$0xff] %v1423
          %v1425 = vld [vmem:[%s581 + $0xd28] sm:$0xff]
          %1426 = vst [vmem:[%s582 + $0xd28] sm:$0xff] %v1425
          %v1427 = vld [vmem:[%s581 + $0xd30] sm:$0xff]
          %1428 = vst [vmem:[%s582 + $0xd30] sm:$0xff] %v1427
          %v1429 = vld [vmem:[%s581 + $0xd38] sm:$0xff]
          %1430 = vst [vmem:[%s582 + $0xd38] sm:$0xff] %v1429
          %v1431 = vld [vmem:[%s581 + $0xd40] sm:$0xff]
          %1432 = vst [vmem:[%s582 + $0xd40] sm:$0xff] %v1431
          %v1433 = vld [vmem:[%s581 + $0xd48] sm:$0xff]
          %1434 = vst [vmem:[%s582 + $0xd48] sm:$0xff] %v1433
          %v1435 = vld [vmem:[%s581 + $0xd50] sm:$0xff]
          %1436 = vst [vmem:[%s582 + $0xd50] sm:$0xff] %v1435
          %v1437 = vld [vmem:[%s581 + $0xd58] sm:$0xff]
          %1438 = vst [vmem:[%s582 + $0xd58] sm:$0xff] %v1437
          %v1439 = vld [vmem:[%s581 + $0xd60] sm:$0xff]
          %1440 = vst [vmem:[%s582 + $0xd60] sm:$0xff] %v1439
          %v1441 = vld [vmem:[%s581 + $0xd68] sm:$0xff]
          %1442 = vst [vmem:[%s582 + $0xd68] sm:$0xff] %v1441
          %v1443 = vld [vmem:[%s581 + $0xd70] sm:$0xff]
          %1444 = vst [vmem:[%s582 + $0xd70] sm:$0xff] %v1443
          %v1445 = vld [vmem:[%s581 + $0xd78] sm:$0xff]
          %1446 = vst [vmem:[%s582 + $0xd78] sm:$0xff] %v1445
          %v1447 = vld [vmem:[%s581 + $0xd80] sm:$0xff]
          %1448 = vst [vmem:[%s582 + $0xd80] sm:$0xff] %v1447
          %v1449 = vld [vmem:[%s581 + $0xd88] sm:$0xff]
          %1450 = vst [vmem:[%s582 + $0xd88] sm:$0xff] %v1449
          %v1451 = vld [vmem:[%s581 + $0xd90] sm:$0xff]
          %1452 = vst [vmem:[%s582 + $0xd90] sm:$0xff] %v1451
          %v1453 = vld [vmem:[%s581 + $0xd98] sm:$0xff]
          %1454 = vst [vmem:[%s582 + $0xd98] sm:$0xff] %v1453
          %v1455 = vld [vmem:[%s581 + $0xda0] sm:$0xff]
          %1456 = vst [vmem:[%s582 + $0xda0] sm:$0xff] %v1455
          %v1457 = vld [vmem:[%s581 + $0xda8] sm:$0xff]
          %1458 = vst [vmem:[%s582 + $0xda8] sm:$0xff] %v1457
          %v1459 = vld [vmem:[%s581 + $0xdb0] sm:$0xff]
          %1460 = vst [vmem:[%s582 + $0xdb0] sm:$0xff] %v1459
          %v1461 = vld [vmem:[%s581 + $0xdb8] sm:$0xff]
          %1462 = vst [vmem:[%s582 + $0xdb8] sm:$0xff] %v1461
          %v1463 = vld [vmem:[%s581 + $0xdc0] sm:$0xff]
          %1464 = vst [vmem:[%s582 + $0xdc0] sm:$0xff] %v1463
          %v1465 = vld [vmem:[%s581 + $0xdc8] sm:$0xff]
          %1466 = vst [vmem:[%s582 + $0xdc8] sm:$0xff] %v1465
          %v1467 = vld [vmem:[%s581 + $0xdd0] sm:$0xff]
          %1468 = vst [vmem:[%s582 + $0xdd0] sm:$0xff] %v1467
          %v1469 = vld [vmem:[%s581 + $0xdd8] sm:$0xff]
          %1470 = vst [vmem:[%s582 + $0xdd8] sm:$0xff] %v1469
          %v1471 = vld [vmem:[%s581 + $0xde0] sm:$0xff]
          %1472 = vst [vmem:[%s582 + $0xde0] sm:$0xff] %v1471
          %v1473 = vld [vmem:[%s581 + $0xde8] sm:$0xff]
          %1474 = vst [vmem:[%s582 + $0xde8] sm:$0xff] %v1473
          %v1475 = vld [vmem:[%s581 + $0xdf0] sm:$0xff]
          %1476 = vst [vmem:[%s582 + $0xdf0] sm:$0xff] %v1475
          %v1477 = vld [vmem:[%s581 + $0xdf8] sm:$0xff]
          %1478 = vst [vmem:[%s582 + $0xdf8] sm:$0xff] %v1477
          %v1479 = vld [vmem:[%s581 + $0xe00] sm:$0xff]
          %1480 = vst [vmem:[%s582 + $0xe00] sm:$0xff] %v1479
          %v1481 = vld [vmem:[%s581 + $0xe08] sm:$0xff]
          %1482 = vst [vmem:[%s582 + $0xe08] sm:$0xff] %v1481
          %v1483 = vld [vmem:[%s581 + $0xe10] sm:$0xff]
          %1484 = vst [vmem:[%s582 + $0xe10] sm:$0xff] %v1483
          %v1485 = vld [vmem:[%s581 + $0xe18] sm:$0xff]
          %1486 = vst [vmem:[%s582 + $0xe18] sm:$0xff] %v1485
          %v1487 = vld [vmem:[%s581 + $0xe20] sm:$0xff]
          %1488 = vst [vmem:[%s582 + $0xe20] sm:$0xff] %v1487
          %v1489 = vld [vmem:[%s581 + $0xe28] sm:$0xff]
          %1490 = vst [vmem:[%s582 + $0xe28] sm:$0xff] %v1489
          %v1491 = vld [vmem:[%s581 + $0xe30] sm:$0xff]
          %1492 = vst [vmem:[%s582 + $0xe30] sm:$0xff] %v1491
          %v1493 = vld [vmem:[%s581 + $0xe38] sm:$0xff]
          %1494 = vst [vmem:[%s582 + $0xe38] sm:$0xff] %v1493
          %v1495 = vld [vmem:[%s581 + $0xe40] sm:$0xff]
          %1496 = vst [vmem:[%s582 + $0xe40] sm:$0xff] %v1495
          %v1497 = vld [vmem:[%s581 + $0xe48] sm:$0xff]
          %1498 = vst [vmem:[%s582 + $0xe48] sm:$0xff] %v1497
          %v1499 = vld [vmem:[%s581 + $0xe50] sm:$0xff]
          %1500 = vst [vmem:[%s582 + $0xe50] sm:$0xff] %v1499
          %v1501 = vld [vmem:[%s581 + $0xe58] sm:$0xff]
          %1502 = vst [vmem:[%s582 + $0xe58] sm:$0xff] %v1501
          %v1503 = vld [vmem:[%s581 + $0xe60] sm:$0xff]
          %1504 = vst [vmem:[%s582 + $0xe60] sm:$0xff] %v1503
          %v1505 = vld [vmem:[%s581 + $0xe68] sm:$0xff]
          %1506 = vst [vmem:[%s582 + $0xe68] sm:$0xff] %v1505
          %v1507 = vld [vmem:[%s581 + $0xe70] sm:$0xff]
          %1508 = vst [vmem:[%s582 + $0xe70] sm:$0xff] %v1507
          %v1509 = vld [vmem:[%s581 + $0xe78] sm:$0xff]
          %1510 = vst [vmem:[%s582 + $0xe78] sm:$0xff] %v1509
          %v1511 = vld [vmem:[%s581 + $0xe80] sm:$0xff]
          %1512 = vst [vmem:[%s582 + $0xe80] sm:$0xff] %v1511
          %v1513 = vld [vmem:[%s581 + $0xe88] sm:$0xff]
          %1514 = vst [vmem:[%s582 + $0xe88] sm:$0xff] %v1513
          %v1515 = vld [vmem:[%s581 + $0xe90] sm:$0xff]
          %1516 = vst [vmem:[%s582 + $0xe90] sm:$0xff] %v1515
          %v1517 = vld [vmem:[%s581 + $0xe98] sm:$0xff]
          %1518 = vst [vmem:[%s582 + $0xe98] sm:$0xff] %v1517
          %v1519 = vld [vmem:[%s581 + $0xea0] sm:$0xff]
          %1520 = vst [vmem:[%s582 + $0xea0] sm:$0xff] %v1519
          %v1521 = vld [vmem:[%s581 + $0xea8] sm:$0xff]
          %1522 = vst [vmem:[%s582 + $0xea8] sm:$0xff] %v1521
          %v1523 = vld [vmem:[%s581 + $0xeb0] sm:$0xff]
          %1524 = vst [vmem:[%s582 + $0xeb0] sm:$0xff] %v1523
          %v1525 = vld [vmem:[%s581 + $0xeb8] sm:$0xff]
          %1526 = vst [vmem:[%s582 + $0xeb8] sm:$0xff] %v1525
          %v1527 = vld [vmem:[%s581 + $0xec0] sm:$0xff]
          %1528 = vst [vmem:[%s582 + $0xec0] sm:$0xff] %v1527
          %v1529 = vld [vmem:[%s581 + $0xec8] sm:$0xff]
          %1530 = vst [vmem:[%s582 + $0xec8] sm:$0xff] %v1529
          %v1531 = vld [vmem:[%s581 + $0xed0] sm:$0xff]
          %1532 = vst [vmem:[%s582 + $0xed0] sm:$0xff] %v1531
          %v1533 = vld [vmem:[%s581 + $0xed8] sm:$0xff]
          %1534 = vst [vmem:[%s582 + $0xed8] sm:$0xff] %v1533
          %v1535 = vld [vmem:[%s581 + $0xee0] sm:$0xff]
          %1536 = vst [vmem:[%s582 + $0xee0] sm:$0xff] %v1535
          %v1537 = vld [vmem:[%s581 + $0xee8] sm:$0xff]
          %1538 = vst [vmem:[%s582 + $0xee8] sm:$0xff] %v1537
          %v1539 = vld [vmem:[%s581 + $0xef0] sm:$0xff]
          %1540 = vst [vmem:[%s582 + $0xef0] sm:$0xff] %v1539
          %v1541 = vld [vmem:[%s581 + $0xef8] sm:$0xff]
          %1542 = vst [vmem:[%s582 + $0xef8] sm:$0xff] %v1541
          %v1543 = vld [vmem:[%s581 + $0xf00] sm:$0xff]
          %1544 = vst [vmem:[%s582 + $0xf00] sm:$0xff] %v1543
          %v1545 = vld [vmem:[%s581 + $0xf08] sm:$0xff]
          %1546 = vst [vmem:[%s582 + $0xf08] sm:$0xff] %v1545
          %v1547 = vld [vmem:[%s581 + $0xf10] sm:$0xff]
          %1548 = vst [vmem:[%s582 + $0xf10] sm:$0xff] %v1547
          %v1549 = vld [vmem:[%s581 + $0xf18] sm:$0xff]
          %1550 = vst [vmem:[%s582 + $0xf18] sm:$0xff] %v1549
          %v1551 = vld [vmem:[%s581 + $0xf20] sm:$0xff]
          %1552 = vst [vmem:[%s582 + $0xf20] sm:$0xff] %v1551
          %v1553 = vld [vmem:[%s581 + $0xf28] sm:$0xff]
          %1554 = vst [vmem:[%s582 + $0xf28] sm:$0xff] %v1553
          %v1555 = vld [vmem:[%s581 + $0xf30] sm:$0xff]
          %1556 = vst [vmem:[%s582 + $0xf30] sm:$0xff] %v1555
          %v1557 = vld [vmem:[%s581 + $0xf38] sm:$0xff]
          %1558 = vst [vmem:[%s582 + $0xf38] sm:$0xff] %v1557
          %v1559 = vld [vmem:[%s581 + $0xf40] sm:$0xff]
          %1560 = vst [vmem:[%s582 + $0xf40] sm:$0xff] %v1559
          %v1561 = vld [vmem:[%s581 + $0xf48] sm:$0xff]
          %1562 = vst [vmem:[%s582 + $0xf48] sm:$0xff] %v1561
          %v1563 = vld [vmem:[%s581 + $0xf50] sm:$0xff]
          %1564 = vst [vmem:[%s582 + $0xf50] sm:$0xff] %v1563
          %v1565 = vld [vmem:[%s581 + $0xf58] sm:$0xff]
          %1566 = vst [vmem:[%s582 + $0xf58] sm:$0xff] %v1565
          %v1567 = vld [vmem:[%s581 + $0xf60] sm:$0xff]
          %1568 = vst [vmem:[%s582 + $0xf60] sm:$0xff] %v1567
          %v1569 = vld [vmem:[%s581 + $0xf68] sm:$0xff]
          %1570 = vst [vmem:[%s582 + $0xf68] sm:$0xff] %v1569
          %v1571 = vld [vmem:[%s581 + $0xf70] sm:$0xff]
          %1572 = vst [vmem:[%s582 + $0xf70] sm:$0xff] %v1571
          %v1573 = vld [vmem:[%s581 + $0xf78] sm:$0xff]
          %1574 = vst [vmem:[%s582 + $0xf78] sm:$0xff] %v1573
          %v1575 = vld [vmem:[%s581 + $0xf80] sm:$0xff]
          %1576 = vst [vmem:[%s582 + $0xf80] sm:$0xff] %v1575
          %v1577 = vld [vmem:[%s581 + $0xf88] sm:$0xff]
          %1578 = vst [vmem:[%s582 + $0xf88] sm:$0xff] %v1577
          %v1579 = vld [vmem:[%s581 + $0xf90] sm:$0xff]
          %1580 = vst [vmem:[%s582 + $0xf90] sm:$0xff] %v1579
          %v1581 = vld [vmem:[%s581 + $0xf98] sm:$0xff]
          %1582 = vst [vmem:[%s582 + $0xf98] sm:$0xff] %v1581
          %v1583 = vld [vmem:[%s581 + $0xfa0] sm:$0xff]
          %1584 = vst [vmem:[%s582 + $0xfa0] sm:$0xff] %v1583
          %v1585 = vld [vmem:[%s581 + $0xfa8] sm:$0xff]
          %1586 = vst [vmem:[%s582 + $0xfa8] sm:$0xff] %v1585
          %v1587 = vld [vmem:[%s581 + $0xfb0] sm:$0xff]
          %1588 = vst [vmem:[%s582 + $0xfb0] sm:$0xff] %v1587
          %v1589 = vld [vmem:[%s581 + $0xfb8] sm:$0xff]
          %1590 = vst [vmem:[%s582 + $0xfb8] sm:$0xff] %v1589
          %v1591 = vld [vmem:[%s581 + $0xfc0] sm:$0xff]
          %1592 = vst [vmem:[%s582 + $0xfc0] sm:$0xff] %v1591
          %v1593 = vld [vmem:[%s581 + $0xfc8] sm:$0xff]
          %1594 = vst [vmem:[%s582 + $0xfc8] sm:$0xff] %v1593
          %v1595 = vld [vmem:[%s581 + $0xfd0] sm:$0xff]
          %1596 = vst [vmem:[%s582 + $0xfd0] sm:$0xff] %v1595
          %v1597 = vld [vmem:[%s581 + $0xfd8] sm:$0xff]
          %1598 = vst [vmem:[%s582 + $0xfd8] sm:$0xff] %v1597
          %v1599 = vld [vmem:[%s581 + $0xfe0] sm:$0xff]
          %1600 = vst [vmem:[%s582 + $0xfe0] sm:$0xff] %v1599
          %v1601 = vld [vmem:[%s581 + $0xfe8] sm:$0xff]
          %1602 = vst [vmem:[%s582 + $0xfe8] sm:$0xff] %v1601
          %v1603 = vld [vmem:[%s581 + $0xff0] sm:$0xff]
          %1604 = vst [vmem:[%s582 + $0xff0] sm:$0xff] %v1603
          %v1605 = vld [vmem:[%s581 + $0xff8] sm:$0xff]
          %1606 = vst [vmem:[%s582 + $0xff8] sm:$0xff] %v1605
        $region169: #{triplet_hdml_forward.1} parent=163 // loop_footer
          %s580 = sadd.s32 1, %s576
        $region170: #{triplet_hdml_forward.1} parent=163 // loop_footer_branch
          %575 = sbr.rel target = $region166
        $region171: #{triplet_hdml_forward.1} parent=163 // loop_exit
          _
      $region164: #{triplet_hdml_forward.1} parent=148 // pred_fallthru
        _
      %p1607 = pneg %p571
      // Predicated region
      $region172: #{triplet_hdml_forward.1} parent=148 // pred_check
        _
      $region173: #{triplet_hdml_forward.1} parent=148 // pred_check_branch
        %1609 = sbr.rel (%p571) target = $region175
      $region174: #{triplet_hdml_forward.1} parent=148 // pred_region
        %s1610 = sand.u32 4096, 7
      $region175: #{triplet_hdml_forward.1} parent=148 // pred_fallthru
        _
    $region149: #{triplet_hdml_forward.1} parent=1 // pred_fallthru
      _
    // Predicated region
    $region150: #{triplet_hdml_forward.1} parent=1 // pred_check
      %p555 = pneg %p551
    $region151: #{triplet_hdml_forward.1} parent=1 // pred_check_branch
      %557 = sbr.rel (%p555) target = $region153
    $region152: #{triplet_hdml_forward.1} parent=1 // pred_region
      %s558 = sshll.u32 1, 4096
      %s559 = ssub.s32 %s558, 1
      loop: start=0, step=1, limit=1
      $region154: #{triplet_hdml_forward.1} parent=152 // loop_pre_header
        _
      $region155: #{triplet_hdml_forward.1} parent=152 // loop_header
        %s561 = sphi 0, %s565
        %p562 = scmp.ge.s32.totalorder %s561, 1
        %s566 = sphi %s15, %s15
        %s567 = sphi [#allocation4], [#allocation4]
      $region156: #{triplet_hdml_forward.1} parent=152 // loop_header_branch
        %564 = sbr.rel (%p562) target = $region160
      $region157: #{triplet_hdml_forward.1} parent=152 // loop_body
        %v568 = vld [vmem:[%s566] sm:%s559]
        %569 = vst [vmem:[%s567] sm:%s559] %v568
      $region158: #{triplet_hdml_forward.1} parent=152 // loop_footer
        %s565 = sadd.s32 1, %s561
      $region159: #{triplet_hdml_forward.1} parent=152 // loop_footer_branch
        %560 = sbr.rel target = $region155
      $region160: #{triplet_hdml_forward.1} parent=152 // loop_exit
        _
    $region153: #{triplet_hdml_forward.1} parent=1 // pred_fallthru
      _
    // Predicated region
    $region176: #{triplet_hdml_forward.1} parent=1 // pred_check
      _
    $region177: #{triplet_hdml_forward.1} parent=1 // pred_check_branch
      %1613 = sbr.rel (0) target = $region179
    $region178: #{triplet_hdml_forward.1} parent=1 // pred_region
      %1614 = vsyncadd %s549, 65536
    $region179: #{triplet_hdml_forward.1} parent=1 // pred_fallthru
      _
    %s1615 = scalar_lea.sflag [#allocation7], 3
    %p1617 = scmp.lt.u32.totalorder 1024, 8
    %p1618 = pneg %p1617
    // Predicated region
    $region180: #{triplet_hdml_forward.1} parent=1 // pred_check
      _
    $region181: #{triplet_hdml_forward.1} parent=1 // pred_check_branch
      %1620 = sbr.rel (%p1617) target = $region183
    $region182: #{triplet_hdml_forward.1} parent=1 // pred_region
      %s1636 = sand.u32 1024, 7
      %p1637 = scmp.eq.s32.totalorder %s1636, 0
      // Predicated region
      $region195: #{triplet_hdml_forward.1} parent=182 // pred_check
        %p1638 = pneg %p1637
      $region196: #{triplet_hdml_forward.1} parent=182 // pred_check_branch
        %1640 = sbr.rel (%p1638) target = $region198
      $region197: #{triplet_hdml_forward.1} parent=182 // pred_region
        loop: start=0, step=1, limit=1
        $region199: #{triplet_hdml_forward.1} parent=197 // loop_pre_header
          _
        $region200: #{triplet_hdml_forward.1} parent=197 // loop_header
          %s1642 = sphi 0, %s1646
          %p1643 = scmp.ge.s32.totalorder %s1642, 1
          %s1647 = sphi %s19, %s19
          %s1648 = sphi [#allocation5], [#allocation5]
        $region201: #{triplet_hdml_forward.1} parent=197 // loop_header_branch
          %1645 = sbr.rel (%p1643) target = $region205
        $region202: #{triplet_hdml_forward.1} parent=197 // loop_body
          %v1649 = vld [vmem:[%s1647] sm:$0xff]
          %1650 = vst [vmem:[%s1648] sm:$0xff] %v1649
          %v1651 = vld [vmem:[%s1647 + $0x8] sm:$0xff]
          %1652 = vst [vmem:[%s1648 + $0x8] sm:$0xff] %v1651
          %v1653 = vld [vmem:[%s1647 + $0x10] sm:$0xff]
          %1654 = vst [vmem:[%s1648 + $0x10] sm:$0xff] %v1653
          %v1655 = vld [vmem:[%s1647 + $0x18] sm:$0xff]
          %1656 = vst [vmem:[%s1648 + $0x18] sm:$0xff] %v1655
          %v1657 = vld [vmem:[%s1647 + $0x20] sm:$0xff]
          %1658 = vst [vmem:[%s1648 + $0x20] sm:$0xff] %v1657
          %v1659 = vld [vmem:[%s1647 + $0x28] sm:$0xff]
          %1660 = vst [vmem:[%s1648 + $0x28] sm:$0xff] %v1659
          %v1661 = vld [vmem:[%s1647 + $0x30] sm:$0xff]
          %1662 = vst [vmem:[%s1648 + $0x30] sm:$0xff] %v1661
          %v1663 = vld [vmem:[%s1647 + $0x38] sm:$0xff]
          %1664 = vst [vmem:[%s1648 + $0x38] sm:$0xff] %v1663
          %v1665 = vld [vmem:[%s1647 + $0x40] sm:$0xff]
          %1666 = vst [vmem:[%s1648 + $0x40] sm:$0xff] %v1665
          %v1667 = vld [vmem:[%s1647 + $0x48] sm:$0xff]
          %1668 = vst [vmem:[%s1648 + $0x48] sm:$0xff] %v1667
          %v1669 = vld [vmem:[%s1647 + $0x50] sm:$0xff]
          %1670 = vst [vmem:[%s1648 + $0x50] sm:$0xff] %v1669
          %v1671 = vld [vmem:[%s1647 + $0x58] sm:$0xff]
          %1672 = vst [vmem:[%s1648 + $0x58] sm:$0xff] %v1671
          %v1673 = vld [vmem:[%s1647 + $0x60] sm:$0xff]
          %1674 = vst [vmem:[%s1648 + $0x60] sm:$0xff] %v1673
          %v1675 = vld [vmem:[%s1647 + $0x68] sm:$0xff]
          %1676 = vst [vmem:[%s1648 + $0x68] sm:$0xff] %v1675
          %v1677 = vld [vmem:[%s1647 + $0x70] sm:$0xff]
          %1678 = vst [vmem:[%s1648 + $0x70] sm:$0xff] %v1677
          %v1679 = vld [vmem:[%s1647 + $0x78] sm:$0xff]
          %1680 = vst [vmem:[%s1648 + $0x78] sm:$0xff] %v1679
          %v1681 = vld [vmem:[%s1647 + $0x80] sm:$0xff]
          %1682 = vst [vmem:[%s1648 + $0x80] sm:$0xff] %v1681
          %v1683 = vld [vmem:[%s1647 + $0x88] sm:$0xff]
          %1684 = vst [vmem:[%s1648 + $0x88] sm:$0xff] %v1683
          %v1685 = vld [vmem:[%s1647 + $0x90] sm:$0xff]
          %1686 = vst [vmem:[%s1648 + $0x90] sm:$0xff] %v1685
          %v1687 = vld [vmem:[%s1647 + $0x98] sm:$0xff]
          %1688 = vst [vmem:[%s1648 + $0x98] sm:$0xff] %v1687
          %v1689 = vld [vmem:[%s1647 + $0xa0] sm:$0xff]
          %1690 = vst [vmem:[%s1648 + $0xa0] sm:$0xff] %v1689
          %v1691 = vld [vmem:[%s1647 + $0xa8] sm:$0xff]
          %1692 = vst [vmem:[%s1648 + $0xa8] sm:$0xff] %v1691
          %v1693 = vld [vmem:[%s1647 + $0xb0] sm:$0xff]
          %1694 = vst [vmem:[%s1648 + $0xb0] sm:$0xff] %v1693
          %v1695 = vld [vmem:[%s1647 + $0xb8] sm:$0xff]
          %1696 = vst [vmem:[%s1648 + $0xb8] sm:$0xff] %v1695
          %v1697 = vld [vmem:[%s1647 + $0xc0] sm:$0xff]
          %1698 = vst [vmem:[%s1648 + $0xc0] sm:$0xff] %v1697
          %v1699 = vld [vmem:[%s1647 + $0xc8] sm:$0xff]
          %1700 = vst [vmem:[%s1648 + $0xc8] sm:$0xff] %v1699
          %v1701 = vld [vmem:[%s1647 + $0xd0] sm:$0xff]
          %1702 = vst [vmem:[%s1648 + $0xd0] sm:$0xff] %v1701
          %v1703 = vld [vmem:[%s1647 + $0xd8] sm:$0xff]
          %1704 = vst [vmem:[%s1648 + $0xd8] sm:$0xff] %v1703
          %v1705 = vld [vmem:[%s1647 + $0xe0] sm:$0xff]
          %1706 = vst [vmem:[%s1648 + $0xe0] sm:$0xff] %v1705
          %v1707 = vld [vmem:[%s1647 + $0xe8] sm:$0xff]
          %1708 = vst [vmem:[%s1648 + $0xe8] sm:$0xff] %v1707
          %v1709 = vld [vmem:[%s1647 + $0xf0] sm:$0xff]
          %1710 = vst [vmem:[%s1648 + $0xf0] sm:$0xff] %v1709
          %v1711 = vld [vmem:[%s1647 + $0xf8] sm:$0xff]
          %1712 = vst [vmem:[%s1648 + $0xf8] sm:$0xff] %v1711
          %v1713 = vld [vmem:[%s1647 + $0x100] sm:$0xff]
          %1714 = vst [vmem:[%s1648 + $0x100] sm:$0xff] %v1713
          %v1715 = vld [vmem:[%s1647 + $0x108] sm:$0xff]
          %1716 = vst [vmem:[%s1648 + $0x108] sm:$0xff] %v1715
          %v1717 = vld [vmem:[%s1647 + $0x110] sm:$0xff]
          %1718 = vst [vmem:[%s1648 + $0x110] sm:$0xff] %v1717
          %v1719 = vld [vmem:[%s1647 + $0x118] sm:$0xff]
          %1720 = vst [vmem:[%s1648 + $0x118] sm:$0xff] %v1719
          %v1721 = vld [vmem:[%s1647 + $0x120] sm:$0xff]
          %1722 = vst [vmem:[%s1648 + $0x120] sm:$0xff] %v1721
          %v1723 = vld [vmem:[%s1647 + $0x128] sm:$0xff]
          %1724 = vst [vmem:[%s1648 + $0x128] sm:$0xff] %v1723
          %v1725 = vld [vmem:[%s1647 + $0x130] sm:$0xff]
          %1726 = vst [vmem:[%s1648 + $0x130] sm:$0xff] %v1725
          %v1727 = vld [vmem:[%s1647 + $0x138] sm:$0xff]
          %1728 = vst [vmem:[%s1648 + $0x138] sm:$0xff] %v1727
          %v1729 = vld [vmem:[%s1647 + $0x140] sm:$0xff]
          %1730 = vst [vmem:[%s1648 + $0x140] sm:$0xff] %v1729
          %v1731 = vld [vmem:[%s1647 + $0x148] sm:$0xff]
          %1732 = vst [vmem:[%s1648 + $0x148] sm:$0xff] %v1731
          %v1733 = vld [vmem:[%s1647 + $0x150] sm:$0xff]
          %1734 = vst [vmem:[%s1648 + $0x150] sm:$0xff] %v1733
          %v1735 = vld [vmem:[%s1647 + $0x158] sm:$0xff]
          %1736 = vst [vmem:[%s1648 + $0x158] sm:$0xff] %v1735
          %v1737 = vld [vmem:[%s1647 + $0x160] sm:$0xff]
          %1738 = vst [vmem:[%s1648 + $0x160] sm:$0xff] %v1737
          %v1739 = vld [vmem:[%s1647 + $0x168] sm:$0xff]
          %1740 = vst [vmem:[%s1648 + $0x168] sm:$0xff] %v1739
          %v1741 = vld [vmem:[%s1647 + $0x170] sm:$0xff]
          %1742 = vst [vmem:[%s1648 + $0x170] sm:$0xff] %v1741
          %v1743 = vld [vmem:[%s1647 + $0x178] sm:$0xff]
          %1744 = vst [vmem:[%s1648 + $0x178] sm:$0xff] %v1743
          %v1745 = vld [vmem:[%s1647 + $0x180] sm:$0xff]
          %1746 = vst [vmem:[%s1648 + $0x180] sm:$0xff] %v1745
          %v1747 = vld [vmem:[%s1647 + $0x188] sm:$0xff]
          %1748 = vst [vmem:[%s1648 + $0x188] sm:$0xff] %v1747
          %v1749 = vld [vmem:[%s1647 + $0x190] sm:$0xff]
          %1750 = vst [vmem:[%s1648 + $0x190] sm:$0xff] %v1749
          %v1751 = vld [vmem:[%s1647 + $0x198] sm:$0xff]
          %1752 = vst [vmem:[%s1648 + $0x198] sm:$0xff] %v1751
          %v1753 = vld [vmem:[%s1647 + $0x1a0] sm:$0xff]
          %1754 = vst [vmem:[%s1648 + $0x1a0] sm:$0xff] %v1753
          %v1755 = vld [vmem:[%s1647 + $0x1a8] sm:$0xff]
          %1756 = vst [vmem:[%s1648 + $0x1a8] sm:$0xff] %v1755
          %v1757 = vld [vmem:[%s1647 + $0x1b0] sm:$0xff]
          %1758 = vst [vmem:[%s1648 + $0x1b0] sm:$0xff] %v1757
          %v1759 = vld [vmem:[%s1647 + $0x1b8] sm:$0xff]
          %1760 = vst [vmem:[%s1648 + $0x1b8] sm:$0xff] %v1759
          %v1761 = vld [vmem:[%s1647 + $0x1c0] sm:$0xff]
          %1762 = vst [vmem:[%s1648 + $0x1c0] sm:$0xff] %v1761
          %v1763 = vld [vmem:[%s1647 + $0x1c8] sm:$0xff]
          %1764 = vst [vmem:[%s1648 + $0x1c8] sm:$0xff] %v1763
          %v1765 = vld [vmem:[%s1647 + $0x1d0] sm:$0xff]
          %1766 = vst [vmem:[%s1648 + $0x1d0] sm:$0xff] %v1765
          %v1767 = vld [vmem:[%s1647 + $0x1d8] sm:$0xff]
          %1768 = vst [vmem:[%s1648 + $0x1d8] sm:$0xff] %v1767
          %v1769 = vld [vmem:[%s1647 + $0x1e0] sm:$0xff]
          %1770 = vst [vmem:[%s1648 + $0x1e0] sm:$0xff] %v1769
          %v1771 = vld [vmem:[%s1647 + $0x1e8] sm:$0xff]
          %1772 = vst [vmem:[%s1648 + $0x1e8] sm:$0xff] %v1771
          %v1773 = vld [vmem:[%s1647 + $0x1f0] sm:$0xff]
          %1774 = vst [vmem:[%s1648 + $0x1f0] sm:$0xff] %v1773
          %v1775 = vld [vmem:[%s1647 + $0x1f8] sm:$0xff]
          %1776 = vst [vmem:[%s1648 + $0x1f8] sm:$0xff] %v1775
          %v1777 = vld [vmem:[%s1647 + $0x200] sm:$0xff]
          %1778 = vst [vmem:[%s1648 + $0x200] sm:$0xff] %v1777
          %v1779 = vld [vmem:[%s1647 + $0x208] sm:$0xff]
          %1780 = vst [vmem:[%s1648 + $0x208] sm:$0xff] %v1779
          %v1781 = vld [vmem:[%s1647 + $0x210] sm:$0xff]
          %1782 = vst [vmem:[%s1648 + $0x210] sm:$0xff] %v1781
          %v1783 = vld [vmem:[%s1647 + $0x218] sm:$0xff]
          %1784 = vst [vmem:[%s1648 + $0x218] sm:$0xff] %v1783
          %v1785 = vld [vmem:[%s1647 + $0x220] sm:$0xff]
          %1786 = vst [vmem:[%s1648 + $0x220] sm:$0xff] %v1785
          %v1787 = vld [vmem:[%s1647 + $0x228] sm:$0xff]
          %1788 = vst [vmem:[%s1648 + $0x228] sm:$0xff] %v1787
          %v1789 = vld [vmem:[%s1647 + $0x230] sm:$0xff]
          %1790 = vst [vmem:[%s1648 + $0x230] sm:$0xff] %v1789
          %v1791 = vld [vmem:[%s1647 + $0x238] sm:$0xff]
          %1792 = vst [vmem:[%s1648 + $0x238] sm:$0xff] %v1791
          %v1793 = vld [vmem:[%s1647 + $0x240] sm:$0xff]
          %1794 = vst [vmem:[%s1648 + $0x240] sm:$0xff] %v1793
          %v1795 = vld [vmem:[%s1647 + $0x248] sm:$0xff]
          %1796 = vst [vmem:[%s1648 + $0x248] sm:$0xff] %v1795
          %v1797 = vld [vmem:[%s1647 + $0x250] sm:$0xff]
          %1798 = vst [vmem:[%s1648 + $0x250] sm:$0xff] %v1797
          %v1799 = vld [vmem:[%s1647 + $0x258] sm:$0xff]
          %1800 = vst [vmem:[%s1648 + $0x258] sm:$0xff] %v1799
          %v1801 = vld [vmem:[%s1647 + $0x260] sm:$0xff]
          %1802 = vst [vmem:[%s1648 + $0x260] sm:$0xff] %v1801
          %v1803 = vld [vmem:[%s1647 + $0x268] sm:$0xff]
          %1804 = vst [vmem:[%s1648 + $0x268] sm:$0xff] %v1803
          %v1805 = vld [vmem:[%s1647 + $0x270] sm:$0xff]
          %1806 = vst [vmem:[%s1648 + $0x270] sm:$0xff] %v1805
          %v1807 = vld [vmem:[%s1647 + $0x278] sm:$0xff]
          %1808 = vst [vmem:[%s1648 + $0x278] sm:$0xff] %v1807
          %v1809 = vld [vmem:[%s1647 + $0x280] sm:$0xff]
          %1810 = vst [vmem:[%s1648 + $0x280] sm:$0xff] %v1809
          %v1811 = vld [vmem:[%s1647 + $0x288] sm:$0xff]
          %1812 = vst [vmem:[%s1648 + $0x288] sm:$0xff] %v1811
          %v1813 = vld [vmem:[%s1647 + $0x290] sm:$0xff]
          %1814 = vst [vmem:[%s1648 + $0x290] sm:$0xff] %v1813
          %v1815 = vld [vmem:[%s1647 + $0x298] sm:$0xff]
          %1816 = vst [vmem:[%s1648 + $0x298] sm:$0xff] %v1815
          %v1817 = vld [vmem:[%s1647 + $0x2a0] sm:$0xff]
          %1818 = vst [vmem:[%s1648 + $0x2a0] sm:$0xff] %v1817
          %v1819 = vld [vmem:[%s1647 + $0x2a8] sm:$0xff]
          %1820 = vst [vmem:[%s1648 + $0x2a8] sm:$0xff] %v1819
          %v1821 = vld [vmem:[%s1647 + $0x2b0] sm:$0xff]
          %1822 = vst [vmem:[%s1648 + $0x2b0] sm:$0xff] %v1821
          %v1823 = vld [vmem:[%s1647 + $0x2b8] sm:$0xff]
          %1824 = vst [vmem:[%s1648 + $0x2b8] sm:$0xff] %v1823
          %v1825 = vld [vmem:[%s1647 + $0x2c0] sm:$0xff]
          %1826 = vst [vmem:[%s1648 + $0x2c0] sm:$0xff] %v1825
          %v1827 = vld [vmem:[%s1647 + $0x2c8] sm:$0xff]
          %1828 = vst [vmem:[%s1648 + $0x2c8] sm:$0xff] %v1827
          %v1829 = vld [vmem:[%s1647 + $0x2d0] sm:$0xff]
          %1830 = vst [vmem:[%s1648 + $0x2d0] sm:$0xff] %v1829
          %v1831 = vld [vmem:[%s1647 + $0x2d8] sm:$0xff]
          %1832 = vst [vmem:[%s1648 + $0x2d8] sm:$0xff] %v1831
          %v1833 = vld [vmem:[%s1647 + $0x2e0] sm:$0xff]
          %1834 = vst [vmem:[%s1648 + $0x2e0] sm:$0xff] %v1833
          %v1835 = vld [vmem:[%s1647 + $0x2e8] sm:$0xff]
          %1836 = vst [vmem:[%s1648 + $0x2e8] sm:$0xff] %v1835
          %v1837 = vld [vmem:[%s1647 + $0x2f0] sm:$0xff]
          %1838 = vst [vmem:[%s1648 + $0x2f0] sm:$0xff] %v1837
          %v1839 = vld [vmem:[%s1647 + $0x2f8] sm:$0xff]
          %1840 = vst [vmem:[%s1648 + $0x2f8] sm:$0xff] %v1839
          %v1841 = vld [vmem:[%s1647 + $0x300] sm:$0xff]
          %1842 = vst [vmem:[%s1648 + $0x300] sm:$0xff] %v1841
          %v1843 = vld [vmem:[%s1647 + $0x308] sm:$0xff]
          %1844 = vst [vmem:[%s1648 + $0x308] sm:$0xff] %v1843
          %v1845 = vld [vmem:[%s1647 + $0x310] sm:$0xff]
          %1846 = vst [vmem:[%s1648 + $0x310] sm:$0xff] %v1845
          %v1847 = vld [vmem:[%s1647 + $0x318] sm:$0xff]
          %1848 = vst [vmem:[%s1648 + $0x318] sm:$0xff] %v1847
          %v1849 = vld [vmem:[%s1647 + $0x320] sm:$0xff]
          %1850 = vst [vmem:[%s1648 + $0x320] sm:$0xff] %v1849
          %v1851 = vld [vmem:[%s1647 + $0x328] sm:$0xff]
          %1852 = vst [vmem:[%s1648 + $0x328] sm:$0xff] %v1851
          %v1853 = vld [vmem:[%s1647 + $0x330] sm:$0xff]
          %1854 = vst [vmem:[%s1648 + $0x330] sm:$0xff] %v1853
          %v1855 = vld [vmem:[%s1647 + $0x338] sm:$0xff]
          %1856 = vst [vmem:[%s1648 + $0x338] sm:$0xff] %v1855
          %v1857 = vld [vmem:[%s1647 + $0x340] sm:$0xff]
          %1858 = vst [vmem:[%s1648 + $0x340] sm:$0xff] %v1857
          %v1859 = vld [vmem:[%s1647 + $0x348] sm:$0xff]
          %1860 = vst [vmem:[%s1648 + $0x348] sm:$0xff] %v1859
          %v1861 = vld [vmem:[%s1647 + $0x350] sm:$0xff]
          %1862 = vst [vmem:[%s1648 + $0x350] sm:$0xff] %v1861
          %v1863 = vld [vmem:[%s1647 + $0x358] sm:$0xff]
          %1864 = vst [vmem:[%s1648 + $0x358] sm:$0xff] %v1863
          %v1865 = vld [vmem:[%s1647 + $0x360] sm:$0xff]
          %1866 = vst [vmem:[%s1648 + $0x360] sm:$0xff] %v1865
          %v1867 = vld [vmem:[%s1647 + $0x368] sm:$0xff]
          %1868 = vst [vmem:[%s1648 + $0x368] sm:$0xff] %v1867
          %v1869 = vld [vmem:[%s1647 + $0x370] sm:$0xff]
          %1870 = vst [vmem:[%s1648 + $0x370] sm:$0xff] %v1869
          %v1871 = vld [vmem:[%s1647 + $0x378] sm:$0xff]
          %1872 = vst [vmem:[%s1648 + $0x378] sm:$0xff] %v1871
          %v1873 = vld [vmem:[%s1647 + $0x380] sm:$0xff]
          %1874 = vst [vmem:[%s1648 + $0x380] sm:$0xff] %v1873
          %v1875 = vld [vmem:[%s1647 + $0x388] sm:$0xff]
          %1876 = vst [vmem:[%s1648 + $0x388] sm:$0xff] %v1875
          %v1877 = vld [vmem:[%s1647 + $0x390] sm:$0xff]
          %1878 = vst [vmem:[%s1648 + $0x390] sm:$0xff] %v1877
          %v1879 = vld [vmem:[%s1647 + $0x398] sm:$0xff]
          %1880 = vst [vmem:[%s1648 + $0x398] sm:$0xff] %v1879
          %v1881 = vld [vmem:[%s1647 + $0x3a0] sm:$0xff]
          %1882 = vst [vmem:[%s1648 + $0x3a0] sm:$0xff] %v1881
          %v1883 = vld [vmem:[%s1647 + $0x3a8] sm:$0xff]
          %1884 = vst [vmem:[%s1648 + $0x3a8] sm:$0xff] %v1883
          %v1885 = vld [vmem:[%s1647 + $0x3b0] sm:$0xff]
          %1886 = vst [vmem:[%s1648 + $0x3b0] sm:$0xff] %v1885
          %v1887 = vld [vmem:[%s1647 + $0x3b8] sm:$0xff]
          %1888 = vst [vmem:[%s1648 + $0x3b8] sm:$0xff] %v1887
          %v1889 = vld [vmem:[%s1647 + $0x3c0] sm:$0xff]
          %1890 = vst [vmem:[%s1648 + $0x3c0] sm:$0xff] %v1889
          %v1891 = vld [vmem:[%s1647 + $0x3c8] sm:$0xff]
          %1892 = vst [vmem:[%s1648 + $0x3c8] sm:$0xff] %v1891
          %v1893 = vld [vmem:[%s1647 + $0x3d0] sm:$0xff]
          %1894 = vst [vmem:[%s1648 + $0x3d0] sm:$0xff] %v1893
          %v1895 = vld [vmem:[%s1647 + $0x3d8] sm:$0xff]
          %1896 = vst [vmem:[%s1648 + $0x3d8] sm:$0xff] %v1895
          %v1897 = vld [vmem:[%s1647 + $0x3e0] sm:$0xff]
          %1898 = vst [vmem:[%s1648 + $0x3e0] sm:$0xff] %v1897
          %v1899 = vld [vmem:[%s1647 + $0x3e8] sm:$0xff]
          %1900 = vst [vmem:[%s1648 + $0x3e8] sm:$0xff] %v1899
          %v1901 = vld [vmem:[%s1647 + $0x3f0] sm:$0xff]
          %1902 = vst [vmem:[%s1648 + $0x3f0] sm:$0xff] %v1901
          %v1903 = vld [vmem:[%s1647 + $0x3f8] sm:$0xff]
          %1904 = vst [vmem:[%s1648 + $0x3f8] sm:$0xff] %v1903
        $region203: #{triplet_hdml_forward.1} parent=197 // loop_footer
          %s1646 = sadd.s32 1, %s1642
        $region204: #{triplet_hdml_forward.1} parent=197 // loop_footer_branch
          %1641 = sbr.rel target = $region200
        $region205: #{triplet_hdml_forward.1} parent=197 // loop_exit
          _
      $region198: #{triplet_hdml_forward.1} parent=182 // pred_fallthru
        _
      %p1905 = pneg %p1637
      // Predicated region
      $region206: #{triplet_hdml_forward.1} parent=182 // pred_check
        _
      $region207: #{triplet_hdml_forward.1} parent=182 // pred_check_branch
        %1907 = sbr.rel (%p1637) target = $region209
      $region208: #{triplet_hdml_forward.1} parent=182 // pred_region
        %s1908 = sand.u32 1024, 7
      $region209: #{triplet_hdml_forward.1} parent=182 // pred_fallthru
        _
    $region183: #{triplet_hdml_forward.1} parent=1 // pred_fallthru
      _
    // Predicated region
    $region184: #{triplet_hdml_forward.1} parent=1 // pred_check
      %p1621 = pneg %p1617
    $region185: #{triplet_hdml_forward.1} parent=1 // pred_check_branch
      %1623 = sbr.rel (%p1621) target = $region187
    $region186: #{triplet_hdml_forward.1} parent=1 // pred_region
      %s1624 = sshll.u32 1, 1024
      %s1625 = ssub.s32 %s1624, 1
      loop: start=0, step=1, limit=1
      $region188: #{triplet_hdml_forward.1} parent=186 // loop_pre_header
        _
      $region189: #{triplet_hdml_forward.1} parent=186 // loop_header
        %s1627 = sphi 0, %s1631
        %p1628 = scmp.ge.s32.totalorder %s1627, 1
        %s1632 = sphi %s19, %s19
        %s1633 = sphi [#allocation5], [#allocation5]
      $region190: #{triplet_hdml_forward.1} parent=186 // loop_header_branch
        %1630 = sbr.rel (%p1628) target = $region194
      $region191: #{triplet_hdml_forward.1} parent=186 // loop_body
        %v1634 = vld [vmem:[%s1632] sm:%s1625]
        %1635 = vst [vmem:[%s1633] sm:%s1625] %v1634
      $region192: #{triplet_hdml_forward.1} parent=186 // loop_footer
        %s1631 = sadd.s32 1, %s1627
      $region193: #{triplet_hdml_forward.1} parent=186 // loop_footer_branch
        %1626 = sbr.rel target = $region189
      $region194: #{triplet_hdml_forward.1} parent=186 // loop_exit
        _
    $region187: #{triplet_hdml_forward.1} parent=1 // pred_fallthru
      _
    // Predicated region
    $region210: #{triplet_hdml_forward.1} parent=1 // pred_check
      _
    $region211: #{triplet_hdml_forward.1} parent=1 // pred_check_branch
      %1911 = sbr.rel (0) target = $region213
    $region212: #{triplet_hdml_forward.1} parent=1 // pred_region
      %1912 = vsyncadd %s1615, 16384
    $region213: #{triplet_hdml_forward.1} parent=1 // pred_fallthru
      _
    %s1913 = scalar_lea.sflag [#allocation7], 4
    %p1915 = scmp.lt.u32.totalorder 1024, 8
    %p1916 = pneg %p1915
    // Predicated region
    $region214: #{triplet_hdml_forward.1} parent=1 // pred_check
      _
    $region215: #{triplet_hdml_forward.1} parent=1 // pred_check_branch
      %1918 = sbr.rel (%p1915) target = $region217
    $region216: #{triplet_hdml_forward.1} parent=1 // pred_region
      %s1934 = sand.u32 1024, 7
      %p1935 = scmp.eq.s32.totalorder %s1934, 0
      // Predicated region
      $region229: #{triplet_hdml_forward.1} parent=216 // pred_check
        %p1936 = pneg %p1935
      $region230: #{triplet_hdml_forward.1} parent=216 // pred_check_branch
        %1938 = sbr.rel (%p1936) target = $region232
      $region231: #{triplet_hdml_forward.1} parent=216 // pred_region
        loop: start=0, step=1, limit=1
        $region233: #{triplet_hdml_forward.1} parent=231 // loop_pre_header
          _
        $region234: #{triplet_hdml_forward.1} parent=231 // loop_header
          %s1940 = sphi 0, %s1944
          %p1941 = scmp.ge.s32.totalorder %s1940, 1
          %s1945 = sphi %s21, %s21
          %s1946 = sphi [#allocation6], [#allocation6]
        $region235: #{triplet_hdml_forward.1} parent=231 // loop_header_branch
          %1943 = sbr.rel (%p1941) target = $region239
        $region236: #{triplet_hdml_forward.1} parent=231 // loop_body
          %v1947 = vld [vmem:[%s1945] sm:$0xff]
          %1948 = vst [vmem:[%s1946] sm:$0xff] %v1947
          %v1949 = vld [vmem:[%s1945 + $0x8] sm:$0xff]
          %1950 = vst [vmem:[%s1946 + $0x8] sm:$0xff] %v1949
          %v1951 = vld [vmem:[%s1945 + $0x10] sm:$0xff]
          %1952 = vst [vmem:[%s1946 + $0x10] sm:$0xff] %v1951
          %v1953 = vld [vmem:[%s1945 + $0x18] sm:$0xff]
          %1954 = vst [vmem:[%s1946 + $0x18] sm:$0xff] %v1953
          %v1955 = vld [vmem:[%s1945 + $0x20] sm:$0xff]
          %1956 = vst [vmem:[%s1946 + $0x20] sm:$0xff] %v1955
          %v1957 = vld [vmem:[%s1945 + $0x28] sm:$0xff]
          %1958 = vst [vmem:[%s1946 + $0x28] sm:$0xff] %v1957
          %v1959 = vld [vmem:[%s1945 + $0x30] sm:$0xff]
          %1960 = vst [vmem:[%s1946 + $0x30] sm:$0xff] %v1959
          %v1961 = vld [vmem:[%s1945 + $0x38] sm:$0xff]
          %1962 = vst [vmem:[%s1946 + $0x38] sm:$0xff] %v1961
          %v1963 = vld [vmem:[%s1945 + $0x40] sm:$0xff]
          %1964 = vst [vmem:[%s1946 + $0x40] sm:$0xff] %v1963
          %v1965 = vld [vmem:[%s1945 + $0x48] sm:$0xff]
          %1966 = vst [vmem:[%s1946 + $0x48] sm:$0xff] %v1965
          %v1967 = vld [vmem:[%s1945 + $0x50] sm:$0xff]
          %1968 = vst [vmem:[%s1946 + $0x50] sm:$0xff] %v1967
          %v1969 = vld [vmem:[%s1945 + $0x58] sm:$0xff]
          %1970 = vst [vmem:[%s1946 + $0x58] sm:$0xff] %v1969
          %v1971 = vld [vmem:[%s1945 + $0x60] sm:$0xff]
          %1972 = vst [vmem:[%s1946 + $0x60] sm:$0xff] %v1971
          %v1973 = vld [vmem:[%s1945 + $0x68] sm:$0xff]
          %1974 = vst [vmem:[%s1946 + $0x68] sm:$0xff] %v1973
          %v1975 = vld [vmem:[%s1945 + $0x70] sm:$0xff]
          %1976 = vst [vmem:[%s1946 + $0x70] sm:$0xff] %v1975
          %v1977 = vld [vmem:[%s1945 + $0x78] sm:$0xff]
          %1978 = vst [vmem:[%s1946 + $0x78] sm:$0xff] %v1977
          %v1979 = vld [vmem:[%s1945 + $0x80] sm:$0xff]
          %1980 = vst [vmem:[%s1946 + $0x80] sm:$0xff] %v1979
          %v1981 = vld [vmem:[%s1945 + $0x88] sm:$0xff]
          %1982 = vst [vmem:[%s1946 + $0x88] sm:$0xff] %v1981
          %v1983 = vld [vmem:[%s1945 + $0x90] sm:$0xff]
          %1984 = vst [vmem:[%s1946 + $0x90] sm:$0xff] %v1983
          %v1985 = vld [vmem:[%s1945 + $0x98] sm:$0xff]
          %1986 = vst [vmem:[%s1946 + $0x98] sm:$0xff] %v1985
          %v1987 = vld [vmem:[%s1945 + $0xa0] sm:$0xff]
          %1988 = vst [vmem:[%s1946 + $0xa0] sm:$0xff] %v1987
          %v1989 = vld [vmem:[%s1945 + $0xa8] sm:$0xff]
          %1990 = vst [vmem:[%s1946 + $0xa8] sm:$0xff] %v1989
          %v1991 = vld [vmem:[%s1945 + $0xb0] sm:$0xff]
          %1992 = vst [vmem:[%s1946 + $0xb0] sm:$0xff] %v1991
          %v1993 = vld [vmem:[%s1945 + $0xb8] sm:$0xff]
          %1994 = vst [vmem:[%s1946 + $0xb8] sm:$0xff] %v1993
          %v1995 = vld [vmem:[%s1945 + $0xc0] sm:$0xff]
          %1996 = vst [vmem:[%s1946 + $0xc0] sm:$0xff] %v1995
          %v1997 = vld [vmem:[%s1945 + $0xc8] sm:$0xff]
          %1998 = vst [vmem:[%s1946 + $0xc8] sm:$0xff] %v1997
          %v1999 = vld [vmem:[%s1945 + $0xd0] sm:$0xff]
          %2000 = vst [vmem:[%s1946 + $0xd0] sm:$0xff] %v1999
          %v2001 = vld [vmem:[%s1945 + $0xd8] sm:$0xff]
          %2002 = vst [vmem:[%s1946 + $0xd8] sm:$0xff] %v2001
          %v2003 = vld [vmem:[%s1945 + $0xe0] sm:$0xff]
          %2004 = vst [vmem:[%s1946 + $0xe0] sm:$0xff] %v2003
          %v2005 = vld [vmem:[%s1945 + $0xe8] sm:$0xff]
          %2006 = vst [vmem:[%s1946 + $0xe8] sm:$0xff] %v2005
          %v2007 = vld [vmem:[%s1945 + $0xf0] sm:$0xff]
          %2008 = vst [vmem:[%s1946 + $0xf0] sm:$0xff] %v2007
          %v2009 = vld [vmem:[%s1945 + $0xf8] sm:$0xff]
          %2010 = vst [vmem:[%s1946 + $0xf8] sm:$0xff] %v2009
          %v2011 = vld [vmem:[%s1945 + $0x100] sm:$0xff]
          %2012 = vst [vmem:[%s1946 + $0x100] sm:$0xff] %v2011
          %v2013 = vld [vmem:[%s1945 + $0x108] sm:$0xff]
          %2014 = vst [vmem:[%s1946 + $0x108] sm:$0xff] %v2013
          %v2015 = vld [vmem:[%s1945 + $0x110] sm:$0xff]
          %2016 = vst [vmem:[%s1946 + $0x110] sm:$0xff] %v2015
          %v2017 = vld [vmem:[%s1945 + $0x118] sm:$0xff]
          %2018 = vst [vmem:[%s1946 + $0x118] sm:$0xff] %v2017
          %v2019 = vld [vmem:[%s1945 + $0x120] sm:$0xff]
          %2020 = vst [vmem:[%s1946 + $0x120] sm:$0xff] %v2019
          %v2021 = vld [vmem:[%s1945 + $0x128] sm:$0xff]
          %2022 = vst [vmem:[%s1946 + $0x128] sm:$0xff] %v2021
          %v2023 = vld [vmem:[%s1945 + $0x130] sm:$0xff]
          %2024 = vst [vmem:[%s1946 + $0x130] sm:$0xff] %v2023
          %v2025 = vld [vmem:[%s1945 + $0x138] sm:$0xff]
          %2026 = vst [vmem:[%s1946 + $0x138] sm:$0xff] %v2025
          %v2027 = vld [vmem:[%s1945 + $0x140] sm:$0xff]
          %2028 = vst [vmem:[%s1946 + $0x140] sm:$0xff] %v2027
          %v2029 = vld [vmem:[%s1945 + $0x148] sm:$0xff]
          %2030 = vst [vmem:[%s1946 + $0x148] sm:$0xff] %v2029
          %v2031 = vld [vmem:[%s1945 + $0x150] sm:$0xff]
          %2032 = vst [vmem:[%s1946 + $0x150] sm:$0xff] %v2031
          %v2033 = vld [vmem:[%s1945 + $0x158] sm:$0xff]
          %2034 = vst [vmem:[%s1946 + $0x158] sm:$0xff] %v2033
          %v2035 = vld [vmem:[%s1945 + $0x160] sm:$0xff]
          %2036 = vst [vmem:[%s1946 + $0x160] sm:$0xff] %v2035
          %v2037 = vld [vmem:[%s1945 + $0x168] sm:$0xff]
          %2038 = vst [vmem:[%s1946 + $0x168] sm:$0xff] %v2037
          %v2039 = vld [vmem:[%s1945 + $0x170] sm:$0xff]
          %2040 = vst [vmem:[%s1946 + $0x170] sm:$0xff] %v2039
          %v2041 = vld [vmem:[%s1945 + $0x178] sm:$0xff]
          %2042 = vst [vmem:[%s1946 + $0x178] sm:$0xff] %v2041
          %v2043 = vld [vmem:[%s1945 + $0x180] sm:$0xff]
          %2044 = vst [vmem:[%s1946 + $0x180] sm:$0xff] %v2043
          %v2045 = vld [vmem:[%s1945 + $0x188] sm:$0xff]
          %2046 = vst [vmem:[%s1946 + $0x188] sm:$0xff] %v2045
          %v2047 = vld [vmem:[%s1945 + $0x190] sm:$0xff]
          %2048 = vst [vmem:[%s1946 + $0x190] sm:$0xff] %v2047
          %v2049 = vld [vmem:[%s1945 + $0x198] sm:$0xff]
          %2050 = vst [vmem:[%s1946 + $0x198] sm:$0xff] %v2049
          %v2051 = vld [vmem:[%s1945 + $0x1a0] sm:$0xff]
          %2052 = vst [vmem:[%s1946 + $0x1a0] sm:$0xff] %v2051
          %v2053 = vld [vmem:[%s1945 + $0x1a8] sm:$0xff]
          %2054 = vst [vmem:[%s1946 + $0x1a8] sm:$0xff] %v2053
          %v2055 = vld [vmem:[%s1945 + $0x1b0] sm:$0xff]
          %2056 = vst [vmem:[%s1946 + $0x1b0] sm:$0xff] %v2055
          %v2057 = vld [vmem:[%s1945 + $0x1b8] sm:$0xff]
          %2058 = vst [vmem:[%s1946 + $0x1b8] sm:$0xff] %v2057
          %v2059 = vld [vmem:[%s1945 + $0x1c0] sm:$0xff]
          %2060 = vst [vmem:[%s1946 + $0x1c0] sm:$0xff] %v2059
          %v2061 = vld [vmem:[%s1945 + $0x1c8] sm:$0xff]
          %2062 = vst [vmem:[%s1946 + $0x1c8] sm:$0xff] %v2061
          %v2063 = vld [vmem:[%s1945 + $0x1d0] sm:$0xff]
          %2064 = vst [vmem:[%s1946 + $0x1d0] sm:$0xff] %v2063
          %v2065 = vld [vmem:[%s1945 + $0x1d8] sm:$0xff]
          %2066 = vst [vmem:[%s1946 + $0x1d8] sm:$0xff] %v2065
          %v2067 = vld [vmem:[%s1945 + $0x1e0] sm:$0xff]
          %2068 = vst [vmem:[%s1946 + $0x1e0] sm:$0xff] %v2067
          %v2069 = vld [vmem:[%s1945 + $0x1e8] sm:$0xff]
          %2070 = vst [vmem:[%s1946 + $0x1e8] sm:$0xff] %v2069
          %v2071 = vld [vmem:[%s1945 + $0x1f0] sm:$0xff]
          %2072 = vst [vmem:[%s1946 + $0x1f0] sm:$0xff] %v2071
          %v2073 = vld [vmem:[%s1945 + $0x1f8] sm:$0xff]
          %2074 = vst [vmem:[%s1946 + $0x1f8] sm:$0xff] %v2073
          %v2075 = vld [vmem:[%s1945 + $0x200] sm:$0xff]
          %2076 = vst [vmem:[%s1946 + $0x200] sm:$0xff] %v2075
          %v2077 = vld [vmem:[%s1945 + $0x208] sm:$0xff]
          %2078 = vst [vmem:[%s1946 + $0x208] sm:$0xff] %v2077
          %v2079 = vld [vmem:[%s1945 + $0x210] sm:$0xff]
          %2080 = vst [vmem:[%s1946 + $0x210] sm:$0xff] %v2079
          %v2081 = vld [vmem:[%s1945 + $0x218] sm:$0xff]
          %2082 = vst [vmem:[%s1946 + $0x218] sm:$0xff] %v2081
          %v2083 = vld [vmem:[%s1945 + $0x220] sm:$0xff]
          %2084 = vst [vmem:[%s1946 + $0x220] sm:$0xff] %v2083
          %v2085 = vld [vmem:[%s1945 + $0x228] sm:$0xff]
          %2086 = vst [vmem:[%s1946 + $0x228] sm:$0xff] %v2085
          %v2087 = vld [vmem:[%s1945 + $0x230] sm:$0xff]
          %2088 = vst [vmem:[%s1946 + $0x230] sm:$0xff] %v2087
          %v2089 = vld [vmem:[%s1945 + $0x238] sm:$0xff]
          %2090 = vst [vmem:[%s1946 + $0x238] sm:$0xff] %v2089
          %v2091 = vld [vmem:[%s1945 + $0x240] sm:$0xff]
          %2092 = vst [vmem:[%s1946 + $0x240] sm:$0xff] %v2091
          %v2093 = vld [vmem:[%s1945 + $0x248] sm:$0xff]
          %2094 = vst [vmem:[%s1946 + $0x248] sm:$0xff] %v2093
          %v2095 = vld [vmem:[%s1945 + $0x250] sm:$0xff]
          %2096 = vst [vmem:[%s1946 + $0x250] sm:$0xff] %v2095
          %v2097 = vld [vmem:[%s1945 + $0x258] sm:$0xff]
          %2098 = vst [vmem:[%s1946 + $0x258] sm:$0xff] %v2097
          %v2099 = vld [vmem:[%s1945 + $0x260] sm:$0xff]
          %2100 = vst [vmem:[%s1946 + $0x260] sm:$0xff] %v2099
          %v2101 = vld [vmem:[%s1945 + $0x268] sm:$0xff]
          %2102 = vst [vmem:[%s1946 + $0x268] sm:$0xff] %v2101
          %v2103 = vld [vmem:[%s1945 + $0x270] sm:$0xff]
          %2104 = vst [vmem:[%s1946 + $0x270] sm:$0xff] %v2103
          %v2105 = vld [vmem:[%s1945 + $0x278] sm:$0xff]
          %2106 = vst [vmem:[%s1946 + $0x278] sm:$0xff] %v2105
          %v2107 = vld [vmem:[%s1945 + $0x280] sm:$0xff]
          %2108 = vst [vmem:[%s1946 + $0x280] sm:$0xff] %v2107
          %v2109 = vld [vmem:[%s1945 + $0x288] sm:$0xff]
          %2110 = vst [vmem:[%s1946 + $0x288] sm:$0xff] %v2109
          %v2111 = vld [vmem:[%s1945 + $0x290] sm:$0xff]
          %2112 = vst [vmem:[%s1946 + $0x290] sm:$0xff] %v2111
          %v2113 = vld [vmem:[%s1945 + $0x298] sm:$0xff]
          %2114 = vst [vmem:[%s1946 + $0x298] sm:$0xff] %v2113
          %v2115 = vld [vmem:[%s1945 + $0x2a0] sm:$0xff]
          %2116 = vst [vmem:[%s1946 + $0x2a0] sm:$0xff] %v2115
          %v2117 = vld [vmem:[%s1945 + $0x2a8] sm:$0xff]
          %2118 = vst [vmem:[%s1946 + $0x2a8] sm:$0xff] %v2117
          %v2119 = vld [vmem:[%s1945 + $0x2b0] sm:$0xff]
          %2120 = vst [vmem:[%s1946 + $0x2b0] sm:$0xff] %v2119
          %v2121 = vld [vmem:[%s1945 + $0x2b8] sm:$0xff]
          %2122 = vst [vmem:[%s1946 + $0x2b8] sm:$0xff] %v2121
          %v2123 = vld [vmem:[%s1945 + $0x2c0] sm:$0xff]
          %2124 = vst [vmem:[%s1946 + $0x2c0] sm:$0xff] %v2123
          %v2125 = vld [vmem:[%s1945 + $0x2c8] sm:$0xff]
          %2126 = vst [vmem:[%s1946 + $0x2c8] sm:$0xff] %v2125
          %v2127 = vld [vmem:[%s1945 + $0x2d0] sm:$0xff]
          %2128 = vst [vmem:[%s1946 + $0x2d0] sm:$0xff] %v2127
          %v2129 = vld [vmem:[%s1945 + $0x2d8] sm:$0xff]
          %2130 = vst [vmem:[%s1946 + $0x2d8] sm:$0xff] %v2129
          %v2131 = vld [vmem:[%s1945 + $0x2e0] sm:$0xff]
          %2132 = vst [vmem:[%s1946 + $0x2e0] sm:$0xff] %v2131
          %v2133 = vld [vmem:[%s1945 + $0x2e8] sm:$0xff]
          %2134 = vst [vmem:[%s1946 + $0x2e8] sm:$0xff] %v2133
          %v2135 = vld [vmem:[%s1945 + $0x2f0] sm:$0xff]
          %2136 = vst [vmem:[%s1946 + $0x2f0] sm:$0xff] %v2135
          %v2137 = vld [vmem:[%s1945 + $0x2f8] sm:$0xff]
          %2138 = vst [vmem:[%s1946 + $0x2f8] sm:$0xff] %v2137
          %v2139 = vld [vmem:[%s1945 + $0x300] sm:$0xff]
          %2140 = vst [vmem:[%s1946 + $0x300] sm:$0xff] %v2139
          %v2141 = vld [vmem:[%s1945 + $0x308] sm:$0xff]
          %2142 = vst [vmem:[%s1946 + $0x308] sm:$0xff] %v2141
          %v2143 = vld [vmem:[%s1945 + $0x310] sm:$0xff]
          %2144 = vst [vmem:[%s1946 + $0x310] sm:$0xff] %v2143
          %v2145 = vld [vmem:[%s1945 + $0x318] sm:$0xff]
          %2146 = vst [vmem:[%s1946 + $0x318] sm:$0xff] %v2145
          %v2147 = vld [vmem:[%s1945 + $0x320] sm:$0xff]
          %2148 = vst [vmem:[%s1946 + $0x320] sm:$0xff] %v2147
          %v2149 = vld [vmem:[%s1945 + $0x328] sm:$0xff]
          %2150 = vst [vmem:[%s1946 + $0x328] sm:$0xff] %v2149
          %v2151 = vld [vmem:[%s1945 + $0x330] sm:$0xff]
          %2152 = vst [vmem:[%s1946 + $0x330] sm:$0xff] %v2151
          %v2153 = vld [vmem:[%s1945 + $0x338] sm:$0xff]
          %2154 = vst [vmem:[%s1946 + $0x338] sm:$0xff] %v2153
          %v2155 = vld [vmem:[%s1945 + $0x340] sm:$0xff]
          %2156 = vst [vmem:[%s1946 + $0x340] sm:$0xff] %v2155
          %v2157 = vld [vmem:[%s1945 + $0x348] sm:$0xff]
          %2158 = vst [vmem:[%s1946 + $0x348] sm:$0xff] %v2157
          %v2159 = vld [vmem:[%s1945 + $0x350] sm:$0xff]
          %2160 = vst [vmem:[%s1946 + $0x350] sm:$0xff] %v2159
          %v2161 = vld [vmem:[%s1945 + $0x358] sm:$0xff]
          %2162 = vst [vmem:[%s1946 + $0x358] sm:$0xff] %v2161
          %v2163 = vld [vmem:[%s1945 + $0x360] sm:$0xff]
          %2164 = vst [vmem:[%s1946 + $0x360] sm:$0xff] %v2163
          %v2165 = vld [vmem:[%s1945 + $0x368] sm:$0xff]
          %2166 = vst [vmem:[%s1946 + $0x368] sm:$0xff] %v2165
          %v2167 = vld [vmem:[%s1945 + $0x370] sm:$0xff]
          %2168 = vst [vmem:[%s1946 + $0x370] sm:$0xff] %v2167
          %v2169 = vld [vmem:[%s1945 + $0x378] sm:$0xff]
          %2170 = vst [vmem:[%s1946 + $0x378] sm:$0xff] %v2169
          %v2171 = vld [vmem:[%s1945 + $0x380] sm:$0xff]
          %2172 = vst [vmem:[%s1946 + $0x380] sm:$0xff] %v2171
          %v2173 = vld [vmem:[%s1945 + $0x388] sm:$0xff]
          %2174 = vst [vmem:[%s1946 + $0x388] sm:$0xff] %v2173
          %v2175 = vld [vmem:[%s1945 + $0x390] sm:$0xff]
          %2176 = vst [vmem:[%s1946 + $0x390] sm:$0xff] %v2175
          %v2177 = vld [vmem:[%s1945 + $0x398] sm:$0xff]
          %2178 = vst [vmem:[%s1946 + $0x398] sm:$0xff] %v2177
          %v2179 = vld [vmem:[%s1945 + $0x3a0] sm:$0xff]
          %2180 = vst [vmem:[%s1946 + $0x3a0] sm:$0xff] %v2179
          %v2181 = vld [vmem:[%s1945 + $0x3a8] sm:$0xff]
          %2182 = vst [vmem:[%s1946 + $0x3a8] sm:$0xff] %v2181
          %v2183 = vld [vmem:[%s1945 + $0x3b0] sm:$0xff]
          %2184 = vst [vmem:[%s1946 + $0x3b0] sm:$0xff] %v2183
          %v2185 = vld [vmem:[%s1945 + $0x3b8] sm:$0xff]
          %2186 = vst [vmem:[%s1946 + $0x3b8] sm:$0xff] %v2185
          %v2187 = vld [vmem:[%s1945 + $0x3c0] sm:$0xff]
          %2188 = vst [vmem:[%s1946 + $0x3c0] sm:$0xff] %v2187
          %v2189 = vld [vmem:[%s1945 + $0x3c8] sm:$0xff]
          %2190 = vst [vmem:[%s1946 + $0x3c8] sm:$0xff] %v2189
          %v2191 = vld [vmem:[%s1945 + $0x3d0] sm:$0xff]
          %2192 = vst [vmem:[%s1946 + $0x3d0] sm:$0xff] %v2191
          %v2193 = vld [vmem:[%s1945 + $0x3d8] sm:$0xff]
          %2194 = vst [vmem:[%s1946 + $0x3d8] sm:$0xff] %v2193
          %v2195 = vld [vmem:[%s1945 + $0x3e0] sm:$0xff]
          %2196 = vst [vmem:[%s1946 + $0x3e0] sm:$0xff] %v2195
          %v2197 = vld [vmem:[%s1945 + $0x3e8] sm:$0xff]
          %2198 = vst [vmem:[%s1946 + $0x3e8] sm:$0xff] %v2197
          %v2199 = vld [vmem:[%s1945 + $0x3f0] sm:$0xff]
          %2200 = vst [vmem:[%s1946 + $0x3f0] sm:$0xff] %v2199
          %v2201 = vld [vmem:[%s1945 + $0x3f8] sm:$0xff]
          %2202 = vst [vmem:[%s1946 + $0x3f8] sm:$0xff] %v2201
        $region237: #{triplet_hdml_forward.1} parent=231 // loop_footer
          %s1944 = sadd.s32 1, %s1940
        $region238: #{triplet_hdml_forward.1} parent=231 // loop_footer_branch
          %1939 = sbr.rel target = $region234
        $region239: #{triplet_hdml_forward.1} parent=231 // loop_exit
          _
      $region232: #{triplet_hdml_forward.1} parent=216 // pred_fallthru
        _
      %p2203 = pneg %p1935
      // Predicated region
      $region240: #{triplet_hdml_forward.1} parent=216 // pred_check
        _
      $region241: #{triplet_hdml_forward.1} parent=216 // pred_check_branch
        %2205 = sbr.rel (%p1935) target = $region243
      $region242: #{triplet_hdml_forward.1} parent=216 // pred_region
        %s2206 = sand.u32 1024, 7
      $region243: #{triplet_hdml_forward.1} parent=216 // pred_fallthru
        _
    $region217: #{triplet_hdml_forward.1} parent=1 // pred_fallthru
      _
    // Predicated region
    $region218: #{triplet_hdml_forward.1} parent=1 // pred_check
      %p1919 = pneg %p1915
    $region219: #{triplet_hdml_forward.1} parent=1 // pred_check_branch
      %1921 = sbr.rel (%p1919) target = $region221
    $region220: #{triplet_hdml_forward.1} parent=1 // pred_region
      %s1922 = sshll.u32 1, 1024
      %s1923 = ssub.s32 %s1922, 1
      loop: start=0, step=1, limit=1
      $region222: #{triplet_hdml_forward.1} parent=220 // loop_pre_header
        _
      $region223: #{triplet_hdml_forward.1} parent=220 // loop_header
        %s1925 = sphi 0, %s1929
        %p1926 = scmp.ge.s32.totalorder %s1925, 1
        %s1930 = sphi %s21, %s21
        %s1931 = sphi [#allocation6], [#allocation6]
      $region224: #{triplet_hdml_forward.1} parent=220 // loop_header_branch
        %1928 = sbr.rel (%p1926) target = $region228
      $region225: #{triplet_hdml_forward.1} parent=220 // loop_body
        %v1932 = vld [vmem:[%s1930] sm:%s1923]
        %1933 = vst [vmem:[%s1931] sm:%s1923] %v1932
      $region226: #{triplet_hdml_forward.1} parent=220 // loop_footer
        %s1929 = sadd.s32 1, %s1925
      $region227: #{triplet_hdml_forward.1} parent=220 // loop_footer_branch
        %1924 = sbr.rel target = $region223
      $region228: #{triplet_hdml_forward.1} parent=220 // loop_exit
        _
    $region221: #{triplet_hdml_forward.1} parent=1 // pred_fallthru
      _
    // Predicated region
    $region244: #{triplet_hdml_forward.1} parent=1 // pred_check
      _
    $region245: #{triplet_hdml_forward.1} parent=1 // pred_check_branch
      %2209 = sbr.rel (0) target = $region247
    $region246: #{triplet_hdml_forward.1} parent=1 // pred_region
      %2210 = vsyncadd %s1913, 16384
    $region247: #{triplet_hdml_forward.1} parent=1 // pred_fallthru
      _
    %v2211 = vld [vmem:[%s2] sm:$0xff]
    %v2212 = vld [vmem:[%s2 + $0x8] sm:$0xff]
    %v2213 = vld [vmem:[%s2 + $0x10] sm:$0xff]
    %v2214 = vld [vmem:[%s2 + $0x18] sm:$0xff]
    %v2215 = vld [vmem:[%s2 + $0x20] sm:$0xff]
    %v2216 = vld [vmem:[%s2 + $0x28] sm:$0xff]
    %v2217 = vld [vmem:[%s2 + $0x30] sm:$0xff]
    %v2218 = vld [vmem:[%s2 + $0x38] sm:$0xff]
    %v2219 = vld [vmem:[%s2 + $0x40] sm:$0xff]
    %v2220 = vld [vmem:[%s2 + $0x48] sm:$0xff]
    %v2221 = vld [vmem:[%s2 + $0x50] sm:$0xff]
    %v2222 = vld [vmem:[%s2 + $0x58] sm:$0xff]
    %v2223 = vld [vmem:[%s2 + $0x60] sm:$0xff]
    %v2224 = vld [vmem:[%s2 + $0x68] sm:$0xff]
    %v2225 = vld [vmem:[%s2 + $0x70] sm:$0xff]
    %v2226 = vld [vmem:[%s2 + $0x78] sm:$0xff]
    %v2227 = vld [vmem:[%s2 + $0x80] sm:$0xff]
    %v2228 = vld [vmem:[%s2 + $0x88] sm:$0xff]
    %v2229 = vld [vmem:[%s2 + $0x90] sm:$0xff]
    %v2230 = vld [vmem:[%s2 + $0x98] sm:$0xff]
    %v2231 = vld [vmem:[%s2 + $0xa0] sm:$0xff]
    %v2232 = vld [vmem:[%s2 + $0xa8] sm:$0xff]
    %v2233 = vld [vmem:[%s2 + $0xb0] sm:$0xff]
    %v2234 = vld [vmem:[%s2 + $0xb8] sm:$0xff]
    %v2235 = vld [vmem:[%s2 + $0xc0] sm:$0xff]
    %v2236 = vld [vmem:[%s2 + $0xc8] sm:$0xff]
    %v2237 = vld [vmem:[%s2 + $0xd0] sm:$0xff]
    %v2238 = vld [vmem:[%s2 + $0xd8] sm:$0xff]
    %v2239 = vld [vmem:[%s2 + $0xe0] sm:$0xff]
    %v2240 = vld [vmem:[%s2 + $0xe8] sm:$0xff]
    %v2241 = vld [vmem:[%s2 + $0xf0] sm:$0xff]
    %v2242 = vld [vmem:[%s2 + $0xf8] sm:$0xff]
    %v2243 = vld [vmem:[%s2 + $0x100] sm:$0xff]
    %v2244 = vld [vmem:[%s2 + $0x108] sm:$0xff]
    %v2245 = vld [vmem:[%s2 + $0x110] sm:$0xff]
    %v2246 = vld [vmem:[%s2 + $0x118] sm:$0xff]
    %v2247 = vld [vmem:[%s2 + $0x120] sm:$0xff]
    %v2248 = vld [vmem:[%s2 + $0x128] sm:$0xff]
    %v2249 = vld [vmem:[%s2 + $0x130] sm:$0xff]
    %v2250 = vld [vmem:[%s2 + $0x138] sm:$0xff]
    %v2251 = vld [vmem:[%s2 + $0x140] sm:$0xff]
    %v2252 = vld [vmem:[%s2 + $0x148] sm:$0xff]
    %v2253 = vld [vmem:[%s2 + $0x150] sm:$0xff]
    %v2254 = vld [vmem:[%s2 + $0x158] sm:$0xff]
    %v2255 = vld [vmem:[%s2 + $0x160] sm:$0xff]
    %v2256 = vld [vmem:[%s2 + $0x168] sm:$0xff]
    %v2257 = vld [vmem:[%s2 + $0x170] sm:$0xff]
    %v2258 = vld [vmem:[%s2 + $0x178] sm:$0xff]
    %v2259 = vld [vmem:[%s2 + $0x180] sm:$0xff]
    %v2260 = vld [vmem:[%s2 + $0x188] sm:$0xff]
    %v2261 = vld [vmem:[%s2 + $0x190] sm:$0xff]
    %v2262 = vld [vmem:[%s2 + $0x198] sm:$0xff]
    %v2263 = vld [vmem:[%s2 + $0x1a0] sm:$0xff]
    %v2264 = vld [vmem:[%s2 + $0x1a8] sm:$0xff]
    %v2265 = vld [vmem:[%s2 + $0x1b0] sm:$0xff]
    %v2266 = vld [vmem:[%s2 + $0x1b8] sm:$0xff]
    %v2267 = vld [vmem:[%s2 + $0x1c0] sm:$0xff]
    %v2268 = vld [vmem:[%s2 + $0x1c8] sm:$0xff]
    %v2269 = vld [vmem:[%s2 + $0x1d0] sm:$0xff]
    %v2270 = vld [vmem:[%s2 + $0x1d8] sm:$0xff]
    %v2271 = vld [vmem:[%s2 + $0x1e0] sm:$0xff]
    %v2272 = vld [vmem:[%s2 + $0x1e8] sm:$0xff]
    %v2273 = vld [vmem:[%s2 + $0x1f0] sm:$0xff]
    %v2274 = vld [vmem:[%s2 + $0x1f8] sm:$0xff]
    %v2275 = vld [vmem:[%s2 + $0x200] sm:$0xff]
    %v2276 = vld [vmem:[%s2 + $0x208] sm:$0xff]
    %v2277 = vld [vmem:[%s2 + $0x210] sm:$0xff]
    %v2278 = vld [vmem:[%s2 + $0x218] sm:$0xff]
    %v2279 = vld [vmem:[%s2 + $0x220] sm:$0xff]
    %v2280 = vld [vmem:[%s2 + $0x228] sm:$0xff]
    %v2281 = vld [vmem:[%s2 + $0x230] sm:$0xff]
    %v2282 = vld [vmem:[%s2 + $0x238] sm:$0xff]
    %v2283 = vld [vmem:[%s2 + $0x240] sm:$0xff]
    %v2284 = vld [vmem:[%s2 + $0x248] sm:$0xff]
    %v2285 = vld [vmem:[%s2 + $0x250] sm:$0xff]
    %v2286 = vld [vmem:[%s2 + $0x258] sm:$0xff]
    %v2287 = vld [vmem:[%s2 + $0x260] sm:$0xff]
    %v2288 = vld [vmem:[%s2 + $0x268] sm:$0xff]
    %v2289 = vld [vmem:[%s2 + $0x270] sm:$0xff]
    %v2290 = vld [vmem:[%s2 + $0x278] sm:$0xff]
    %v2291 = vld [vmem:[%s2 + $0x280] sm:$0xff]
    %v2292 = vld [vmem:[%s2 + $0x288] sm:$0xff]
    %v2293 = vld [vmem:[%s2 + $0x290] sm:$0xff]
    %v2294 = vld [vmem:[%s2 + $0x298] sm:$0xff]
    %v2295 = vld [vmem:[%s2 + $0x2a0] sm:$0xff]
    %v2296 = vld [vmem:[%s2 + $0x2a8] sm:$0xff]
    %v2297 = vld [vmem:[%s2 + $0x2b0] sm:$0xff]
    %v2298 = vld [vmem:[%s2 + $0x2b8] sm:$0xff]
    %v2299 = vld [vmem:[%s2 + $0x2c0] sm:$0xff]
    %v2300 = vld [vmem:[%s2 + $0x2c8] sm:$0xff]
    %v2301 = vld [vmem:[%s2 + $0x2d0] sm:$0xff]
    %v2302 = vld [vmem:[%s2 + $0x2d8] sm:$0xff]
    %v2303 = vld [vmem:[%s2 + $0x2e0] sm:$0xff]
    %v2304 = vld [vmem:[%s2 + $0x2e8] sm:$0xff]
    %v2305 = vld [vmem:[%s2 + $0x2f0] sm:$0xff]
    %v2306 = vld [vmem:[%s2 + $0x2f8] sm:$0xff]
    %v2307 = vld [vmem:[%s2 + $0x300] sm:$0xff]
    %v2308 = vld [vmem:[%s2 + $0x308] sm:$0xff]
    %v2309 = vld [vmem:[%s2 + $0x310] sm:$0xff]
    %v2310 = vld [vmem:[%s2 + $0x318] sm:$0xff]
    %v2311 = vld [vmem:[%s2 + $0x320] sm:$0xff]
    %v2312 = vld [vmem:[%s2 + $0x328] sm:$0xff]
    %v2313 = vld [vmem:[%s2 + $0x330] sm:$0xff]
    %v2314 = vld [vmem:[%s2 + $0x338] sm:$0xff]
    %v2315 = vld [vmem:[%s2 + $0x340] sm:$0xff]
    %v2316 = vld [vmem:[%s2 + $0x348] sm:$0xff]
    %v2317 = vld [vmem:[%s2 + $0x350] sm:$0xff]
    %v2318 = vld [vmem:[%s2 + $0x358] sm:$0xff]
    %v2319 = vld [vmem:[%s2 + $0x360] sm:$0xff]
    %v2320 = vld [vmem:[%s2 + $0x368] sm:$0xff]
    %v2321 = vld [vmem:[%s2 + $0x370] sm:$0xff]
    %v2322 = vld [vmem:[%s2 + $0x378] sm:$0xff]
    %v2323 = vld [vmem:[%s2 + $0x380] sm:$0xff]
    %v2324 = vld [vmem:[%s2 + $0x388] sm:$0xff]
    %v2325 = vld [vmem:[%s2 + $0x390] sm:$0xff]
    %v2326 = vld [vmem:[%s2 + $0x398] sm:$0xff]
    %v2327 = vld [vmem:[%s2 + $0x3a0] sm:$0xff]
    %v2328 = vld [vmem:[%s2 + $0x3a8] sm:$0xff]
    %v2329 = vld [vmem:[%s2 + $0x3b0] sm:$0xff]
    %v2330 = vld [vmem:[%s2 + $0x3b8] sm:$0xff]
    %v2331 = vld [vmem:[%s2 + $0x3c0] sm:$0xff]
    %v2332 = vld [vmem:[%s2 + $0x3c8] sm:$0xff]
    %v2333 = vld [vmem:[%s2 + $0x3d0] sm:$0xff]
    %v2334 = vld [vmem:[%s2 + $0x3d8] sm:$0xff]
    %v2335 = vld [vmem:[%s2 + $0x3e0] sm:$0xff]
    %v2336 = vld [vmem:[%s2 + $0x3e8] sm:$0xff]
    %v2337 = vld [vmem:[%s2 + $0x3f0] sm:$0xff]
    %v2338 = vld [vmem:[%s2 + $0x3f8] sm:$0xff]
    %v2339 = vld [vmem:[%s2 + $0x400] sm:$0xff]
    %v2340 = vld [vmem:[%s2 + $0x408] sm:$0xff]
    %v2341 = vld [vmem:[%s2 + $0x410] sm:$0xff]
    %v2342 = vld [vmem:[%s2 + $0x418] sm:$0xff]
    %v2343 = vld [vmem:[%s2 + $0x420] sm:$0xff]
    %v2344 = vld [vmem:[%s2 + $0x428] sm:$0xff]
    %v2345 = vld [vmem:[%s2 + $0x430] sm:$0xff]
    %v2346 = vld [vmem:[%s2 + $0x438] sm:$0xff]
    %v2347 = vld [vmem:[%s2 + $0x440] sm:$0xff]
    %v2348 = vld [vmem:[%s2 + $0x448] sm:$0xff]
    %v2349 = vld [vmem:[%s2 + $0x450] sm:$0xff]
    %v2350 = vld [vmem:[%s2 + $0x458] sm:$0xff]
    %v2351 = vld [vmem:[%s2 + $0x460] sm:$0xff]
    %v2352 = vld [vmem:[%s2 + $0x468] sm:$0xff]
    %v2353 = vld [vmem:[%s2 + $0x470] sm:$0xff]
    %v2354 = vld [vmem:[%s2 + $0x478] sm:$0xff]
    %v2355 = vld [vmem:[%s2 + $0x480] sm:$0xff]
    %v2356 = vld [vmem:[%s2 + $0x488] sm:$0xff]
    %v2357 = vld [vmem:[%s2 + $0x490] sm:$0xff]
    %v2358 = vld [vmem:[%s2 + $0x498] sm:$0xff]
    %v2359 = vld [vmem:[%s2 + $0x4a0] sm:$0xff]
    %v2360 = vld [vmem:[%s2 + $0x4a8] sm:$0xff]
    %v2361 = vld [vmem:[%s2 + $0x4b0] sm:$0xff]
    %v2362 = vld [vmem:[%s2 + $0x4b8] sm:$0xff]
    %v2363 = vld [vmem:[%s2 + $0x4c0] sm:$0xff]
    %v2364 = vld [vmem:[%s2 + $0x4c8] sm:$0xff]
    %v2365 = vld [vmem:[%s2 + $0x4d0] sm:$0xff]
    %v2366 = vld [vmem:[%s2 + $0x4d8] sm:$0xff]
    %v2367 = vld [vmem:[%s2 + $0x4e0] sm:$0xff]
    %v2368 = vld [vmem:[%s2 + $0x4e8] sm:$0xff]
    %v2369 = vld [vmem:[%s2 + $0x4f0] sm:$0xff]
    %v2370 = vld [vmem:[%s2 + $0x4f8] sm:$0xff]
    %v2371 = vld [vmem:[%s2 + $0x500] sm:$0xff]
    %v2372 = vld [vmem:[%s2 + $0x508] sm:$0xff]
    %v2373 = vld [vmem:[%s2 + $0x510] sm:$0xff]
    %v2374 = vld [vmem:[%s2 + $0x518] sm:$0xff]
    %v2375 = vld [vmem:[%s2 + $0x520] sm:$0xff]
    %v2376 = vld [vmem:[%s2 + $0x528] sm:$0xff]
    %v2377 = vld [vmem:[%s2 + $0x530] sm:$0xff]
    %v2378 = vld [vmem:[%s2 + $0x538] sm:$0xff]
    %v2379 = vld [vmem:[%s2 + $0x540] sm:$0xff]
    %v2380 = vld [vmem:[%s2 + $0x548] sm:$0xff]
    %v2381 = vld [vmem:[%s2 + $0x550] sm:$0xff]
    %v2382 = vld [vmem:[%s2 + $0x558] sm:$0xff]
    %v2383 = vld [vmem:[%s2 + $0x560] sm:$0xff]
    %v2384 = vld [vmem:[%s2 + $0x568] sm:$0xff]
    %v2385 = vld [vmem:[%s2 + $0x570] sm:$0xff]
    %v2386 = vld [vmem:[%s2 + $0x578] sm:$0xff]
    %v2387 = vld [vmem:[%s2 + $0x580] sm:$0xff]
    %v2388 = vld [vmem:[%s2 + $0x588] sm:$0xff]
    %v2389 = vld [vmem:[%s2 + $0x590] sm:$0xff]
    %v2390 = vld [vmem:[%s2 + $0x598] sm:$0xff]
    %v2391 = vld [vmem:[%s2 + $0x5a0] sm:$0xff]
    %v2392 = vld [vmem:[%s2 + $0x5a8] sm:$0xff]
    %v2393 = vld [vmem:[%s2 + $0x5b0] sm:$0xff]
    %v2394 = vld [vmem:[%s2 + $0x5b8] sm:$0xff]
    %v2395 = vld [vmem:[%s2 + $0x5c0] sm:$0xff]
    %v2396 = vld [vmem:[%s2 + $0x5c8] sm:$0xff]
    %v2397 = vld [vmem:[%s2 + $0x5d0] sm:$0xff]
    %v2398 = vld [vmem:[%s2 + $0x5d8] sm:$0xff]
    %v2399 = vld [vmem:[%s2 + $0x5e0] sm:$0xff]
    %v2400 = vld [vmem:[%s2 + $0x5e8] sm:$0xff]
    %v2401 = vld [vmem:[%s2 + $0x5f0] sm:$0xff]
    %v2402 = vld [vmem:[%s2 + $0x5f8] sm:$0xff]
    %v2403 = vld [vmem:[%s3] sm:$0xff]
    %v2404 = vld [vmem:[%s3 + $0x8] sm:$0xff]
    %v2405 = vld [vmem:[%s3 + $0x10] sm:$0xff]
    %v2406 = vld [vmem:[%s3 + $0x18] sm:$0xff]
    %v2407 = vld [vmem:[%s4] sm:$0x1]
    %v2409 = vlaneseq
    %v2410 = vshrl.u32 %v2409, 7
    %v2411 = vsub.s32 0, %v2410
    %v2412 = vrot.slane %v2407, %v2411
    %vm2414 = vcmask 261120
    %v2416 = vsel %vm2414, %v2211, 0
    %v2419 = vsel %vm2414, %v2212, 0
    %v2422 = vsel %vm2414, %v2213, 0
    %v2425 = vsel %vm2414, %v2214, 0
    %v2428 = vsel %vm2414, %v2215, 0
    %v2431 = vsel %vm2414, %v2216, 0
    %v2434 = vsel %vm2414, %v2217, 0
    %v2437 = vsel %vm2414, %v2218, 0
    %v2440 = vsel %vm2414, %v2219, 0
    %v2443 = vsel %vm2414, %v2220, 0
    %v2446 = vsel %vm2414, %v2221, 0
    %v2449 = vsel %vm2414, %v2222, 0
    %v2452 = vsel %vm2414, %v2223, 0
    %v2455 = vsel %vm2414, %v2224, 0
    %v2458 = vsel %vm2414, %v2225, 0
    %v2461 = vsel %vm2414, %v2226, 0
    %v2464 = vsel %vm2414, %v2227, 0
    %v2467 = vsel %vm2414, %v2228, 0
    %v2470 = vsel %vm2414, %v2229, 0
    %v2473 = vsel %vm2414, %v2230, 0
    %v2476 = vsel %vm2414, %v2231, 0
    %v2479 = vsel %vm2414, %v2232, 0
    %v2482 = vsel %vm2414, %v2233, 0
    %v2485 = vsel %vm2414, %v2234, 0
    %v2488 = vsel %vm2414, %v2235, 0
    %v2491 = vsel %vm2414, %v2236, 0
    %v2494 = vsel %vm2414, %v2237, 0
    %v2497 = vsel %vm2414, %v2238, 0
    %v2500 = vsel %vm2414, %v2239, 0
    %v2503 = vsel %vm2414, %v2240, 0
    %v2506 = vsel %vm2414, %v2241, 0
    %v2509 = vsel %vm2414, %v2242, 0
    %v2512 = vsel %vm2414, %v2243, 0
    %v2515 = vsel %vm2414, %v2244, 0
    %v2518 = vsel %vm2414, %v2245, 0
    %v2521 = vsel %vm2414, %v2246, 0
    %v2524 = vsel %vm2414, %v2247, 0
    %v2527 = vsel %vm2414, %v2248, 0
    %v2530 = vsel %vm2414, %v2249, 0
    %v2533 = vsel %vm2414, %v2250, 0
    %v2536 = vsel %vm2414, %v2251, 0
    %v2539 = vsel %vm2414, %v2252, 0
    %v2542 = vsel %vm2414, %v2253, 0
    %v2545 = vsel %vm2414, %v2254, 0
    %v2548 = vsel %vm2414, %v2255, 0
    %v2551 = vsel %vm2414, %v2256, 0
    %v2554 = vsel %vm2414, %v2257, 0
    %v2557 = vsel %vm2414, %v2258, 0
    %v2560 = vsel %vm2414, %v2259, 0
    %v2563 = vsel %vm2414, %v2260, 0
    %v2566 = vsel %vm2414, %v2261, 0
    %v2569 = vsel %vm2414, %v2262, 0
    %v2572 = vsel %vm2414, %v2263, 0
    %v2575 = vsel %vm2414, %v2264, 0
    %v2578 = vsel %vm2414, %v2265, 0
    %v2581 = vsel %vm2414, %v2266, 0
    %v2584 = vsel %vm2414, %v2267, 0
    %v2587 = vsel %vm2414, %v2268, 0
    %v2590 = vsel %vm2414, %v2269, 0
    %v2593 = vsel %vm2414, %v2270, 0
    %v2596 = vsel %vm2414, %v2271, 0
    %v2599 = vsel %vm2414, %v2272, 0
    %v2602 = vsel %vm2414, %v2273, 0
    %v2605 = vsel %vm2414, %v2274, 0
    %v2608 = vsel %vm2414, %v2275, 0
    %v2611 = vsel %vm2414, %v2276, 0
    %v2614 = vsel %vm2414, %v2277, 0
    %v2617 = vsel %vm2414, %v2278, 0
    %v2620 = vsel %vm2414, %v2279, 0
    %v2623 = vsel %vm2414, %v2280, 0
    %v2626 = vsel %vm2414, %v2281, 0
    %v2629 = vsel %vm2414, %v2282, 0
    %v2632 = vsel %vm2414, %v2283, 0
    %v2635 = vsel %vm2414, %v2284, 0
    %v2638 = vsel %vm2414, %v2285, 0
    %v2641 = vsel %vm2414, %v2286, 0
    %v2644 = vsel %vm2414, %v2287, 0
    %v2647 = vsel %vm2414, %v2288, 0
    %v2650 = vsel %vm2414, %v2289, 0
    %v2653 = vsel %vm2414, %v2290, 0
    %v2656 = vsel %vm2414, %v2291, 0
    %v2659 = vsel %vm2414, %v2292, 0
    %v2662 = vsel %vm2414, %v2293, 0
    %v2665 = vsel %vm2414, %v2294, 0
    %v2668 = vsel %vm2414, %v2295, 0
    %v2671 = vsel %vm2414, %v2296, 0
    %v2674 = vsel %vm2414, %v2297, 0
    %v2677 = vsel %vm2414, %v2298, 0
    %v2680 = vsel %vm2414, %v2299, 0
    %v2683 = vsel %vm2414, %v2300, 0
    %v2686 = vsel %vm2414, %v2301, 0
    %v2689 = vsel %vm2414, %v2302, 0
    %v2692 = vsel %vm2414, %v2303, 0
    %v2695 = vsel %vm2414, %v2304, 0
    %v2698 = vsel %vm2414, %v2305, 0
    %v2701 = vsel %vm2414, %v2306, 0
    %v2704 = vsel %vm2414, %v2307, 0
    %v2707 = vsel %vm2414, %v2308, 0
    %v2710 = vsel %vm2414, %v2309, 0
    %v2713 = vsel %vm2414, %v2310, 0
    %v2716 = vsel %vm2414, %v2311, 0
    %v2719 = vsel %vm2414, %v2312, 0
    %v2722 = vsel %vm2414, %v2313, 0
    %v2725 = vsel %vm2414, %v2314, 0
    %v2728 = vsel %vm2414, %v2315, 0
    %v2731 = vsel %vm2414, %v2316, 0
    %v2734 = vsel %vm2414, %v2317, 0
    %v2737 = vsel %vm2414, %v2318, 0
    %v2740 = vsel %vm2414, %v2319, 0
    %v2743 = vsel %vm2414, %v2320, 0
    %v2746 = vsel %vm2414, %v2321, 0
    %v2749 = vsel %vm2414, %v2322, 0
    %v2752 = vsel %vm2414, %v2323, 0
    %v2755 = vsel %vm2414, %v2324, 0
    %v2758 = vsel %vm2414, %v2325, 0
    %v2761 = vsel %vm2414, %v2326, 0
    %v2764 = vsel %vm2414, %v2327, 0
    %v2767 = vsel %vm2414, %v2328, 0
    %v2770 = vsel %vm2414, %v2329, 0
    %v2773 = vsel %vm2414, %v2330, 0
    %v2776 = vsel %vm2414, %v2331, 0
    %v2779 = vsel %vm2414, %v2332, 0
    %v2782 = vsel %vm2414, %v2333, 0
    %v2785 = vsel %vm2414, %v2334, 0
    %v2788 = vsel %vm2414, %v2335, 0
    %v2791 = vsel %vm2414, %v2336, 0
    %v2794 = vsel %vm2414, %v2337, 0
    %v2797 = vsel %vm2414, %v2338, 0
    %v2800 = vsel %vm2414, %v2339, 0
    %v2803 = vsel %vm2414, %v2340, 0
    %v2806 = vsel %vm2414, %v2341, 0
    %v2809 = vsel %vm2414, %v2342, 0
    %v2812 = vsel %vm2414, %v2343, 0
    %v2815 = vsel %vm2414, %v2344, 0
    %v2818 = vsel %vm2414, %v2345, 0
    %v2821 = vsel %vm2414, %v2346, 0
    %v2824 = vsel %vm2414, %v2347, 0
    %v2827 = vsel %vm2414, %v2348, 0
    %v2830 = vsel %vm2414, %v2349, 0
    %v2833 = vsel %vm2414, %v2350, 0
    %v2836 = vsel %vm2414, %v2351, 0
    %v2839 = vsel %vm2414, %v2352, 0
    %v2842 = vsel %vm2414, %v2353, 0
    %v2845 = vsel %vm2414, %v2354, 0
    %v2848 = vsel %vm2414, %v2355, 0
    %v2851 = vsel %vm2414, %v2356, 0
    %v2854 = vsel %vm2414, %v2357, 0
    %v2857 = vsel %vm2414, %v2358, 0
    %v2860 = vsel %vm2414, %v2359, 0
    %v2863 = vsel %vm2414, %v2360, 0
    %v2866 = vsel %vm2414, %v2361, 0
    %v2869 = vsel %vm2414, %v2362, 0
    %v2872 = vsel %vm2414, %v2363, 0
    %v2875 = vsel %vm2414, %v2364, 0
    %v2878 = vsel %vm2414, %v2365, 0
    %v2881 = vsel %vm2414, %v2366, 0
    %v2884 = vsel %vm2414, %v2367, 0
    %v2887 = vsel %vm2414, %v2368, 0
    %v2890 = vsel %vm2414, %v2369, 0
    %v2893 = vsel %vm2414, %v2370, 0
    %v2896 = vsel %vm2414, %v2371, 0
    %v2899 = vsel %vm2414, %v2372, 0
    %v2902 = vsel %vm2414, %v2373, 0
    %v2905 = vsel %vm2414, %v2374, 0
    %v2908 = vsel %vm2414, %v2375, 0
    %v2911 = vsel %vm2414, %v2376, 0
    %v2914 = vsel %vm2414, %v2377, 0
    %v2917 = vsel %vm2414, %v2378, 0
    %v2920 = vsel %vm2414, %v2379, 0
    %v2923 = vsel %vm2414, %v2380, 0
    %v2926 = vsel %vm2414, %v2381, 0
    %v2929 = vsel %vm2414, %v2382, 0
    %v2932 = vsel %vm2414, %v2383, 0
    %v2935 = vsel %vm2414, %v2384, 0
    %v2938 = vsel %vm2414, %v2385, 0
    %v2941 = vsel %vm2414, %v2386, 0
    %v2944 = vsel %vm2414, %v2387, 0
    %v2947 = vsel %vm2414, %v2388, 0
    %v2950 = vsel %vm2414, %v2389, 0
    %v2953 = vsel %vm2414, %v2390, 0
    %v2956 = vsel %vm2414, %v2391, 0
    %v2959 = vsel %vm2414, %v2392, 0
    %v2962 = vsel %vm2414, %v2393, 0
    %v2965 = vsel %vm2414, %v2394, 0
    %v2968 = vsel %vm2414, %v2395, 0
    %v2971 = vsel %vm2414, %v2396, 0
    %v2974 = vsel %vm2414, %v2397, 0
    %v2977 = vsel %vm2414, %v2398, 0
    %v2980 = vsel %vm2414, %v2399, 0
    %v2983 = vsel %vm2414, %v2400, 0
    %v2986 = vsel %vm2414, %v2401, 0
    %v2989 = vsel %vm2414, %v2402, 0
    %2991 = vmatprep.subr.mxu0 0.0
    %2992 = vmatpush1.msra.mxu0 0.0
    %2993 = vmatprep.subr.mxu0 0.0
    %2994 = vmatpush1.msra.mxu0 0.0
    %2995 = vmatprep.subr.mxu0 0.0
    %2996 = vmatpush1.msra.mxu0 0.0
    %2997 = vmatprep.subr.mxu0 0.0
    %2998 = vmatpush1.msra.mxu0 0.0
    %2999 = vmatprep.subr.mxu0 0.0
    %3000 = vmatpush1.msra.mxu0 0.0
    %3001 = vmatprep.subr.mxu0 0.0
    %3002 = vmatpush1.msra.mxu0 0.0
    %3003 = vmatprep.subr.mxu0 0.0
    %3004 = vmatpush1.msra.mxu0 0.0
    %3005 = vmatprep.subr.mxu0 0.0
    %3006 = vmatpush1.msra.mxu0 0.0
    %3007 = vmatprep.subr.mxu0 0.0
    %3008 = vmatpush1.msra.mxu0 0.0
    %3009 = vmatprep.subr.mxu0 0.0
    %3010 = vmatpush1.msra.mxu0 0.0
    %3011 = vmatprep.subr.mxu0 0.0
    %3012 = vmatpush1.msra.mxu0 0.0
    %3013 = vmatprep.subr.mxu0 0.0
    %3014 = vmatpush1.msra.mxu0 0.0
    %3015 = vmatprep.subr.mxu0 0.0
    %3016 = vmatpush1.msra.mxu0 %v2406
    %3017 = vmatprep.subr.mxu0 0.0
    %3018 = vmatpush1.msra.mxu0 %v2405
    %3019 = vmatprep.subr.mxu0 0.0
    %3020 = vmatpush1.msra.mxu0 %v2404
    %3021 = vmatprep.subr.mxu0 0.0
    %3022 = vmatpush1.msra.mxu0 %v2403
    %3023 = vmatprep.subr.mxu0 0.0
    %3024 = vmatpush2.msra.mxu0 0.0
    %3025 = vmatprep.subr.mxu0 0.0
    %3026 = vmatpush2.msra.mxu0 0.0
    %3027 = vmatprep.subr.mxu0 0.0
    %3028 = vmatpush2.msra.mxu0 0.0
    %3029 = vmatprep.subr.mxu0 0.0
    %3030 = vmatpush2.msra.mxu0 0.0
    %3031 = vmatprep.subr.mxu0 0.0
    %3032 = vmatpush2.msra.mxu0 0.0
    %3033 = vmatprep.subr.mxu0 0.0
    %3034 = vmatpush2.msra.mxu0 0.0
    %3035 = vmatprep.subr.mxu0 0.0
    %3036 = vmatpush2.msra.mxu0 0.0
    %3037 = vmatprep.subr.mxu0 0.0
    %3038 = vmatpush2.msra.mxu0 0.0
    %3039 = vmatprep.subr.mxu0 0.0
    %3040 = vmatpush2.msra.mxu0 0.0
    %3041 = vmatprep.subr.mxu0 0.0
    %3042 = vmatpush2.msra.mxu0 0.0
    %3043 = vmatprep.subr.mxu0 0.0
    %3044 = vmatpush2.msra.mxu0 0.0
    %3045 = vmatprep.subr.mxu0 0.0
    %3046 = vmatpush2.msra.mxu0 0.0
    %3047 = vmatprep.subr.mxu0 0.0
    %3048 = vmatpush2.msra.mxu0 0.0
    %3049 = vmatprep.subr.mxu0 0.0
    %3050 = vmatpush2.msra.mxu0 0.0
    %3051 = vmatprep.subr.mxu0 0.0
    %3052 = vmatpush2.msra.mxu0 0.0
    %3053 = vmatprep.subr.mxu0 0.0
    %3054 = vmatpush2.msra.mxu0 0.0
    %3055 = vmatprep.mubr.f32.mxu0 0.0
    %3056 = vmatmul.mubr.f32.gmra.mxu0 %v2416
    %v3057 = vpop.f32.mrf.mxu0
    %v3058 = vadd.f32 %v2412, %v3057
    %v3059 = vpop.f32.mrf.mxu0
    %3060 = vmatprep.mubr.f32.mxu0 0.0
    %3061 = vmatmul.mubr.f32.gmra.mxu0 %v2419
    %v3062 = vpop.f32.mrf.mxu0
    %v3063 = vadd.f32 %v2412, %v3062
    %v3064 = vpop.f32.mrf.mxu0
    %3065 = vmatprep.mubr.f32.mxu0 0.0
    %3066 = vmatmul.mubr.f32.gmra.mxu0 %v2422
    %v3067 = vpop.f32.mrf.mxu0
    %v3068 = vadd.f32 %v2412, %v3067
    %v3069 = vpop.f32.mrf.mxu0
    %3070 = vmatprep.mubr.f32.mxu0 0.0
    %3071 = vmatmul.mubr.f32.gmra.mxu0 %v2425
    %v3072 = vpop.f32.mrf.mxu0
    %v3073 = vadd.f32 %v2412, %v3072
    %v3074 = vpop.f32.mrf.mxu0
    %3075 = vmatprep.mubr.f32.mxu0 0.0
    %3076 = vmatmul.mubr.f32.gmra.mxu0 %v2428
    %v3077 = vpop.f32.mrf.mxu0
    %v3078 = vadd.f32 %v2412, %v3077
    %v3079 = vpop.f32.mrf.mxu0
    %3080 = vmatprep.mubr.f32.mxu0 0.0
    %3081 = vmatmul.mubr.f32.gmra.mxu0 %v2431
    %v3082 = vpop.f32.mrf.mxu0
    %v3083 = vadd.f32 %v2412, %v3082
    %v3084 = vpop.f32.mrf.mxu0
    %3085 = vmatprep.mubr.f32.mxu0 0.0
    %3086 = vmatmul.mubr.f32.gmra.mxu0 %v2434
    %v3087 = vpop.f32.mrf.mxu0
    %v3088 = vadd.f32 %v2412, %v3087
    %v3089 = vpop.f32.mrf.mxu0
    %3090 = vmatprep.mubr.f32.mxu0 0.0
    %3091 = vmatmul.mubr.f32.gmra.mxu0 %v2437
    %v3092 = vpop.f32.mrf.mxu0
    %v3093 = vadd.f32 %v2412, %v3092
    %v3094 = vpop.f32.mrf.mxu0
    %3095 = vmatprep.mubr.f32.mxu0 0.0
    %3096 = vmatmul.mubr.f32.gmra.mxu0 %v2440
    %v3097 = vpop.f32.mrf.mxu0
    %v3098 = vadd.f32 %v2412, %v3097
    %v3099 = vpop.f32.mrf.mxu0
    %3100 = vmatprep.mubr.f32.mxu0 0.0
    %3101 = vmatmul.mubr.f32.gmra.mxu0 %v2443
    %v3102 = vpop.f32.mrf.mxu0
    %v3103 = vadd.f32 %v2412, %v3102
    %v3104 = vpop.f32.mrf.mxu0
    %3105 = vmatprep.mubr.f32.mxu0 0.0
    %3106 = vmatmul.mubr.f32.gmra.mxu0 %v2446
    %v3107 = vpop.f32.mrf.mxu0
    %v3108 = vadd.f32 %v2412, %v3107
    %v3109 = vpop.f32.mrf.mxu0
    %3110 = vmatprep.mubr.f32.mxu0 0.0
    %3111 = vmatmul.mubr.f32.gmra.mxu0 %v2449
    %v3112 = vpop.f32.mrf.mxu0
    %v3113 = vadd.f32 %v2412, %v3112
    %v3114 = vpop.f32.mrf.mxu0
    %3115 = vmatprep.mubr.f32.mxu0 0.0
    %3116 = vmatmul.mubr.f32.gmra.mxu0 %v2452
    %v3117 = vpop.f32.mrf.mxu0
    %v3118 = vadd.f32 %v2412, %v3117
    %v3119 = vpop.f32.mrf.mxu0
    %3120 = vmatprep.mubr.f32.mxu0 0.0
    %3121 = vmatmul.mubr.f32.gmra.mxu0 %v2455
    %v3122 = vpop.f32.mrf.mxu0
    %v3123 = vadd.f32 %v2412, %v3122
    %v3124 = vpop.f32.mrf.mxu0
    %3125 = vmatprep.mubr.f32.mxu0 0.0
    %3126 = vmatmul.mubr.f32.gmra.mxu0 %v2458
    %v3127 = vpop.f32.mrf.mxu0
    %v3128 = vadd.f32 %v2412, %v3127
    %v3129 = vpop.f32.mrf.mxu0
    %3130 = vmatprep.mubr.f32.mxu0 0.0
    %3131 = vmatmul.mubr.f32.gmra.mxu0 %v2461
    %v3132 = vpop.f32.mrf.mxu0
    %v3133 = vadd.f32 %v2412, %v3132
    %v3134 = vpop.f32.mrf.mxu0
    %3135 = vmatprep.mubr.f32.mxu0 0.0
    %3136 = vmatmul.mubr.f32.gmra.mxu0 %v2464
    %v3137 = vpop.f32.mrf.mxu0
    %v3138 = vadd.f32 %v2412, %v3137
    %v3139 = vpop.f32.mrf.mxu0
    %3140 = vmatprep.mubr.f32.mxu0 0.0
    %3141 = vmatmul.mubr.f32.gmra.mxu0 %v2467
    %v3142 = vpop.f32.mrf.mxu0
    %v3143 = vadd.f32 %v2412, %v3142
    %v3144 = vpop.f32.mrf.mxu0
    %3145 = vmatprep.mubr.f32.mxu0 0.0
    %3146 = vmatmul.mubr.f32.gmra.mxu0 %v2470
    %v3147 = vpop.f32.mrf.mxu0
    %v3148 = vadd.f32 %v2412, %v3147
    %v3149 = vpop.f32.mrf.mxu0
    %3150 = vmatprep.mubr.f32.mxu0 0.0
    %3151 = vmatmul.mubr.f32.gmra.mxu0 %v2473
    %v3152 = vpop.f32.mrf.mxu0
    %v3153 = vadd.f32 %v2412, %v3152
    %v3154 = vpop.f32.mrf.mxu0
    %3155 = vmatprep.mubr.f32.mxu0 0.0
    %3156 = vmatmul.mubr.f32.gmra.mxu0 %v2476
    %v3157 = vpop.f32.mrf.mxu0
    %v3158 = vadd.f32 %v2412, %v3157
    %v3159 = vpop.f32.mrf.mxu0
    %3160 = vmatprep.mubr.f32.mxu0 0.0
    %3161 = vmatmul.mubr.f32.gmra.mxu0 %v2479
    %v3162 = vpop.f32.mrf.mxu0
    %v3163 = vadd.f32 %v2412, %v3162
    %v3164 = vpop.f32.mrf.mxu0
    %3165 = vmatprep.mubr.f32.mxu0 0.0
    %3166 = vmatmul.mubr.f32.gmra.mxu0 %v2482
    %v3167 = vpop.f32.mrf.mxu0
    %v3168 = vadd.f32 %v2412, %v3167
    %v3169 = vpop.f32.mrf.mxu0
    %3170 = vmatprep.mubr.f32.mxu0 0.0
    %3171 = vmatmul.mubr.f32.gmra.mxu0 %v2485
    %v3172 = vpop.f32.mrf.mxu0
    %v3173 = vadd.f32 %v2412, %v3172
    %v3174 = vpop.f32.mrf.mxu0
    %3175 = vmatprep.mubr.f32.mxu0 0.0
    %3176 = vmatmul.mubr.f32.gmra.mxu0 %v2488
    %v3177 = vpop.f32.mrf.mxu0
    %v3178 = vadd.f32 %v2412, %v3177
    %v3179 = vpop.f32.mrf.mxu0
    %3180 = vmatprep.mubr.f32.mxu0 0.0
    %3181 = vmatmul.mubr.f32.gmra.mxu0 %v2491
    %v3182 = vpop.f32.mrf.mxu0
    %v3183 = vadd.f32 %v2412, %v3182
    %v3184 = vpop.f32.mrf.mxu0
    %3185 = vmatprep.mubr.f32.mxu0 0.0
    %3186 = vmatmul.mubr.f32.gmra.mxu0 %v2494
    %v3187 = vpop.f32.mrf.mxu0
    %v3188 = vadd.f32 %v2412, %v3187
    %v3189 = vpop.f32.mrf.mxu0
    %3190 = vmatprep.mubr.f32.mxu0 0.0
    %3191 = vmatmul.mubr.f32.gmra.mxu0 %v2497
    %v3192 = vpop.f32.mrf.mxu0
    %v3193 = vadd.f32 %v2412, %v3192
    %v3194 = vpop.f32.mrf.mxu0
    %3195 = vmatprep.mubr.f32.mxu0 0.0
    %3196 = vmatmul.mubr.f32.gmra.mxu0 %v2500
    %v3197 = vpop.f32.mrf.mxu0
    %v3198 = vadd.f32 %v2412, %v3197
    %v3199 = vpop.f32.mrf.mxu0
    %3200 = vmatprep.mubr.f32.mxu0 0.0
    %3201 = vmatmul.mubr.f32.gmra.mxu0 %v2503
    %v3202 = vpop.f32.mrf.mxu0
    %v3203 = vadd.f32 %v2412, %v3202
    %v3204 = vpop.f32.mrf.mxu0
    %3205 = vmatprep.mubr.f32.mxu0 0.0
    %3206 = vmatmul.mubr.f32.gmra.mxu0 %v2506
    %v3207 = vpop.f32.mrf.mxu0
    %v3208 = vadd.f32 %v2412, %v3207
    %v3209 = vpop.f32.mrf.mxu0
    %3210 = vmatprep.mubr.f32.mxu0 0.0
    %3211 = vmatmul.mubr.f32.gmra.mxu0 %v2509
    %v3212 = vpop.f32.mrf.mxu0
    %v3213 = vadd.f32 %v2412, %v3212
    %v3214 = vpop.f32.mrf.mxu0
    %3215 = vmatprep.mubr.f32.mxu0 0.0
    %3216 = vmatmul.mubr.f32.gmra.mxu0 %v2512
    %v3217 = vpop.f32.mrf.mxu0
    %v3218 = vadd.f32 %v2412, %v3217
    %v3219 = vpop.f32.mrf.mxu0
    %3220 = vmatprep.mubr.f32.mxu0 0.0
    %3221 = vmatmul.mubr.f32.gmra.mxu0 %v2515
    %v3222 = vpop.f32.mrf.mxu0
    %v3223 = vadd.f32 %v2412, %v3222
    %v3224 = vpop.f32.mrf.mxu0
    %3225 = vmatprep.mubr.f32.mxu0 0.0
    %3226 = vmatmul.mubr.f32.gmra.mxu0 %v2518
    %v3227 = vpop.f32.mrf.mxu0
    %v3228 = vadd.f32 %v2412, %v3227
    %v3229 = vpop.f32.mrf.mxu0
    %3230 = vmatprep.mubr.f32.mxu0 0.0
    %3231 = vmatmul.mubr.f32.gmra.mxu0 %v2521
    %v3232 = vpop.f32.mrf.mxu0
    %v3233 = vadd.f32 %v2412, %v3232
    %v3234 = vpop.f32.mrf.mxu0
    %3235 = vmatprep.mubr.f32.mxu0 0.0
    %3236 = vmatmul.mubr.f32.gmra.mxu0 %v2524
    %v3237 = vpop.f32.mrf.mxu0
    %v3238 = vadd.f32 %v2412, %v3237
    %v3239 = vpop.f32.mrf.mxu0
    %3240 = vmatprep.mubr.f32.mxu0 0.0
    %3241 = vmatmul.mubr.f32.gmra.mxu0 %v2527
    %v3242 = vpop.f32.mrf.mxu0
    %v3243 = vadd.f32 %v2412, %v3242
    %v3244 = vpop.f32.mrf.mxu0
    %3245 = vmatprep.mubr.f32.mxu0 0.0
    %3246 = vmatmul.mubr.f32.gmra.mxu0 %v2530
    %v3247 = vpop.f32.mrf.mxu0
    %v3248 = vadd.f32 %v2412, %v3247
    %v3249 = vpop.f32.mrf.mxu0
    %3250 = vmatprep.mubr.f32.mxu0 0.0
    %3251 = vmatmul.mubr.f32.gmra.mxu0 %v2533
    %v3252 = vpop.f32.mrf.mxu0
    %v3253 = vadd.f32 %v2412, %v3252
    %v3254 = vpop.f32.mrf.mxu0
    %3255 = vmatprep.mubr.f32.mxu0 0.0
    %3256 = vmatmul.mubr.f32.gmra.mxu0 %v2536
    %v3257 = vpop.f32.mrf.mxu0
    %v3258 = vadd.f32 %v2412, %v3257
    %v3259 = vpop.f32.mrf.mxu0
    %3260 = vmatprep.mubr.f32.mxu0 0.0
    %3261 = vmatmul.mubr.f32.gmra.mxu0 %v2539
    %v3262 = vpop.f32.mrf.mxu0
    %v3263 = vadd.f32 %v2412, %v3262
    %v3264 = vpop.f32.mrf.mxu0
    %3265 = vmatprep.mubr.f32.mxu0 0.0
    %3266 = vmatmul.mubr.f32.gmra.mxu0 %v2542
    %v3267 = vpop.f32.mrf.mxu0
    %v3268 = vadd.f32 %v2412, %v3267
    %v3269 = vpop.f32.mrf.mxu0
    %3270 = vmatprep.mubr.f32.mxu0 0.0
    %3271 = vmatmul.mubr.f32.gmra.mxu0 %v2545
    %v3272 = vpop.f32.mrf.mxu0
    %v3273 = vadd.f32 %v2412, %v3272
    %v3274 = vpop.f32.mrf.mxu0
    %3275 = vmatprep.mubr.f32.mxu0 0.0
    %3276 = vmatmul.mubr.f32.gmra.mxu0 %v2548
    %v3277 = vpop.f32.mrf.mxu0
    %v3278 = vadd.f32 %v2412, %v3277
    %v3279 = vpop.f32.mrf.mxu0
    %3280 = vmatprep.mubr.f32.mxu0 0.0
    %3281 = vmatmul.mubr.f32.gmra.mxu0 %v2551
    %v3282 = vpop.f32.mrf.mxu0
    %v3283 = vadd.f32 %v2412, %v3282
    %v3284 = vpop.f32.mrf.mxu0
    %3285 = vmatprep.mubr.f32.mxu0 0.0
    %3286 = vmatmul.mubr.f32.gmra.mxu0 %v2554
    %v3287 = vpop.f32.mrf.mxu0
    %v3288 = vadd.f32 %v2412, %v3287
    %v3289 = vpop.f32.mrf.mxu0
    %3290 = vmatprep.mubr.f32.mxu0 0.0
    %3291 = vmatmul.mubr.f32.gmra.mxu0 %v2557
    %v3292 = vpop.f32.mrf.mxu0
    %v3293 = vadd.f32 %v2412, %v3292
    %v3294 = vpop.f32.mrf.mxu0
    %3295 = vmatprep.mubr.f32.mxu0 0.0
    %3296 = vmatmul.mubr.f32.gmra.mxu0 %v2560
    %v3297 = vpop.f32.mrf.mxu0
    %v3298 = vadd.f32 %v2412, %v3297
    %v3299 = vpop.f32.mrf.mxu0
    %3300 = vmatprep.mubr.f32.mxu0 0.0
    %3301 = vmatmul.mubr.f32.gmra.mxu0 %v2563
    %v3302 = vpop.f32.mrf.mxu0
    %v3303 = vadd.f32 %v2412, %v3302
    %v3304 = vpop.f32.mrf.mxu0
    %3305 = vmatprep.mubr.f32.mxu0 0.0
    %3306 = vmatmul.mubr.f32.gmra.mxu0 %v2566
    %v3307 = vpop.f32.mrf.mxu0
    %v3308 = vadd.f32 %v2412, %v3307
    %v3309 = vpop.f32.mrf.mxu0
    %3310 = vmatprep.mubr.f32.mxu0 0.0
    %3311 = vmatmul.mubr.f32.gmra.mxu0 %v2569
    %v3312 = vpop.f32.mrf.mxu0
    %v3313 = vadd.f32 %v2412, %v3312
    %v3314 = vpop.f32.mrf.mxu0
    %3315 = vmatprep.mubr.f32.mxu0 0.0
    %3316 = vmatmul.mubr.f32.gmra.mxu0 %v2572
    %v3317 = vpop.f32.mrf.mxu0
    %v3318 = vadd.f32 %v2412, %v3317
    %v3319 = vpop.f32.mrf.mxu0
    %3320 = vmatprep.mubr.f32.mxu0 0.0
    %3321 = vmatmul.mubr.f32.gmra.mxu0 %v2575
    %v3322 = vpop.f32.mrf.mxu0
    %v3323 = vadd.f32 %v2412, %v3322
    %v3324 = vpop.f32.mrf.mxu0
    %3325 = vmatprep.mubr.f32.mxu0 0.0
    %3326 = vmatmul.mubr.f32.gmra.mxu0 %v2578
    %v3327 = vpop.f32.mrf.mxu0
    %v3328 = vadd.f32 %v2412, %v3327
    %v3329 = vpop.f32.mrf.mxu0
    %3330 = vmatprep.mubr.f32.mxu0 0.0
    %3331 = vmatmul.mubr.f32.gmra.mxu0 %v2581
    %v3332 = vpop.f32.mrf.mxu0
    %v3333 = vadd.f32 %v2412, %v3332
    %v3334 = vpop.f32.mrf.mxu0
    %3335 = vmatprep.mubr.f32.mxu0 0.0
    %3336 = vmatmul.mubr.f32.gmra.mxu0 %v2584
    %v3337 = vpop.f32.mrf.mxu0
    %v3338 = vadd.f32 %v2412, %v3337
    %v3339 = vpop.f32.mrf.mxu0
    %3340 = vmatprep.mubr.f32.mxu0 0.0
    %3341 = vmatmul.mubr.f32.gmra.mxu0 %v2587
    %v3342 = vpop.f32.mrf.mxu0
    %v3343 = vadd.f32 %v2412, %v3342
    %v3344 = vpop.f32.mrf.mxu0
    %3345 = vmatprep.mubr.f32.mxu0 0.0
    %3346 = vmatmul.mubr.f32.gmra.mxu0 %v2590
    %v3347 = vpop.f32.mrf.mxu0
    %v3348 = vadd.f32 %v2412, %v3347
    %v3349 = vpop.f32.mrf.mxu0
    %3350 = vmatprep.mubr.f32.mxu0 0.0
    %3351 = vmatmul.mubr.f32.gmra.mxu0 %v2593
    %v3352 = vpop.f32.mrf.mxu0
    %v3353 = vadd.f32 %v2412, %v3352
    %v3354 = vpop.f32.mrf.mxu0
    %3355 = vmatprep.mubr.f32.mxu0 0.0
    %3356 = vmatmul.mubr.f32.gmra.mxu0 %v2596
    %v3357 = vpop.f32.mrf.mxu0
    %v3358 = vadd.f32 %v2412, %v3357
    %v3359 = vpop.f32.mrf.mxu0
    %3360 = vmatprep.mubr.f32.mxu0 0.0
    %3361 = vmatmul.mubr.f32.gmra.mxu0 %v2599
    %v3362 = vpop.f32.mrf.mxu0
    %v3363 = vadd.f32 %v2412, %v3362
    %v3364 = vpop.f32.mrf.mxu0
    %3365 = vmatprep.mubr.f32.mxu0 0.0
    %3366 = vmatmul.mubr.f32.gmra.mxu0 %v2602
    %v3367 = vpop.f32.mrf.mxu0
    %v3368 = vadd.f32 %v2412, %v3367
    %v3369 = vpop.f32.mrf.mxu0
    %3370 = vmatprep.mubr.f32.mxu0 0.0
    %3371 = vmatmul.mubr.f32.gmra.mxu0 %v2605
    %v3372 = vpop.f32.mrf.mxu0
    %v3373 = vadd.f32 %v2412, %v3372
    %v3374 = vpop.f32.mrf.mxu0
    %3375 = vmatprep.mubr.f32.mxu0 0.0
    %3376 = vmatmul.mubr.f32.gmra.mxu0 %v2608
    %v3377 = vpop.f32.mrf.mxu0
    %v3378 = vadd.f32 %v2412, %v3377
    %v3379 = vpop.f32.mrf.mxu0
    %3380 = vmatprep.mubr.f32.mxu0 0.0
    %3381 = vmatmul.mubr.f32.gmra.mxu0 %v2611
    %v3382 = vpop.f32.mrf.mxu0
    %v3383 = vadd.f32 %v2412, %v3382
    %v3384 = vpop.f32.mrf.mxu0
    %3385 = vmatprep.mubr.f32.mxu0 0.0
    %3386 = vmatmul.mubr.f32.gmra.mxu0 %v2614
    %v3387 = vpop.f32.mrf.mxu0
    %v3388 = vadd.f32 %v2412, %v3387
    %v3389 = vpop.f32.mrf.mxu0
    %3390 = vmatprep.mubr.f32.mxu0 0.0
    %3391 = vmatmul.mubr.f32.gmra.mxu0 %v2617
    %v3392 = vpop.f32.mrf.mxu0
    %v3393 = vadd.f32 %v2412, %v3392
    %v3394 = vpop.f32.mrf.mxu0
    %3395 = vmatprep.mubr.f32.mxu0 0.0
    %3396 = vmatmul.mubr.f32.gmra.mxu0 %v2620
    %v3397 = vpop.f32.mrf.mxu0
    %v3398 = vadd.f32 %v2412, %v3397
    %v3399 = vpop.f32.mrf.mxu0
    %3400 = vmatprep.mubr.f32.mxu0 0.0
    %3401 = vmatmul.mubr.f32.gmra.mxu0 %v2623
    %v3402 = vpop.f32.mrf.mxu0
    %v3403 = vadd.f32 %v2412, %v3402
    %v3404 = vpop.f32.mrf.mxu0
    %3405 = vmatprep.mubr.f32.mxu0 0.0
    %3406 = vmatmul.mubr.f32.gmra.mxu0 %v2626
    %v3407 = vpop.f32.mrf.mxu0
    %v3408 = vadd.f32 %v2412, %v3407
    %v3409 = vpop.f32.mrf.mxu0
    %3410 = vmatprep.mubr.f32.mxu0 0.0
    %3411 = vmatmul.mubr.f32.gmra.mxu0 %v2629
    %v3412 = vpop.f32.mrf.mxu0
    %v3413 = vadd.f32 %v2412, %v3412
    %v3414 = vpop.f32.mrf.mxu0
    %3415 = vmatprep.mubr.f32.mxu0 0.0
    %3416 = vmatmul.mubr.f32.gmra.mxu0 %v2632
    %v3417 = vpop.f32.mrf.mxu0
    %v3418 = vadd.f32 %v2412, %v3417
    %v3419 = vpop.f32.mrf.mxu0
    %3420 = vmatprep.mubr.f32.mxu0 0.0
    %3421 = vmatmul.mubr.f32.gmra.mxu0 %v2635
    %v3422 = vpop.f32.mrf.mxu0
    %v3423 = vadd.f32 %v2412, %v3422
    %v3424 = vpop.f32.mrf.mxu0
    %3425 = vmatprep.mubr.f32.mxu0 0.0
    %3426 = vmatmul.mubr.f32.gmra.mxu0 %v2638
    %v3427 = vpop.f32.mrf.mxu0
    %v3428 = vadd.f32 %v2412, %v3427
    %v3429 = vpop.f32.mrf.mxu0
    %3430 = vmatprep.mubr.f32.mxu0 0.0
    %3431 = vmatmul.mubr.f32.gmra.mxu0 %v2641
    %v3432 = vpop.f32.mrf.mxu0
    %v3433 = vadd.f32 %v2412, %v3432
    %v3434 = vpop.f32.mrf.mxu0
    %3435 = vmatprep.mubr.f32.mxu0 0.0
    %3436 = vmatmul.mubr.f32.gmra.mxu0 %v2644
    %v3437 = vpop.f32.mrf.mxu0
    %v3438 = vadd.f32 %v2412, %v3437
    %v3439 = vpop.f32.mrf.mxu0
    %3440 = vmatprep.mubr.f32.mxu0 0.0
    %3441 = vmatmul.mubr.f32.gmra.mxu0 %v2647
    %v3442 = vpop.f32.mrf.mxu0
    %v3443 = vadd.f32 %v2412, %v3442
    %v3444 = vpop.f32.mrf.mxu0
    %3445 = vmatprep.mubr.f32.mxu0 0.0
    %3446 = vmatmul.mubr.f32.gmra.mxu0 %v2650
    %v3447 = vpop.f32.mrf.mxu0
    %v3448 = vadd.f32 %v2412, %v3447
    %v3449 = vpop.f32.mrf.mxu0
    %3450 = vmatprep.mubr.f32.mxu0 0.0
    %3451 = vmatmul.mubr.f32.gmra.mxu0 %v2653
    %v3452 = vpop.f32.mrf.mxu0
    %v3453 = vadd.f32 %v2412, %v3452
    %v3454 = vpop.f32.mrf.mxu0
    %3455 = vmatprep.mubr.f32.mxu0 0.0
    %3456 = vmatmul.mubr.f32.gmra.mxu0 %v2656
    %v3457 = vpop.f32.mrf.mxu0
    %v3458 = vadd.f32 %v2412, %v3457
    %v3459 = vpop.f32.mrf.mxu0
    %3460 = vmatprep.mubr.f32.mxu0 0.0
    %3461 = vmatmul.mubr.f32.gmra.mxu0 %v2659
    %v3462 = vpop.f32.mrf.mxu0
    %v3463 = vadd.f32 %v2412, %v3462
    %v3464 = vpop.f32.mrf.mxu0
    %3465 = vmatprep.mubr.f32.mxu0 0.0
    %3466 = vmatmul.mubr.f32.gmra.mxu0 %v2662
    %v3467 = vpop.f32.mrf.mxu0
    %v3468 = vadd.f32 %v2412, %v3467
    %v3469 = vpop.f32.mrf.mxu0
    %3470 = vmatprep.mubr.f32.mxu0 0.0
    %3471 = vmatmul.mubr.f32.gmra.mxu0 %v2665
    %v3472 = vpop.f32.mrf.mxu0
    %v3473 = vadd.f32 %v2412, %v3472
    %v3474 = vpop.f32.mrf.mxu0
    %3475 = vmatprep.mubr.f32.mxu0 0.0
    %3476 = vmatmul.mubr.f32.gmra.mxu0 %v2668
    %v3477 = vpop.f32.mrf.mxu0
    %v3478 = vadd.f32 %v2412, %v3477
    %v3479 = vpop.f32.mrf.mxu0
    %3480 = vmatprep.mubr.f32.mxu0 0.0
    %3481 = vmatmul.mubr.f32.gmra.mxu0 %v2671
    %v3482 = vpop.f32.mrf.mxu0
    %v3483 = vadd.f32 %v2412, %v3482
    %v3484 = vpop.f32.mrf.mxu0
    %3485 = vmatprep.mubr.f32.mxu0 0.0
    %3486 = vmatmul.mubr.f32.gmra.mxu0 %v2674
    %v3487 = vpop.f32.mrf.mxu0
    %v3488 = vadd.f32 %v2412, %v3487
    %v3489 = vpop.f32.mrf.mxu0
    %3490 = vmatprep.mubr.f32.mxu0 0.0
    %3491 = vmatmul.mubr.f32.gmra.mxu0 %v2677
    %v3492 = vpop.f32.mrf.mxu0
    %v3493 = vadd.f32 %v2412, %v3492
    %v3494 = vpop.f32.mrf.mxu0
    %3495 = vmatprep.mubr.f32.mxu0 0.0
    %3496 = vmatmul.mubr.f32.gmra.mxu0 %v2680
    %v3497 = vpop.f32.mrf.mxu0
    %v3498 = vadd.f32 %v2412, %v3497
    %v3499 = vpop.f32.mrf.mxu0
    %3500 = vmatprep.mubr.f32.mxu0 0.0
    %3501 = vmatmul.mubr.f32.gmra.mxu0 %v2683
    %v3502 = vpop.f32.mrf.mxu0
    %v3503 = vadd.f32 %v2412, %v3502
    %v3504 = vpop.f32.mrf.mxu0
    %3505 = vmatprep.mubr.f32.mxu0 0.0
    %3506 = vmatmul.mubr.f32.gmra.mxu0 %v2686
    %v3507 = vpop.f32.mrf.mxu0
    %v3508 = vadd.f32 %v2412, %v3507
    %v3509 = vpop.f32.mrf.mxu0
    %3510 = vmatprep.mubr.f32.mxu0 0.0
    %3511 = vmatmul.mubr.f32.gmra.mxu0 %v2689
    %v3512 = vpop.f32.mrf.mxu0
    %v3513 = vadd.f32 %v2412, %v3512
    %v3514 = vpop.f32.mrf.mxu0
    %3515 = vmatprep.mubr.f32.mxu0 0.0
    %3516 = vmatmul.mubr.f32.gmra.mxu0 %v2692
    %v3517 = vpop.f32.mrf.mxu0
    %v3518 = vadd.f32 %v2412, %v3517
    %v3519 = vpop.f32.mrf.mxu0
    %3520 = vmatprep.mubr.f32.mxu0 0.0
    %3521 = vmatmul.mubr.f32.gmra.mxu0 %v2695
    %v3522 = vpop.f32.mrf.mxu0
    %v3523 = vadd.f32 %v2412, %v3522
    %v3524 = vpop.f32.mrf.mxu0
    %3525 = vmatprep.mubr.f32.mxu0 0.0
    %3526 = vmatmul.mubr.f32.gmra.mxu0 %v2698
    %v3527 = vpop.f32.mrf.mxu0
    %v3528 = vadd.f32 %v2412, %v3527
    %v3529 = vpop.f32.mrf.mxu0
    %3530 = vmatprep.mubr.f32.mxu0 0.0
    %3531 = vmatmul.mubr.f32.gmra.mxu0 %v2701
    %v3532 = vpop.f32.mrf.mxu0
    %v3533 = vadd.f32 %v2412, %v3532
    %v3534 = vpop.f32.mrf.mxu0
    %3535 = vmatprep.mubr.f32.mxu0 0.0
    %3536 = vmatmul.mubr.f32.gmra.mxu0 %v2704
    %v3537 = vpop.f32.mrf.mxu0
    %v3538 = vadd.f32 %v2412, %v3537
    %v3539 = vpop.f32.mrf.mxu0
    %3540 = vmatprep.mubr.f32.mxu0 0.0
    %3541 = vmatmul.mubr.f32.gmra.mxu0 %v2707
    %v3542 = vpop.f32.mrf.mxu0
    %v3543 = vadd.f32 %v2412, %v3542
    %v3544 = vpop.f32.mrf.mxu0
    %3545 = vmatprep.mubr.f32.mxu0 0.0
    %3546 = vmatmul.mubr.f32.gmra.mxu0 %v2710
    %v3547 = vpop.f32.mrf.mxu0
    %v3548 = vadd.f32 %v2412, %v3547
    %v3549 = vpop.f32.mrf.mxu0
    %3550 = vmatprep.mubr.f32.mxu0 0.0
    %3551 = vmatmul.mubr.f32.gmra.mxu0 %v2713
    %v3552 = vpop.f32.mrf.mxu0
    %v3553 = vadd.f32 %v2412, %v3552
    %v3554 = vpop.f32.mrf.mxu0
    %3555 = vmatprep.mubr.f32.mxu0 0.0
    %3556 = vmatmul.mubr.f32.gmra.mxu0 %v2716
    %v3557 = vpop.f32.mrf.mxu0
    %v3558 = vadd.f32 %v2412, %v3557
    %v3559 = vpop.f32.mrf.mxu0
    %3560 = vmatprep.mubr.f32.mxu0 0.0
    %3561 = vmatmul.mubr.f32.gmra.mxu0 %v2719
    %v3562 = vpop.f32.mrf.mxu0
    %v3563 = vadd.f32 %v2412, %v3562
    %v3564 = vpop.f32.mrf.mxu0
    %3565 = vmatprep.mubr.f32.mxu0 0.0
    %3566 = vmatmul.mubr.f32.gmra.mxu0 %v2722
    %v3567 = vpop.f32.mrf.mxu0
    %v3568 = vadd.f32 %v2412, %v3567
    %v3569 = vpop.f32.mrf.mxu0
    %3570 = vmatprep.mubr.f32.mxu0 0.0
    %3571 = vmatmul.mubr.f32.gmra.mxu0 %v2725
    %v3572 = vpop.f32.mrf.mxu0
    %v3573 = vadd.f32 %v2412, %v3572
    %v3574 = vpop.f32.mrf.mxu0
    %3575 = vmatprep.mubr.f32.mxu0 0.0
    %3576 = vmatmul.mubr.f32.gmra.mxu0 %v2728
    %v3577 = vpop.f32.mrf.mxu0
    %v3578 = vadd.f32 %v2412, %v3577
    %v3579 = vpop.f32.mrf.mxu0
    %3580 = vmatprep.mubr.f32.mxu0 0.0
    %3581 = vmatmul.mubr.f32.gmra.mxu0 %v2731
    %v3582 = vpop.f32.mrf.mxu0
    %v3583 = vadd.f32 %v2412, %v3582
    %v3584 = vpop.f32.mrf.mxu0
    %3585 = vmatprep.mubr.f32.mxu0 0.0
    %3586 = vmatmul.mubr.f32.gmra.mxu0 %v2734
    %v3587 = vpop.f32.mrf.mxu0
    %v3588 = vadd.f32 %v2412, %v3587
    %v3589 = vpop.f32.mrf.mxu0
    %3590 = vmatprep.mubr.f32.mxu0 0.0
    %3591 = vmatmul.mubr.f32.gmra.mxu0 %v2737
    %v3592 = vpop.f32.mrf.mxu0
    %v3593 = vadd.f32 %v2412, %v3592
    %v3594 = vpop.f32.mrf.mxu0
    %3595 = vmatprep.mubr.f32.mxu0 0.0
    %3596 = vmatmul.mubr.f32.gmra.mxu0 %v2740
    %v3597 = vpop.f32.mrf.mxu0
    %v3598 = vadd.f32 %v2412, %v3597
    %v3599 = vpop.f32.mrf.mxu0
    %3600 = vmatprep.mubr.f32.mxu0 0.0
    %3601 = vmatmul.mubr.f32.gmra.mxu0 %v2743
    %v3602 = vpop.f32.mrf.mxu0
    %v3603 = vadd.f32 %v2412, %v3602
    %v3604 = vpop.f32.mrf.mxu0
    %3605 = vmatprep.mubr.f32.mxu0 0.0
    %3606 = vmatmul.mubr.f32.gmra.mxu0 %v2746
    %v3607 = vpop.f32.mrf.mxu0
    %v3608 = vadd.f32 %v2412, %v3607
    %v3609 = vpop.f32.mrf.mxu0
    %3610 = vmatprep.mubr.f32.mxu0 0.0
    %3611 = vmatmul.mubr.f32.gmra.mxu0 %v2749
    %v3612 = vpop.f32.mrf.mxu0
    %v3613 = vadd.f32 %v2412, %v3612
    %v3614 = vpop.f32.mrf.mxu0
    %3615 = vmatprep.mubr.f32.mxu0 0.0
    %3616 = vmatmul.mubr.f32.gmra.mxu0 %v2752
    %v3617 = vpop.f32.mrf.mxu0
    %v3618 = vadd.f32 %v2412, %v3617
    %v3619 = vpop.f32.mrf.mxu0
    %3620 = vmatprep.mubr.f32.mxu0 0.0
    %3621 = vmatmul.mubr.f32.gmra.mxu0 %v2755
    %v3622 = vpop.f32.mrf.mxu0
    %v3623 = vadd.f32 %v2412, %v3622
    %v3624 = vpop.f32.mrf.mxu0
    %3625 = vmatprep.mubr.f32.mxu0 0.0
    %3626 = vmatmul.mubr.f32.gmra.mxu0 %v2758
    %v3627 = vpop.f32.mrf.mxu0
    %v3628 = vadd.f32 %v2412, %v3627
    %v3629 = vpop.f32.mrf.mxu0
    %3630 = vmatprep.mubr.f32.mxu0 0.0
    %3631 = vmatmul.mubr.f32.gmra.mxu0 %v2761
    %v3632 = vpop.f32.mrf.mxu0
    %v3633 = vadd.f32 %v2412, %v3632
    %v3634 = vpop.f32.mrf.mxu0
    %3635 = vmatprep.mubr.f32.mxu0 0.0
    %3636 = vmatmul.mubr.f32.gmra.mxu0 %v2764
    %v3637 = vpop.f32.mrf.mxu0
    %v3638 = vadd.f32 %v2412, %v3637
    %v3639 = vpop.f32.mrf.mxu0
    %3640 = vmatprep.mubr.f32.mxu0 0.0
    %3641 = vmatmul.mubr.f32.gmra.mxu0 %v2767
    %v3642 = vpop.f32.mrf.mxu0
    %v3643 = vadd.f32 %v2412, %v3642
    %v3644 = vpop.f32.mrf.mxu0
    %3645 = vmatprep.mubr.f32.mxu0 0.0
    %3646 = vmatmul.mubr.f32.gmra.mxu0 %v2770
    %v3647 = vpop.f32.mrf.mxu0
    %v3648 = vadd.f32 %v2412, %v3647
    %v3649 = vpop.f32.mrf.mxu0
    %3650 = vmatprep.mubr.f32.mxu0 0.0
    %3651 = vmatmul.mubr.f32.gmra.mxu0 %v2773
    %v3652 = vpop.f32.mrf.mxu0
    %v3653 = vadd.f32 %v2412, %v3652
    %v3654 = vpop.f32.mrf.mxu0
    %3655 = vmatprep.mubr.f32.mxu0 0.0
    %3656 = vmatmul.mubr.f32.gmra.mxu0 %v2776
    %v3657 = vpop.f32.mrf.mxu0
    %v3658 = vadd.f32 %v2412, %v3657
    %v3659 = vpop.f32.mrf.mxu0
    %3660 = vmatprep.mubr.f32.mxu0 0.0
    %3661 = vmatmul.mubr.f32.gmra.mxu0 %v2779
    %v3662 = vpop.f32.mrf.mxu0
    %v3663 = vadd.f32 %v2412, %v3662
    %v3664 = vpop.f32.mrf.mxu0
    %3665 = vmatprep.mubr.f32.mxu0 0.0
    %3666 = vmatmul.mubr.f32.gmra.mxu0 %v2782
    %v3667 = vpop.f32.mrf.mxu0
    %v3668 = vadd.f32 %v2412, %v3667
    %v3669 = vpop.f32.mrf.mxu0
    %3670 = vmatprep.mubr.f32.mxu0 0.0
    %3671 = vmatmul.mubr.f32.gmra.mxu0 %v2785
    %v3672 = vpop.f32.mrf.mxu0
    %v3673 = vadd.f32 %v2412, %v3672
    %v3674 = vpop.f32.mrf.mxu0
    %3675 = vmatprep.mubr.f32.mxu0 0.0
    %3676 = vmatmul.mubr.f32.gmra.mxu0 %v2788
    %v3677 = vpop.f32.mrf.mxu0
    %v3678 = vadd.f32 %v2412, %v3677
    %v3679 = vpop.f32.mrf.mxu0
    %3680 = vmatprep.mubr.f32.mxu0 0.0
    %3681 = vmatmul.mubr.f32.gmra.mxu0 %v2791
    %v3682 = vpop.f32.mrf.mxu0
    %v3683 = vadd.f32 %v2412, %v3682
    %v3684 = vpop.f32.mrf.mxu0
    %3685 = vmatprep.mubr.f32.mxu0 0.0
    %3686 = vmatmul.mubr.f32.gmra.mxu0 %v2794
    %v3687 = vpop.f32.mrf.mxu0
    %v3688 = vadd.f32 %v2412, %v3687
    %v3689 = vpop.f32.mrf.mxu0
    %3690 = vmatprep.mubr.f32.mxu0 0.0
    %3691 = vmatmul.mubr.f32.gmra.mxu0 %v2797
    %v3692 = vpop.f32.mrf.mxu0
    %v3693 = vadd.f32 %v2412, %v3692
    %v3694 = vpop.f32.mrf.mxu0
    %3695 = vmatprep.mubr.f32.mxu0 0.0
    %3696 = vmatmul.mubr.f32.gmra.mxu0 %v2800
    %v3697 = vpop.f32.mrf.mxu0
    %v3698 = vadd.f32 %v2412, %v3697
    %v3699 = vpop.f32.mrf.mxu0
    %3700 = vmatprep.mubr.f32.mxu0 0.0
    %3701 = vmatmul.mubr.f32.gmra.mxu0 %v2803
    %v3702 = vpop.f32.mrf.mxu0
    %v3703 = vadd.f32 %v2412, %v3702
    %v3704 = vpop.f32.mrf.mxu0
    %3705 = vmatprep.mubr.f32.mxu0 0.0
    %3706 = vmatmul.mubr.f32.gmra.mxu0 %v2806
    %v3707 = vpop.f32.mrf.mxu0
    %v3708 = vadd.f32 %v2412, %v3707
    %v3709 = vpop.f32.mrf.mxu0
    %3710 = vmatprep.mubr.f32.mxu0 0.0
    %3711 = vmatmul.mubr.f32.gmra.mxu0 %v2809
    %v3712 = vpop.f32.mrf.mxu0
    %v3713 = vadd.f32 %v2412, %v3712
    %v3714 = vpop.f32.mrf.mxu0
    %3715 = vmatprep.mubr.f32.mxu0 0.0
    %3716 = vmatmul.mubr.f32.gmra.mxu0 %v2812
    %v3717 = vpop.f32.mrf.mxu0
    %v3718 = vadd.f32 %v2412, %v3717
    %v3719 = vpop.f32.mrf.mxu0
    %3720 = vmatprep.mubr.f32.mxu0 0.0
    %3721 = vmatmul.mubr.f32.gmra.mxu0 %v2815
    %v3722 = vpop.f32.mrf.mxu0
    %v3723 = vadd.f32 %v2412, %v3722
    %v3724 = vpop.f32.mrf.mxu0
    %3725 = vmatprep.mubr.f32.mxu0 0.0
    %3726 = vmatmul.mubr.f32.gmra.mxu0 %v2818
    %v3727 = vpop.f32.mrf.mxu0
    %v3728 = vadd.f32 %v2412, %v3727
    %v3729 = vpop.f32.mrf.mxu0
    %3730 = vmatprep.mubr.f32.mxu0 0.0
    %3731 = vmatmul.mubr.f32.gmra.mxu0 %v2821
    %v3732 = vpop.f32.mrf.mxu0
    %v3733 = vadd.f32 %v2412, %v3732
    %v3734 = vpop.f32.mrf.mxu0
    %3735 = vmatprep.mubr.f32.mxu0 0.0
    %3736 = vmatmul.mubr.f32.gmra.mxu0 %v2824
    %v3737 = vpop.f32.mrf.mxu0
    %v3738 = vadd.f32 %v2412, %v3737
    %v3739 = vpop.f32.mrf.mxu0
    %3740 = vmatprep.mubr.f32.mxu0 0.0
    %3741 = vmatmul.mubr.f32.gmra.mxu0 %v2827
    %v3742 = vpop.f32.mrf.mxu0
    %v3743 = vadd.f32 %v2412, %v3742
    %v3744 = vpop.f32.mrf.mxu0
    %3745 = vmatprep.mubr.f32.mxu0 0.0
    %3746 = vmatmul.mubr.f32.gmra.mxu0 %v2830
    %v3747 = vpop.f32.mrf.mxu0
    %v3748 = vadd.f32 %v2412, %v3747
    %v3749 = vpop.f32.mrf.mxu0
    %3750 = vmatprep.mubr.f32.mxu0 0.0
    %3751 = vmatmul.mubr.f32.gmra.mxu0 %v2833
    %v3752 = vpop.f32.mrf.mxu0
    %v3753 = vadd.f32 %v2412, %v3752
    %v3754 = vpop.f32.mrf.mxu0
    %3755 = vmatprep.mubr.f32.mxu0 0.0
    %3756 = vmatmul.mubr.f32.gmra.mxu0 %v2836
    %v3757 = vpop.f32.mrf.mxu0
    %v3758 = vadd.f32 %v2412, %v3757
    %v3759 = vpop.f32.mrf.mxu0
    %3760 = vmatprep.mubr.f32.mxu0 0.0
    %3761 = vmatmul.mubr.f32.gmra.mxu0 %v2839
    %v3762 = vpop.f32.mrf.mxu0
    %v3763 = vadd.f32 %v2412, %v3762
    %v3764 = vpop.f32.mrf.mxu0
    %3765 = vmatprep.mubr.f32.mxu0 0.0
    %3766 = vmatmul.mubr.f32.gmra.mxu0 %v2842
    %v3767 = vpop.f32.mrf.mxu0
    %v3768 = vadd.f32 %v2412, %v3767
    %v3769 = vpop.f32.mrf.mxu0
    %3770 = vmatprep.mubr.f32.mxu0 0.0
    %3771 = vmatmul.mubr.f32.gmra.mxu0 %v2845
    %v3772 = vpop.f32.mrf.mxu0
    %v3773 = vadd.f32 %v2412, %v3772
    %v3774 = vpop.f32.mrf.mxu0
    %3775 = vmatprep.mubr.f32.mxu0 0.0
    %3776 = vmatmul.mubr.f32.gmra.mxu0 %v2848
    %v3777 = vpop.f32.mrf.mxu0
    %v3778 = vadd.f32 %v2412, %v3777
    %v3779 = vpop.f32.mrf.mxu0
    %3780 = vmatprep.mubr.f32.mxu0 0.0
    %3781 = vmatmul.mubr.f32.gmra.mxu0 %v2851
    %v3782 = vpop.f32.mrf.mxu0
    %v3783 = vadd.f32 %v2412, %v3782
    %v3784 = vpop.f32.mrf.mxu0
    %3785 = vmatprep.mubr.f32.mxu0 0.0
    %3786 = vmatmul.mubr.f32.gmra.mxu0 %v2854
    %v3787 = vpop.f32.mrf.mxu0
    %v3788 = vadd.f32 %v2412, %v3787
    %v3789 = vpop.f32.mrf.mxu0
    %3790 = vmatprep.mubr.f32.mxu0 0.0
    %3791 = vmatmul.mubr.f32.gmra.mxu0 %v2857
    %v3792 = vpop.f32.mrf.mxu0
    %v3793 = vadd.f32 %v2412, %v3792
    %v3794 = vpop.f32.mrf.mxu0
    %3795 = vmatprep.mubr.f32.mxu0 0.0
    %3796 = vmatmul.mubr.f32.gmra.mxu0 %v2860
    %v3797 = vpop.f32.mrf.mxu0
    %v3798 = vadd.f32 %v2412, %v3797
    %v3799 = vpop.f32.mrf.mxu0
    %3800 = vmatprep.mubr.f32.mxu0 0.0
    %3801 = vmatmul.mubr.f32.gmra.mxu0 %v2863
    %v3802 = vpop.f32.mrf.mxu0
    %v3803 = vadd.f32 %v2412, %v3802
    %v3804 = vpop.f32.mrf.mxu0
    %3805 = vmatprep.mubr.f32.mxu0 0.0
    %3806 = vmatmul.mubr.f32.gmra.mxu0 %v2866
    %v3807 = vpop.f32.mrf.mxu0
    %v3808 = vadd.f32 %v2412, %v3807
    %v3809 = vpop.f32.mrf.mxu0
    %3810 = vmatprep.mubr.f32.mxu0 0.0
    %3811 = vmatmul.mubr.f32.gmra.mxu0 %v2869
    %v3812 = vpop.f32.mrf.mxu0
    %v3813 = vadd.f32 %v2412, %v3812
    %v3814 = vpop.f32.mrf.mxu0
    %3815 = vmatprep.mubr.f32.mxu0 0.0
    %3816 = vmatmul.mubr.f32.gmra.mxu0 %v2872
    %v3817 = vpop.f32.mrf.mxu0
    %v3818 = vadd.f32 %v2412, %v3817
    %v3819 = vpop.f32.mrf.mxu0
    %3820 = vmatprep.mubr.f32.mxu0 0.0
    %3821 = vmatmul.mubr.f32.gmra.mxu0 %v2875
    %v3822 = vpop.f32.mrf.mxu0
    %v3823 = vadd.f32 %v2412, %v3822
    %v3824 = vpop.f32.mrf.mxu0
    %3825 = vmatprep.mubr.f32.mxu0 0.0
    %3826 = vmatmul.mubr.f32.gmra.mxu0 %v2878
    %v3827 = vpop.f32.mrf.mxu0
    %v3828 = vadd.f32 %v2412, %v3827
    %v3829 = vpop.f32.mrf.mxu0
    %3830 = vmatprep.mubr.f32.mxu0 0.0
    %3831 = vmatmul.mubr.f32.gmra.mxu0 %v2881
    %v3832 = vpop.f32.mrf.mxu0
    %v3833 = vadd.f32 %v2412, %v3832
    %v3834 = vpop.f32.mrf.mxu0
    %3835 = vmatprep.mubr.f32.mxu0 0.0
    %3836 = vmatmul.mubr.f32.gmra.mxu0 %v2884
    %v3837 = vpop.f32.mrf.mxu0
    %v3838 = vadd.f32 %v2412, %v3837
    %v3839 = vpop.f32.mrf.mxu0
    %3840 = vmatprep.mubr.f32.mxu0 0.0
    %3841 = vmatmul.mubr.f32.gmra.mxu0 %v2887
    %v3842 = vpop.f32.mrf.mxu0
    %v3843 = vadd.f32 %v2412, %v3842
    %v3844 = vpop.f32.mrf.mxu0
    %3845 = vmatprep.mubr.f32.mxu0 0.0
    %3846 = vmatmul.mubr.f32.gmra.mxu0 %v2890
    %v3847 = vpop.f32.mrf.mxu0
    %v3848 = vadd.f32 %v2412, %v3847
    %v3849 = vpop.f32.mrf.mxu0
    %3850 = vmatprep.mubr.f32.mxu0 0.0
    %3851 = vmatmul.mubr.f32.gmra.mxu0 %v2893
    %v3852 = vpop.f32.mrf.mxu0
    %v3853 = vadd.f32 %v2412, %v3852
    %v3854 = vpop.f32.mrf.mxu0
    %3855 = vmatprep.mubr.f32.mxu0 0.0
    %3856 = vmatmul.mubr.f32.gmra.mxu0 %v2896
    %v3857 = vpop.f32.mrf.mxu0
    %v3858 = vadd.f32 %v2412, %v3857
    %v3859 = vpop.f32.mrf.mxu0
    %3860 = vmatprep.mubr.f32.mxu0 0.0
    %3861 = vmatmul.mubr.f32.gmra.mxu0 %v2899
    %v3862 = vpop.f32.mrf.mxu0
    %v3863 = vadd.f32 %v2412, %v3862
    %v3864 = vpop.f32.mrf.mxu0
    %3865 = vmatprep.mubr.f32.mxu0 0.0
    %3866 = vmatmul.mubr.f32.gmra.mxu0 %v2902
    %v3867 = vpop.f32.mrf.mxu0
    %v3868 = vadd.f32 %v2412, %v3867
    %v3869 = vpop.f32.mrf.mxu0
    %3870 = vmatprep.mubr.f32.mxu0 0.0
    %3871 = vmatmul.mubr.f32.gmra.mxu0 %v2905
    %v3872 = vpop.f32.mrf.mxu0
    %v3873 = vadd.f32 %v2412, %v3872
    %v3874 = vpop.f32.mrf.mxu0
    %3875 = vmatprep.mubr.f32.mxu0 0.0
    %3876 = vmatmul.mubr.f32.gmra.mxu0 %v2908
    %v3877 = vpop.f32.mrf.mxu0
    %v3878 = vadd.f32 %v2412, %v3877
    %v3879 = vpop.f32.mrf.mxu0
    %3880 = vmatprep.mubr.f32.mxu0 0.0
    %3881 = vmatmul.mubr.f32.gmra.mxu0 %v2911
    %v3882 = vpop.f32.mrf.mxu0
    %v3883 = vadd.f32 %v2412, %v3882
    %v3884 = vpop.f32.mrf.mxu0
    %3885 = vmatprep.mubr.f32.mxu0 0.0
    %3886 = vmatmul.mubr.f32.gmra.mxu0 %v2914
    %v3887 = vpop.f32.mrf.mxu0
    %v3888 = vadd.f32 %v2412, %v3887
    %v3889 = vpop.f32.mrf.mxu0
    %3890 = vmatprep.mubr.f32.mxu0 0.0
    %3891 = vmatmul.mubr.f32.gmra.mxu0 %v2917
    %v3892 = vpop.f32.mrf.mxu0
    %v3893 = vadd.f32 %v2412, %v3892
    %v3894 = vpop.f32.mrf.mxu0
    %3895 = vmatprep.mubr.f32.mxu0 0.0
    %3896 = vmatmul.mubr.f32.gmra.mxu0 %v2920
    %v3897 = vpop.f32.mrf.mxu0
    %v3898 = vadd.f32 %v2412, %v3897
    %v3899 = vpop.f32.mrf.mxu0
    %3900 = vmatprep.mubr.f32.mxu0 0.0
    %3901 = vmatmul.mubr.f32.gmra.mxu0 %v2923
    %v3902 = vpop.f32.mrf.mxu0
    %v3903 = vadd.f32 %v2412, %v3902
    %v3904 = vpop.f32.mrf.mxu0
    %3905 = vmatprep.mubr.f32.mxu0 0.0
    %3906 = vmatmul.mubr.f32.gmra.mxu0 %v2926
    %v3907 = vpop.f32.mrf.mxu0
    %v3908 = vadd.f32 %v2412, %v3907
    %v3909 = vpop.f32.mrf.mxu0
    %3910 = vmatprep.mubr.f32.mxu0 0.0
    %3911 = vmatmul.mubr.f32.gmra.mxu0 %v2929
    %v3912 = vpop.f32.mrf.mxu0
    %v3913 = vadd.f32 %v2412, %v3912
    %v3914 = vpop.f32.mrf.mxu0
    %3915 = vmatprep.mubr.f32.mxu0 0.0
    %3916 = vmatmul.mubr.f32.gmra.mxu0 %v2932
    %v3917 = vpop.f32.mrf.mxu0
    %v3918 = vadd.f32 %v2412, %v3917
    %v3919 = vpop.f32.mrf.mxu0
    %3920 = vmatprep.mubr.f32.mxu0 0.0
    %3921 = vmatmul.mubr.f32.gmra.mxu0 %v2935
    %v3922 = vpop.f32.mrf.mxu0
    %v3923 = vadd.f32 %v2412, %v3922
    %v3924 = vpop.f32.mrf.mxu0
    %3925 = vmatprep.mubr.f32.mxu0 0.0
    %3926 = vmatmul.mubr.f32.gmra.mxu0 %v2938
    %v3927 = vpop.f32.mrf.mxu0
    %v3928 = vadd.f32 %v2412, %v3927
    %v3929 = vpop.f32.mrf.mxu0
    %3930 = vmatprep.mubr.f32.mxu0 0.0
    %3931 = vmatmul.mubr.f32.gmra.mxu0 %v2941
    %v3932 = vpop.f32.mrf.mxu0
    %v3933 = vadd.f32 %v2412, %v3932
    %v3934 = vpop.f32.mrf.mxu0
    %3935 = vmatprep.mubr.f32.mxu0 0.0
    %3936 = vmatmul.mubr.f32.gmra.mxu0 %v2944
    %v3937 = vpop.f32.mrf.mxu0
    %v3938 = vadd.f32 %v2412, %v3937
    %v3939 = vpop.f32.mrf.mxu0
    %3940 = vmatprep.mubr.f32.mxu0 0.0
    %3941 = vmatmul.mubr.f32.gmra.mxu0 %v2947
    %v3942 = vpop.f32.mrf.mxu0
    %v3943 = vadd.f32 %v2412, %v3942
    %v3944 = vpop.f32.mrf.mxu0
    %3945 = vmatprep.mubr.f32.mxu0 0.0
    %3946 = vmatmul.mubr.f32.gmra.mxu0 %v2950
    %v3947 = vpop.f32.mrf.mxu0
    %v3948 = vadd.f32 %v2412, %v3947
    %v3949 = vpop.f32.mrf.mxu0
    %3950 = vmatprep.mubr.f32.mxu0 0.0
    %3951 = vmatmul.mubr.f32.gmra.mxu0 %v2953
    %v3952 = vpop.f32.mrf.mxu0
    %v3953 = vadd.f32 %v2412, %v3952
    %v3954 = vpop.f32.mrf.mxu0
    %3955 = vmatprep.mubr.f32.mxu0 0.0
    %3956 = vmatmul.mubr.f32.gmra.mxu0 %v2956
    %v3957 = vpop.f32.mrf.mxu0
    %v3958 = vadd.f32 %v2412, %v3957
    %v3959 = vpop.f32.mrf.mxu0
    %3960 = vmatprep.mubr.f32.mxu0 0.0
    %3961 = vmatmul.mubr.f32.gmra.mxu0 %v2959
    %v3962 = vpop.f32.mrf.mxu0
    %v3963 = vadd.f32 %v2412, %v3962
    %v3964 = vpop.f32.mrf.mxu0
    %3965 = vmatprep.mubr.f32.mxu0 0.0
    %3966 = vmatmul.mubr.f32.gmra.mxu0 %v2962
    %v3967 = vpop.f32.mrf.mxu0
    %v3968 = vadd.f32 %v2412, %v3967
    %v3969 = vpop.f32.mrf.mxu0
    %3970 = vmatprep.mubr.f32.mxu0 0.0
    %3971 = vmatmul.mubr.f32.gmra.mxu0 %v2965
    %v3972 = vpop.f32.mrf.mxu0
    %v3973 = vadd.f32 %v2412, %v3972
    %v3974 = vpop.f32.mrf.mxu0
    %3975 = vmatprep.mubr.f32.mxu0 0.0
    %3976 = vmatmul.mubr.f32.gmra.mxu0 %v2968
    %v3977 = vpop.f32.mrf.mxu0
    %v3978 = vadd.f32 %v2412, %v3977
    %v3979 = vpop.f32.mrf.mxu0
    %3980 = vmatprep.mubr.f32.mxu0 0.0
    %3981 = vmatmul.mubr.f32.gmra.mxu0 %v2971
    %v3982 = vpop.f32.mrf.mxu0
    %v3983 = vadd.f32 %v2412, %v3982
    %v3984 = vpop.f32.mrf.mxu0
    %3985 = vmatprep.mubr.f32.mxu0 0.0
    %3986 = vmatmul.mubr.f32.gmra.mxu0 %v2974
    %v3987 = vpop.f32.mrf.mxu0
    %v3988 = vadd.f32 %v2412, %v3987
    %v3989 = vpop.f32.mrf.mxu0
    %3990 = vmatprep.mubr.f32.mxu0 0.0
    %3991 = vmatmul.mubr.f32.gmra.mxu0 %v2977
    %v3992 = vpop.f32.mrf.mxu0
    %v3993 = vadd.f32 %v2412, %v3992
    %v3994 = vpop.f32.mrf.mxu0
    %3995 = vmatprep.mubr.f32.mxu0 0.0
    %3996 = vmatmul.mubr.f32.gmra.mxu0 %v2980
    %v3997 = vpop.f32.mrf.mxu0
    %v3998 = vadd.f32 %v2412, %v3997
    %v3999 = vpop.f32.mrf.mxu0
    %4000 = vmatprep.mubr.f32.mxu0 0.0
    %4001 = vmatmul.mubr.f32.gmra.mxu0 %v2983
    %v4002 = vpop.f32.mrf.mxu0
    %v4003 = vadd.f32 %v2412, %v4002
    %v4004 = vpop.f32.mrf.mxu0
    %4005 = vmatprep.mubr.f32.mxu0 0.0
    %4006 = vmatmul.mubr.f32.gmra.mxu0 %v2986
    %v4007 = vpop.f32.mrf.mxu0
    %v4008 = vadd.f32 %v2412, %v4007
    %v4009 = vpop.f32.mrf.mxu0
    %4010 = vmatprep.mubr.f32.mxu0 0.0
    %4011 = vmatmul.mubr.f32.gmra.mxu0 %v2989
    %v4012 = vpop.f32.mrf.mxu0
    %v4013 = vadd.f32 %v2412, %v4012
    %v4014 = vpop.f32.mrf.mxu0
    %4015 = vdwg.mxu0
    %v4016 = vmax.f32 %v3058, 0.0
    %v4017 = vmax.f32 %v3063, 0.0
    %v4018 = vmax.f32 %v3068, 0.0
    %v4019 = vmax.f32 %v3073, 0.0
    %v4020 = vmax.f32 %v3078, 0.0
    %v4021 = vmax.f32 %v3083, 0.0
    %v4022 = vmax.f32 %v3088, 0.0
    %v4023 = vmax.f32 %v3093, 0.0
    %v4024 = vmax.f32 %v3098, 0.0
    %v4025 = vmax.f32 %v3103, 0.0
    %v4026 = vmax.f32 %v3108, 0.0
    %v4027 = vmax.f32 %v3113, 0.0
    %v4028 = vmax.f32 %v3118, 0.0
    %v4029 = vmax.f32 %v3123, 0.0
    %v4030 = vmax.f32 %v3128, 0.0
    %v4031 = vmax.f32 %v3133, 0.0
    %v4032 = vmax.f32 %v3138, 0.0
    %v4033 = vmax.f32 %v3143, 0.0
    %v4034 = vmax.f32 %v3148, 0.0
    %v4035 = vmax.f32 %v3153, 0.0
    %v4036 = vmax.f32 %v3158, 0.0
    %v4037 = vmax.f32 %v3163, 0.0
    %v4038 = vmax.f32 %v3168, 0.0
    %v4039 = vmax.f32 %v3173, 0.0
    %v4040 = vmax.f32 %v3178, 0.0
    %v4041 = vmax.f32 %v3183, 0.0
    %v4042 = vmax.f32 %v3188, 0.0
    %v4043 = vmax.f32 %v3193, 0.0
    %v4044 = vmax.f32 %v3198, 0.0
    %v4045 = vmax.f32 %v3203, 0.0
    %v4046 = vmax.f32 %v3208, 0.0
    %v4047 = vmax.f32 %v3213, 0.0
    %v4048 = vmax.f32 %v3218, 0.0
    %v4049 = vmax.f32 %v3223, 0.0
    %v4050 = vmax.f32 %v3228, 0.0
    %v4051 = vmax.f32 %v3233, 0.0
    %v4052 = vmax.f32 %v3238, 0.0
    %v4053 = vmax.f32 %v3243, 0.0
    %v4054 = vmax.f32 %v3248, 0.0
    %v4055 = vmax.f32 %v3253, 0.0
    %v4056 = vmax.f32 %v3258, 0.0
    %v4057 = vmax.f32 %v3263, 0.0
    %v4058 = vmax.f32 %v3268, 0.0
    %v4059 = vmax.f32 %v3273, 0.0
    %v4060 = vmax.f32 %v3278, 0.0
    %v4061 = vmax.f32 %v3283, 0.0
    %v4062 = vmax.f32 %v3288, 0.0
    %v4063 = vmax.f32 %v3293, 0.0
    %v4064 = vmax.f32 %v3298, 0.0
    %v4065 = vmax.f32 %v3303, 0.0
    %v4066 = vmax.f32 %v3308, 0.0
    %v4067 = vmax.f32 %v3313, 0.0
    %v4068 = vmax.f32 %v3318, 0.0
    %v4069 = vmax.f32 %v3323, 0.0
    %v4070 = vmax.f32 %v3328, 0.0
    %v4071 = vmax.f32 %v3333, 0.0
    %v4072 = vmax.f32 %v3338, 0.0
    %v4073 = vmax.f32 %v3343, 0.0
    %v4074 = vmax.f32 %v3348, 0.0
    %v4075 = vmax.f32 %v3353, 0.0
    %v4076 = vmax.f32 %v3358, 0.0
    %v4077 = vmax.f32 %v3363, 0.0
    %v4078 = vmax.f32 %v3368, 0.0
    %v4079 = vmax.f32 %v3373, 0.0
    %v4080 = vmax.f32 %v3378, 0.0
    %v4081 = vmax.f32 %v3383, 0.0
    %v4082 = vmax.f32 %v3388, 0.0
    %v4083 = vmax.f32 %v3393, 0.0
    %v4084 = vmax.f32 %v3398, 0.0
    %v4085 = vmax.f32 %v3403, 0.0
    %v4086 = vmax.f32 %v3408, 0.0
    %v4087 = vmax.f32 %v3413, 0.0
    %v4088 = vmax.f32 %v3418, 0.0
    %v4089 = vmax.f32 %v3423, 0.0
    %v4090 = vmax.f32 %v3428, 0.0
    %v4091 = vmax.f32 %v3433, 0.0
    %v4092 = vmax.f32 %v3438, 0.0
    %v4093 = vmax.f32 %v3443, 0.0
    %v4094 = vmax.f32 %v3448, 0.0
    %v4095 = vmax.f32 %v3453, 0.0
    %v4096 = vmax.f32 %v3458, 0.0
    %v4097 = vmax.f32 %v3463, 0.0
    %v4098 = vmax.f32 %v3468, 0.0
    %v4099 = vmax.f32 %v3473, 0.0
    %v4100 = vmax.f32 %v3478, 0.0
    %v4101 = vmax.f32 %v3483, 0.0
    %v4102 = vmax.f32 %v3488, 0.0
    %v4103 = vmax.f32 %v3493, 0.0
    %v4104 = vmax.f32 %v3498, 0.0
    %v4105 = vmax.f32 %v3503, 0.0
    %v4106 = vmax.f32 %v3508, 0.0
    %v4107 = vmax.f32 %v3513, 0.0
    %v4108 = vmax.f32 %v3518, 0.0
    %v4109 = vmax.f32 %v3523, 0.0
    %v4110 = vmax.f32 %v3528, 0.0
    %v4111 = vmax.f32 %v3533, 0.0
    %v4112 = vmax.f32 %v3538, 0.0
    %v4113 = vmax.f32 %v3543, 0.0
    %v4114 = vmax.f32 %v3548, 0.0
    %v4115 = vmax.f32 %v3553, 0.0
    %v4116 = vmax.f32 %v3558, 0.0
    %v4117 = vmax.f32 %v3563, 0.0
    %v4118 = vmax.f32 %v3568, 0.0
    %v4119 = vmax.f32 %v3573, 0.0
    %v4120 = vmax.f32 %v3578, 0.0
    %v4121 = vmax.f32 %v3583, 0.0
    %v4122 = vmax.f32 %v3588, 0.0
    %v4123 = vmax.f32 %v3593, 0.0
    %v4124 = vmax.f32 %v3598, 0.0
    %v4125 = vmax.f32 %v3603, 0.0
    %v4126 = vmax.f32 %v3608, 0.0
    %v4127 = vmax.f32 %v3613, 0.0
    %v4128 = vmax.f32 %v3618, 0.0
    %v4129 = vmax.f32 %v3623, 0.0
    %v4130 = vmax.f32 %v3628, 0.0
    %v4131 = vmax.f32 %v3633, 0.0
    %v4132 = vmax.f32 %v3638, 0.0
    %v4133 = vmax.f32 %v3643, 0.0
    %v4134 = vmax.f32 %v3648, 0.0
    %v4135 = vmax.f32 %v3653, 0.0
    %v4136 = vmax.f32 %v3658, 0.0
    %v4137 = vmax.f32 %v3663, 0.0
    %v4138 = vmax.f32 %v3668, 0.0
    %v4139 = vmax.f32 %v3673, 0.0
    %v4140 = vmax.f32 %v3678, 0.0
    %v4141 = vmax.f32 %v3683, 0.0
    %v4142 = vmax.f32 %v3688, 0.0
    %v4143 = vmax.f32 %v3693, 0.0
    %v4144 = vmax.f32 %v3698, 0.0
    %v4145 = vmax.f32 %v3703, 0.0
    %v4146 = vmax.f32 %v3708, 0.0
    %v4147 = vmax.f32 %v3713, 0.0
    %v4148 = vmax.f32 %v3718, 0.0
    %v4149 = vmax.f32 %v3723, 0.0
    %v4150 = vmax.f32 %v3728, 0.0
    %v4151 = vmax.f32 %v3733, 0.0
    %v4152 = vmax.f32 %v3738, 0.0
    %v4153 = vmax.f32 %v3743, 0.0
    %v4154 = vmax.f32 %v3748, 0.0
    %v4155 = vmax.f32 %v3753, 0.0
    %v4156 = vmax.f32 %v3758, 0.0
    %v4157 = vmax.f32 %v3763, 0.0
    %v4158 = vmax.f32 %v3768, 0.0
    %v4159 = vmax.f32 %v3773, 0.0
    %v4160 = vmax.f32 %v3778, 0.0
    %v4161 = vmax.f32 %v3783, 0.0
    %v4162 = vmax.f32 %v3788, 0.0
    %v4163 = vmax.f32 %v3793, 0.0
    %v4164 = vmax.f32 %v3798, 0.0
    %v4165 = vmax.f32 %v3803, 0.0
    %v4166 = vmax.f32 %v3808, 0.0
    %v4167 = vmax.f32 %v3813, 0.0
    %v4168 = vmax.f32 %v3818, 0.0
    %v4169 = vmax.f32 %v3823, 0.0
    %v4170 = vmax.f32 %v3828, 0.0
    %v4171 = vmax.f32 %v3833, 0.0
    %v4172 = vmax.f32 %v3838, 0.0
    %v4173 = vmax.f32 %v3843, 0.0
    %v4174 = vmax.f32 %v3848, 0.0
    %v4175 = vmax.f32 %v3853, 0.0
    %v4176 = vmax.f32 %v3858, 0.0
    %v4177 = vmax.f32 %v3863, 0.0
    %v4178 = vmax.f32 %v3868, 0.0
    %v4179 = vmax.f32 %v3873, 0.0
    %v4180 = vmax.f32 %v3878, 0.0
    %v4181 = vmax.f32 %v3883, 0.0
    %v4182 = vmax.f32 %v3888, 0.0
    %v4183 = vmax.f32 %v3893, 0.0
    %v4184 = vmax.f32 %v3898, 0.0
    %v4185 = vmax.f32 %v3903, 0.0
    %v4186 = vmax.f32 %v3908, 0.0
    %v4187 = vmax.f32 %v3913, 0.0
    %v4188 = vmax.f32 %v3918, 0.0
    %v4189 = vmax.f32 %v3923, 0.0
    %v4190 = vmax.f32 %v3928, 0.0
    %v4191 = vmax.f32 %v3933, 0.0
    %v4192 = vmax.f32 %v3938, 0.0
    %v4193 = vmax.f32 %v3943, 0.0
    %v4194 = vmax.f32 %v3948, 0.0
    %v4195 = vmax.f32 %v3953, 0.0
    %v4196 = vmax.f32 %v3958, 0.0
    %v4197 = vmax.f32 %v3963, 0.0
    %v4198 = vmax.f32 %v3968, 0.0
    %v4199 = vmax.f32 %v3973, 0.0
    %v4200 = vmax.f32 %v3978, 0.0
    %v4201 = vmax.f32 %v3983, 0.0
    %v4202 = vmax.f32 %v3988, 0.0
    %v4203 = vmax.f32 %v3993, 0.0
    %v4204 = vmax.f32 %v3998, 0.0
    %v4205 = vmax.f32 %v4003, 0.0
    %v4206 = vmax.f32 %v4008, 0.0
    %v4207 = vmax.f32 %v4013, 0.0
    %v4208 = vadd.f32 %v4016, %v4017
    %v4209 = vadd.f32 %v4208, %v4018
    %v4210 = vadd.f32 %v4209, %v4019
    %v4211 = vadd.f32 %v4210, %v4020
    %v4212 = vadd.f32 %v4211, %v4021
    %v4213 = vadd.f32 %v4212, %v4022
    %v4214 = vadd.f32 %v4213, %v4023
    %v4215 = vrot.slane %v4214, 4
    %v4216 = vadd.f32 %v4214, %v4215
    %v4217 = vrot.slane %v4216, 2
    %v4218 = vadd.f32 %v4216, %v4217
    %v4219 = vrot.slane %v4218, 1
    %v4220 = vadd.f32 %v4218, %v4219
    %v4221 = vadd.f32 %v4024, %v4025
    %v4222 = vadd.f32 %v4221, %v4026
    %v4223 = vadd.f32 %v4222, %v4027
    %v4224 = vadd.f32 %v4223, %v4028
    %v4225 = vadd.f32 %v4224, %v4029
    %v4226 = vadd.f32 %v4225, %v4030
    %v4227 = vadd.f32 %v4226, %v4031
    %v4228 = vrot.slane %v4227, 4
    %v4229 = vadd.f32 %v4227, %v4228
    %v4230 = vrot.slane %v4229, 2
    %v4231 = vadd.f32 %v4229, %v4230
    %v4232 = vrot.slane %v4231, 1
    %v4233 = vadd.f32 %v4231, %v4232
    %v4234 = vadd.f32 %v4032, %v4033
    %v4235 = vadd.f32 %v4234, %v4034
    %v4236 = vadd.f32 %v4235, %v4035
    %v4237 = vadd.f32 %v4236, %v4036
    %v4238 = vadd.f32 %v4237, %v4037
    %v4239 = vadd.f32 %v4238, %v4038
    %v4240 = vadd.f32 %v4239, %v4039
    %v4241 = vrot.slane %v4240, 4
    %v4242 = vadd.f32 %v4240, %v4241
    %v4243 = vrot.slane %v4242, 2
    %v4244 = vadd.f32 %v4242, %v4243
    %v4245 = vrot.slane %v4244, 1
    %v4246 = vadd.f32 %v4244, %v4245
    %v4247 = vadd.f32 %v4040, %v4041
    %v4248 = vadd.f32 %v4247, %v4042
    %v4249 = vadd.f32 %v4248, %v4043
    %v4250 = vadd.f32 %v4249, %v4044
    %v4251 = vadd.f32 %v4250, %v4045
    %v4252 = vadd.f32 %v4251, %v4046
    %v4253 = vadd.f32 %v4252, %v4047
    %v4254 = vrot.slane %v4253, 4
    %v4255 = vadd.f32 %v4253, %v4254
    %v4256 = vrot.slane %v4255, 2
    %v4257 = vadd.f32 %v4255, %v4256
    %v4258 = vrot.slane %v4257, 1
    %v4259 = vadd.f32 %v4257, %v4258
    %v4260 = vadd.f32 %v4048, %v4049
    %v4261 = vadd.f32 %v4260, %v4050
    %v4262 = vadd.f32 %v4261, %v4051
    %v4263 = vadd.f32 %v4262, %v4052
    %v4264 = vadd.f32 %v4263, %v4053
    %v4265 = vadd.f32 %v4264, %v4054
    %v4266 = vadd.f32 %v4265, %v4055
    %v4267 = vrot.slane %v4266, 4
    %v4268 = vadd.f32 %v4266, %v4267
    %v4269 = vrot.slane %v4268, 2
    %v4270 = vadd.f32 %v4268, %v4269
    %v4271 = vrot.slane %v4270, 1
    %v4272 = vadd.f32 %v4270, %v4271
    %v4273 = vadd.f32 %v4056, %v4057
    %v4274 = vadd.f32 %v4273, %v4058
    %v4275 = vadd.f32 %v4274, %v4059
    %v4276 = vadd.f32 %v4275, %v4060
    %v4277 = vadd.f32 %v4276, %v4061
    %v4278 = vadd.f32 %v4277, %v4062
    %v4279 = vadd.f32 %v4278, %v4063
    %v4280 = vrot.slane %v4279, 4
    %v4281 = vadd.f32 %v4279, %v4280
    %v4282 = vrot.slane %v4281, 2
    %v4283 = vadd.f32 %v4281, %v4282
    %v4284 = vrot.slane %v4283, 1
    %v4285 = vadd.f32 %v4283, %v4284
    %v4286 = vadd.f32 %v4064, %v4065
    %v4287 = vadd.f32 %v4286, %v4066
    %v4288 = vadd.f32 %v4287, %v4067
    %v4289 = vadd.f32 %v4288, %v4068
    %v4290 = vadd.f32 %v4289, %v4069
    %v4291 = vadd.f32 %v4290, %v4070
    %v4292 = vadd.f32 %v4291, %v4071
    %v4293 = vrot.slane %v4292, 4
    %v4294 = vadd.f32 %v4292, %v4293
    %v4295 = vrot.slane %v4294, 2
    %v4296 = vadd.f32 %v4294, %v4295
    %v4297 = vrot.slane %v4296, 1
    %v4298 = vadd.f32 %v4296, %v4297
    %v4299 = vadd.f32 %v4072, %v4073
    %v4300 = vadd.f32 %v4299, %v4074
    %v4301 = vadd.f32 %v4300, %v4075
    %v4302 = vadd.f32 %v4301, %v4076
    %v4303 = vadd.f32 %v4302, %v4077
    %v4304 = vadd.f32 %v4303, %v4078
    %v4305 = vadd.f32 %v4304, %v4079
    %v4306 = vrot.slane %v4305, 4
    %v4307 = vadd.f32 %v4305, %v4306
    %v4308 = vrot.slane %v4307, 2
    %v4309 = vadd.f32 %v4307, %v4308
    %v4310 = vrot.slane %v4309, 1
    %v4311 = vadd.f32 %v4309, %v4310
    %v4312 = vadd.f32 %v4080, %v4081
    %v4313 = vadd.f32 %v4312, %v4082
    %v4314 = vadd.f32 %v4313, %v4083
    %v4315 = vadd.f32 %v4314, %v4084
    %v4316 = vadd.f32 %v4315, %v4085
    %v4317 = vadd.f32 %v4316, %v4086
    %v4318 = vadd.f32 %v4317, %v4087
    %v4319 = vrot.slane %v4318, 4
    %v4320 = vadd.f32 %v4318, %v4319
    %v4321 = vrot.slane %v4320, 2
    %v4322 = vadd.f32 %v4320, %v4321
    %v4323 = vrot.slane %v4322, 1
    %v4324 = vadd.f32 %v4322, %v4323
    %v4325 = vadd.f32 %v4088, %v4089
    %v4326 = vadd.f32 %v4325, %v4090
    %v4327 = vadd.f32 %v4326, %v4091
    %v4328 = vadd.f32 %v4327, %v4092
    %v4329 = vadd.f32 %v4328, %v4093
    %v4330 = vadd.f32 %v4329, %v4094
    %v4331 = vadd.f32 %v4330, %v4095
    %v4332 = vrot.slane %v4331, 4
    %v4333 = vadd.f32 %v4331, %v4332
    %v4334 = vrot.slane %v4333, 2
    %v4335 = vadd.f32 %v4333, %v4334
    %v4336 = vrot.slane %v4335, 1
    %v4337 = vadd.f32 %v4335, %v4336
    %v4338 = vadd.f32 %v4096, %v4097
    %v4339 = vadd.f32 %v4338, %v4098
    %v4340 = vadd.f32 %v4339, %v4099
    %v4341 = vadd.f32 %v4340, %v4100
    %v4342 = vadd.f32 %v4341, %v4101
    %v4343 = vadd.f32 %v4342, %v4102
    %v4344 = vadd.f32 %v4343, %v4103
    %v4345 = vrot.slane %v4344, 4
    %v4346 = vadd.f32 %v4344, %v4345
    %v4347 = vrot.slane %v4346, 2
    %v4348 = vadd.f32 %v4346, %v4347
    %v4349 = vrot.slane %v4348, 1
    %v4350 = vadd.f32 %v4348, %v4349
    %v4351 = vadd.f32 %v4104, %v4105
    %v4352 = vadd.f32 %v4351, %v4106
    %v4353 = vadd.f32 %v4352, %v4107
    %v4354 = vadd.f32 %v4353, %v4108
    %v4355 = vadd.f32 %v4354, %v4109
    %v4356 = vadd.f32 %v4355, %v4110
    %v4357 = vadd.f32 %v4356, %v4111
    %v4358 = vrot.slane %v4357, 4
    %v4359 = vadd.f32 %v4357, %v4358
    %v4360 = vrot.slane %v4359, 2
    %v4361 = vadd.f32 %v4359, %v4360
    %v4362 = vrot.slane %v4361, 1
    %v4363 = vadd.f32 %v4361, %v4362
    %v4364 = vadd.f32 %v4112, %v4113
    %v4365 = vadd.f32 %v4364, %v4114
    %v4366 = vadd.f32 %v4365, %v4115
    %v4367 = vadd.f32 %v4366, %v4116
    %v4368 = vadd.f32 %v4367, %v4117
    %v4369 = vadd.f32 %v4368, %v4118
    %v4370 = vadd.f32 %v4369, %v4119
    %v4371 = vrot.slane %v4370, 4
    %v4372 = vadd.f32 %v4370, %v4371
    %v4373 = vrot.slane %v4372, 2
    %v4374 = vadd.f32 %v4372, %v4373
    %v4375 = vrot.slane %v4374, 1
    %v4376 = vadd.f32 %v4374, %v4375
    %v4377 = vadd.f32 %v4120, %v4121
    %v4378 = vadd.f32 %v4377, %v4122
    %v4379 = vadd.f32 %v4378, %v4123
    %v4380 = vadd.f32 %v4379, %v4124
    %v4381 = vadd.f32 %v4380, %v4125
    %v4382 = vadd.f32 %v4381, %v4126
    %v4383 = vadd.f32 %v4382, %v4127
    %v4384 = vrot.slane %v4383, 4
    %v4385 = vadd.f32 %v4383, %v4384
    %v4386 = vrot.slane %v4385, 2
    %v4387 = vadd.f32 %v4385, %v4386
    %v4388 = vrot.slane %v4387, 1
    %v4389 = vadd.f32 %v4387, %v4388
    %v4390 = vadd.f32 %v4128, %v4129
    %v4391 = vadd.f32 %v4390, %v4130
    %v4392 = vadd.f32 %v4391, %v4131
    %v4393 = vadd.f32 %v4392, %v4132
    %v4394 = vadd.f32 %v4393, %v4133
    %v4395 = vadd.f32 %v4394, %v4134
    %v4396 = vadd.f32 %v4395, %v4135
    %v4397 = vrot.slane %v4396, 4
    %v4398 = vadd.f32 %v4396, %v4397
    %v4399 = vrot.slane %v4398, 2
    %v4400 = vadd.f32 %v4398, %v4399
    %v4401 = vrot.slane %v4400, 1
    %v4402 = vadd.f32 %v4400, %v4401
    %v4403 = vadd.f32 %v4136, %v4137
    %v4404 = vadd.f32 %v4403, %v4138
    %v4405 = vadd.f32 %v4404, %v4139
    %v4406 = vadd.f32 %v4405, %v4140
    %v4407 = vadd.f32 %v4406, %v4141
    %v4408 = vadd.f32 %v4407, %v4142
    %v4409 = vadd.f32 %v4408, %v4143
    %v4410 = vrot.slane %v4409, 4
    %v4411 = vadd.f32 %v4409, %v4410
    %v4412 = vrot.slane %v4411, 2
    %v4413 = vadd.f32 %v4411, %v4412
    %v4414 = vrot.slane %v4413, 1
    %v4415 = vadd.f32 %v4413, %v4414
    %v4416 = vadd.f32 %v4144, %v4145
    %v4417 = vadd.f32 %v4416, %v4146
    %v4418 = vadd.f32 %v4417, %v4147
    %v4419 = vadd.f32 %v4418, %v4148
    %v4420 = vadd.f32 %v4419, %v4149
    %v4421 = vadd.f32 %v4420, %v4150
    %v4422 = vadd.f32 %v4421, %v4151
    %v4423 = vrot.slane %v4422, 4
    %v4424 = vadd.f32 %v4422, %v4423
    %v4425 = vrot.slane %v4424, 2
    %v4426 = vadd.f32 %v4424, %v4425
    %v4427 = vrot.slane %v4426, 1
    %v4428 = vadd.f32 %v4426, %v4427
    %v4429 = vadd.f32 %v4152, %v4153
    %v4430 = vadd.f32 %v4429, %v4154
    %v4431 = vadd.f32 %v4430, %v4155
    %v4432 = vadd.f32 %v4431, %v4156
    %v4433 = vadd.f32 %v4432, %v4157
    %v4434 = vadd.f32 %v4433, %v4158
    %v4435 = vadd.f32 %v4434, %v4159
    %v4436 = vrot.slane %v4435, 4
    %v4437 = vadd.f32 %v4435, %v4436
    %v4438 = vrot.slane %v4437, 2
    %v4439 = vadd.f32 %v4437, %v4438
    %v4440 = vrot.slane %v4439, 1
    %v4441 = vadd.f32 %v4439, %v4440
    %v4442 = vadd.f32 %v4160, %v4161
    %v4443 = vadd.f32 %v4442, %v4162
    %v4444 = vadd.f32 %v4443, %v4163
    %v4445 = vadd.f32 %v4444, %v4164
    %v4446 = vadd.f32 %v4445, %v4165
    %v4447 = vadd.f32 %v4446, %v4166
    %v4448 = vadd.f32 %v4447, %v4167
    %v4449 = vrot.slane %v4448, 4
    %v4450 = vadd.f32 %v4448, %v4449
    %v4451 = vrot.slane %v4450, 2
    %v4452 = vadd.f32 %v4450, %v4451
    %v4453 = vrot.slane %v4452, 1
    %v4454 = vadd.f32 %v4452, %v4453
    %v4455 = vadd.f32 %v4168, %v4169
    %v4456 = vadd.f32 %v4455, %v4170
    %v4457 = vadd.f32 %v4456, %v4171
    %v4458 = vadd.f32 %v4457, %v4172
    %v4459 = vadd.f32 %v4458, %v4173
    %v4460 = vadd.f32 %v4459, %v4174
    %v4461 = vadd.f32 %v4460, %v4175
    %v4462 = vrot.slane %v4461, 4
    %v4463 = vadd.f32 %v4461, %v4462
    %v4464 = vrot.slane %v4463, 2
    %v4465 = vadd.f32 %v4463, %v4464
    %v4466 = vrot.slane %v4465, 1
    %v4467 = vadd.f32 %v4465, %v4466
    %v4468 = vadd.f32 %v4176, %v4177
    %v4469 = vadd.f32 %v4468, %v4178
    %v4470 = vadd.f32 %v4469, %v4179
    %v4471 = vadd.f32 %v4470, %v4180
    %v4472 = vadd.f32 %v4471, %v4181
    %v4473 = vadd.f32 %v4472, %v4182
    %v4474 = vadd.f32 %v4473, %v4183
    %v4475 = vrot.slane %v4474, 4
    %v4476 = vadd.f32 %v4474, %v4475
    %v4477 = vrot.slane %v4476, 2
    %v4478 = vadd.f32 %v4476, %v4477
    %v4479 = vrot.slane %v4478, 1
    %v4480 = vadd.f32 %v4478, %v4479
    %v4481 = vadd.f32 %v4184, %v4185
    %v4482 = vadd.f32 %v4481, %v4186
    %v4483 = vadd.f32 %v4482, %v4187
    %v4484 = vadd.f32 %v4483, %v4188
    %v4485 = vadd.f32 %v4484, %v4189
    %v4486 = vadd.f32 %v4485, %v4190
    %v4487 = vadd.f32 %v4486, %v4191
    %v4488 = vrot.slane %v4487, 4
    %v4489 = vadd.f32 %v4487, %v4488
    %v4490 = vrot.slane %v4489, 2
    %v4491 = vadd.f32 %v4489, %v4490
    %v4492 = vrot.slane %v4491, 1
    %v4493 = vadd.f32 %v4491, %v4492
    %v4494 = vadd.f32 %v4192, %v4193
    %v4495 = vadd.f32 %v4494, %v4194
    %v4496 = vadd.f32 %v4495, %v4195
    %v4497 = vadd.f32 %v4496, %v4196
    %v4498 = vadd.f32 %v4497, %v4197
    %v4499 = vadd.f32 %v4498, %v4198
    %v4500 = vadd.f32 %v4499, %v4199
    %v4501 = vrot.slane %v4500, 4
    %v4502 = vadd.f32 %v4500, %v4501
    %v4503 = vrot.slane %v4502, 2
    %v4504 = vadd.f32 %v4502, %v4503
    %v4505 = vrot.slane %v4504, 1
    %v4506 = vadd.f32 %v4504, %v4505
    %v4507 = vadd.f32 %v4200, %v4201
    %v4508 = vadd.f32 %v4507, %v4202
    %v4509 = vadd.f32 %v4508, %v4203
    %v4510 = vadd.f32 %v4509, %v4204
    %v4511 = vadd.f32 %v4510, %v4205
    %v4512 = vadd.f32 %v4511, %v4206
    %v4513 = vadd.f32 %v4512, %v4207
    %v4514 = vrot.slane %v4513, 4
    %v4515 = vadd.f32 %v4513, %v4514
    %v4516 = vrot.slane %v4515, 2
    %v4517 = vadd.f32 %v4515, %v4516
    %v4518 = vrot.slane %v4517, 1
    %v4519 = vadd.f32 %v4517, %v4518
    %v4520 = vrcp.pop 64.0
    %v4521 = vmul.f32 %v4220, %v4520
    %v4522 = vmul.f32 %v4233, %v4520
    %v4523 = vmul.f32 %v4246, %v4520
    %v4524 = vmul.f32 %v4259, %v4520
    %v4525 = vmul.f32 %v4272, %v4520
    %v4526 = vmul.f32 %v4285, %v4520
    %v4527 = vmul.f32 %v4298, %v4520
    %v4528 = vmul.f32 %v4311, %v4520
    %v4529 = vmul.f32 %v4324, %v4520
    %v4530 = vmul.f32 %v4337, %v4520
    %v4531 = vmul.f32 %v4350, %v4520
    %v4532 = vmul.f32 %v4363, %v4520
    %v4533 = vmul.f32 %v4376, %v4520
    %v4534 = vmul.f32 %v4389, %v4520
    %v4535 = vmul.f32 %v4402, %v4520
    %v4536 = vmul.f32 %v4415, %v4520
    %v4537 = vmul.f32 %v4428, %v4520
    %v4538 = vmul.f32 %v4441, %v4520
    %v4539 = vmul.f32 %v4454, %v4520
    %v4540 = vmul.f32 %v4467, %v4520
    %v4541 = vmul.f32 %v4480, %v4520
    %v4542 = vmul.f32 %v4493, %v4520
    %v4543 = vmul.f32 %v4506, %v4520
    %v4544 = vmul.f32 %v4519, %v4520
    %v4545 = vld [vmem:[%s5] sm:$0xff]
    %v4546 = vld [vmem:[%s5 + $0x8] sm:$0xff]
    %v4547 = vld [vmem:[%s5 + $0x10] sm:$0xff]
    %v4548 = vld [vmem:[%s5 + $0x18] sm:$0xff]
    %v4549 = vld [vmem:[%s5 + $0x20] sm:$0xff]
    %v4550 = vld [vmem:[%s5 + $0x28] sm:$0xff]
    %v4551 = vld [vmem:[%s5 + $0x30] sm:$0xff]
    %v4552 = vld [vmem:[%s5 + $0x38] sm:$0xff]
    %v4553 = vld [vmem:[%s5 + $0x40] sm:$0xff]
    %v4554 = vld [vmem:[%s5 + $0x48] sm:$0xff]
    %v4555 = vld [vmem:[%s5 + $0x50] sm:$0xff]
    %v4556 = vld [vmem:[%s5 + $0x58] sm:$0xff]
    %v4557 = vld [vmem:[%s5 + $0x60] sm:$0xff]
    %v4558 = vld [vmem:[%s5 + $0x68] sm:$0xff]
    %v4559 = vld [vmem:[%s5 + $0x70] sm:$0xff]
    %v4560 = vld [vmem:[%s5 + $0x78] sm:$0xff]
    %v4561 = vld [vmem:[%s5 + $0x80] sm:$0xff]
    %v4562 = vld [vmem:[%s5 + $0x88] sm:$0xff]
    %v4563 = vld [vmem:[%s5 + $0x90] sm:$0xff]
    %v4564 = vld [vmem:[%s5 + $0x98] sm:$0xff]
    %v4565 = vld [vmem:[%s5 + $0xa0] sm:$0xff]
    %v4566 = vld [vmem:[%s5 + $0xa8] sm:$0xff]
    %v4567 = vld [vmem:[%s5 + $0xb0] sm:$0xff]
    %v4568 = vld [vmem:[%s5 + $0xb8] sm:$0xff]
    %v4569 = vld [vmem:[%s5 + $0xc0] sm:$0xff]
    %v4570 = vld [vmem:[%s5 + $0xc8] sm:$0xff]
    %v4571 = vld [vmem:[%s5 + $0xd0] sm:$0xff]
    %v4572 = vld [vmem:[%s5 + $0xd8] sm:$0xff]
    %v4573 = vld [vmem:[%s5 + $0xe0] sm:$0xff]
    %v4574 = vld [vmem:[%s5 + $0xe8] sm:$0xff]
    %v4575 = vld [vmem:[%s5 + $0xf0] sm:$0xff]
    %v4576 = vld [vmem:[%s5 + $0xf8] sm:$0xff]
    %v4577 = vld [vmem:[%s5 + $0x100] sm:$0xff]
    %v4578 = vld [vmem:[%s5 + $0x108] sm:$0xff]
    %v4579 = vld [vmem:[%s5 + $0x110] sm:$0xff]
    %v4580 = vld [vmem:[%s5 + $0x118] sm:$0xff]
    %v4581 = vld [vmem:[%s5 + $0x120] sm:$0xff]
    %v4582 = vld [vmem:[%s5 + $0x128] sm:$0xff]
    %v4583 = vld [vmem:[%s5 + $0x130] sm:$0xff]
    %v4584 = vld [vmem:[%s5 + $0x138] sm:$0xff]
    %v4585 = vld [vmem:[%s5 + $0x140] sm:$0xff]
    %v4586 = vld [vmem:[%s5 + $0x148] sm:$0xff]
    %v4587 = vld [vmem:[%s5 + $0x150] sm:$0xff]
    %v4588 = vld [vmem:[%s5 + $0x158] sm:$0xff]
    %v4589 = vld [vmem:[%s5 + $0x160] sm:$0xff]
    %v4590 = vld [vmem:[%s5 + $0x168] sm:$0xff]
    %v4591 = vld [vmem:[%s5 + $0x170] sm:$0xff]
    %v4592 = vld [vmem:[%s5 + $0x178] sm:$0xff]
    %v4593 = vld [vmem:[%s5 + $0x180] sm:$0xff]
    %v4594 = vld [vmem:[%s5 + $0x188] sm:$0xff]
    %v4595 = vld [vmem:[%s5 + $0x190] sm:$0xff]
    %v4596 = vld [vmem:[%s5 + $0x198] sm:$0xff]
    %v4597 = vld [vmem:[%s5 + $0x1a0] sm:$0xff]
    %v4598 = vld [vmem:[%s5 + $0x1a8] sm:$0xff]
    %v4599 = vld [vmem:[%s5 + $0x1b0] sm:$0xff]
    %v4600 = vld [vmem:[%s5 + $0x1b8] sm:$0xff]
    %v4601 = vld [vmem:[%s5 + $0x1c0] sm:$0xff]
    %v4602 = vld [vmem:[%s5 + $0x1c8] sm:$0xff]
    %v4603 = vld [vmem:[%s5 + $0x1d0] sm:$0xff]
    %v4604 = vld [vmem:[%s5 + $0x1d8] sm:$0xff]
    %v4605 = vld [vmem:[%s5 + $0x1e0] sm:$0xff]
    %v4606 = vld [vmem:[%s5 + $0x1e8] sm:$0xff]
    %v4607 = vld [vmem:[%s5 + $0x1f0] sm:$0xff]
    %v4608 = vld [vmem:[%s5 + $0x1f8] sm:$0xff]
    %v4609 = vld [vmem:[%s5 + $0x200] sm:$0xff]
    %v4610 = vld [vmem:[%s5 + $0x208] sm:$0xff]
    %v4611 = vld [vmem:[%s5 + $0x210] sm:$0xff]
    %v4612 = vld [vmem:[%s5 + $0x218] sm:$0xff]
    %v4613 = vld [vmem:[%s5 + $0x220] sm:$0xff]
    %v4614 = vld [vmem:[%s5 + $0x228] sm:$0xff]
    %v4615 = vld [vmem:[%s5 + $0x230] sm:$0xff]
    %v4616 = vld [vmem:[%s5 + $0x238] sm:$0xff]
    %v4617 = vld [vmem:[%s5 + $0x240] sm:$0xff]
    %v4618 = vld [vmem:[%s5 + $0x248] sm:$0xff]
    %v4619 = vld [vmem:[%s5 + $0x250] sm:$0xff]
    %v4620 = vld [vmem:[%s5 + $0x258] sm:$0xff]
    %v4621 = vld [vmem:[%s5 + $0x260] sm:$0xff]
    %v4622 = vld [vmem:[%s5 + $0x268] sm:$0xff]
    %v4623 = vld [vmem:[%s5 + $0x270] sm:$0xff]
    %v4624 = vld [vmem:[%s5 + $0x278] sm:$0xff]
    %v4625 = vld [vmem:[%s5 + $0x280] sm:$0xff]
    %v4626 = vld [vmem:[%s5 + $0x288] sm:$0xff]
    %v4627 = vld [vmem:[%s5 + $0x290] sm:$0xff]
    %v4628 = vld [vmem:[%s5 + $0x298] sm:$0xff]
    %v4629 = vld [vmem:[%s5 + $0x2a0] sm:$0xff]
    %v4630 = vld [vmem:[%s5 + $0x2a8] sm:$0xff]
    %v4631 = vld [vmem:[%s5 + $0x2b0] sm:$0xff]
    %v4632 = vld [vmem:[%s5 + $0x2b8] sm:$0xff]
    %v4633 = vld [vmem:[%s5 + $0x2c0] sm:$0xff]
    %v4634 = vld [vmem:[%s5 + $0x2c8] sm:$0xff]
    %v4635 = vld [vmem:[%s5 + $0x2d0] sm:$0xff]
    %v4636 = vld [vmem:[%s5 + $0x2d8] sm:$0xff]
    %v4637 = vld [vmem:[%s5 + $0x2e0] sm:$0xff]
    %v4638 = vld [vmem:[%s5 + $0x2e8] sm:$0xff]
    %v4639 = vld [vmem:[%s5 + $0x2f0] sm:$0xff]
    %v4640 = vld [vmem:[%s5 + $0x2f8] sm:$0xff]
    %v4641 = vld [vmem:[%s5 + $0x300] sm:$0xff]
    %v4642 = vld [vmem:[%s5 + $0x308] sm:$0xff]
    %v4643 = vld [vmem:[%s5 + $0x310] sm:$0xff]
    %v4644 = vld [vmem:[%s5 + $0x318] sm:$0xff]
    %v4645 = vld [vmem:[%s5 + $0x320] sm:$0xff]
    %v4646 = vld [vmem:[%s5 + $0x328] sm:$0xff]
    %v4647 = vld [vmem:[%s5 + $0x330] sm:$0xff]
    %v4648 = vld [vmem:[%s5 + $0x338] sm:$0xff]
    %v4649 = vld [vmem:[%s5 + $0x340] sm:$0xff]
    %v4650 = vld [vmem:[%s5 + $0x348] sm:$0xff]
    %v4651 = vld [vmem:[%s5 + $0x350] sm:$0xff]
    %v4652 = vld [vmem:[%s5 + $0x358] sm:$0xff]
    %v4653 = vld [vmem:[%s5 + $0x360] sm:$0xff]
    %v4654 = vld [vmem:[%s5 + $0x368] sm:$0xff]
    %v4655 = vld [vmem:[%s5 + $0x370] sm:$0xff]
    %v4656 = vld [vmem:[%s5 + $0x378] sm:$0xff]
    %v4657 = vld [vmem:[%s5 + $0x380] sm:$0xff]
    %v4658 = vld [vmem:[%s5 + $0x388] sm:$0xff]
    %v4659 = vld [vmem:[%s5 + $0x390] sm:$0xff]
    %v4660 = vld [vmem:[%s5 + $0x398] sm:$0xff]
    %v4661 = vld [vmem:[%s5 + $0x3a0] sm:$0xff]
    %v4662 = vld [vmem:[%s5 + $0x3a8] sm:$0xff]
    %v4663 = vld [vmem:[%s5 + $0x3b0] sm:$0xff]
    %v4664 = vld [vmem:[%s5 + $0x3b8] sm:$0xff]
    %v4665 = vld [vmem:[%s5 + $0x3c0] sm:$0xff]
    %v4666 = vld [vmem:[%s5 + $0x3c8] sm:$0xff]
    %v4667 = vld [vmem:[%s5 + $0x3d0] sm:$0xff]
    %v4668 = vld [vmem:[%s5 + $0x3d8] sm:$0xff]
    %v4669 = vld [vmem:[%s5 + $0x3e0] sm:$0xff]
    %v4670 = vld [vmem:[%s5 + $0x3e8] sm:$0xff]
    %v4671 = vld [vmem:[%s5 + $0x3f0] sm:$0xff]
    %v4672 = vld [vmem:[%s5 + $0x3f8] sm:$0xff]
    %v4673 = vld [vmem:[%s6] sm:$0xff]
    %v4675 = vlaneseq
    %v4676 = vshrl.u32 %v4675, 7
    %v4677 = vsub.s32 0, %v4676
    %v4678 = vrot.slane %v4673, %v4677
    %v4679 = vlaneseq
    %v4680 = vshrl.u32 %v4679, 7
    %v4681 = vsub.s32 1, %v4680
    %v4682 = vrot.slane %v4673, %v4681
    %v4683 = vlaneseq
    %v4684 = vshrl.u32 %v4683, 7
    %v4685 = vsub.s32 2, %v4684
    %v4686 = vrot.slane %v4673, %v4685
    %v4687 = vlaneseq
    %v4688 = vshrl.u32 %v4687, 7
    %v4689 = vsub.s32 3, %v4688
    %v4690 = vrot.slane %v4673, %v4689
    %v4691 = vlaneseq
    %v4692 = vshrl.u32 %v4691, 7
    %v4693 = vsub.s32 4, %v4692
    %v4694 = vrot.slane %v4673, %v4693
    %v4695 = vlaneseq
    %v4696 = vshrl.u32 %v4695, 7
    %v4697 = vsub.s32 5, %v4696
    %v4698 = vrot.slane %v4673, %v4697
    %v4699 = vlaneseq
    %v4700 = vshrl.u32 %v4699, 7
    %v4701 = vsub.s32 6, %v4700
    %v4702 = vrot.slane %v4673, %v4701
    %v4703 = vlaneseq
    %v4704 = vshrl.u32 %v4703, 7
    %v4705 = vsub.s32 7, %v4704
    %v4706 = vrot.slane %v4673, %v4705
    %vm4739 = vcmask 1041409
    %v4740 = vsel %vm4739, %v4522, %v4521
    %vm4741 = vcmask 1042434
    %v4742 = vsel %vm4741, %v4523, %v4740
    %vm4743 = vcmask 1043459
    %v4744 = vsel %vm4743, %v4524, %v4742
    %vm4745 = vcmask 1044484
    %v4746 = vsel %vm4745, %v4525, %v4744
    %vm4747 = vcmask 1045509
    %v4748 = vsel %vm4747, %v4526, %v4746
    %vm4749 = vcmask 1046534
    %v4750 = vsel %vm4749, %v4527, %v4748
    %vm4751 = vcmask 1047559
    %v4752 = vsel %vm4751, %v4528, %v4750
    %v4753 = vsel %vm4739, %v4530, %v4529
    %v4754 = vsel %vm4741, %v4531, %v4753
    %v4755 = vsel %vm4743, %v4532, %v4754
    %v4756 = vsel %vm4745, %v4533, %v4755
    %v4757 = vsel %vm4747, %v4534, %v4756
    %v4758 = vsel %vm4749, %v4535, %v4757
    %v4759 = vsel %vm4751, %v4536, %v4758
    %v4760 = vsel %vm4739, %v4538, %v4537
    %v4761 = vsel %vm4741, %v4539, %v4760
    %v4762 = vsel %vm4743, %v4540, %v4761
    %v4763 = vsel %vm4745, %v4541, %v4762
    %v4764 = vsel %vm4747, %v4542, %v4763
    %v4765 = vsel %vm4749, %v4543, %v4764
    %v4766 = vsel %vm4751, %v4544, %v4765
    %4770 = vmatprep.subr.mxu0 %v4666
    %4771 = vmatpush1.msra.mxu0 %v4665
    %4772 = vmatprep.subr.mxu0 %v4658
    %4773 = vmatpush1.msra.mxu0 %v4657
    %4774 = vmatprep.subr.mxu0 %v4650
    %4775 = vmatpush1.msra.mxu0 %v4649
    %4776 = vmatprep.subr.mxu0 %v4642
    %4777 = vmatpush1.msra.mxu0 %v4641
    %4778 = vmatprep.subr.mxu0 %v4634
    %4779 = vmatpush1.msra.mxu0 %v4633
    %4780 = vmatprep.subr.mxu0 %v4626
    %4781 = vmatpush1.msra.mxu0 %v4625
    %4782 = vmatprep.subr.mxu0 %v4618
    %4783 = vmatpush1.msra.mxu0 %v4617
    %4784 = vmatprep.subr.mxu0 %v4610
    %4785 = vmatpush1.msra.mxu0 %v4609
    %4786 = vmatprep.subr.mxu0 %v4602
    %4787 = vmatpush1.msra.mxu0 %v4601
    %4788 = vmatprep.subr.mxu0 %v4594
    %4789 = vmatpush1.msra.mxu0 %v4593
    %4790 = vmatprep.subr.mxu0 %v4586
    %4791 = vmatpush1.msra.mxu0 %v4585
    %4792 = vmatprep.subr.mxu0 %v4578
    %4793 = vmatpush1.msra.mxu0 %v4577
    %4794 = vmatprep.subr.mxu0 %v4570
    %4795 = vmatpush1.msra.mxu0 %v4569
    %4796 = vmatprep.subr.mxu0 %v4562
    %4797 = vmatpush1.msra.mxu0 %v4561
    %4798 = vmatprep.subr.mxu0 %v4554
    %4799 = vmatpush1.msra.mxu0 %v4553
    %4800 = vmatprep.subr.mxu0 %v4546
    %4801 = vmatpush1.msra.mxu0 %v4545
    %4802 = vmatprep.subr.mxu0 0.0
    %4803 = vmatpush2.msra.mxu0 0.0
    %4804 = vmatprep.subr.mxu0 0.0
    %4805 = vmatpush2.msra.mxu0 0.0
    %4806 = vmatprep.subr.mxu0 0.0
    %4807 = vmatpush2.msra.mxu0 0.0
    %4808 = vmatprep.subr.mxu0 0.0
    %4809 = vmatpush2.msra.mxu0 0.0
    %4810 = vmatprep.subr.mxu0 0.0
    %4811 = vmatpush2.msra.mxu0 0.0
    %4812 = vmatprep.subr.mxu0 0.0
    %4813 = vmatpush2.msra.mxu0 0.0
    %4814 = vmatprep.subr.mxu0 0.0
    %4815 = vmatpush2.msra.mxu0 0.0
    %4816 = vmatprep.subr.mxu0 0.0
    %4817 = vmatpush2.msra.mxu0 0.0
    %4818 = vmatprep.subr.mxu0 0.0
    %4819 = vmatpush2.msra.mxu0 0.0
    %4820 = vmatprep.subr.mxu0 0.0
    %4821 = vmatpush2.msra.mxu0 0.0
    %4822 = vmatprep.subr.mxu0 0.0
    %4823 = vmatpush2.msra.mxu0 0.0
    %4824 = vmatprep.subr.mxu0 0.0
    %4825 = vmatpush2.msra.mxu0 0.0
    %4826 = vmatprep.subr.mxu0 0.0
    %4827 = vmatpush2.msra.mxu0 0.0
    %4828 = vmatprep.subr.mxu0 0.0
    %4829 = vmatpush2.msra.mxu0 0.0
    %4830 = vmatprep.subr.mxu0 0.0
    %4831 = vmatpush2.msra.mxu0 0.0
    %4832 = vmatprep.subr.mxu0 0.0
    %4833 = vmatpush2.msra.mxu0 0.0
    %4834 = vmatprep.mubr.f32.mxu0 0.0
    %4835 = vmatmul.mubr.f32.gmra.mxu0 %v4752
    %v4836 = vpop.f32.mrf.mxu0
    %v4837 = vadd.f32 %v4678, %v4836
    %v4838 = vpop.f32.mrf.mxu0
    %v4839 = vadd.f32 %v4682, %v4838
    %4840 = vmatprep.mubr.f32.mxu0 0.0
    %4841 = vmatmul.mubr.f32.gmra.mxu0 %v4759
    %v4842 = vpop.f32.mrf.mxu0
    %v4843 = vadd.f32 %v4678, %v4842
    %v4844 = vpop.f32.mrf.mxu0
    %v4845 = vadd.f32 %v4682, %v4844
    %4846 = vmatprep.mubr.f32.mxu0 0.0
    %4847 = vmatmul.mubr.f32.gmra.mxu0 %v4766
    %v4848 = vpop.f32.mrf.mxu0
    %v4849 = vadd.f32 %v4678, %v4848
    %v4850 = vpop.f32.mrf.mxu0
    %v4851 = vadd.f32 %v4682, %v4850
    %4852 = vdwg.mxu0
    %4853 = vmatprep.subr.mxu0 %v4668
    %4854 = vmatpush1.msra.mxu0 %v4667
    %4855 = vmatprep.subr.mxu0 %v4660
    %4856 = vmatpush1.msra.mxu0 %v4659
    %4857 = vmatprep.subr.mxu0 %v4652
    %4858 = vmatpush1.msra.mxu0 %v4651
    %4859 = vmatprep.subr.mxu0 %v4644
    %4860 = vmatpush1.msra.mxu0 %v4643
    %4861 = vmatprep.subr.mxu0 %v4636
    %4862 = vmatpush1.msra.mxu0 %v4635
    %4863 = vmatprep.subr.mxu0 %v4628
    %4864 = vmatpush1.msra.mxu0 %v4627
    %4865 = vmatprep.subr.mxu0 %v4620
    %4866 = vmatpush1.msra.mxu0 %v4619
    %4867 = vmatprep.subr.mxu0 %v4612
    %4868 = vmatpush1.msra.mxu0 %v4611
    %4869 = vmatprep.subr.mxu0 %v4604
    %4870 = vmatpush1.msra.mxu0 %v4603
    %4871 = vmatprep.subr.mxu0 %v4596
    %4872 = vmatpush1.msra.mxu0 %v4595
    %4873 = vmatprep.subr.mxu0 %v4588
    %4874 = vmatpush1.msra.mxu0 %v4587
    %4875 = vmatprep.subr.mxu0 %v4580
    %4876 = vmatpush1.msra.mxu0 %v4579
    %4877 = vmatprep.subr.mxu0 %v4572
    %4878 = vmatpush1.msra.mxu0 %v4571
    %4879 = vmatprep.subr.mxu0 %v4564
    %4880 = vmatpush1.msra.mxu0 %v4563
    %4881 = vmatprep.subr.mxu0 %v4556
    %4882 = vmatpush1.msra.mxu0 %v4555
    %4883 = vmatprep.subr.mxu0 %v4548
    %4884 = vmatpush1.msra.mxu0 %v4547
    %4885 = vmatprep.subr.mxu0 0.0
    %4886 = vmatpush2.msra.mxu0 0.0
    %4887 = vmatprep.subr.mxu0 0.0
    %4888 = vmatpush2.msra.mxu0 0.0
    %4889 = vmatprep.subr.mxu0 0.0
    %4890 = vmatpush2.msra.mxu0 0.0
    %4891 = vmatprep.subr.mxu0 0.0
    %4892 = vmatpush2.msra.mxu0 0.0
    %4893 = vmatprep.subr.mxu0 0.0
    %4894 = vmatpush2.msra.mxu0 0.0
    %4895 = vmatprep.subr.mxu0 0.0
    %4896 = vmatpush2.msra.mxu0 0.0
    %4897 = vmatprep.subr.mxu0 0.0
    %4898 = vmatpush2.msra.mxu0 0.0
    %4899 = vmatprep.subr.mxu0 0.0
    %4900 = vmatpush2.msra.mxu0 0.0
    %4901 = vmatprep.subr.mxu0 0.0
    %4902 = vmatpush2.msra.mxu0 0.0
    %4903 = vmatprep.subr.mxu0 0.0
    %4904 = vmatpush2.msra.mxu0 0.0
    %4905 = vmatprep.subr.mxu0 0.0
    %4906 = vmatpush2.msra.mxu0 0.0
    %4907 = vmatprep.subr.mxu0 0.0
    %4908 = vmatpush2.msra.mxu0 0.0
    %4909 = vmatprep.subr.mxu0 0.0
    %4910 = vmatpush2.msra.mxu0 0.0
    %4911 = vmatprep.subr.mxu0 0.0
    %4912 = vmatpush2.msra.mxu0 0.0
    %4913 = vmatprep.subr.mxu0 0.0
    %4914 = vmatpush2.msra.mxu0 0.0
    %4915 = vmatprep.subr.mxu0 0.0
    %4916 = vmatpush2.msra.mxu0 0.0
    %4917 = vmatprep.mubr.f32.mxu0 0.0
    %4918 = vmatmul.mubr.f32.gmra.mxu0 %v4752
    %v4919 = vpop.f32.mrf.mxu0
    %v4920 = vadd.f32 %v4686, %v4919
    %v4921 = vpop.f32.mrf.mxu0
    %v4922 = vadd.f32 %v4690, %v4921
    %4923 = vmatprep.mubr.f32.mxu0 0.0
    %4924 = vmatmul.mubr.f32.gmra.mxu0 %v4759
    %v4925 = vpop.f32.mrf.mxu0
    %v4926 = vadd.f32 %v4686, %v4925
    %v4927 = vpop.f32.mrf.mxu0
    %v4928 = vadd.f32 %v4690, %v4927
    %4929 = vmatprep.mubr.f32.mxu0 0.0
    %4930 = vmatmul.mubr.f32.gmra.mxu0 %v4766
    %v4931 = vpop.f32.mrf.mxu0
    %v4932 = vadd.f32 %v4686, %v4931
    %v4933 = vpop.f32.mrf.mxu0
    %v4934 = vadd.f32 %v4690, %v4933
    %4935 = vdwg.mxu0
    %4936 = vmatprep.subr.mxu0 %v4670
    %4937 = vmatpush1.msra.mxu0 %v4669
    %4938 = vmatprep.subr.mxu0 %v4662
    %4939 = vmatpush1.msra.mxu0 %v4661
    %4940 = vmatprep.subr.mxu0 %v4654
    %4941 = vmatpush1.msra.mxu0 %v4653
    %4942 = vmatprep.subr.mxu0 %v4646
    %4943 = vmatpush1.msra.mxu0 %v4645
    %4944 = vmatprep.subr.mxu0 %v4638
    %4945 = vmatpush1.msra.mxu0 %v4637
    %4946 = vmatprep.subr.mxu0 %v4630
    %4947 = vmatpush1.msra.mxu0 %v4629
    %4948 = vmatprep.subr.mxu0 %v4622
    %4949 = vmatpush1.msra.mxu0 %v4621
    %4950 = vmatprep.subr.mxu0 %v4614
    %4951 = vmatpush1.msra.mxu0 %v4613
    %4952 = vmatprep.subr.mxu0 %v4606
    %4953 = vmatpush1.msra.mxu0 %v4605
    %4954 = vmatprep.subr.mxu0 %v4598
    %4955 = vmatpush1.msra.mxu0 %v4597
    %4956 = vmatprep.subr.mxu0 %v4590
    %4957 = vmatpush1.msra.mxu0 %v4589
    %4958 = vmatprep.subr.mxu0 %v4582
    %4959 = vmatpush1.msra.mxu0 %v4581
    %4960 = vmatprep.subr.mxu0 %v4574
    %4961 = vmatpush1.msra.mxu0 %v4573
    %4962 = vmatprep.subr.mxu0 %v4566
    %4963 = vmatpush1.msra.mxu0 %v4565
    %4964 = vmatprep.subr.mxu0 %v4558
    %4965 = vmatpush1.msra.mxu0 %v4557
    %4966 = vmatprep.subr.mxu0 %v4550
    %4967 = vmatpush1.msra.mxu0 %v4549
    %4968 = vmatprep.subr.mxu0 0.0
    %4969 = vmatpush2.msra.mxu0 0.0
    %4970 = vmatprep.subr.mxu0 0.0
    %4971 = vmatpush2.msra.mxu0 0.0
    %4972 = vmatprep.subr.mxu0 0.0
    %4973 = vmatpush2.msra.mxu0 0.0
    %4974 = vmatprep.subr.mxu0 0.0
    %4975 = vmatpush2.msra.mxu0 0.0
    %4976 = vmatprep.subr.mxu0 0.0
    %4977 = vmatpush2.msra.mxu0 0.0
    %4978 = vmatprep.subr.mxu0 0.0
    %4979 = vmatpush2.msra.mxu0 0.0
    %4980 = vmatprep.subr.mxu0 0.0
    %4981 = vmatpush2.msra.mxu0 0.0
    %4982 = vmatprep.subr.mxu0 0.0
    %4983 = vmatpush2.msra.mxu0 0.0
    %4984 = vmatprep.subr.mxu0 0.0
    %4985 = vmatpush2.msra.mxu0 0.0
    %4986 = vmatprep.subr.mxu0 0.0
    %4987 = vmatpush2.msra.mxu0 0.0
    %4988 = vmatprep.subr.mxu0 0.0
    %4989 = vmatpush2.msra.mxu0 0.0
    %4990 = vmatprep.subr.mxu0 0.0
    %4991 = vmatpush2.msra.mxu0 0.0
    %4992 = vmatprep.subr.mxu0 0.0
    %4993 = vmatpush2.msra.mxu0 0.0
    %4994 = vmatprep.subr.mxu0 0.0
    %4995 = vmatpush2.msra.mxu0 0.0
    %4996 = vmatprep.subr.mxu0 0.0
    %4997 = vmatpush2.msra.mxu0 0.0
    %4998 = vmatprep.subr.mxu0 0.0
    %4999 = vmatpush2.msra.mxu0 0.0
    %5000 = vmatprep.mubr.f32.mxu0 0.0
    %5001 = vmatmul.mubr.f32.gmra.mxu0 %v4752
    %v5002 = vpop.f32.mrf.mxu0
    %v5003 = vadd.f32 %v4694, %v5002
    %v5004 = vpop.f32.mrf.mxu0
    %v5005 = vadd.f32 %v4698, %v5004
    %5006 = vmatprep.mubr.f32.mxu0 0.0
    %5007 = vmatmul.mubr.f32.gmra.mxu0 %v4759
    %v5008 = vpop.f32.mrf.mxu0
    %v5009 = vadd.f32 %v4694, %v5008
    %v5010 = vpop.f32.mrf.mxu0
    %v5011 = vadd.f32 %v4698, %v5010
    %5012 = vmatprep.mubr.f32.mxu0 0.0
    %5013 = vmatmul.mubr.f32.gmra.mxu0 %v4766
    %v5014 = vpop.f32.mrf.mxu0
    %v5015 = vadd.f32 %v4694, %v5014
    %v5016 = vpop.f32.mrf.mxu0
    %v5017 = vadd.f32 %v4698, %v5016
    %5018 = vdwg.mxu0
    %5019 = vmatprep.subr.mxu0 %v4672
    %5020 = vmatpush1.msra.mxu0 %v4671
    %5021 = vmatprep.subr.mxu0 %v4664
    %5022 = vmatpush1.msra.mxu0 %v4663
    %5023 = vmatprep.subr.mxu0 %v4656
    %5024 = vmatpush1.msra.mxu0 %v4655
    %5025 = vmatprep.subr.mxu0 %v4648
    %5026 = vmatpush1.msra.mxu0 %v4647
    %5027 = vmatprep.subr.mxu0 %v4640
    %5028 = vmatpush1.msra.mxu0 %v4639
    %5029 = vmatprep.subr.mxu0 %v4632
    %5030 = vmatpush1.msra.mxu0 %v4631
    %5031 = vmatprep.subr.mxu0 %v4624
    %5032 = vmatpush1.msra.mxu0 %v4623
    %5033 = vmatprep.subr.mxu0 %v4616
    %5034 = vmatpush1.msra.mxu0 %v4615
    %5035 = vmatprep.subr.mxu0 %v4608
    %5036 = vmatpush1.msra.mxu0 %v4607
    %5037 = vmatprep.subr.mxu0 %v4600
    %5038 = vmatpush1.msra.mxu0 %v4599
    %5039 = vmatprep.subr.mxu0 %v4592
    %5040 = vmatpush1.msra.mxu0 %v4591
    %5041 = vmatprep.subr.mxu0 %v4584
    %5042 = vmatpush1.msra.mxu0 %v4583
    %5043 = vmatprep.subr.mxu0 %v4576
    %5044 = vmatpush1.msra.mxu0 %v4575
    %5045 = vmatprep.subr.mxu0 %v4568
    %5046 = vmatpush1.msra.mxu0 %v4567
    %5047 = vmatprep.subr.mxu0 %v4560
    %5048 = vmatpush1.msra.mxu0 %v4559
    %5049 = vmatprep.subr.mxu0 %v4552
    %5050 = vmatpush1.msra.mxu0 %v4551
    %5051 = vmatprep.subr.mxu0 0.0
    %5052 = vmatpush2.msra.mxu0 0.0
    %5053 = vmatprep.subr.mxu0 0.0
    %5054 = vmatpush2.msra.mxu0 0.0
    %5055 = vmatprep.subr.mxu0 0.0
    %5056 = vmatpush2.msra.mxu0 0.0
    %5057 = vmatprep.subr.mxu0 0.0
    %5058 = vmatpush2.msra.mxu0 0.0
    %5059 = vmatprep.subr.mxu0 0.0
    %5060 = vmatpush2.msra.mxu0 0.0
    %5061 = vmatprep.subr.mxu0 0.0
    %5062 = vmatpush2.msra.mxu0 0.0
    %5063 = vmatprep.subr.mxu0 0.0
    %5064 = vmatpush2.msra.mxu0 0.0
    %5065 = vmatprep.subr.mxu0 0.0
    %5066 = vmatpush2.msra.mxu0 0.0
    %5067 = vmatprep.subr.mxu0 0.0
    %5068 = vmatpush2.msra.mxu0 0.0
    %5069 = vmatprep.subr.mxu0 0.0
    %5070 = vmatpush2.msra.mxu0 0.0
    %5071 = vmatprep.subr.mxu0 0.0
    %5072 = vmatpush2.msra.mxu0 0.0
    %5073 = vmatprep.subr.mxu0 0.0
    %5074 = vmatpush2.msra.mxu0 0.0
    %5075 = vmatprep.subr.mxu0 0.0
    %5076 = vmatpush2.msra.mxu0 0.0
    %5077 = vmatprep.subr.mxu0 0.0
    %5078 = vmatpush2.msra.mxu0 0.0
    %5079 = vmatprep.subr.mxu0 0.0
    %5080 = vmatpush2.msra.mxu0 0.0
    %5081 = vmatprep.subr.mxu0 0.0
    %5082 = vmatpush2.msra.mxu0 0.0
    %5083 = vmatprep.mubr.f32.mxu0 0.0
    %5084 = vmatmul.mubr.f32.gmra.mxu0 %v4752
    %v5085 = vpop.f32.mrf.mxu0
    %v5086 = vadd.f32 %v4702, %v5085
    %v5087 = vpop.f32.mrf.mxu0
    %v5088 = vadd.f32 %v4706, %v5087
    %5089 = vmatprep.mubr.f32.mxu0 0.0
    %5090 = vmatmul.mubr.f32.gmra.mxu0 %v4759
    %v5091 = vpop.f32.mrf.mxu0
    %v5092 = vadd.f32 %v4702, %v5091
    %v5093 = vpop.f32.mrf.mxu0
    %v5094 = vadd.f32 %v4706, %v5093
    %5095 = vmatprep.mubr.f32.mxu0 0.0
    %5096 = vmatmul.mubr.f32.gmra.mxu0 %v4766
    %v5097 = vpop.f32.mrf.mxu0
    %v5098 = vadd.f32 %v4702, %v5097
    %v5099 = vpop.f32.mrf.mxu0
    %v5100 = vadd.f32 %v4706, %v5099
    %5101 = vdwg.mxu0
    %s5102 = smul.u32 1024, 1
    %s5103 = sshll.u32 %s5102, 4
    %5104 = dma.done [#allocation7], %s5103
    %v5105 = vld [vmem:[%s7] sm:$0xff]
    %v5106 = vld [vmem:[%s8] sm:$0xff]
    %v5107 = vadd.f32 %v4837, %v4843
    %v5108 = vadd.f32 %v5107, %v4849
    %v5109 = vrot.slane %v5108, 4
    %v5110 = vadd.f32 %v5108, %v5109
    %v5111 = vrot.slane %v5110, 2
    %v5112 = vadd.f32 %v5110, %v5111
    %v5113 = vrot.slane %v5112, 1
    %v5114 = vadd.f32 %v5112, %v5113
    %v5115 = vadd.f32 %v4839, %v4845
    %v5116 = vadd.f32 %v5115, %v4851
    %v5117 = vrot.slane %v5116, 4
    %v5118 = vadd.f32 %v5116, %v5117
    %v5119 = vrot.slane %v5118, 2
    %v5120 = vadd.f32 %v5118, %v5119
    %v5121 = vrot.slane %v5120, 1
    %v5122 = vadd.f32 %v5120, %v5121
    %v5123 = vadd.f32 %v4920, %v4926
    %v5124 = vadd.f32 %v5123, %v4932
    %v5125 = vrot.slane %v5124, 4
    %v5126 = vadd.f32 %v5124, %v5125
    %v5127 = vrot.slane %v5126, 2
    %v5128 = vadd.f32 %v5126, %v5127
    %v5129 = vrot.slane %v5128, 1
    %v5130 = vadd.f32 %v5128, %v5129
    %v5131 = vadd.f32 %v4922, %v4928
    %v5132 = vadd.f32 %v5131, %v4934
    %v5133 = vrot.slane %v5132, 4
    %v5134 = vadd.f32 %v5132, %v5133
    %v5135 = vrot.slane %v5134, 2
    %v5136 = vadd.f32 %v5134, %v5135
    %v5137 = vrot.slane %v5136, 1
    %v5138 = vadd.f32 %v5136, %v5137
    %v5139 = vadd.f32 %v5003, %v5009
    %v5140 = vadd.f32 %v5139, %v5015
    %v5141 = vrot.slane %v5140, 4
    %v5142 = vadd.f32 %v5140, %v5141
    %v5143 = vrot.slane %v5142, 2
    %v5144 = vadd.f32 %v5142, %v5143
    %v5145 = vrot.slane %v5144, 1
    %v5146 = vadd.f32 %v5144, %v5145
    %v5147 = vadd.f32 %v5005, %v5011
    %v5148 = vadd.f32 %v5147, %v5017
    %v5149 = vrot.slane %v5148, 4
    %v5150 = vadd.f32 %v5148, %v5149
    %v5151 = vrot.slane %v5150, 2
    %v5152 = vadd.f32 %v5150, %v5151
    %v5153 = vrot.slane %v5152, 1
    %v5154 = vadd.f32 %v5152, %v5153
    %v5155 = vadd.f32 %v5086, %v5092
    %v5156 = vadd.f32 %v5155, %v5098
    %v5157 = vrot.slane %v5156, 4
    %v5158 = vadd.f32 %v5156, %v5157
    %v5159 = vrot.slane %v5158, 2
    %v5160 = vadd.f32 %v5158, %v5159
    %v5161 = vrot.slane %v5160, 1
    %v5162 = vadd.f32 %v5160, %v5161
    %v5163 = vadd.f32 %v5088, %v5094
    %v5164 = vadd.f32 %v5163, %v5100
    %v5165 = vrot.slane %v5164, 4
    %v5166 = vadd.f32 %v5164, %v5165
    %v5167 = vrot.slane %v5166, 2
    %v5168 = vadd.f32 %v5166, %v5167
    %v5169 = vrot.slane %v5168, 1
    %v5170 = vadd.f32 %v5168, %v5169
    %v5171 = vrcp.pop 24.0
    %v5172 = vmul.f32 %v5114, %v5171
    %v5173 = vmul.f32 %v5122, %v5171
    %v5174 = vmul.f32 %v5130, %v5171
    %v5175 = vmul.f32 %v5138, %v5171
    %v5176 = vmul.f32 %v5146, %v5171
    %v5177 = vmul.f32 %v5154, %v5171
    %v5178 = vmul.f32 %v5162, %v5171
    %v5179 = vmul.f32 %v5170, %v5171
    %v5180 = vmul.f32 %v4837, %v4837
    %v5181 = vmul.f32 %v4839, %v4839
    %v5182 = vmul.f32 %v4920, %v4920
    %v5183 = vmul.f32 %v4922, %v4922
    %v5184 = vmul.f32 %v5003, %v5003
    %v5185 = vmul.f32 %v5005, %v5005
    %v5186 = vmul.f32 %v5086, %v5086
    %v5187 = vmul.f32 %v5088, %v5088
    %v5188 = vmul.f32 %v4843, %v4843
    %v5189 = vmul.f32 %v4845, %v4845
    %v5190 = vmul.f32 %v4926, %v4926
    %v5191 = vmul.f32 %v4928, %v4928
    %v5192 = vmul.f32 %v5009, %v5009
    %v5193 = vmul.f32 %v5011, %v5011
    %v5194 = vmul.f32 %v5092, %v5092
    %v5195 = vmul.f32 %v5094, %v5094
    %v5196 = vmul.f32 %v4849, %v4849
    %v5197 = vmul.f32 %v4851, %v4851
    %v5198 = vmul.f32 %v4932, %v4932
    %v5199 = vmul.f32 %v4934, %v4934
    %v5200 = vmul.f32 %v5015, %v5015
    %v5201 = vmul.f32 %v5017, %v5017
    %v5202 = vmul.f32 %v5098, %v5098
    %v5203 = vmul.f32 %v5100, %v5100
    %v5204 = vadd.f32 %v5180, %v5188
    %v5205 = vadd.f32 %v5204, %v5196
    %v5206 = vrot.slane %v5205, 4
    %v5207 = vadd.f32 %v5205, %v5206
    %v5208 = vrot.slane %v5207, 2
    %v5209 = vadd.f32 %v5207, %v5208
    %v5210 = vrot.slane %v5209, 1
    %v5211 = vadd.f32 %v5209, %v5210
    %v5212 = vadd.f32 %v5181, %v5189
    %v5213 = vadd.f32 %v5212, %v5197
    %v5214 = vrot.slane %v5213, 4
    %v5215 = vadd.f32 %v5213, %v5214
    %v5216 = vrot.slane %v5215, 2
    %v5217 = vadd.f32 %v5215, %v5216
    %v5218 = vrot.slane %v5217, 1
    %v5219 = vadd.f32 %v5217, %v5218
    %v5220 = vadd.f32 %v5182, %v5190
    %v5221 = vadd.f32 %v5220, %v5198
    %v5222 = vrot.slane %v5221, 4
    %v5223 = vadd.f32 %v5221, %v5222
    %v5224 = vrot.slane %v5223, 2
    %v5225 = vadd.f32 %v5223, %v5224
    %v5226 = vrot.slane %v5225, 1
    %v5227 = vadd.f32 %v5225, %v5226
    %v5228 = vadd.f32 %v5183, %v5191
    %v5229 = vadd.f32 %v5228, %v5199
    %v5230 = vrot.slane %v5229, 4
    %v5231 = vadd.f32 %v5229, %v5230
    %v5232 = vrot.slane %v5231, 2
    %v5233 = vadd.f32 %v5231, %v5232
    %v5234 = vrot.slane %v5233, 1
    %v5235 = vadd.f32 %v5233, %v5234
    %v5236 = vadd.f32 %v5184, %v5192
    %v5237 = vadd.f32 %v5236, %v5200
    %v5238 = vrot.slane %v5237, 4
    %v5239 = vadd.f32 %v5237, %v5238
    %v5240 = vrot.slane %v5239, 2
    %v5241 = vadd.f32 %v5239, %v5240
    %v5242 = vrot.slane %v5241, 1
    %v5243 = vadd.f32 %v5241, %v5242
    %v5244 = vadd.f32 %v5185, %v5193
    %v5245 = vadd.f32 %v5244, %v5201
    %v5246 = vrot.slane %v5245, 4
    %v5247 = vadd.f32 %v5245, %v5246
    %v5248 = vrot.slane %v5247, 2
    %v5249 = vadd.f32 %v5247, %v5248
    %v5250 = vrot.slane %v5249, 1
    %v5251 = vadd.f32 %v5249, %v5250
    %v5252 = vadd.f32 %v5186, %v5194
    %v5253 = vadd.f32 %v5252, %v5202
    %v5254 = vrot.slane %v5253, 4
    %v5255 = vadd.f32 %v5253, %v5254
    %v5256 = vrot.slane %v5255, 2
    %v5257 = vadd.f32 %v5255, %v5256
    %v5258 = vrot.slane %v5257, 1
    %v5259 = vadd.f32 %v5257, %v5258
    %v5260 = vadd.f32 %v5187, %v5195
    %v5261 = vadd.f32 %v5260, %v5203
    %v5262 = vrot.slane %v5261, 4
    %v5263 = vadd.f32 %v5261, %v5262
    %v5264 = vrot.slane %v5263, 2
    %v5265 = vadd.f32 %v5263, %v5264
    %v5266 = vrot.slane %v5265, 1
    %v5267 = vadd.f32 %v5265, %v5266
    %v5268 = vmul.f32 %v5211, %v5171
    %v5269 = vmul.f32 %v5219, %v5171
    %v5270 = vmul.f32 %v5227, %v5171
    %v5271 = vmul.f32 %v5235, %v5171
    %v5272 = vmul.f32 %v5243, %v5171
    %v5273 = vmul.f32 %v5251, %v5171
    %v5274 = vmul.f32 %v5259, %v5171
    %v5275 = vmul.f32 %v5267, %v5171
    %v5276 = vmul.f32 %v5172, %v5172
    %v5277 = vmul.f32 %v5173, %v5173
    %v5278 = vmul.f32 %v5174, %v5174
    %v5279 = vmul.f32 %v5175, %v5175
    %v5280 = vmul.f32 %v5176, %v5176
    %v5281 = vmul.f32 %v5177, %v5177
    %v5282 = vmul.f32 %v5178, %v5178
    %v5283 = vmul.f32 %v5179, %v5179
    %v5284 = vsub.f32 %v5268, %v5276
    %v5285 = vsub.f32 %v5269, %v5277
    %v5286 = vsub.f32 %v5270, %v5278
    %v5287 = vsub.f32 %v5271, %v5279
    %v5288 = vsub.f32 %v5272, %v5280
    %v5289 = vsub.f32 %v5273, %v5281
    %v5290 = vsub.f32 %v5274, %v5282
    %v5291 = vsub.f32 %v5275, %v5283
    %v5292 = vmax.f32 %v5284, 0.0
    %v5293 = vmax.f32 %v5285, 0.0
    %v5294 = vmax.f32 %v5286, 0.0
    %v5295 = vmax.f32 %v5287, 0.0
    %v5296 = vmax.f32 %v5288, 0.0
    %v5297 = vmax.f32 %v5289, 0.0
    %v5298 = vmax.f32 %v5290, 0.0
    %v5299 = vmax.f32 %v5291, 0.0
    %v5300 = vsub.f32 %v4837, %v5172
    %v5301 = vsub.f32 %v4839, %v5173
    %v5302 = vsub.f32 %v4920, %v5174
    %v5303 = vsub.f32 %v4922, %v5175
    %v5304 = vsub.f32 %v5003, %v5176
    %v5305 = vsub.f32 %v5005, %v5177
    %v5306 = vsub.f32 %v5086, %v5178
    %v5307 = vsub.f32 %v5088, %v5179
    %v5308 = vsub.f32 %v4843, %v5172
    %v5309 = vsub.f32 %v4845, %v5173
    %v5310 = vsub.f32 %v4926, %v5174
    %v5311 = vsub.f32 %v4928, %v5175
    %v5312 = vsub.f32 %v5009, %v5176
    %v5313 = vsub.f32 %v5011, %v5177
    %v5314 = vsub.f32 %v5092, %v5178
    %v5315 = vsub.f32 %v5094, %v5179
    %v5316 = vsub.f32 %v4849, %v5172
    %v5317 = vsub.f32 %v4851, %v5173
    %v5318 = vsub.f32 %v4932, %v5174
    %v5319 = vsub.f32 %v4934, %v5175
    %v5320 = vsub.f32 %v5015, %v5176
    %v5321 = vsub.f32 %v5017, %v5177
    %v5322 = vsub.f32 %v5098, %v5178
    %v5323 = vsub.f32 %v5100, %v5179
    %v5324 = vadd.f32 %v5292, 1e-05
    %v5325 = vadd.f32 %v5293, 1e-05
    %v5326 = vadd.f32 %v5294, 1e-05
    %v5327 = vadd.f32 %v5295, 1e-05
    %v5328 = vadd.f32 %v5296, 1e-05
    %v5329 = vadd.f32 %v5297, 1e-05
    %v5330 = vadd.f32 %v5298, 1e-05
    %v5331 = vadd.f32 %v5299, 1e-05
    %v5332 = vrsqrt.pop %v5324
    %v5333 = vrsqrt.pop %v5325
    %v5334 = vrsqrt.pop %v5326
    %v5335 = vrsqrt.pop %v5327
    %v5336 = vrsqrt.pop %v5328
    %v5337 = vrsqrt.pop %v5329
    %v5338 = vrsqrt.pop %v5330
    %v5339 = vrsqrt.pop %v5331
    %v5340 = vmul.f32 %v5300, %v5332
    %v5341 = vmul.f32 %v5301, %v5333
    %v5342 = vmul.f32 %v5302, %v5334
    %v5343 = vmul.f32 %v5303, %v5335
    %v5344 = vmul.f32 %v5304, %v5336
    %v5345 = vmul.f32 %v5305, %v5337
    %v5346 = vmul.f32 %v5306, %v5338
    %v5347 = vmul.f32 %v5307, %v5339
    %v5348 = vmul.f32 %v5308, %v5332
    %v5349 = vmul.f32 %v5309, %v5333
    %v5350 = vmul.f32 %v5310, %v5334
    %v5351 = vmul.f32 %v5311, %v5335
    %v5352 = vmul.f32 %v5312, %v5336
    %v5353 = vmul.f32 %v5313, %v5337
    %v5354 = vmul.f32 %v5314, %v5338
    %v5355 = vmul.f32 %v5315, %v5339
    %v5356 = vmul.f32 %v5316, %v5332
    %v5357 = vmul.f32 %v5317, %v5333
    %v5358 = vmul.f32 %v5318, %v5334
    %v5359 = vmul.f32 %v5319, %v5335
    %v5360 = vmul.f32 %v5320, %v5336
    %v5361 = vmul.f32 %v5321, %v5337
    %v5362 = vmul.f32 %v5322, %v5338
    %v5363 = vmul.f32 %v5323, %v5339
    %v5365 = vlaneseq
    %v5366 = vshrl.u32 %v5365, 7
    %v5367 = vsub.s32 0, %v5366
    %v5368 = vrot.slane %v5105, %v5367
    %v5369 = vlaneseq
    %v5370 = vshrl.u32 %v5369, 7
    %v5371 = vsub.s32 1, %v5370
    %v5372 = vrot.slane %v5105, %v5371
    %v5373 = vlaneseq
    %v5374 = vshrl.u32 %v5373, 7
    %v5375 = vsub.s32 2, %v5374
    %v5376 = vrot.slane %v5105, %v5375
    %v5377 = vlaneseq
    %v5378 = vshrl.u32 %v5377, 7
    %v5379 = vsub.s32 3, %v5378
    %v5380 = vrot.slane %v5105, %v5379
    %v5381 = vlaneseq
    %v5382 = vshrl.u32 %v5381, 7
    %v5383 = vsub.s32 4, %v5382
    %v5384 = vrot.slane %v5105, %v5383
    %v5385 = vlaneseq
    %v5386 = vshrl.u32 %v5385, 7
    %v5387 = vsub.s32 5, %v5386
    %v5388 = vrot.slane %v5105, %v5387
    %v5389 = vlaneseq
    %v5390 = vshrl.u32 %v5389, 7
    %v5391 = vsub.s32 6, %v5390
    %v5392 = vrot.slane %v5105, %v5391
    %v5393 = vlaneseq
    %v5394 = vshrl.u32 %v5393, 7
    %v5395 = vsub.s32 7, %v5394
    %v5396 = vrot.slane %v5105, %v5395
    %v5405 = vmul.f32 %v5340, %v5368
    %v5406 = vmul.f32 %v5341, %v5372
    %v5407 = vmul.f32 %v5342, %v5376
    %v5408 = vmul.f32 %v5343, %v5380
    %v5409 = vmul.f32 %v5344, %v5384
    %v5410 = vmul.f32 %v5345, %v5388
    %v5411 = vmul.f32 %v5346, %v5392
    %v5412 = vmul.f32 %v5347, %v5396
    %v5413 = vmul.f32 %v5348, %v5368
    %v5414 = vmul.f32 %v5349, %v5372
    %v5415 = vmul.f32 %v5350, %v5376
    %v5416 = vmul.f32 %v5351, %v5380
    %v5417 = vmul.f32 %v5352, %v5384
    %v5418 = vmul.f32 %v5353, %v5388
    %v5419 = vmul.f32 %v5354, %v5392
    %v5420 = vmul.f32 %v5355, %v5396
    %v5421 = vmul.f32 %v5356, %v5368
    %v5422 = vmul.f32 %v5357, %v5372
    %v5423 = vmul.f32 %v5358, %v5376
    %v5424 = vmul.f32 %v5359, %v5380
    %v5425 = vmul.f32 %v5360, %v5384
    %v5426 = vmul.f32 %v5361, %v5388
    %v5427 = vmul.f32 %v5362, %v5392
    %v5428 = vmul.f32 %v5363, %v5396
    %v5430 = vlaneseq
    %v5431 = vshrl.u32 %v5430, 7
    %v5432 = vsub.s32 0, %v5431
    %v5433 = vrot.slane %v5106, %v5432
    %v5434 = vlaneseq
    %v5435 = vshrl.u32 %v5434, 7
    %v5436 = vsub.s32 1, %v5435
    %v5437 = vrot.slane %v5106, %v5436
    %v5438 = vlaneseq
    %v5439 = vshrl.u32 %v5438, 7
    %v5440 = vsub.s32 2, %v5439
    %v5441 = vrot.slane %v5106, %v5440
    %v5442 = vlaneseq
    %v5443 = vshrl.u32 %v5442, 7
    %v5444 = vsub.s32 3, %v5443
    %v5445 = vrot.slane %v5106, %v5444
    %v5446 = vlaneseq
    %v5447 = vshrl.u32 %v5446, 7
    %v5448 = vsub.s32 4, %v5447
    %v5449 = vrot.slane %v5106, %v5448
    %v5450 = vlaneseq
    %v5451 = vshrl.u32 %v5450, 7
    %v5452 = vsub.s32 5, %v5451
    %v5453 = vrot.slane %v5106, %v5452
    %v5454 = vlaneseq
    %v5455 = vshrl.u32 %v5454, 7
    %v5456 = vsub.s32 6, %v5455
    %v5457 = vrot.slane %v5106, %v5456
    %v5458 = vlaneseq
    %v5459 = vshrl.u32 %v5458, 7
    %v5460 = vsub.s32 7, %v5459
    %v5461 = vrot.slane %v5106, %v5460
    %v5470 = vadd.f32 %v5405, %v5433
    %v5471 = vadd.f32 %v5406, %v5437
    %v5472 = vadd.f32 %v5407, %v5441
    %v5473 = vadd.f32 %v5408, %v5445
    %v5474 = vadd.f32 %v5409, %v5449
    %v5475 = vadd.f32 %v5410, %v5453
    %v5476 = vadd.f32 %v5411, %v5457
    %v5477 = vadd.f32 %v5412, %v5461
    %v5478 = vadd.f32 %v5413, %v5433
    %v5479 = vadd.f32 %v5414, %v5437
    %v5480 = vadd.f32 %v5415, %v5441
    %v5481 = vadd.f32 %v5416, %v5445
    %v5482 = vadd.f32 %v5417, %v5449
    %v5483 = vadd.f32 %v5418, %v5453
    %v5484 = vadd.f32 %v5419, %v5457
    %v5485 = vadd.f32 %v5420, %v5461
    %v5486 = vadd.f32 %v5421, %v5433
    %v5487 = vadd.f32 %v5422, %v5437
    %v5488 = vadd.f32 %v5423, %v5441
    %v5489 = vadd.f32 %v5424, %v5445
    %v5490 = vadd.f32 %v5425, %v5449
    %v5491 = vadd.f32 %v5426, %v5453
    %v5492 = vadd.f32 %v5427, %v5457
    %v5493 = vadd.f32 %v5428, %v5461
    %v5494 = vld [vmem:[#allocation2] sm:$0xff]
    %v5495 = vld [vmem:[#allocation2 + $0x8] sm:$0xff]
    %v5496 = vld [vmem:[#allocation2 + $0x10] sm:$0xff]
    %v5497 = vld [vmem:[#allocation2 + $0x18] sm:$0xff]
    %v5498 = vld [vmem:[#allocation2 + $0x20] sm:$0xff]
    %v5499 = vld [vmem:[#allocation2 + $0x28] sm:$0xff]
    %v5500 = vld [vmem:[#allocation2 + $0x30] sm:$0xff]
    %v5501 = vld [vmem:[#allocation2 + $0x38] sm:$0xff]
    %v5502 = vld [vmem:[#allocation2 + $0x40] sm:$0xff]
    %v5503 = vld [vmem:[#allocation2 + $0x48] sm:$0xff]
    %v5504 = vld [vmem:[#allocation2 + $0x50] sm:$0xff]
    %v5505 = vld [vmem:[#allocation2 + $0x58] sm:$0xff]
    %v5506 = vld [vmem:[#allocation2 + $0x60] sm:$0xff]
    %v5507 = vld [vmem:[#allocation2 + $0x68] sm:$0xff]
    %v5508 = vld [vmem:[#allocation2 + $0x70] sm:$0xff]
    %v5509 = vld [vmem:[#allocation2 + $0x78] sm:$0xff]
    %v5510 = vld [vmem:[#allocation2 + $0x80] sm:$0xff]
    %v5511 = vld [vmem:[#allocation2 + $0x88] sm:$0xff]
    %v5512 = vld [vmem:[#allocation2 + $0x90] sm:$0xff]
    %v5513 = vld [vmem:[#allocation2 + $0x98] sm:$0xff]
    %v5514 = vld [vmem:[#allocation2 + $0xa0] sm:$0xff]
    %v5515 = vld [vmem:[#allocation2 + $0xa8] sm:$0xff]
    %v5516 = vld [vmem:[#allocation2 + $0xb0] sm:$0xff]
    %v5517 = vld [vmem:[#allocation2 + $0xb8] sm:$0xff]
    %v5518 = vld [vmem:[#allocation2 + $0xc0] sm:$0xff]
    %v5519 = vld [vmem:[#allocation2 + $0xc8] sm:$0xff]
    %v5520 = vld [vmem:[#allocation2 + $0xd0] sm:$0xff]
    %v5521 = vld [vmem:[#allocation2 + $0xd8] sm:$0xff]
    %v5522 = vld [vmem:[#allocation2 + $0xe0] sm:$0xff]
    %v5523 = vld [vmem:[#allocation2 + $0xe8] sm:$0xff]
    %v5524 = vld [vmem:[#allocation2 + $0xf0] sm:$0xff]
    %v5525 = vld [vmem:[#allocation2 + $0xf8] sm:$0xff]
    %v5526 = vld [vmem:[#allocation2 + $0x100] sm:$0xff]
    %v5527 = vld [vmem:[#allocation2 + $0x108] sm:$0xff]
    %v5528 = vld [vmem:[#allocation2 + $0x110] sm:$0xff]
    %v5529 = vld [vmem:[#allocation2 + $0x118] sm:$0xff]
    %v5530 = vld [vmem:[#allocation2 + $0x120] sm:$0xff]
    %v5531 = vld [vmem:[#allocation2 + $0x128] sm:$0xff]
    %v5532 = vld [vmem:[#allocation2 + $0x130] sm:$0xff]
    %v5533 = vld [vmem:[#allocation2 + $0x138] sm:$0xff]
    %v5534 = vld [vmem:[#allocation2 + $0x140] sm:$0xff]
    %v5535 = vld [vmem:[#allocation2 + $0x148] sm:$0xff]
    %v5536 = vld [vmem:[#allocation2 + $0x150] sm:$0xff]
    %v5537 = vld [vmem:[#allocation2 + $0x158] sm:$0xff]
    %v5538 = vld [vmem:[#allocation2 + $0x160] sm:$0xff]
    %v5539 = vld [vmem:[#allocation2 + $0x168] sm:$0xff]
    %v5540 = vld [vmem:[#allocation2 + $0x170] sm:$0xff]
    %v5541 = vld [vmem:[#allocation2 + $0x178] sm:$0xff]
    %v5542 = vld [vmem:[#allocation2 + $0x180] sm:$0xff]
    %v5543 = vld [vmem:[#allocation2 + $0x188] sm:$0xff]
    %v5544 = vld [vmem:[#allocation2 + $0x190] sm:$0xff]
    %v5545 = vld [vmem:[#allocation2 + $0x198] sm:$0xff]
    %v5546 = vld [vmem:[#allocation2 + $0x1a0] sm:$0xff]
    %v5547 = vld [vmem:[#allocation2 + $0x1a8] sm:$0xff]
    %v5548 = vld [vmem:[#allocation2 + $0x1b0] sm:$0xff]
    %v5549 = vld [vmem:[#allocation2 + $0x1b8] sm:$0xff]
    %v5550 = vld [vmem:[#allocation2 + $0x1c0] sm:$0xff]
    %v5551 = vld [vmem:[#allocation2 + $0x1c8] sm:$0xff]
    %v5552 = vld [vmem:[#allocation2 + $0x1d0] sm:$0xff]
    %v5553 = vld [vmem:[#allocation2 + $0x1d8] sm:$0xff]
    %v5554 = vld [vmem:[#allocation2 + $0x1e0] sm:$0xff]
    %v5555 = vld [vmem:[#allocation2 + $0x1e8] sm:$0xff]
    %v5556 = vld [vmem:[#allocation2 + $0x1f0] sm:$0xff]
    %v5557 = vld [vmem:[#allocation2 + $0x1f8] sm:$0xff]
    %v5558 = vld [vmem:[#allocation2 + $0x200] sm:$0xff]
    %v5559 = vld [vmem:[#allocation2 + $0x208] sm:$0xff]
    %v5560 = vld [vmem:[#allocation2 + $0x210] sm:$0xff]
    %v5561 = vld [vmem:[#allocation2 + $0x218] sm:$0xff]
    %v5562 = vld [vmem:[#allocation2 + $0x220] sm:$0xff]
    %v5563 = vld [vmem:[#allocation2 + $0x228] sm:$0xff]
    %v5564 = vld [vmem:[#allocation2 + $0x230] sm:$0xff]
    %v5565 = vld [vmem:[#allocation2 + $0x238] sm:$0xff]
    %v5566 = vld [vmem:[#allocation2 + $0x240] sm:$0xff]
    %v5567 = vld [vmem:[#allocation2 + $0x248] sm:$0xff]
    %v5568 = vld [vmem:[#allocation2 + $0x250] sm:$0xff]
    %v5569 = vld [vmem:[#allocation2 + $0x258] sm:$0xff]
    %v5570 = vld [vmem:[#allocation2 + $0x260] sm:$0xff]
    %v5571 = vld [vmem:[#allocation2 + $0x268] sm:$0xff]
    %v5572 = vld [vmem:[#allocation2 + $0x270] sm:$0xff]
    %v5573 = vld [vmem:[#allocation2 + $0x278] sm:$0xff]
    %v5574 = vld [vmem:[#allocation2 + $0x280] sm:$0xff]
    %v5575 = vld [vmem:[#allocation2 + $0x288] sm:$0xff]
    %v5576 = vld [vmem:[#allocation2 + $0x290] sm:$0xff]
    %v5577 = vld [vmem:[#allocation2 + $0x298] sm:$0xff]
    %v5578 = vld [vmem:[#allocation2 + $0x2a0] sm:$0xff]
    %v5579 = vld [vmem:[#allocation2 + $0x2a8] sm:$0xff]
    %v5580 = vld [vmem:[#allocation2 + $0x2b0] sm:$0xff]
    %v5581 = vld [vmem:[#allocation2 + $0x2b8] sm:$0xff]
    %v5582 = vld [vmem:[#allocation2 + $0x2c0] sm:$0xff]
    %v5583 = vld [vmem:[#allocation2 + $0x2c8] sm:$0xff]
    %v5584 = vld [vmem:[#allocation2 + $0x2d0] sm:$0xff]
    %v5585 = vld [vmem:[#allocation2 + $0x2d8] sm:$0xff]
    %v5586 = vld [vmem:[#allocation2 + $0x2e0] sm:$0xff]
    %v5587 = vld [vmem:[#allocation2 + $0x2e8] sm:$0xff]
    %v5588 = vld [vmem:[#allocation2 + $0x2f0] sm:$0xff]
    %v5589 = vld [vmem:[#allocation2 + $0x2f8] sm:$0xff]
    %v5590 = vld [vmem:[#allocation2 + $0x300] sm:$0xff]
    %v5591 = vld [vmem:[#allocation2 + $0x308] sm:$0xff]
    %v5592 = vld [vmem:[#allocation2 + $0x310] sm:$0xff]
    %v5593 = vld [vmem:[#allocation2 + $0x318] sm:$0xff]
    %v5594 = vld [vmem:[#allocation2 + $0x320] sm:$0xff]
    %v5595 = vld [vmem:[#allocation2 + $0x328] sm:$0xff]
    %v5596 = vld [vmem:[#allocation2 + $0x330] sm:$0xff]
    %v5597 = vld [vmem:[#allocation2 + $0x338] sm:$0xff]
    %v5598 = vld [vmem:[#allocation2 + $0x340] sm:$0xff]
    %v5599 = vld [vmem:[#allocation2 + $0x348] sm:$0xff]
    %v5600 = vld [vmem:[#allocation2 + $0x350] sm:$0xff]
    %v5601 = vld [vmem:[#allocation2 + $0x358] sm:$0xff]
    %v5602 = vld [vmem:[#allocation2 + $0x360] sm:$0xff]
    %v5603 = vld [vmem:[#allocation2 + $0x368] sm:$0xff]
    %v5604 = vld [vmem:[#allocation2 + $0x370] sm:$0xff]
    %v5605 = vld [vmem:[#allocation2 + $0x378] sm:$0xff]
    %v5606 = vld [vmem:[#allocation2 + $0x380] sm:$0xff]
    %v5607 = vld [vmem:[#allocation2 + $0x388] sm:$0xff]
    %v5608 = vld [vmem:[#allocation2 + $0x390] sm:$0xff]
    %v5609 = vld [vmem:[#allocation2 + $0x398] sm:$0xff]
    %v5610 = vld [vmem:[#allocation2 + $0x3a0] sm:$0xff]
    %v5611 = vld [vmem:[#allocation2 + $0x3a8] sm:$0xff]
    %v5612 = vld [vmem:[#allocation2 + $0x3b0] sm:$0xff]
    %v5613 = vld [vmem:[#allocation2 + $0x3b8] sm:$0xff]
    %v5614 = vld [vmem:[#allocation2 + $0x3c0] sm:$0xff]
    %v5615 = vld [vmem:[#allocation2 + $0x3c8] sm:$0xff]
    %v5616 = vld [vmem:[#allocation2 + $0x3d0] sm:$0xff]
    %v5617 = vld [vmem:[#allocation2 + $0x3d8] sm:$0xff]
    %v5618 = vld [vmem:[#allocation2 + $0x3e0] sm:$0xff]
    %v5619 = vld [vmem:[#allocation2 + $0x3e8] sm:$0xff]
    %v5620 = vld [vmem:[#allocation2 + $0x3f0] sm:$0xff]
    %v5621 = vld [vmem:[#allocation2 + $0x3f8] sm:$0xff]
    %v5622 = vld [vmem:[%s10] sm:$0x1]
    %v5624 = vlaneseq
    %v5625 = vshrl.u32 %v5624, 7
    %v5626 = vsub.s32 0, %v5625
    %v5627 = vrot.slane %v5622, %v5626
    %5629 = vmatprep.subr.mxu0 0.0
    %5630 = vmatpush1.msra.mxu0 %v5509
    %5631 = vmatprep.subr.mxu0 0.0
    %5632 = vmatpush1.msra.mxu0 %v5508
    %5633 = vmatprep.subr.mxu0 0.0
    %5634 = vmatpush1.msra.mxu0 %v5507
    %5635 = vmatprep.subr.mxu0 0.0
    %5636 = vmatpush1.msra.mxu0 %v5506
    %5637 = vmatprep.subr.mxu0 0.0
    %5638 = vmatpush1.msra.mxu0 %v5505
    %5639 = vmatprep.subr.mxu0 0.0
    %5640 = vmatpush1.msra.mxu0 %v5504
    %5641 = vmatprep.subr.mxu0 0.0
    %5642 = vmatpush1.msra.mxu0 %v5503
    %5643 = vmatprep.subr.mxu0 0.0
    %5644 = vmatpush1.msra.mxu0 %v5502
    %5645 = vmatprep.subr.mxu0 0.0
    %5646 = vmatpush1.msra.mxu0 %v5501
    %5647 = vmatprep.subr.mxu0 0.0
    %5648 = vmatpush1.msra.mxu0 %v5500
    %5649 = vmatprep.subr.mxu0 0.0
    %5650 = vmatpush1.msra.mxu0 %v5499
    %5651 = vmatprep.subr.mxu0 0.0
    %5652 = vmatpush1.msra.mxu0 %v5498
    %5653 = vmatprep.subr.mxu0 0.0
    %5654 = vmatpush1.msra.mxu0 %v5497
    %5655 = vmatprep.subr.mxu0 0.0
    %5656 = vmatpush1.msra.mxu0 %v5496
    %5657 = vmatprep.subr.mxu0 0.0
    %5658 = vmatpush1.msra.mxu0 %v5495
    %5659 = vmatprep.subr.mxu0 0.0
    %5660 = vmatpush1.msra.mxu0 %v5494
    %5661 = vmatprep.subr.mxu0 0.0
    %5662 = vmatpush2.msra.mxu0 %v5525
    %5663 = vmatprep.subr.mxu0 0.0
    %5664 = vmatpush2.msra.mxu0 %v5524
    %5665 = vmatprep.subr.mxu0 0.0
    %5666 = vmatpush2.msra.mxu0 %v5523
    %5667 = vmatprep.subr.mxu0 0.0
    %5668 = vmatpush2.msra.mxu0 %v5522
    %5669 = vmatprep.subr.mxu0 0.0
    %5670 = vmatpush2.msra.mxu0 %v5521
    %5671 = vmatprep.subr.mxu0 0.0
    %5672 = vmatpush2.msra.mxu0 %v5520
    %5673 = vmatprep.subr.mxu0 0.0
    %5674 = vmatpush2.msra.mxu0 %v5519
    %5675 = vmatprep.subr.mxu0 0.0
    %5676 = vmatpush2.msra.mxu0 %v5518
    %5677 = vmatprep.subr.mxu0 0.0
    %5678 = vmatpush2.msra.mxu0 %v5517
    %5679 = vmatprep.subr.mxu0 0.0
    %5680 = vmatpush2.msra.mxu0 %v5516
    %5681 = vmatprep.subr.mxu0 0.0
    %5682 = vmatpush2.msra.mxu0 %v5515
    %5683 = vmatprep.subr.mxu0 0.0
    %5684 = vmatpush2.msra.mxu0 %v5514
    %5685 = vmatprep.subr.mxu0 0.0
    %5686 = vmatpush2.msra.mxu0 %v5513
    %5687 = vmatprep.subr.mxu0 0.0
    %5688 = vmatpush2.msra.mxu0 %v5512
    %5689 = vmatprep.subr.mxu0 0.0
    %5690 = vmatpush2.msra.mxu0 %v5511
    %5691 = vmatprep.subr.mxu0 0.0
    %5692 = vmatpush2.msra.mxu0 %v5510
    %5693 = vmatprep.mubr.f32.mxu0 %v5471
    %5694 = vmatmul.mubr.f32.gmra.mxu0 %v5470
    %v5695 = vpop.f32.mrf.mxu0
    %v5696 = vadd.f32 %v5627, %v5695
    %v5697 = vpop.f32.mrf.mxu0
    %5698 = vmatprep.mubr.f32.mxu0 %v5479
    %5699 = vmatmul.mubr.f32.gmra.mxu0 %v5478
    %v5700 = vpop.f32.mrf.mxu0
    %v5701 = vadd.f32 %v5627, %v5700
    %v5702 = vpop.f32.mrf.mxu0
    %5703 = vmatprep.mubr.f32.mxu0 %v5487
    %5704 = vmatmul.mubr.f32.gmra.mxu0 %v5486
    %v5705 = vpop.f32.mrf.mxu0
    %v5706 = vadd.f32 %v5627, %v5705
    %v5707 = vpop.f32.mrf.mxu0
    %5708 = vdwg.mxu0
    %5709 = vmatprep.subr.mxu0 0.0
    %5710 = vmatpush1.msra.mxu0 %v5541
    %5711 = vmatprep.subr.mxu0 0.0
    %5712 = vmatpush1.msra.mxu0 %v5540
    %5713 = vmatprep.subr.mxu0 0.0
    %5714 = vmatpush1.msra.mxu0 %v5539
    %5715 = vmatprep.subr.mxu0 0.0
    %5716 = vmatpush1.msra.mxu0 %v5538
    %5717 = vmatprep.subr.mxu0 0.0
    %5718 = vmatpush1.msra.mxu0 %v5537
    %5719 = vmatprep.subr.mxu0 0.0
    %5720 = vmatpush1.msra.mxu0 %v5536
    %5721 = vmatprep.subr.mxu0 0.0
    %5722 = vmatpush1.msra.mxu0 %v5535
    %5723 = vmatprep.subr.mxu0 0.0
    %5724 = vmatpush1.msra.mxu0 %v5534
    %5725 = vmatprep.subr.mxu0 0.0
    %5726 = vmatpush1.msra.mxu0 %v5533
    %5727 = vmatprep.subr.mxu0 0.0
    %5728 = vmatpush1.msra.mxu0 %v5532
    %5729 = vmatprep.subr.mxu0 0.0
    %5730 = vmatpush1.msra.mxu0 %v5531
    %5731 = vmatprep.subr.mxu0 0.0
    %5732 = vmatpush1.msra.mxu0 %v5530
    %5733 = vmatprep.subr.mxu0 0.0
    %5734 = vmatpush1.msra.mxu0 %v5529
    %5735 = vmatprep.subr.mxu0 0.0
    %5736 = vmatpush1.msra.mxu0 %v5528
    %5737 = vmatprep.subr.mxu0 0.0
    %5738 = vmatpush1.msra.mxu0 %v5527
    %5739 = vmatprep.subr.mxu0 0.0
    %5740 = vmatpush1.msra.mxu0 %v5526
    %5741 = vmatprep.subr.mxu0 0.0
    %5742 = vmatpush2.msra.mxu0 %v5557
    %5743 = vmatprep.subr.mxu0 0.0
    %5744 = vmatpush2.msra.mxu0 %v5556
    %5745 = vmatprep.subr.mxu0 0.0
    %5746 = vmatpush2.msra.mxu0 %v5555
    %5747 = vmatprep.subr.mxu0 0.0
    %5748 = vmatpush2.msra.mxu0 %v5554
    %5749 = vmatprep.subr.mxu0 0.0
    %5750 = vmatpush2.msra.mxu0 %v5553
    %5751 = vmatprep.subr.mxu0 0.0
    %5752 = vmatpush2.msra.mxu0 %v5552
    %5753 = vmatprep.subr.mxu0 0.0
    %5754 = vmatpush2.msra.mxu0 %v5551
    %5755 = vmatprep.subr.mxu0 0.0
    %5756 = vmatpush2.msra.mxu0 %v5550
    %5757 = vmatprep.subr.mxu0 0.0
    %5758 = vmatpush2.msra.mxu0 %v5549
    %5759 = vmatprep.subr.mxu0 0.0
    %5760 = vmatpush2.msra.mxu0 %v5548
    %5761 = vmatprep.subr.mxu0 0.0
    %5762 = vmatpush2.msra.mxu0 %v5547
    %5763 = vmatprep.subr.mxu0 0.0
    %5764 = vmatpush2.msra.mxu0 %v5546
    %5765 = vmatprep.subr.mxu0 0.0
    %5766 = vmatpush2.msra.mxu0 %v5545
    %5767 = vmatprep.subr.mxu0 0.0
    %5768 = vmatpush2.msra.mxu0 %v5544
    %5769 = vmatprep.subr.mxu0 0.0
    %5770 = vmatpush2.msra.mxu0 %v5543
    %5771 = vmatprep.subr.mxu0 0.0
    %5772 = vmatpush2.msra.mxu0 %v5542
    %5773 = vmatprep.mubr.f32.mxu0 %v5473
    %5774 = vmatmul.mubr.f32.gmra.mxu0 %v5472
    %v5775 = vpop.f32.mrf.mxu0
    %v5776 = vadd.f32 %v5696, %v5775
    %v5777 = vpop.f32.mrf.mxu0
    %5778 = vmatprep.mubr.f32.mxu0 %v5481
    %5779 = vmatmul.mubr.f32.gmra.mxu0 %v5480
    %v5780 = vpop.f32.mrf.mxu0
    %v5781 = vadd.f32 %v5701, %v5780
    %v5782 = vpop.f32.mrf.mxu0
    %5783 = vmatprep.mubr.f32.mxu0 %v5489
    %5784 = vmatmul.mubr.f32.gmra.mxu0 %v5488
    %v5785 = vpop.f32.mrf.mxu0
    %v5786 = vadd.f32 %v5706, %v5785
    %v5787 = vpop.f32.mrf.mxu0
    %5788 = vdwg.mxu0
    %5789 = vmatprep.subr.mxu0 0.0
    %5790 = vmatpush1.msra.mxu0 %v5573
    %5791 = vmatprep.subr.mxu0 0.0
    %5792 = vmatpush1.msra.mxu0 %v5572
    %5793 = vmatprep.subr.mxu0 0.0
    %5794 = vmatpush1.msra.mxu0 %v5571
    %5795 = vmatprep.subr.mxu0 0.0
    %5796 = vmatpush1.msra.mxu0 %v5570
    %5797 = vmatprep.subr.mxu0 0.0
    %5798 = vmatpush1.msra.mxu0 %v5569
    %5799 = vmatprep.subr.mxu0 0.0
    %5800 = vmatpush1.msra.mxu0 %v5568
    %5801 = vmatprep.subr.mxu0 0.0
    %5802 = vmatpush1.msra.mxu0 %v5567
    %5803 = vmatprep.subr.mxu0 0.0
    %5804 = vmatpush1.msra.mxu0 %v5566
    %5805 = vmatprep.subr.mxu0 0.0
    %5806 = vmatpush1.msra.mxu0 %v5565
    %5807 = vmatprep.subr.mxu0 0.0
    %5808 = vmatpush1.msra.mxu0 %v5564
    %5809 = vmatprep.subr.mxu0 0.0
    %5810 = vmatpush1.msra.mxu0 %v5563
    %5811 = vmatprep.subr.mxu0 0.0
    %5812 = vmatpush1.msra.mxu0 %v5562
    %5813 = vmatprep.subr.mxu0 0.0
    %5814 = vmatpush1.msra.mxu0 %v5561
    %5815 = vmatprep.subr.mxu0 0.0
    %5816 = vmatpush1.msra.mxu0 %v5560
    %5817 = vmatprep.subr.mxu0 0.0
    %5818 = vmatpush1.msra.mxu0 %v5559
    %5819 = vmatprep.subr.mxu0 0.0
    %5820 = vmatpush1.msra.mxu0 %v5558
    %5821 = vmatprep.subr.mxu0 0.0
    %5822 = vmatpush2.msra.mxu0 %v5589
    %5823 = vmatprep.subr.mxu0 0.0
    %5824 = vmatpush2.msra.mxu0 %v5588
    %5825 = vmatprep.subr.mxu0 0.0
    %5826 = vmatpush2.msra.mxu0 %v5587
    %5827 = vmatprep.subr.mxu0 0.0
    %5828 = vmatpush2.msra.mxu0 %v5586
    %5829 = vmatprep.subr.mxu0 0.0
    %5830 = vmatpush2.msra.mxu0 %v5585
    %5831 = vmatprep.subr.mxu0 0.0
    %5832 = vmatpush2.msra.mxu0 %v5584
    %5833 = vmatprep.subr.mxu0 0.0
    %5834 = vmatpush2.msra.mxu0 %v5583
    %5835 = vmatprep.subr.mxu0 0.0
    %5836 = vmatpush2.msra.mxu0 %v5582
    %5837 = vmatprep.subr.mxu0 0.0
    %5838 = vmatpush2.msra.mxu0 %v5581
    %5839 = vmatprep.subr.mxu0 0.0
    %5840 = vmatpush2.msra.mxu0 %v5580
    %5841 = vmatprep.subr.mxu0 0.0
    %5842 = vmatpush2.msra.mxu0 %v5579
    %5843 = vmatprep.subr.mxu0 0.0
    %5844 = vmatpush2.msra.mxu0 %v5578
    %5845 = vmatprep.subr.mxu0 0.0
    %5846 = vmatpush2.msra.mxu0 %v5577
    %5847 = vmatprep.subr.mxu0 0.0
    %5848 = vmatpush2.msra.mxu0 %v5576
    %5849 = vmatprep.subr.mxu0 0.0
    %5850 = vmatpush2.msra.mxu0 %v5575
    %5851 = vmatprep.subr.mxu0 0.0
    %5852 = vmatpush2.msra.mxu0 %v5574
    %5853 = vmatprep.mubr.f32.mxu0 %v5475
    %5854 = vmatmul.mubr.f32.gmra.mxu0 %v5474
    %v5855 = vpop.f32.mrf.mxu0
    %v5856 = vadd.f32 %v5776, %v5855
    %v5857 = vpop.f32.mrf.mxu0
    %5858 = vmatprep.mubr.f32.mxu0 %v5483
    %5859 = vmatmul.mubr.f32.gmra.mxu0 %v5482
    %v5860 = vpop.f32.mrf.mxu0
    %v5861 = vadd.f32 %v5781, %v5860
    %v5862 = vpop.f32.mrf.mxu0
    %5863 = vmatprep.mubr.f32.mxu0 %v5491
    %5864 = vmatmul.mubr.f32.gmra.mxu0 %v5490
    %v5865 = vpop.f32.mrf.mxu0
    %v5866 = vadd.f32 %v5786, %v5865
    %v5867 = vpop.f32.mrf.mxu0
    %5868 = vdwg.mxu0
    %5869 = vmatprep.subr.mxu0 0.0
    %5870 = vmatpush1.msra.mxu0 %v5605
    %5871 = vmatprep.subr.mxu0 0.0
    %5872 = vmatpush1.msra.mxu0 %v5604
    %5873 = vmatprep.subr.mxu0 0.0
    %5874 = vmatpush1.msra.mxu0 %v5603
    %5875 = vmatprep.subr.mxu0 0.0
    %5876 = vmatpush1.msra.mxu0 %v5602
    %5877 = vmatprep.subr.mxu0 0.0
    %5878 = vmatpush1.msra.mxu0 %v5601
    %5879 = vmatprep.subr.mxu0 0.0
    %5880 = vmatpush1.msra.mxu0 %v5600
    %5881 = vmatprep.subr.mxu0 0.0
    %5882 = vmatpush1.msra.mxu0 %v5599
    %5883 = vmatprep.subr.mxu0 0.0
    %5884 = vmatpush1.msra.mxu0 %v5598
    %5885 = vmatprep.subr.mxu0 0.0
    %5886 = vmatpush1.msra.mxu0 %v5597
    %5887 = vmatprep.subr.mxu0 0.0
    %5888 = vmatpush1.msra.mxu0 %v5596
    %5889 = vmatprep.subr.mxu0 0.0
    %5890 = vmatpush1.msra.mxu0 %v5595
    %5891 = vmatprep.subr.mxu0 0.0
    %5892 = vmatpush1.msra.mxu0 %v5594
    %5893 = vmatprep.subr.mxu0 0.0
    %5894 = vmatpush1.msra.mxu0 %v5593
    %5895 = vmatprep.subr.mxu0 0.0
    %5896 = vmatpush1.msra.mxu0 %v5592
    %5897 = vmatprep.subr.mxu0 0.0
    %5898 = vmatpush1.msra.mxu0 %v5591
    %5899 = vmatprep.subr.mxu0 0.0
    %5900 = vmatpush1.msra.mxu0 %v5590
    %5901 = vmatprep.subr.mxu0 0.0
    %5902 = vmatpush2.msra.mxu0 %v5621
    %5903 = vmatprep.subr.mxu0 0.0
    %5904 = vmatpush2.msra.mxu0 %v5620
    %5905 = vmatprep.subr.mxu0 0.0
    %5906 = vmatpush2.msra.mxu0 %v5619
    %5907 = vmatprep.subr.mxu0 0.0
    %5908 = vmatpush2.msra.mxu0 %v5618
    %5909 = vmatprep.subr.mxu0 0.0
    %5910 = vmatpush2.msra.mxu0 %v5617
    %5911 = vmatprep.subr.mxu0 0.0
    %5912 = vmatpush2.msra.mxu0 %v5616
    %5913 = vmatprep.subr.mxu0 0.0
    %5914 = vmatpush2.msra.mxu0 %v5615
    %5915 = vmatprep.subr.mxu0 0.0
    %5916 = vmatpush2.msra.mxu0 %v5614
    %5917 = vmatprep.subr.mxu0 0.0
    %5918 = vmatpush2.msra.mxu0 %v5613
    %5919 = vmatprep.subr.mxu0 0.0
    %5920 = vmatpush2.msra.mxu0 %v5612
    %5921 = vmatprep.subr.mxu0 0.0
    %5922 = vmatpush2.msra.mxu0 %v5611
    %5923 = vmatprep.subr.mxu0 0.0
    %5924 = vmatpush2.msra.mxu0 %v5610
    %5925 = vmatprep.subr.mxu0 0.0
    %5926 = vmatpush2.msra.mxu0 %v5609
    %5927 = vmatprep.subr.mxu0 0.0
    %5928 = vmatpush2.msra.mxu0 %v5608
    %5929 = vmatprep.subr.mxu0 0.0
    %5930 = vmatpush2.msra.mxu0 %v5607
    %5931 = vmatprep.subr.mxu0 0.0
    %5932 = vmatpush2.msra.mxu0 %v5606
    %5933 = vmatprep.mubr.f32.mxu0 %v5477
    %5934 = vmatmul.mubr.f32.gmra.mxu0 %v5476
    %v5935 = vpop.f32.mrf.mxu0
    %v5936 = vadd.f32 %v5856, %v5935
    %v5937 = vpop.f32.mrf.mxu0
    %5938 = vmatprep.mubr.f32.mxu0 %v5485
    %5939 = vmatmul.mubr.f32.gmra.mxu0 %v5484
    %v5940 = vpop.f32.mrf.mxu0
    %v5941 = vadd.f32 %v5861, %v5940
    %v5942 = vpop.f32.mrf.mxu0
    %5943 = vmatprep.mubr.f32.mxu0 %v5493
    %5944 = vmatmul.mubr.f32.gmra.mxu0 %v5492
    %v5945 = vpop.f32.mrf.mxu0
    %v5946 = vadd.f32 %v5866, %v5945
    %v5947 = vpop.f32.mrf.mxu0
    %5948 = vdwg.mxu0
    %5949 = vst [vmem:[#allocation11] sm:$0xff] %v5936
    %5950 = vst [vmem:[#allocation11 + $0x8] sm:$0xff] %v5941
    %5951 = vst [vmem:[#allocation11 + $0x10] sm:$0xff] %v5946
    %v5952 = vsub.f32 %v5936, %v5941
    %v5953 = vmul.f32 %v5952, %v5952
    %5954 = vadd.xlane.f32.xlu0 %v5953
    %v5955 = vpop.xlane.xlu0 %5954
    %v5956 = vsub.f32 %v5936, %v5946
    %v5957 = vmul.f32 %v5956, %v5956
    %5958 = vadd.xlane.f32.xlu0 %v5957
    %v5959 = vpop.xlane.xlu0 %5958
    %v5960 = vsub.f32 %v5955, %v5959
    %v5961 = vadd.f32 %v5960, 1.0
    %v5962 = vmax.f32 %v5961, 0.0
    %vm5963 = vcmask 7168
    %v5964 = vsel %vm5963, %v5962, 0.0
    %5965 = vadd.xlane.f32.xlu0 %v5964
    %v5966 = vpop.xlane.xlu0 %5965
    %v5967 = vrot.slane %v5966, 4
    %v5968 = vadd.f32 %v5966, %v5967
    %v5969 = vrot.slane %v5968, 2
    %v5970 = vadd.f32 %v5968, %v5969
    %v5971 = vrot.slane %v5970, 1
    %v5972 = vadd.f32 %v5970, %v5971
    %s5973 = vtos %v5972
    %v5974 = vstv %s5973
    %v5975 = vrcp.pop 8.0
    %v5976 = vmul.f32 %v5974, %v5975
    %v5977 = vstv %s80
    %v5978 = vrcp.pop %v5977
    %v5979 = vmul.f32 -90.0, %v5978
    %v5980 = vmul.f32 %v5979, 1.442695
    %v5981 = vpow.pop %v5980
    %v5982 = vadd.f32 %v5952, 1e-06
    %v5983 = vmul.f32 %v5982, %v5982
    %5984 = vadd.xlane.f32.xlu0 %v5983
    %v5985 = vpop.xlane.xlu0 %5984
    %v5986 = vrsqrt.pop %v5985
    %v5987 = vmul.f32 %v5985, %v5986
    %vm5988 = vcmp.eq.f32.partialorder %v5985, inf
    %v5989 = vsel %vm5988, %v5985, %v5987
    %vm5990 = vcmp.eq.f32.partialorder %v5985, 0.0
    %v5991 = vand.u32 %v5985, 2147483648
    %v5992 = vsel %vm5990, %v5991, %v5989
    %v5993 = vadd.f32 %v5956, 1e-06
    %v5994 = vmul.f32 %v5993, %v5993
    %5995 = vadd.xlane.f32.xlu0 %v5994
    %v5996 = vpop.xlane.xlu0 %5995
    %v5997 = vrsqrt.pop %v5996
    %v5998 = vmul.f32 %v5996, %v5997
    %vm5999 = vcmp.eq.f32.partialorder %v5996, inf
    %v6000 = vsel %vm5999, %v5996, %v5998
    %vm6001 = vcmp.eq.f32.partialorder %v5996, 0.0
    %v6002 = vand.u32 %v5996, 2147483648
    %v6003 = vsel %vm6001, %v6002, %v6000
    %v6004 = vsub.f32 %v6003, %v5992
    %v6005 = vmul.f32 %v6004, %v5981
    %v6006 = vadd.f32 %v5992, %v6005
    %v6007 = vrcp.pop %v6003
    %v6008 = vmul.f32 %v6006, %v6007
    %v6009 = vsub.f32 %v5946, %v5936
    %v6010 = vmul.f32 %v6009, %v6008
    %v6011 = vadd.f32 %v5936, %v6010
    %vm6012 = vcmp.ge.f32.partialorder %v5992, %v6003
    %v6013 = vsel %vm6012, 1, 0
    %vm6014 = vcmp.eq.s32.totalorder %v6013, 1
    %v6015 = vsel %vm6014, %v5946, %v6011
    %s6016 = smul.u32 8, 16
    %s6017 = smul.u32 %s6016, 4
    %s6018 = sshll.u32 %s6017, 4
    %6019 = dma.done %s379, %s6018
    %v6020 = vld [vmem:[#allocation3] sm:$0xff]
    %v6021 = vld [vmem:[#allocation3 + $0x8] sm:$0xff]
    %v6022 = vld [vmem:[#allocation3 + $0x10] sm:$0xff]
    %v6023 = vld [vmem:[#allocation3 + $0x18] sm:$0xff]
    %v6024 = vld [vmem:[#allocation3 + $0x20] sm:$0xff]
    %v6025 = vld [vmem:[#allocation3 + $0x28] sm:$0xff]
    %v6026 = vld [vmem:[#allocation3 + $0x30] sm:$0xff]
    %v6027 = vld [vmem:[#allocation3 + $0x38] sm:$0xff]
    %v6028 = vld [vmem:[#allocation3 + $0x40] sm:$0xff]
    %v6029 = vld [vmem:[#allocation3 + $0x48] sm:$0xff]
    %v6030 = vld [vmem:[#allocation3 + $0x50] sm:$0xff]
    %v6031 = vld [vmem:[#allocation3 + $0x58] sm:$0xff]
    %v6032 = vld [vmem:[#allocation3 + $0x60] sm:$0xff]
    %v6033 = vld [vmem:[#allocation3 + $0x68] sm:$0xff]
    %v6034 = vld [vmem:[#allocation3 + $0x70] sm:$0xff]
    %v6035 = vld [vmem:[#allocation3 + $0x78] sm:$0xff]
    %v6036 = vld [vmem:[#allocation3 + $0x80] sm:$0xff]
    %v6037 = vld [vmem:[#allocation3 + $0x88] sm:$0xff]
    %v6038 = vld [vmem:[#allocation3 + $0x90] sm:$0xff]
    %v6039 = vld [vmem:[#allocation3 + $0x98] sm:$0xff]
    %v6040 = vld [vmem:[#allocation3 + $0xa0] sm:$0xff]
    %v6041 = vld [vmem:[#allocation3 + $0xa8] sm:$0xff]
    %v6042 = vld [vmem:[#allocation3 + $0xb0] sm:$0xff]
    %v6043 = vld [vmem:[#allocation3 + $0xb8] sm:$0xff]
    %v6044 = vld [vmem:[#allocation3 + $0xc0] sm:$0xff]
    %v6045 = vld [vmem:[#allocation3 + $0xc8] sm:$0xff]
    %v6046 = vld [vmem:[#allocation3 + $0xd0] sm:$0xff]
    %v6047 = vld [vmem:[#allocation3 + $0xd8] sm:$0xff]
    %v6048 = vld [vmem:[#allocation3 + $0xe0] sm:$0xff]
    %v6049 = vld [vmem:[#allocation3 + $0xe8] sm:$0xff]
    %v6050 = vld [vmem:[#allocation3 + $0xf0] sm:$0xff]
    %v6051 = vld [vmem:[#allocation3 + $0xf8] sm:$0xff]
    %v6052 = vld [vmem:[#allocation3 + $0x100] sm:$0xff]
    %v6053 = vld [vmem:[#allocation3 + $0x108] sm:$0xff]
    %v6054 = vld [vmem:[#allocation3 + $0x110] sm:$0xff]
    %v6055 = vld [vmem:[#allocation3 + $0x118] sm:$0xff]
    %v6056 = vld [vmem:[#allocation3 + $0x120] sm:$0xff]
    %v6057 = vld [vmem:[#allocation3 + $0x128] sm:$0xff]
    %v6058 = vld [vmem:[#allocation3 + $0x130] sm:$0xff]
    %v6059 = vld [vmem:[#allocation3 + $0x138] sm:$0xff]
    %v6060 = vld [vmem:[#allocation3 + $0x140] sm:$0xff]
    %v6061 = vld [vmem:[#allocation3 + $0x148] sm:$0xff]
    %v6062 = vld [vmem:[#allocation3 + $0x150] sm:$0xff]
    %v6063 = vld [vmem:[#allocation3 + $0x158] sm:$0xff]
    %v6064 = vld [vmem:[#allocation3 + $0x160] sm:$0xff]
    %v6065 = vld [vmem:[#allocation3 + $0x168] sm:$0xff]
    %v6066 = vld [vmem:[#allocation3 + $0x170] sm:$0xff]
    %v6067 = vld [vmem:[#allocation3 + $0x178] sm:$0xff]
    %v6068 = vld [vmem:[#allocation3 + $0x180] sm:$0xff]
    %v6069 = vld [vmem:[#allocation3 + $0x188] sm:$0xff]
    %v6070 = vld [vmem:[#allocation3 + $0x190] sm:$0xff]
    %v6071 = vld [vmem:[#allocation3 + $0x198] sm:$0xff]
    %v6072 = vld [vmem:[#allocation3 + $0x1a0] sm:$0xff]
    %v6073 = vld [vmem:[#allocation3 + $0x1a8] sm:$0xff]
    %v6074 = vld [vmem:[#allocation3 + $0x1b0] sm:$0xff]
    %v6075 = vld [vmem:[#allocation3 + $0x1b8] sm:$0xff]
    %v6076 = vld [vmem:[#allocation3 + $0x1c0] sm:$0xff]
    %v6077 = vld [vmem:[#allocation3 + $0x1c8] sm:$0xff]
    %v6078 = vld [vmem:[#allocation3 + $0x1d0] sm:$0xff]
    %v6079 = vld [vmem:[#allocation3 + $0x1d8] sm:$0xff]
    %v6080 = vld [vmem:[#allocation3 + $0x1e0] sm:$0xff]
    %v6081 = vld [vmem:[#allocation3 + $0x1e8] sm:$0xff]
    %v6082 = vld [vmem:[#allocation3 + $0x1f0] sm:$0xff]
    %v6083 = vld [vmem:[#allocation3 + $0x1f8] sm:$0xff]
    %v6084 = vld [vmem:[%s12] sm:$0xf]
    %v6086 = vlaneseq
    %v6087 = vshrl.u32 %v6086, 7
    %v6088 = vsub.s32 0, %v6087
    %v6089 = vrot.slane %v6084, %v6088
    %v6090 = vlaneseq
    %v6091 = vshrl.u32 %v6090, 7
    %v6092 = vsub.s32 1, %v6091
    %v6093 = vrot.slane %v6084, %v6092
    %v6094 = vlaneseq
    %v6095 = vshrl.u32 %v6094, 7
    %v6096 = vsub.s32 2, %v6095
    %v6097 = vrot.slane %v6084, %v6096
    %v6098 = vlaneseq
    %v6099 = vshrl.u32 %v6098, 7
    %v6100 = vsub.s32 3, %v6099
    %v6101 = vrot.slane %v6084, %v6100
    %6106 = vmatprep.subr.mxu0 %v6081
    %6107 = vmatpush1.msra.mxu0 %v6080
    %6108 = vmatprep.subr.mxu0 %v6077
    %6109 = vmatpush1.msra.mxu0 %v6076
    %6110 = vmatprep.subr.mxu0 %v6073
    %6111 = vmatpush1.msra.mxu0 %v6072
    %6112 = vmatprep.subr.mxu0 %v6069
    %6113 = vmatpush1.msra.mxu0 %v6068
    %6114 = vmatprep.subr.mxu0 %v6065
    %6115 = vmatpush1.msra.mxu0 %v6064
    %6116 = vmatprep.subr.mxu0 %v6061
    %6117 = vmatpush1.msra.mxu0 %v6060
    %6118 = vmatprep.subr.mxu0 %v6057
    %6119 = vmatpush1.msra.mxu0 %v6056
    %6120 = vmatprep.subr.mxu0 %v6053
    %6121 = vmatpush1.msra.mxu0 %v6052
    %6122 = vmatprep.subr.mxu0 %v6049
    %6123 = vmatpush1.msra.mxu0 %v6048
    %6124 = vmatprep.subr.mxu0 %v6045
    %6125 = vmatpush1.msra.mxu0 %v6044
    %6126 = vmatprep.subr.mxu0 %v6041
    %6127 = vmatpush1.msra.mxu0 %v6040
    %6128 = vmatprep.subr.mxu0 %v6037
    %6129 = vmatpush1.msra.mxu0 %v6036
    %6130 = vmatprep.subr.mxu0 %v6033
    %6131 = vmatpush1.msra.mxu0 %v6032
    %6132 = vmatprep.subr.mxu0 %v6029
    %6133 = vmatpush1.msra.mxu0 %v6028
    %6134 = vmatprep.subr.mxu0 %v6025
    %6135 = vmatpush1.msra.mxu0 %v6024
    %6136 = vmatprep.subr.mxu0 %v6021
    %6137 = vmatpush1.msra.mxu0 %v6020
    %6138 = vmatprep.subr.mxu0 0.0
    %6139 = vmatpush2.msra.mxu0 0.0
    %6140 = vmatprep.subr.mxu0 0.0
    %6141 = vmatpush2.msra.mxu0 0.0
    %6142 = vmatprep.subr.mxu0 0.0
    %6143 = vmatpush2.msra.mxu0 0.0
    %6144 = vmatprep.subr.mxu0 0.0
    %6145 = vmatpush2.msra.mxu0 0.0
    %6146 = vmatprep.subr.mxu0 0.0
    %6147 = vmatpush2.msra.mxu0 0.0
    %6148 = vmatprep.subr.mxu0 0.0
    %6149 = vmatpush2.msra.mxu0 0.0
    %6150 = vmatprep.subr.mxu0 0.0
    %6151 = vmatpush2.msra.mxu0 0.0
    %6152 = vmatprep.subr.mxu0 0.0
    %6153 = vmatpush2.msra.mxu0 0.0
    %6154 = vmatprep.subr.mxu0 0.0
    %6155 = vmatpush2.msra.mxu0 0.0
    %6156 = vmatprep.subr.mxu0 0.0
    %6157 = vmatpush2.msra.mxu0 0.0
    %6158 = vmatprep.subr.mxu0 0.0
    %6159 = vmatpush2.msra.mxu0 0.0
    %6160 = vmatprep.subr.mxu0 0.0
    %6161 = vmatpush2.msra.mxu0 0.0
    %6162 = vmatprep.subr.mxu0 0.0
    %6163 = vmatpush2.msra.mxu0 0.0
    %6164 = vmatprep.subr.mxu0 0.0
    %6165 = vmatpush2.msra.mxu0 0.0
    %6166 = vmatprep.subr.mxu0 0.0
    %6167 = vmatpush2.msra.mxu0 0.0
    %6168 = vmatprep.subr.mxu0 0.0
    %6169 = vmatpush2.msra.mxu0 0.0
    %6170 = vmatprep.mubr.f32.mxu0 0.0
    %6171 = vmatmul.mubr.f32.gmra.mxu0 %v5936
    %v6172 = vpop.f32.mrf.mxu0
    %v6173 = vadd.f32 %v6089, %v6172
    %v6174 = vpop.f32.mrf.mxu0
    %v6175 = vadd.f32 %v6093, %v6174
    %6176 = vmatprep.mubr.f32.mxu0 0.0
    %6177 = vmatmul.mubr.f32.gmra.mxu0 %v5941
    %v6178 = vpop.f32.mrf.mxu0
    %v6179 = vadd.f32 %v6089, %v6178
    %v6180 = vpop.f32.mrf.mxu0
    %v6181 = vadd.f32 %v6093, %v6180
    %6182 = vmatprep.mubr.f32.mxu0 0.0
    %6183 = vmatmul.mubr.f32.gmra.mxu0 %v5946
    %v6184 = vpop.f32.mrf.mxu0
    %v6185 = vadd.f32 %v6089, %v6184
    %v6186 = vpop.f32.mrf.mxu0
    %v6187 = vadd.f32 %v6093, %v6186
    %6188 = vmatprep.mubr.f32.mxu0 0.0
    %6189 = vmatmul.mubr.f32.gmra.mxu0 %v5936
    %v6190 = vpop.f32.mrf.mxu0
    %v6191 = vadd.f32 %v6089, %v6190
    %v6192 = vpop.f32.mrf.mxu0
    %v6193 = vadd.f32 %v6093, %v6192
    %6194 = vmatprep.mubr.f32.mxu0 0.0
    %6195 = vmatmul.mubr.f32.gmra.mxu0 %v5941
    %v6196 = vpop.f32.mrf.mxu0
    %v6197 = vadd.f32 %v6089, %v6196
    %v6198 = vpop.f32.mrf.mxu0
    %v6199 = vadd.f32 %v6093, %v6198
    %6200 = vmatprep.mubr.f32.mxu0 0.0
    %6201 = vmatmul.mubr.f32.gmra.mxu0 %v6015
    %v6202 = vpop.f32.mrf.mxu0
    %v6203 = vadd.f32 %v6089, %v6202
    %v6204 = vpop.f32.mrf.mxu0
    %v6205 = vadd.f32 %v6093, %v6204
    %6206 = vdwg.mxu0
    %6207 = vmatprep.subr.mxu0 %v6083
    %6208 = vmatpush1.msra.mxu0 %v6082
    %6209 = vmatprep.subr.mxu0 %v6079
    %6210 = vmatpush1.msra.mxu0 %v6078
    %6211 = vmatprep.subr.mxu0 %v6075
    %6212 = vmatpush1.msra.mxu0 %v6074
    %6213 = vmatprep.subr.mxu0 %v6071
    %6214 = vmatpush1.msra.mxu0 %v6070
    %6215 = vmatprep.subr.mxu0 %v6067
    %6216 = vmatpush1.msra.mxu0 %v6066
    %6217 = vmatprep.subr.mxu0 %v6063
    %6218 = vmatpush1.msra.mxu0 %v6062
    %6219 = vmatprep.subr.mxu0 %v6059
    %6220 = vmatpush1.msra.mxu0 %v6058
    %6221 = vmatprep.subr.mxu0 %v6055
    %6222 = vmatpush1.msra.mxu0 %v6054
    %6223 = vmatprep.subr.mxu0 %v6051
    %6224 = vmatpush1.msra.mxu0 %v6050
    %6225 = vmatprep.subr.mxu0 %v6047
    %6226 = vmatpush1.msra.mxu0 %v6046
    %6227 = vmatprep.subr.mxu0 %v6043
    %6228 = vmatpush1.msra.mxu0 %v6042
    %6229 = vmatprep.subr.mxu0 %v6039
    %6230 = vmatpush1.msra.mxu0 %v6038
    %6231 = vmatprep.subr.mxu0 %v6035
    %6232 = vmatpush1.msra.mxu0 %v6034
    %6233 = vmatprep.subr.mxu0 %v6031
    %6234 = vmatpush1.msra.mxu0 %v6030
    %6235 = vmatprep.subr.mxu0 %v6027
    %6236 = vmatpush1.msra.mxu0 %v6026
    %6237 = vmatprep.subr.mxu0 %v6023
    %6238 = vmatpush1.msra.mxu0 %v6022
    %6239 = vmatprep.subr.mxu0 0.0
    %6240 = vmatpush2.msra.mxu0 0.0
    %6241 = vmatprep.subr.mxu0 0.0
    %6242 = vmatpush2.msra.mxu0 0.0
    %6243 = vmatprep.subr.mxu0 0.0
    %6244 = vmatpush2.msra.mxu0 0.0
    %6245 = vmatprep.subr.mxu0 0.0
    %6246 = vmatpush2.msra.mxu0 0.0
    %6247 = vmatprep.subr.mxu0 0.0
    %6248 = vmatpush2.msra.mxu0 0.0
    %6249 = vmatprep.subr.mxu0 0.0
    %6250 = vmatpush2.msra.mxu0 0.0
    %6251 = vmatprep.subr.mxu0 0.0
    %6252 = vmatpush2.msra.mxu0 0.0
    %6253 = vmatprep.subr.mxu0 0.0
    %6254 = vmatpush2.msra.mxu0 0.0
    %6255 = vmatprep.subr.mxu0 0.0
    %6256 = vmatpush2.msra.mxu0 0.0
    %6257 = vmatprep.subr.mxu0 0.0
    %6258 = vmatpush2.msra.mxu0 0.0
    %6259 = vmatprep.subr.mxu0 0.0
    %6260 = vmatpush2.msra.mxu0 0.0
    %6261 = vmatprep.subr.mxu0 0.0
    %6262 = vmatpush2.msra.mxu0 0.0
    %6263 = vmatprep.subr.mxu0 0.0
    %6264 = vmatpush2.msra.mxu0 0.0
    %6265 = vmatprep.subr.mxu0 0.0
    %6266 = vmatpush2.msra.mxu0 0.0
    %6267 = vmatprep.subr.mxu0 0.0
    %6268 = vmatpush2.msra.mxu0 0.0
    %6269 = vmatprep.subr.mxu0 0.0
    %6270 = vmatpush2.msra.mxu0 0.0
    %6271 = vmatprep.mubr.f32.mxu0 0.0
    %6272 = vmatmul.mubr.f32.gmra.mxu0 %v5936
    %v6273 = vpop.f32.mrf.mxu0
    %v6274 = vadd.f32 %v6097, %v6273
    %v6275 = vpop.f32.mrf.mxu0
    %v6276 = vadd.f32 %v6101, %v6275
    %6277 = vmatprep.mubr.f32.mxu0 0.0
    %6278 = vmatmul.mubr.f32.gmra.mxu0 %v5941
    %v6279 = vpop.f32.mrf.mxu0
    %v6280 = vadd.f32 %v6097, %v6279
    %v6281 = vpop.f32.mrf.mxu0
    %v6282 = vadd.f32 %v6101, %v6281
    %6283 = vmatprep.mubr.f32.mxu0 0.0
    %6284 = vmatmul.mubr.f32.gmra.mxu0 %v5946
    %v6285 = vpop.f32.mrf.mxu0
    %v6286 = vadd.f32 %v6097, %v6285
    %v6287 = vpop.f32.mrf.mxu0
    %v6288 = vadd.f32 %v6101, %v6287
    %6289 = vmatprep.mubr.f32.mxu0 0.0
    %6290 = vmatmul.mubr.f32.gmra.mxu0 %v5936
    %v6291 = vpop.f32.mrf.mxu0
    %v6292 = vadd.f32 %v6097, %v6291
    %v6293 = vpop.f32.mrf.mxu0
    %v6294 = vadd.f32 %v6101, %v6293
    %6295 = vmatprep.mubr.f32.mxu0 0.0
    %6296 = vmatmul.mubr.f32.gmra.mxu0 %v5941
    %v6297 = vpop.f32.mrf.mxu0
    %v6298 = vadd.f32 %v6097, %v6297
    %v6299 = vpop.f32.mrf.mxu0
    %v6300 = vadd.f32 %v6101, %v6299
    %6301 = vmatprep.mubr.f32.mxu0 0.0
    %6302 = vmatmul.mubr.f32.gmra.mxu0 %v6015
    %v6303 = vpop.f32.mrf.mxu0
    %v6304 = vadd.f32 %v6097, %v6303
    %v6305 = vpop.f32.mrf.mxu0
    %v6306 = vadd.f32 %v6101, %v6305
    %6307 = vdwg.mxu0
    %v6308 = vmax.f32 %v6173, 0.0
    %v6309 = vmax.f32 %v6175, 0.0
    %v6310 = vmax.f32 %v6274, 0.0
    %v6311 = vmax.f32 %v6276, 0.0
    %v6312 = vmax.f32 %v6179, 0.0
    %v6313 = vmax.f32 %v6181, 0.0
    %v6314 = vmax.f32 %v6280, 0.0
    %v6315 = vmax.f32 %v6282, 0.0
    %v6316 = vmax.f32 %v6185, 0.0
    %v6317 = vmax.f32 %v6187, 0.0
    %v6318 = vmax.f32 %v6286, 0.0
    %v6319 = vmax.f32 %v6288, 0.0
    %v6320 = vmax.f32 %v6191, 0.0
    %v6321 = vmax.f32 %v6193, 0.0
    %v6322 = vmax.f32 %v6292, 0.0
    %v6323 = vmax.f32 %v6294, 0.0
    %v6324 = vmax.f32 %v6197, 0.0
    %v6325 = vmax.f32 %v6199, 0.0
    %v6326 = vmax.f32 %v6298, 0.0
    %v6327 = vmax.f32 %v6300, 0.0
    %v6328 = vmax.f32 %v6203, 0.0
    %v6329 = vmax.f32 %v6205, 0.0
    %v6330 = vmax.f32 %v6304, 0.0
    %v6331 = vmax.f32 %v6306, 0.0
    %v6332 = vld [vmem:[%s13] sm:$0xf]
    %v6333 = vld [vmem:[%s14] sm:$0xf]
    %v6334 = vadd.f32 %v6308, %v6312
    %v6335 = vadd.f32 %v6334, %v6316
    %v6336 = vadd.f32 %v6335, %v6320
    %v6337 = vadd.f32 %v6336, %v6324
    %v6338 = vadd.f32 %v6337, %v6328
    %v6339 = vrot.slane %v6338, 4
    %v6340 = vadd.f32 %v6338, %v6339
    %v6341 = vrot.slane %v6340, 2
    %v6342 = vadd.f32 %v6340, %v6341
    %v6343 = vrot.slane %v6342, 1
    %v6344 = vadd.f32 %v6342, %v6343
    %v6345 = vadd.f32 %v6309, %v6313
    %v6346 = vadd.f32 %v6345, %v6317
    %v6347 = vadd.f32 %v6346, %v6321
    %v6348 = vadd.f32 %v6347, %v6325
    %v6349 = vadd.f32 %v6348, %v6329
    %v6350 = vrot.slane %v6349, 4
    %v6351 = vadd.f32 %v6349, %v6350
    %v6352 = vrot.slane %v6351, 2
    %v6353 = vadd.f32 %v6351, %v6352
    %v6354 = vrot.slane %v6353, 1
    %v6355 = vadd.f32 %v6353, %v6354
    %v6356 = vadd.f32 %v6310, %v6314
    %v6357 = vadd.f32 %v6356, %v6318
    %v6358 = vadd.f32 %v6357, %v6322
    %v6359 = vadd.f32 %v6358, %v6326
    %v6360 = vadd.f32 %v6359, %v6330
    %v6361 = vrot.slane %v6360, 4
    %v6362 = vadd.f32 %v6360, %v6361
    %v6363 = vrot.slane %v6362, 2
    %v6364 = vadd.f32 %v6362, %v6363
    %v6365 = vrot.slane %v6364, 1
    %v6366 = vadd.f32 %v6364, %v6365
    %v6367 = vadd.f32 %v6311, %v6315
    %v6368 = vadd.f32 %v6367, %v6319
    %v6369 = vadd.f32 %v6368, %v6323
    %v6370 = vadd.f32 %v6369, %v6327
    %v6371 = vadd.f32 %v6370, %v6331
    %v6372 = vrot.slane %v6371, 4
    %v6373 = vadd.f32 %v6371, %v6372
    %v6374 = vrot.slane %v6373, 2
    %v6375 = vadd.f32 %v6373, %v6374
    %v6376 = vrot.slane %v6375, 1
    %v6377 = vadd.f32 %v6375, %v6376
    %v6378 = vrcp.pop 48.0
    %v6379 = vmul.f32 %v6344, %v6378
    %v6380 = vmul.f32 %v6355, %v6378
    %v6381 = vmul.f32 %v6366, %v6378
    %v6382 = vmul.f32 %v6377, %v6378
    %v6383 = vmul.f32 %v6308, %v6308
    %v6384 = vmul.f32 %v6309, %v6309
    %v6385 = vmul.f32 %v6310, %v6310
    %v6386 = vmul.f32 %v6311, %v6311
    %v6387 = vmul.f32 %v6312, %v6312
    %v6388 = vmul.f32 %v6313, %v6313
    %v6389 = vmul.f32 %v6314, %v6314
    %v6390 = vmul.f32 %v6315, %v6315
    %v6391 = vmul.f32 %v6316, %v6316
    %v6392 = vmul.f32 %v6317, %v6317
    %v6393 = vmul.f32 %v6318, %v6318
    %v6394 = vmul.f32 %v6319, %v6319
    %v6395 = vmul.f32 %v6320, %v6320
    %v6396 = vmul.f32 %v6321, %v6321
    %v6397 = vmul.f32 %v6322, %v6322
    %v6398 = vmul.f32 %v6323, %v6323
    %v6399 = vmul.f32 %v6324, %v6324
    %v6400 = vmul.f32 %v6325, %v6325
    %v6401 = vmul.f32 %v6326, %v6326
    %v6402 = vmul.f32 %v6327, %v6327
    %v6403 = vmul.f32 %v6328, %v6328
    %v6404 = vmul.f32 %v6329, %v6329
    %v6405 = vmul.f32 %v6330, %v6330
    %v6406 = vmul.f32 %v6331, %v6331
    %v6407 = vadd.f32 %v6383, %v6387
    %v6408 = vadd.f32 %v6407, %v6391
    %v6409 = vadd.f32 %v6408, %v6395
    %v6410 = vadd.f32 %v6409, %v6399
    %v6411 = vadd.f32 %v6410, %v6403
    %v6412 = vrot.slane %v6411, 4
    %v6413 = vadd.f32 %v6411, %v6412
    %v6414 = vrot.slane %v6413, 2
    %v6415 = vadd.f32 %v6413, %v6414
    %v6416 = vrot.slane %v6415, 1
    %v6417 = vadd.f32 %v6415, %v6416
    %v6418 = vadd.f32 %v6384, %v6388
    %v6419 = vadd.f32 %v6418, %v6392
    %v6420 = vadd.f32 %v6419, %v6396
    %v6421 = vadd.f32 %v6420, %v6400
    %v6422 = vadd.f32 %v6421, %v6404
    %v6423 = vrot.slane %v6422, 4
    %v6424 = vadd.f32 %v6422, %v6423
    %v6425 = vrot.slane %v6424, 2
    %v6426 = vadd.f32 %v6424, %v6425
    %v6427 = vrot.slane %v6426, 1
    %v6428 = vadd.f32 %v6426, %v6427
    %v6429 = vadd.f32 %v6385, %v6389
    %v6430 = vadd.f32 %v6429, %v6393
    %v6431 = vadd.f32 %v6430, %v6397
    %v6432 = vadd.f32 %v6431, %v6401
    %v6433 = vadd.f32 %v6432, %v6405
    %v6434 = vrot.slane %v6433, 4
    %v6435 = vadd.f32 %v6433, %v6434
    %v6436 = vrot.slane %v6435, 2
    %v6437 = vadd.f32 %v6435, %v6436
    %v6438 = vrot.slane %v6437, 1
    %v6439 = vadd.f32 %v6437, %v6438
    %v6440 = vadd.f32 %v6386, %v6390
    %v6441 = vadd.f32 %v6440, %v6394
    %v6442 = vadd.f32 %v6441, %v6398
    %v6443 = vadd.f32 %v6442, %v6402
    %v6444 = vadd.f32 %v6443, %v6406
    %v6445 = vrot.slane %v6444, 4
    %v6446 = vadd.f32 %v6444, %v6445
    %v6447 = vrot.slane %v6446, 2
    %v6448 = vadd.f32 %v6446, %v6447
    %v6449 = vrot.slane %v6448, 1
    %v6450 = vadd.f32 %v6448, %v6449
    %v6451 = vmul.f32 %v6417, %v6378
    %v6452 = vmul.f32 %v6428, %v6378
    %v6453 = vmul.f32 %v6439, %v6378
    %v6454 = vmul.f32 %v6450, %v6378
    %v6455 = vmul.f32 %v6379, %v6379
    %v6456 = vmul.f32 %v6380, %v6380
    %v6457 = vmul.f32 %v6381, %v6381
    %v6458 = vmul.f32 %v6382, %v6382
    %v6459 = vsub.f32 %v6451, %v6455
    %v6460 = vsub.f32 %v6452, %v6456
    %v6461 = vsub.f32 %v6453, %v6457
    %v6462 = vsub.f32 %v6454, %v6458
    %v6463 = vmax.f32 %v6459, 0.0
    %v6464 = vmax.f32 %v6460, 0.0
    %v6465 = vmax.f32 %v6461, 0.0
    %v6466 = vmax.f32 %v6462, 0.0
    %v6467 = vsub.f32 %v6308, %v6379
    %v6468 = vsub.f32 %v6309, %v6380
    %v6469 = vsub.f32 %v6310, %v6381
    %v6470 = vsub.f32 %v6311, %v6382
    %v6471 = vsub.f32 %v6312, %v6379
    %v6472 = vsub.f32 %v6313, %v6380
    %v6473 = vsub.f32 %v6314, %v6381
    %v6474 = vsub.f32 %v6315, %v6382
    %v6475 = vsub.f32 %v6316, %v6379
    %v6476 = vsub.f32 %v6317, %v6380
    %v6477 = vsub.f32 %v6318, %v6381
    %v6478 = vsub.f32 %v6319, %v6382
    %v6479 = vsub.f32 %v6320, %v6379
    %v6480 = vsub.f32 %v6321, %v6380
    %v6481 = vsub.f32 %v6322, %v6381
    %v6482 = vsub.f32 %v6323, %v6382
    %v6483 = vsub.f32 %v6324, %v6379
    %v6484 = vsub.f32 %v6325, %v6380
    %v6485 = vsub.f32 %v6326, %v6381
    %v6486 = vsub.f32 %v6327, %v6382
    %v6487 = vsub.f32 %v6328, %v6379
    %v6488 = vsub.f32 %v6329, %v6380
    %v6489 = vsub.f32 %v6330, %v6381
    %v6490 = vsub.f32 %v6331, %v6382
    %v6491 = vadd.f32 %v6463, 1e-05
    %v6492 = vadd.f32 %v6464, 1e-05
    %v6493 = vadd.f32 %v6465, 1e-05
    %v6494 = vadd.f32 %v6466, 1e-05
    %v6495 = vrsqrt.pop %v6491
    %v6496 = vrsqrt.pop %v6492
    %v6497 = vrsqrt.pop %v6493
    %v6498 = vrsqrt.pop %v6494
    %v6499 = vmul.f32 %v6467, %v6495
    %v6500 = vmul.f32 %v6468, %v6496
    %v6501 = vmul.f32 %v6469, %v6497
    %v6502 = vmul.f32 %v6470, %v6498
    %v6503 = vmul.f32 %v6471, %v6495
    %v6504 = vmul.f32 %v6472, %v6496
    %v6505 = vmul.f32 %v6473, %v6497
    %v6506 = vmul.f32 %v6474, %v6498
    %v6507 = vmul.f32 %v6475, %v6495
    %v6508 = vmul.f32 %v6476, %v6496
    %v6509 = vmul.f32 %v6477, %v6497
    %v6510 = vmul.f32 %v6478, %v6498
    %v6511 = vmul.f32 %v6479, %v6495
    %v6512 = vmul.f32 %v6480, %v6496
    %v6513 = vmul.f32 %v6481, %v6497
    %v6514 = vmul.f32 %v6482, %v6498
    %v6515 = vmul.f32 %v6483, %v6495
    %v6516 = vmul.f32 %v6484, %v6496
    %v6517 = vmul.f32 %v6485, %v6497
    %v6518 = vmul.f32 %v6486, %v6498
    %v6519 = vmul.f32 %v6487, %v6495
    %v6520 = vmul.f32 %v6488, %v6496
    %v6521 = vmul.f32 %v6489, %v6497
    %v6522 = vmul.f32 %v6490, %v6498
    %v6524 = vlaneseq
    %v6525 = vshrl.u32 %v6524, 7
    %v6526 = vsub.s32 0, %v6525
    %v6527 = vrot.slane %v6332, %v6526
    %v6528 = vlaneseq
    %v6529 = vshrl.u32 %v6528, 7
    %v6530 = vsub.s32 1, %v6529
    %v6531 = vrot.slane %v6332, %v6530
    %v6532 = vlaneseq
    %v6533 = vshrl.u32 %v6532, 7
    %v6534 = vsub.s32 2, %v6533
    %v6535 = vrot.slane %v6332, %v6534
    %v6536 = vlaneseq
    %v6537 = vshrl.u32 %v6536, 7
    %v6538 = vsub.s32 3, %v6537
    %v6539 = vrot.slane %v6332, %v6538
    %v6544 = vmul.f32 %v6499, %v6527
    %v6545 = vmul.f32 %v6500, %v6531
    %v6546 = vmul.f32 %v6501, %v6535
    %v6547 = vmul.f32 %v6502, %v6539
    %v6548 = vmul.f32 %v6503, %v6527
    %v6549 = vmul.f32 %v6504, %v6531
    %v6550 = vmul.f32 %v6505, %v6535
    %v6551 = vmul.f32 %v6506, %v6539
    %v6552 = vmul.f32 %v6507, %v6527
    %v6553 = vmul.f32 %v6508, %v6531
    %v6554 = vmul.f32 %v6509, %v6535
    %v6555 = vmul.f32 %v6510, %v6539
    %v6556 = vmul.f32 %v6511, %v6527
    %v6557 = vmul.f32 %v6512, %v6531
    %v6558 = vmul.f32 %v6513, %v6535
    %v6559 = vmul.f32 %v6514, %v6539
    %v6560 = vmul.f32 %v6515, %v6527
    %v6561 = vmul.f32 %v6516, %v6531
    %v6562 = vmul.f32 %v6517, %v6535
    %v6563 = vmul.f32 %v6518, %v6539
    %v6564 = vmul.f32 %v6519, %v6527
    %v6565 = vmul.f32 %v6520, %v6531
    %v6566 = vmul.f32 %v6521, %v6535
    %v6567 = vmul.f32 %v6522, %v6539
    %v6569 = vlaneseq
    %v6570 = vshrl.u32 %v6569, 7
    %v6571 = vsub.s32 0, %v6570
    %v6572 = vrot.slane %v6333, %v6571
    %v6573 = vlaneseq
    %v6574 = vshrl.u32 %v6573, 7
    %v6575 = vsub.s32 1, %v6574
    %v6576 = vrot.slane %v6333, %v6575
    %v6577 = vlaneseq
    %v6578 = vshrl.u32 %v6577, 7
    %v6579 = vsub.s32 2, %v6578
    %v6580 = vrot.slane %v6333, %v6579
    %v6581 = vlaneseq
    %v6582 = vshrl.u32 %v6581, 7
    %v6583 = vsub.s32 3, %v6582
    %v6584 = vrot.slane %v6333, %v6583
    %v6589 = vadd.f32 %v6544, %v6572
    %v6590 = vadd.f32 %v6545, %v6576
    %v6591 = vadd.f32 %v6546, %v6580
    %v6592 = vadd.f32 %v6547, %v6584
    %v6593 = vadd.f32 %v6548, %v6572
    %v6594 = vadd.f32 %v6549, %v6576
    %v6595 = vadd.f32 %v6550, %v6580
    %v6596 = vadd.f32 %v6551, %v6584
    %v6597 = vadd.f32 %v6552, %v6572
    %v6598 = vadd.f32 %v6553, %v6576
    %v6599 = vadd.f32 %v6554, %v6580
    %v6600 = vadd.f32 %v6555, %v6584
    %v6601 = vadd.f32 %v6556, %v6572
    %v6602 = vadd.f32 %v6557, %v6576
    %v6603 = vadd.f32 %v6558, %v6580
    %v6604 = vadd.f32 %v6559, %v6584
    %v6605 = vadd.f32 %v6560, %v6572
    %v6606 = vadd.f32 %v6561, %v6576
    %v6607 = vadd.f32 %v6562, %v6580
    %v6608 = vadd.f32 %v6563, %v6584
    %v6609 = vadd.f32 %v6564, %v6572
    %v6610 = vadd.f32 %v6565, %v6576
    %v6611 = vadd.f32 %v6566, %v6580
    %v6612 = vadd.f32 %v6567, %v6584
    %s6613 = smul.u32 8, 64
    %s6614 = smul.u32 %s6613, 8
    %s6615 = sshll.u32 %s6614, 4
    %6616 = dma.done %s549, %s6615
    %v6617 = vld [vmem:[#allocation4] sm:$0xff]
    %v6618 = vld [vmem:[#allocation4 + $0x8] sm:$0xff]
    %v6619 = vld [vmem:[#allocation4 + $0x10] sm:$0xff]
    %v6620 = vld [vmem:[#allocation4 + $0x18] sm:$0xff]
    %v6621 = vld [vmem:[#allocation4 + $0x20] sm:$0xff]
    %v6622 = vld [vmem:[#allocation4 + $0x28] sm:$0xff]
    %v6623 = vld [vmem:[#allocation4 + $0x30] sm:$0xff]
    %v6624 = vld [vmem:[#allocation4 + $0x38] sm:$0xff]
    %v6625 = vld [vmem:[#allocation4 + $0x40] sm:$0xff]
    %v6626 = vld [vmem:[#allocation4 + $0x48] sm:$0xff]
    %v6627 = vld [vmem:[#allocation4 + $0x50] sm:$0xff]
    %v6628 = vld [vmem:[#allocation4 + $0x58] sm:$0xff]
    %v6629 = vld [vmem:[#allocation4 + $0x60] sm:$0xff]
    %v6630 = vld [vmem:[#allocation4 + $0x68] sm:$0xff]
    %v6631 = vld [vmem:[#allocation4 + $0x70] sm:$0xff]
    %v6632 = vld [vmem:[#allocation4 + $0x78] sm:$0xff]
    %v6633 = vld [vmem:[#allocation4 + $0x80] sm:$0xff]
    %v6634 = vld [vmem:[#allocation4 + $0x88] sm:$0xff]
    %v6635 = vld [vmem:[#allocation4 + $0x90] sm:$0xff]
    %v6636 = vld [vmem:[#allocation4 + $0x98] sm:$0xff]
    %v6637 = vld [vmem:[#allocation4 + $0xa0] sm:$0xff]
    %v6638 = vld [vmem:[#allocation4 + $0xa8] sm:$0xff]
    %v6639 = vld [vmem:[#allocation4 + $0xb0] sm:$0xff]
    %v6640 = vld [vmem:[#allocation4 + $0xb8] sm:$0xff]
    %v6641 = vld [vmem:[#allocation4 + $0xc0] sm:$0xff]
    %v6642 = vld [vmem:[#allocation4 + $0xc8] sm:$0xff]
    %v6643 = vld [vmem:[#allocation4 + $0xd0] sm:$0xff]
    %v6644 = vld [vmem:[#allocation4 + $0xd8] sm:$0xff]
    %v6645 = vld [vmem:[#allocation4 + $0xe0] sm:$0xff]
    %v6646 = vld [vmem:[#allocation4 + $0xe8] sm:$0xff]
    %v6647 = vld [vmem:[#allocation4 + $0xf0] sm:$0xff]
    %v6648 = vld [vmem:[#allocation4 + $0xf8] sm:$0xff]
    %v6649 = vld [vmem:[#allocation4 + $0x100] sm:$0xff]
    %v6650 = vld [vmem:[#allocation4 + $0x108] sm:$0xff]
    %v6651 = vld [vmem:[#allocation4 + $0x110] sm:$0xff]
    %v6652 = vld [vmem:[#allocation4 + $0x118] sm:$0xff]
    %v6653 = vld [vmem:[#allocation4 + $0x120] sm:$0xff]
    %v6654 = vld [vmem:[#allocation4 + $0x128] sm:$0xff]
    %v6655 = vld [vmem:[#allocation4 + $0x130] sm:$0xff]
    %v6656 = vld [vmem:[#allocation4 + $0x138] sm:$0xff]
    %v6657 = vld [vmem:[#allocation4 + $0x140] sm:$0xff]
    %v6658 = vld [vmem:[#allocation4 + $0x148] sm:$0xff]
    %v6659 = vld [vmem:[#allocation4 + $0x150] sm:$0xff]
    %v6660 = vld [vmem:[#allocation4 + $0x158] sm:$0xff]
    %v6661 = vld [vmem:[#allocation4 + $0x160] sm:$0xff]
    %v6662 = vld [vmem:[#allocation4 + $0x168] sm:$0xff]
    %v6663 = vld [vmem:[#allocation4 + $0x170] sm:$0xff]
    %v6664 = vld [vmem:[#allocation4 + $0x178] sm:$0xff]
    %v6665 = vld [vmem:[#allocation4 + $0x180] sm:$0xff]
    %v6666 = vld [vmem:[#allocation4 + $0x188] sm:$0xff]
    %v6667 = vld [vmem:[#allocation4 + $0x190] sm:$0xff]
    %v6668 = vld [vmem:[#allocation4 + $0x198] sm:$0xff]
    %v6669 = vld [vmem:[#allocation4 + $0x1a0] sm:$0xff]
    %v6670 = vld [vmem:[#allocation4 + $0x1a8] sm:$0xff]
    %v6671 = vld [vmem:[#allocation4 + $0x1b0] sm:$0xff]
    %v6672 = vld [vmem:[#allocation4 + $0x1b8] sm:$0xff]
    %v6673 = vld [vmem:[#allocation4 + $0x1c0] sm:$0xff]
    %v6674 = vld [vmem:[#allocation4 + $0x1c8] sm:$0xff]
    %v6675 = vld [vmem:[#allocation4 + $0x1d0] sm:$0xff]
    %v6676 = vld [vmem:[#allocation4 + $0x1d8] sm:$0xff]
    %v6677 = vld [vmem:[#allocation4 + $0x1e0] sm:$0xff]
    %v6678 = vld [vmem:[#allocation4 + $0x1e8] sm:$0xff]
    %v6679 = vld [vmem:[#allocation4 + $0x1f0] sm:$0xff]
    %v6680 = vld [vmem:[#allocation4 + $0x1f8] sm:$0xff]
    %v6681 = vld [vmem:[#allocation4 + $0x200] sm:$0xff]
    %v6682 = vld [vmem:[#allocation4 + $0x208] sm:$0xff]
    %v6683 = vld [vmem:[#allocation4 + $0x210] sm:$0xff]
    %v6684 = vld [vmem:[#allocation4 + $0x218] sm:$0xff]
    %v6685 = vld [vmem:[#allocation4 + $0x220] sm:$0xff]
    %v6686 = vld [vmem:[#allocation4 + $0x228] sm:$0xff]
    %v6687 = vld [vmem:[#allocation4 + $0x230] sm:$0xff]
    %v6688 = vld [vmem:[#allocation4 + $0x238] sm:$0xff]
    %v6689 = vld [vmem:[#allocation4 + $0x240] sm:$0xff]
    %v6690 = vld [vmem:[#allocation4 + $0x248] sm:$0xff]
    %v6691 = vld [vmem:[#allocation4 + $0x250] sm:$0xff]
    %v6692 = vld [vmem:[#allocation4 + $0x258] sm:$0xff]
    %v6693 = vld [vmem:[#allocation4 + $0x260] sm:$0xff]
    %v6694 = vld [vmem:[#allocation4 + $0x268] sm:$0xff]
    %v6695 = vld [vmem:[#allocation4 + $0x270] sm:$0xff]
    %v6696 = vld [vmem:[#allocation4 + $0x278] sm:$0xff]
    %v6697 = vld [vmem:[#allocation4 + $0x280] sm:$0xff]
    %v6698 = vld [vmem:[#allocation4 + $0x288] sm:$0xff]
    %v6699 = vld [vmem:[#allocation4 + $0x290] sm:$0xff]
    %v6700 = vld [vmem:[#allocation4 + $0x298] sm:$0xff]
    %v6701 = vld [vmem:[#allocation4 + $0x2a0] sm:$0xff]
    %v6702 = vld [vmem:[#allocation4 + $0x2a8] sm:$0xff]
    %v6703 = vld [vmem:[#allocation4 + $0x2b0] sm:$0xff]
    %v6704 = vld [vmem:[#allocation4 + $0x2b8] sm:$0xff]
    %v6705 = vld [vmem:[#allocation4 + $0x2c0] sm:$0xff]
    %v6706 = vld [vmem:[#allocation4 + $0x2c8] sm:$0xff]
    %v6707 = vld [vmem:[#allocation4 + $0x2d0] sm:$0xff]
    %v6708 = vld [vmem:[#allocation4 + $0x2d8] sm:$0xff]
    %v6709 = vld [vmem:[#allocation4 + $0x2e0] sm:$0xff]
    %v6710 = vld [vmem:[#allocation4 + $0x2e8] sm:$0xff]
    %v6711 = vld [vmem:[#allocation4 + $0x2f0] sm:$0xff]
    %v6712 = vld [vmem:[#allocation4 + $0x2f8] sm:$0xff]
    %v6713 = vld [vmem:[#allocation4 + $0x300] sm:$0xff]
    %v6714 = vld [vmem:[#allocation4 + $0x308] sm:$0xff]
    %v6715 = vld [vmem:[#allocation4 + $0x310] sm:$0xff]
    %v6716 = vld [vmem:[#allocation4 + $0x318] sm:$0xff]
    %v6717 = vld [vmem:[#allocation4 + $0x320] sm:$0xff]
    %v6718 = vld [vmem:[#allocation4 + $0x328] sm:$0xff]
    %v6719 = vld [vmem:[#allocation4 + $0x330] sm:$0xff]
    %v6720 = vld [vmem:[#allocation4 + $0x338] sm:$0xff]
    %v6721 = vld [vmem:[#allocation4 + $0x340] sm:$0xff]
    %v6722 = vld [vmem:[#allocation4 + $0x348] sm:$0xff]
    %v6723 = vld [vmem:[#allocation4 + $0x350] sm:$0xff]
    %v6724 = vld [vmem:[#allocation4 + $0x358] sm:$0xff]
    %v6725 = vld [vmem:[#allocation4 + $0x360] sm:$0xff]
    %v6726 = vld [vmem:[#allocation4 + $0x368] sm:$0xff]
    %v6727 = vld [vmem:[#allocation4 + $0x370] sm:$0xff]
    %v6728 = vld [vmem:[#allocation4 + $0x378] sm:$0xff]
    %v6729 = vld [vmem:[#allocation4 + $0x380] sm:$0xff]
    %v6730 = vld [vmem:[#allocation4 + $0x388] sm:$0xff]
    %v6731 = vld [vmem:[#allocation4 + $0x390] sm:$0xff]
    %v6732 = vld [vmem:[#allocation4 + $0x398] sm:$0xff]
    %v6733 = vld [vmem:[#allocation4 + $0x3a0] sm:$0xff]
    %v6734 = vld [vmem:[#allocation4 + $0x3a8] sm:$0xff]
    %v6735 = vld [vmem:[#allocation4 + $0x3b0] sm:$0xff]
    %v6736 = vld [vmem:[#allocation4 + $0x3b8] sm:$0xff]
    %v6737 = vld [vmem:[#allocation4 + $0x3c0] sm:$0xff]
    %v6738 = vld [vmem:[#allocation4 + $0x3c8] sm:$0xff]
    %v6739 = vld [vmem:[#allocation4 + $0x3d0] sm:$0xff]
    %v6740 = vld [vmem:[#allocation4 + $0x3d8] sm:$0xff]
    %v6741 = vld [vmem:[#allocation4 + $0x3e0] sm:$0xff]
    %v6742 = vld [vmem:[#allocation4 + $0x3e8] sm:$0xff]
    %v6743 = vld [vmem:[#allocation4 + $0x3f0] sm:$0xff]
    %v6744 = vld [vmem:[#allocation4 + $0x3f8] sm:$0xff]
    %v6745 = vld [vmem:[#allocation4 + $0x400] sm:$0xff]
    %v6746 = vld [vmem:[#allocation4 + $0x408] sm:$0xff]
    %v6747 = vld [vmem:[#allocation4 + $0x410] sm:$0xff]
    %v6748 = vld [vmem:[#allocation4 + $0x418] sm:$0xff]
    %v6749 = vld [vmem:[#allocation4 + $0x420] sm:$0xff]
    %v6750 = vld [vmem:[#allocation4 + $0x428] sm:$0xff]
    %v6751 = vld [vmem:[#allocation4 + $0x430] sm:$0xff]
    %v6752 = vld [vmem:[#allocation4 + $0x438] sm:$0xff]
    %v6753 = vld [vmem:[#allocation4 + $0x440] sm:$0xff]
    %v6754 = vld [vmem:[#allocation4 + $0x448] sm:$0xff]
    %v6755 = vld [vmem:[#allocation4 + $0x450] sm:$0xff]
    %v6756 = vld [vmem:[#allocation4 + $0x458] sm:$0xff]
    %v6757 = vld [vmem:[#allocation4 + $0x460] sm:$0xff]
    %v6758 = vld [vmem:[#allocation4 + $0x468] sm:$0xff]
    %v6759 = vld [vmem:[#allocation4 + $0x470] sm:$0xff]
    %v6760 = vld [vmem:[#allocation4 + $0x478] sm:$0xff]
    %v6761 = vld [vmem:[#allocation4 + $0x480] sm:$0xff]
    %v6762 = vld [vmem:[#allocation4 + $0x488] sm:$0xff]
    %v6763 = vld [vmem:[#allocation4 + $0x490] sm:$0xff]
    %v6764 = vld [vmem:[#allocation4 + $0x498] sm:$0xff]
    %v6765 = vld [vmem:[#allocation4 + $0x4a0] sm:$0xff]
    %v6766 = vld [vmem:[#allocation4 + $0x4a8] sm:$0xff]
    %v6767 = vld [vmem:[#allocation4 + $0x4b0] sm:$0xff]
    %v6768 = vld [vmem:[#allocation4 + $0x4b8] sm:$0xff]
    %v6769 = vld [vmem:[#allocation4 + $0x4c0] sm:$0xff]
    %v6770 = vld [vmem:[#allocation4 + $0x4c8] sm:$0xff]
    %v6771 = vld [vmem:[#allocation4 + $0x4d0] sm:$0xff]
    %v6772 = vld [vmem:[#allocation4 + $0x4d8] sm:$0xff]
    %v6773 = vld [vmem:[#allocation4 + $0x4e0] sm:$0xff]
    %v6774 = vld [vmem:[#allocation4 + $0x4e8] sm:$0xff]
    %v6775 = vld [vmem:[#allocation4 + $0x4f0] sm:$0xff]
    %v6776 = vld [vmem:[#allocation4 + $0x4f8] sm:$0xff]
    %v6777 = vld [vmem:[#allocation4 + $0x500] sm:$0xff]
    %v6778 = vld [vmem:[#allocation4 + $0x508] sm:$0xff]
    %v6779 = vld [vmem:[#allocation4 + $0x510] sm:$0xff]
    %v6780 = vld [vmem:[#allocation4 + $0x518] sm:$0xff]
    %v6781 = vld [vmem:[#allocation4 + $0x520] sm:$0xff]
    %v6782 = vld [vmem:[#allocation4 + $0x528] sm:$0xff]
    %v6783 = vld [vmem:[#allocation4 + $0x530] sm:$0xff]
    %v6784 = vld [vmem:[#allocation4 + $0x538] sm:$0xff]
    %v6785 = vld [vmem:[#allocation4 + $0x540] sm:$0xff]
    %v6786 = vld [vmem:[#allocation4 + $0x548] sm:$0xff]
    %v6787 = vld [vmem:[#allocation4 + $0x550] sm:$0xff]
    %v6788 = vld [vmem:[#allocation4 + $0x558] sm:$0xff]
    %v6789 = vld [vmem:[#allocation4 + $0x560] sm:$0xff]
    %v6790 = vld [vmem:[#allocation4 + $0x568] sm:$0xff]
    %v6791 = vld [vmem:[#allocation4 + $0x570] sm:$0xff]
    %v6792 = vld [vmem:[#allocation4 + $0x578] sm:$0xff]
    %v6793 = vld [vmem:[#allocation4 + $0x580] sm:$0xff]
    %v6794 = vld [vmem:[#allocation4 + $0x588] sm:$0xff]
    %v6795 = vld [vmem:[#allocation4 + $0x590] sm:$0xff]
    %v6796 = vld [vmem:[#allocation4 + $0x598] sm:$0xff]
    %v6797 = vld [vmem:[#allocation4 + $0x5a0] sm:$0xff]
    %v6798 = vld [vmem:[#allocation4 + $0x5a8] sm:$0xff]
    %v6799 = vld [vmem:[#allocation4 + $0x5b0] sm:$0xff]
    %v6800 = vld [vmem:[#allocation4 + $0x5b8] sm:$0xff]
    %v6801 = vld [vmem:[#allocation4 + $0x5c0] sm:$0xff]
    %v6802 = vld [vmem:[#allocation4 + $0x5c8] sm:$0xff]
    %v6803 = vld [vmem:[#allocation4 + $0x5d0] sm:$0xff]
    %v6804 = vld [vmem:[#allocation4 + $0x5d8] sm:$0xff]
    %v6805 = vld [vmem:[#allocation4 + $0x5e0] sm:$0xff]
    %v6806 = vld [vmem:[#allocation4 + $0x5e8] sm:$0xff]
    %v6807 = vld [vmem:[#allocation4 + $0x5f0] sm:$0xff]
    %v6808 = vld [vmem:[#allocation4 + $0x5f8] sm:$0xff]
    %v6809 = vld [vmem:[#allocation4 + $0x600] sm:$0xff]
    %v6810 = vld [vmem:[#allocation4 + $0x608] sm:$0xff]
    %v6811 = vld [vmem:[#allocation4 + $0x610] sm:$0xff]
    %v6812 = vld [vmem:[#allocation4 + $0x618] sm:$0xff]
    %v6813 = vld [vmem:[#allocation4 + $0x620] sm:$0xff]
    %v6814 = vld [vmem:[#allocation4 + $0x628] sm:$0xff]
    %v6815 = vld [vmem:[#allocation4 + $0x630] sm:$0xff]
    %v6816 = vld [vmem:[#allocation4 + $0x638] sm:$0xff]
    %v6817 = vld [vmem:[#allocation4 + $0x640] sm:$0xff]
    %v6818 = vld [vmem:[#allocation4 + $0x648] sm:$0xff]
    %v6819 = vld [vmem:[#allocation4 + $0x650] sm:$0xff]
    %v6820 = vld [vmem:[#allocation4 + $0x658] sm:$0xff]
    %v6821 = vld [vmem:[#allocation4 + $0x660] sm:$0xff]
    %v6822 = vld [vmem:[#allocation4 + $0x668] sm:$0xff]
    %v6823 = vld [vmem:[#allocation4 + $0x670] sm:$0xff]
    %v6824 = vld [vmem:[#allocation4 + $0x678] sm:$0xff]
    %v6825 = vld [vmem:[#allocation4 + $0x680] sm:$0xff]
    %v6826 = vld [vmem:[#allocation4 + $0x688] sm:$0xff]
    %v6827 = vld [vmem:[#allocation4 + $0x690] sm:$0xff]
    %v6828 = vld [vmem:[#allocation4 + $0x698] sm:$0xff]
    %v6829 = vld [vmem:[#allocation4 + $0x6a0] sm:$0xff]
    %v6830 = vld [vmem:[#allocation4 + $0x6a8] sm:$0xff]
    %v6831 = vld [vmem:[#allocation4 + $0x6b0] sm:$0xff]
    %v6832 = vld [vmem:[#allocation4 + $0x6b8] sm:$0xff]
    %v6833 = vld [vmem:[#allocation4 + $0x6c0] sm:$0xff]
    %v6834 = vld [vmem:[#allocation4 + $0x6c8] sm:$0xff]
    %v6835 = vld [vmem:[#allocation4 + $0x6d0] sm:$0xff]
    %v6836 = vld [vmem:[#allocation4 + $0x6d8] sm:$0xff]
    %v6837 = vld [vmem:[#allocation4 + $0x6e0] sm:$0xff]
    %v6838 = vld [vmem:[#allocation4 + $0x6e8] sm:$0xff]
    %v6839 = vld [vmem:[#allocation4 + $0x6f0] sm:$0xff]
    %v6840 = vld [vmem:[#allocation4 + $0x6f8] sm:$0xff]
    %v6841 = vld [vmem:[#allocation4 + $0x700] sm:$0xff]
    %v6842 = vld [vmem:[#allocation4 + $0x708] sm:$0xff]
    %v6843 = vld [vmem:[#allocation4 + $0x710] sm:$0xff]
    %v6844 = vld [vmem:[#allocation4 + $0x718] sm:$0xff]
    %v6845 = vld [vmem:[#allocation4 + $0x720] sm:$0xff]
    %v6846 = vld [vmem:[#allocation4 + $0x728] sm:$0xff]
    %v6847 = vld [vmem:[#allocation4 + $0x730] sm:$0xff]
    %v6848 = vld [vmem:[#allocation4 + $0x738] sm:$0xff]
    %v6849 = vld [vmem:[#allocation4 + $0x740] sm:$0xff]
    %v6850 = vld [vmem:[#allocation4 + $0x748] sm:$0xff]
    %v6851 = vld [vmem:[#allocation4 + $0x750] sm:$0xff]
    %v6852 = vld [vmem:[#allocation4 + $0x758] sm:$0xff]
    %v6853 = vld [vmem:[#allocation4 + $0x760] sm:$0xff]
    %v6854 = vld [vmem:[#allocation4 + $0x768] sm:$0xff]
    %v6855 = vld [vmem:[#allocation4 + $0x770] sm:$0xff]
    %v6856 = vld [vmem:[#allocation4 + $0x778] sm:$0xff]
    %v6857 = vld [vmem:[#allocation4 + $0x780] sm:$0xff]
    %v6858 = vld [vmem:[#allocation4 + $0x788] sm:$0xff]
    %v6859 = vld [vmem:[#allocation4 + $0x790] sm:$0xff]
    %v6860 = vld [vmem:[#allocation4 + $0x798] sm:$0xff]
    %v6861 = vld [vmem:[#allocation4 + $0x7a0] sm:$0xff]
    %v6862 = vld [vmem:[#allocation4 + $0x7a8] sm:$0xff]
    %v6863 = vld [vmem:[#allocation4 + $0x7b0] sm:$0xff]
    %v6864 = vld [vmem:[#allocation4 + $0x7b8] sm:$0xff]
    %v6865 = vld [vmem:[#allocation4 + $0x7c0] sm:$0xff]
    %v6866 = vld [vmem:[#allocation4 + $0x7c8] sm:$0xff]
    %v6867 = vld [vmem:[#allocation4 + $0x7d0] sm:$0xff]
    %v6868 = vld [vmem:[#allocation4 + $0x7d8] sm:$0xff]
    %v6869 = vld [vmem:[#allocation4 + $0x7e0] sm:$0xff]
    %v6870 = vld [vmem:[#allocation4 + $0x7e8] sm:$0xff]
    %v6871 = vld [vmem:[#allocation4 + $0x7f0] sm:$0xff]
    %v6872 = vld [vmem:[#allocation4 + $0x7f8] sm:$0xff]
    %v6873 = vld [vmem:[#allocation4 + $0x800] sm:$0xff]
    %v6874 = vld [vmem:[#allocation4 + $0x808] sm:$0xff]
    %v6875 = vld [vmem:[#allocation4 + $0x810] sm:$0xff]
    %v6876 = vld [vmem:[#allocation4 + $0x818] sm:$0xff]
    %v6877 = vld [vmem:[#allocation4 + $0x820] sm:$0xff]
    %v6878 = vld [vmem:[#allocation4 + $0x828] sm:$0xff]
    %v6879 = vld [vmem:[#allocation4 + $0x830] sm:$0xff]
    %v6880 = vld [vmem:[#allocation4 + $0x838] sm:$0xff]
    %v6881 = vld [vmem:[#allocation4 + $0x840] sm:$0xff]
    %v6882 = vld [vmem:[#allocation4 + $0x848] sm:$0xff]
    %v6883 = vld [vmem:[#allocation4 + $0x850] sm:$0xff]
    %v6884 = vld [vmem:[#allocation4 + $0x858] sm:$0xff]
    %v6885 = vld [vmem:[#allocation4 + $0x860] sm:$0xff]
    %v6886 = vld [vmem:[#allocation4 + $0x868] sm:$0xff]
    %v6887 = vld [vmem:[#allocation4 + $0x870] sm:$0xff]
    %v6888 = vld [vmem:[#allocation4 + $0x878] sm:$0xff]
    %v6889 = vld [vmem:[#allocation4 + $0x880] sm:$0xff]
    %v6890 = vld [vmem:[#allocation4 + $0x888] sm:$0xff]
    %v6891 = vld [vmem:[#allocation4 + $0x890] sm:$0xff]
    %v6892 = vld [vmem:[#allocation4 + $0x898] sm:$0xff]
    %v6893 = vld [vmem:[#allocation4 + $0x8a0] sm:$0xff]
    %v6894 = vld [vmem:[#allocation4 + $0x8a8] sm:$0xff]
    %v6895 = vld [vmem:[#allocation4 + $0x8b0] sm:$0xff]
    %v6896 = vld [vmem:[#allocation4 + $0x8b8] sm:$0xff]
    %v6897 = vld [vmem:[#allocation4 + $0x8c0] sm:$0xff]
    %v6898 = vld [vmem:[#allocation4 + $0x8c8] sm:$0xff]
    %v6899 = vld [vmem:[#allocation4 + $0x8d0] sm:$0xff]
    %v6900 = vld [vmem:[#allocation4 + $0x8d8] sm:$0xff]
    %v6901 = vld [vmem:[#allocation4 + $0x8e0] sm:$0xff]
    %v6902 = vld [vmem:[#allocation4 + $0x8e8] sm:$0xff]
    %v6903 = vld [vmem:[#allocation4 + $0x8f0] sm:$0xff]
    %v6904 = vld [vmem:[#allocation4 + $0x8f8] sm:$0xff]
    %v6905 = vld [vmem:[#allocation4 + $0x900] sm:$0xff]
    %v6906 = vld [vmem:[#allocation4 + $0x908] sm:$0xff]
    %v6907 = vld [vmem:[#allocation4 + $0x910] sm:$0xff]
    %v6908 = vld [vmem:[#allocation4 + $0x918] sm:$0xff]
    %v6909 = vld [vmem:[#allocation4 + $0x920] sm:$0xff]
    %v6910 = vld [vmem:[#allocation4 + $0x928] sm:$0xff]
    %v6911 = vld [vmem:[#allocation4 + $0x930] sm:$0xff]
    %v6912 = vld [vmem:[#allocation4 + $0x938] sm:$0xff]
    %v6913 = vld [vmem:[#allocation4 + $0x940] sm:$0xff]
    %v6914 = vld [vmem:[#allocation4 + $0x948] sm:$0xff]
    %v6915 = vld [vmem:[#allocation4 + $0x950] sm:$0xff]
    %v6916 = vld [vmem:[#allocation4 + $0x958] sm:$0xff]
    %v6917 = vld [vmem:[#allocation4 + $0x960] sm:$0xff]
    %v6918 = vld [vmem:[#allocation4 + $0x968] sm:$0xff]
    %v6919 = vld [vmem:[#allocation4 + $0x970] sm:$0xff]
    %v6920 = vld [vmem:[#allocation4 + $0x978] sm:$0xff]
    %v6921 = vld [vmem:[#allocation4 + $0x980] sm:$0xff]
    %v6922 = vld [vmem:[#allocation4 + $0x988] sm:$0xff]
    %v6923 = vld [vmem:[#allocation4 + $0x990] sm:$0xff]
    %v6924 = vld [vmem:[#allocation4 + $0x998] sm:$0xff]
    %v6925 = vld [vmem:[#allocation4 + $0x9a0] sm:$0xff]
    %v6926 = vld [vmem:[#allocation4 + $0x9a8] sm:$0xff]
    %v6927 = vld [vmem:[#allocation4 + $0x9b0] sm:$0xff]
    %v6928 = vld [vmem:[#allocation4 + $0x9b8] sm:$0xff]
    %v6929 = vld [vmem:[#allocation4 + $0x9c0] sm:$0xff]
    %v6930 = vld [vmem:[#allocation4 + $0x9c8] sm:$0xff]
    %v6931 = vld [vmem:[#allocation4 + $0x9d0] sm:$0xff]
    %v6932 = vld [vmem:[#allocation4 + $0x9d8] sm:$0xff]
    %v6933 = vld [vmem:[#allocation4 + $0x9e0] sm:$0xff]
    %v6934 = vld [vmem:[#allocation4 + $0x9e8] sm:$0xff]
    %v6935 = vld [vmem:[#allocation4 + $0x9f0] sm:$0xff]
    %v6936 = vld [vmem:[#allocation4 + $0x9f8] sm:$0xff]
    %v6937 = vld [vmem:[#allocation4 + $0xa00] sm:$0xff]
    %v6938 = vld [vmem:[#allocation4 + $0xa08] sm:$0xff]
    %v6939 = vld [vmem:[#allocation4 + $0xa10] sm:$0xff]
    %v6940 = vld [vmem:[#allocation4 + $0xa18] sm:$0xff]
    %v6941 = vld [vmem:[#allocation4 + $0xa20] sm:$0xff]
    %v6942 = vld [vmem:[#allocation4 + $0xa28] sm:$0xff]
    %v6943 = vld [vmem:[#allocation4 + $0xa30] sm:$0xff]
    %v6944 = vld [vmem:[#allocation4 + $0xa38] sm:$0xff]
    %v6945 = vld [vmem:[#allocation4 + $0xa40] sm:$0xff]
    %v6946 = vld [vmem:[#allocation4 + $0xa48] sm:$0xff]
    %v6947 = vld [vmem:[#allocation4 + $0xa50] sm:$0xff]
    %v6948 = vld [vmem:[#allocation4 + $0xa58] sm:$0xff]
    %v6949 = vld [vmem:[#allocation4 + $0xa60] sm:$0xff]
    %v6950 = vld [vmem:[#allocation4 + $0xa68] sm:$0xff]
    %v6951 = vld [vmem:[#allocation4 + $0xa70] sm:$0xff]
    %v6952 = vld [vmem:[#allocation4 + $0xa78] sm:$0xff]
    %v6953 = vld [vmem:[#allocation4 + $0xa80] sm:$0xff]
    %v6954 = vld [vmem:[#allocation4 + $0xa88] sm:$0xff]
    %v6955 = vld [vmem:[#allocation4 + $0xa90] sm:$0xff]
    %v6956 = vld [vmem:[#allocation4 + $0xa98] sm:$0xff]
    %v6957 = vld [vmem:[#allocation4 + $0xaa0] sm:$0xff]
    %v6958 = vld [vmem:[#allocation4 + $0xaa8] sm:$0xff]
    %v6959 = vld [vmem:[#allocation4 + $0xab0] sm:$0xff]
    %v6960 = vld [vmem:[#allocation4 + $0xab8] sm:$0xff]
    %v6961 = vld [vmem:[#allocation4 + $0xac0] sm:$0xff]
    %v6962 = vld [vmem:[#allocation4 + $0xac8] sm:$0xff]
    %v6963 = vld [vmem:[#allocation4 + $0xad0] sm:$0xff]
    %v6964 = vld [vmem:[#allocation4 + $0xad8] sm:$0xff]
    %v6965 = vld [vmem:[#allocation4 + $0xae0] sm:$0xff]
    %v6966 = vld [vmem:[#allocation4 + $0xae8] sm:$0xff]
    %v6967 = vld [vmem:[#allocation4 + $0xaf0] sm:$0xff]
    %v6968 = vld [vmem:[#allocation4 + $0xaf8] sm:$0xff]
    %v6969 = vld [vmem:[#allocation4 + $0xb00] sm:$0xff]
    %v6970 = vld [vmem:[#allocation4 + $0xb08] sm:$0xff]
    %v6971 = vld [vmem:[#allocation4 + $0xb10] sm:$0xff]
    %v6972 = vld [vmem:[#allocation4 + $0xb18] sm:$0xff]
    %v6973 = vld [vmem:[#allocation4 + $0xb20] sm:$0xff]
    %v6974 = vld [vmem:[#allocation4 + $0xb28] sm:$0xff]
    %v6975 = vld [vmem:[#allocation4 + $0xb30] sm:$0xff]
    %v6976 = vld [vmem:[#allocation4 + $0xb38] sm:$0xff]
    %v6977 = vld [vmem:[#allocation4 + $0xb40] sm:$0xff]
    %v6978 = vld [vmem:[#allocation4 + $0xb48] sm:$0xff]
    %v6979 = vld [vmem:[#allocation4 + $0xb50] sm:$0xff]
    %v6980 = vld [vmem:[#allocation4 + $0xb58] sm:$0xff]
    %v6981 = vld [vmem:[#allocation4 + $0xb60] sm:$0xff]
    %v6982 = vld [vmem:[#allocation4 + $0xb68] sm:$0xff]
    %v6983 = vld [vmem:[#allocation4 + $0xb70] sm:$0xff]
    %v6984 = vld [vmem:[#allocation4 + $0xb78] sm:$0xff]
    %v6985 = vld [vmem:[#allocation4 + $0xb80] sm:$0xff]
    %v6986 = vld [vmem:[#allocation4 + $0xb88] sm:$0xff]
    %v6987 = vld [vmem:[#allocation4 + $0xb90] sm:$0xff]
    %v6988 = vld [vmem:[#allocation4 + $0xb98] sm:$0xff]
    %v6989 = vld [vmem:[#allocation4 + $0xba0] sm:$0xff]
    %v6990 = vld [vmem:[#allocation4 + $0xba8] sm:$0xff]
    %v6991 = vld [vmem:[#allocation4 + $0xbb0] sm:$0xff]
    %v6992 = vld [vmem:[#allocation4 + $0xbb8] sm:$0xff]
    %v6993 = vld [vmem:[#allocation4 + $0xbc0] sm:$0xff]
    %v6994 = vld [vmem:[#allocation4 + $0xbc8] sm:$0xff]
    %v6995 = vld [vmem:[#allocation4 + $0xbd0] sm:$0xff]
    %v6996 = vld [vmem:[#allocation4 + $0xbd8] sm:$0xff]
    %v6997 = vld [vmem:[#allocation4 + $0xbe0] sm:$0xff]
    %v6998 = vld [vmem:[#allocation4 + $0xbe8] sm:$0xff]
    %v6999 = vld [vmem:[#allocation4 + $0xbf0] sm:$0xff]
    %v7000 = vld [vmem:[#allocation4 + $0xbf8] sm:$0xff]
    %v7001 = vld [vmem:[#allocation4 + $0xc00] sm:$0xff]
    %v7002 = vld [vmem:[#allocation4 + $0xc08] sm:$0xff]
    %v7003 = vld [vmem:[#allocation4 + $0xc10] sm:$0xff]
    %v7004 = vld [vmem:[#allocation4 + $0xc18] sm:$0xff]
    %v7005 = vld [vmem:[#allocation4 + $0xc20] sm:$0xff]
    %v7006 = vld [vmem:[#allocation4 + $0xc28] sm:$0xff]
    %v7007 = vld [vmem:[#allocation4 + $0xc30] sm:$0xff]
    %v7008 = vld [vmem:[#allocation4 + $0xc38] sm:$0xff]
    %v7009 = vld [vmem:[#allocation4 + $0xc40] sm:$0xff]
    %v7010 = vld [vmem:[#allocation4 + $0xc48] sm:$0xff]
    %v7011 = vld [vmem:[#allocation4 + $0xc50] sm:$0xff]
    %v7012 = vld [vmem:[#allocation4 + $0xc58] sm:$0xff]
    %v7013 = vld [vmem:[#allocation4 + $0xc60] sm:$0xff]
    %v7014 = vld [vmem:[#allocation4 + $0xc68] sm:$0xff]
    %v7015 = vld [vmem:[#allocation4 + $0xc70] sm:$0xff]
    %v7016 = vld [vmem:[#allocation4 + $0xc78] sm:$0xff]
    %v7017 = vld [vmem:[#allocation4 + $0xc80] sm:$0xff]
    %v7018 = vld [vmem:[#allocation4 + $0xc88] sm:$0xff]
    %v7019 = vld [vmem:[#allocation4 + $0xc90] sm:$0xff]
    %v7020 = vld [vmem:[#allocation4 + $0xc98] sm:$0xff]
    %v7021 = vld [vmem:[#allocation4 + $0xca0] sm:$0xff]
    %v7022 = vld [vmem:[#allocation4 + $0xca8] sm:$0xff]
    %v7023 = vld [vmem:[#allocation4 + $0xcb0] sm:$0xff]
    %v7024 = vld [vmem:[#allocation4 + $0xcb8] sm:$0xff]
    %v7025 = vld [vmem:[#allocation4 + $0xcc0] sm:$0xff]
    %v7026 = vld [vmem:[#allocation4 + $0xcc8] sm:$0xff]
    %v7027 = vld [vmem:[#allocation4 + $0xcd0] sm:$0xff]
    %v7028 = vld [vmem:[#allocation4 + $0xcd8] sm:$0xff]
    %v7029 = vld [vmem:[#allocation4 + $0xce0] sm:$0xff]
    %v7030 = vld [vmem:[#allocation4 + $0xce8] sm:$0xff]
    %v7031 = vld [vmem:[#allocation4 + $0xcf0] sm:$0xff]
    %v7032 = vld [vmem:[#allocation4 + $0xcf8] sm:$0xff]
    %v7033 = vld [vmem:[#allocation4 + $0xd00] sm:$0xff]
    %v7034 = vld [vmem:[#allocation4 + $0xd08] sm:$0xff]
    %v7035 = vld [vmem:[#allocation4 + $0xd10] sm:$0xff]
    %v7036 = vld [vmem:[#allocation4 + $0xd18] sm:$0xff]
    %v7037 = vld [vmem:[#allocation4 + $0xd20] sm:$0xff]
    %v7038 = vld [vmem:[#allocation4 + $0xd28] sm:$0xff]
    %v7039 = vld [vmem:[#allocation4 + $0xd30] sm:$0xff]
    %v7040 = vld [vmem:[#allocation4 + $0xd38] sm:$0xff]
    %v7041 = vld [vmem:[#allocation4 + $0xd40] sm:$0xff]
    %v7042 = vld [vmem:[#allocation4 + $0xd48] sm:$0xff]
    %v7043 = vld [vmem:[#allocation4 + $0xd50] sm:$0xff]
    %v7044 = vld [vmem:[#allocation4 + $0xd58] sm:$0xff]
    %v7045 = vld [vmem:[#allocation4 + $0xd60] sm:$0xff]
    %v7046 = vld [vmem:[#allocation4 + $0xd68] sm:$0xff]
    %v7047 = vld [vmem:[#allocation4 + $0xd70] sm:$0xff]
    %v7048 = vld [vmem:[#allocation4 + $0xd78] sm:$0xff]
    %v7049 = vld [vmem:[#allocation4 + $0xd80] sm:$0xff]
    %v7050 = vld [vmem:[#allocation4 + $0xd88] sm:$0xff]
    %v7051 = vld [vmem:[#allocation4 + $0xd90] sm:$0xff]
    %v7052 = vld [vmem:[#allocation4 + $0xd98] sm:$0xff]
    %v7053 = vld [vmem:[#allocation4 + $0xda0] sm:$0xff]
    %v7054 = vld [vmem:[#allocation4 + $0xda8] sm:$0xff]
    %v7055 = vld [vmem:[#allocation4 + $0xdb0] sm:$0xff]
    %v7056 = vld [vmem:[#allocation4 + $0xdb8] sm:$0xff]
    %v7057 = vld [vmem:[#allocation4 + $0xdc0] sm:$0xff]
    %v7058 = vld [vmem:[#allocation4 + $0xdc8] sm:$0xff]
    %v7059 = vld [vmem:[#allocation4 + $0xdd0] sm:$0xff]
    %v7060 = vld [vmem:[#allocation4 + $0xdd8] sm:$0xff]
    %v7061 = vld [vmem:[#allocation4 + $0xde0] sm:$0xff]
    %v7062 = vld [vmem:[#allocation4 + $0xde8] sm:$0xff]
    %v7063 = vld [vmem:[#allocation4 + $0xdf0] sm:$0xff]
    %v7064 = vld [vmem:[#allocation4 + $0xdf8] sm:$0xff]
    %v7065 = vld [vmem:[#allocation4 + $0xe00] sm:$0xff]
    %v7066 = vld [vmem:[#allocation4 + $0xe08] sm:$0xff]
    %v7067 = vld [vmem:[#allocation4 + $0xe10] sm:$0xff]
    %v7068 = vld [vmem:[#allocation4 + $0xe18] sm:$0xff]
    %v7069 = vld [vmem:[#allocation4 + $0xe20] sm:$0xff]
    %v7070 = vld [vmem:[#allocation4 + $0xe28] sm:$0xff]
    %v7071 = vld [vmem:[#allocation4 + $0xe30] sm:$0xff]
    %v7072 = vld [vmem:[#allocation4 + $0xe38] sm:$0xff]
    %v7073 = vld [vmem:[#allocation4 + $0xe40] sm:$0xff]
    %v7074 = vld [vmem:[#allocation4 + $0xe48] sm:$0xff]
    %v7075 = vld [vmem:[#allocation4 + $0xe50] sm:$0xff]
    %v7076 = vld [vmem:[#allocation4 + $0xe58] sm:$0xff]
    %v7077 = vld [vmem:[#allocation4 + $0xe60] sm:$0xff]
    %v7078 = vld [vmem:[#allocation4 + $0xe68] sm:$0xff]
    %v7079 = vld [vmem:[#allocation4 + $0xe70] sm:$0xff]
    %v7080 = vld [vmem:[#allocation4 + $0xe78] sm:$0xff]
    %v7081 = vld [vmem:[#allocation4 + $0xe80] sm:$0xff]
    %v7082 = vld [vmem:[#allocation4 + $0xe88] sm:$0xff]
    %v7083 = vld [vmem:[#allocation4 + $0xe90] sm:$0xff]
    %v7084 = vld [vmem:[#allocation4 + $0xe98] sm:$0xff]
    %v7085 = vld [vmem:[#allocation4 + $0xea0] sm:$0xff]
    %v7086 = vld [vmem:[#allocation4 + $0xea8] sm:$0xff]
    %v7087 = vld [vmem:[#allocation4 + $0xeb0] sm:$0xff]
    %v7088 = vld [vmem:[#allocation4 + $0xeb8] sm:$0xff]
    %v7089 = vld [vmem:[#allocation4 + $0xec0] sm:$0xff]
    %v7090 = vld [vmem:[#allocation4 + $0xec8] sm:$0xff]
    %v7091 = vld [vmem:[#allocation4 + $0xed0] sm:$0xff]
    %v7092 = vld [vmem:[#allocation4 + $0xed8] sm:$0xff]
    %v7093 = vld [vmem:[#allocation4 + $0xee0] sm:$0xff]
    %v7094 = vld [vmem:[#allocation4 + $0xee8] sm:$0xff]
    %v7095 = vld [vmem:[#allocation4 + $0xef0] sm:$0xff]
    %v7096 = vld [vmem:[#allocation4 + $0xef8] sm:$0xff]
    %v7097 = vld [vmem:[#allocation4 + $0xf00] sm:$0xff]
    %v7098 = vld [vmem:[#allocation4 + $0xf08] sm:$0xff]
    %v7099 = vld [vmem:[#allocation4 + $0xf10] sm:$0xff]
    %v7100 = vld [vmem:[#allocation4 + $0xf18] sm:$0xff]
    %v7101 = vld [vmem:[#allocation4 + $0xf20] sm:$0xff]
    %v7102 = vld [vmem:[#allocation4 + $0xf28] sm:$0xff]
    %v7103 = vld [vmem:[#allocation4 + $0xf30] sm:$0xff]
    %v7104 = vld [vmem:[#allocation4 + $0xf38] sm:$0xff]
    %v7105 = vld [vmem:[#allocation4 + $0xf40] sm:$0xff]
    %v7106 = vld [vmem:[#allocation4 + $0xf48] sm:$0xff]
    %v7107 = vld [vmem:[#allocation4 + $0xf50] sm:$0xff]
    %v7108 = vld [vmem:[#allocation4 + $0xf58] sm:$0xff]
    %v7109 = vld [vmem:[#allocation4 + $0xf60] sm:$0xff]
    %v7110 = vld [vmem:[#allocation4 + $0xf68] sm:$0xff]
    %v7111 = vld [vmem:[#allocation4 + $0xf70] sm:$0xff]
    %v7112 = vld [vmem:[#allocation4 + $0xf78] sm:$0xff]
    %v7113 = vld [vmem:[#allocation4 + $0xf80] sm:$0xff]
    %v7114 = vld [vmem:[#allocation4 + $0xf88] sm:$0xff]
    %v7115 = vld [vmem:[#allocation4 + $0xf90] sm:$0xff]
    %v7116 = vld [vmem:[#allocation4 + $0xf98] sm:$0xff]
    %v7117 = vld [vmem:[#allocation4 + $0xfa0] sm:$0xff]
    %v7118 = vld [vmem:[#allocation4 + $0xfa8] sm:$0xff]
    %v7119 = vld [vmem:[#allocation4 + $0xfb0] sm:$0xff]
    %v7120 = vld [vmem:[#allocation4 + $0xfb8] sm:$0xff]
    %v7121 = vld [vmem:[#allocation4 + $0xfc0] sm:$0xff]
    %v7122 = vld [vmem:[#allocation4 + $0xfc8] sm:$0xff]
    %v7123 = vld [vmem:[#allocation4 + $0xfd0] sm:$0xff]
    %v7124 = vld [vmem:[#allocation4 + $0xfd8] sm:$0xff]
    %v7125 = vld [vmem:[#allocation4 + $0xfe0] sm:$0xff]
    %v7126 = vld [vmem:[#allocation4 + $0xfe8] sm:$0xff]
    %v7127 = vld [vmem:[#allocation4 + $0xff0] sm:$0xff]
    %v7128 = vld [vmem:[#allocation4 + $0xff8] sm:$0xff]
    %v7129 = vld [vmem:[%s16] sm:$0xff]
    %v7131 = vlaneseq
    %v7132 = vshrl.u32 %v7131, 7
    %v7133 = vsub.s32 0, %v7132
    %v7134 = vrot.slane %v7129, %v7133
    %v7135 = vlaneseq
    %v7136 = vshrl.u32 %v7135, 7
    %v7137 = vsub.s32 1, %v7136
    %v7138 = vrot.slane %v7129, %v7137
    %v7139 = vlaneseq
    %v7140 = vshrl.u32 %v7139, 7
    %v7141 = vsub.s32 2, %v7140
    %v7142 = vrot.slane %v7129, %v7141
    %v7143 = vlaneseq
    %v7144 = vshrl.u32 %v7143, 7
    %v7145 = vsub.s32 3, %v7144
    %v7146 = vrot.slane %v7129, %v7145
    %v7147 = vlaneseq
    %v7148 = vshrl.u32 %v7147, 7
    %v7149 = vsub.s32 4, %v7148
    %v7150 = vrot.slane %v7129, %v7149
    %v7151 = vlaneseq
    %v7152 = vshrl.u32 %v7151, 7
    %v7153 = vsub.s32 5, %v7152
    %v7154 = vrot.slane %v7129, %v7153
    %v7155 = vlaneseq
    %v7156 = vshrl.u32 %v7155, 7
    %v7157 = vsub.s32 6, %v7156
    %v7158 = vrot.slane %v7129, %v7157
    %v7159 = vlaneseq
    %v7160 = vshrl.u32 %v7159, 7
    %v7161 = vsub.s32 7, %v7160
    %v7162 = vrot.slane %v7129, %v7161
    %7171 = vmatprep.subr.mxu0 %v6738
    %7172 = vmatpush1.msra.mxu0 %v6737
    %7173 = vmatprep.subr.mxu0 %v6730
    %7174 = vmatpush1.msra.mxu0 %v6729
    %7175 = vmatprep.subr.mxu0 %v6722
    %7176 = vmatpush1.msra.mxu0 %v6721
    %7177 = vmatprep.subr.mxu0 %v6714
    %7178 = vmatpush1.msra.mxu0 %v6713
    %7179 = vmatprep.subr.mxu0 %v6706
    %7180 = vmatpush1.msra.mxu0 %v6705
    %7181 = vmatprep.subr.mxu0 %v6698
    %7182 = vmatpush1.msra.mxu0 %v6697
    %7183 = vmatprep.subr.mxu0 %v6690
    %7184 = vmatpush1.msra.mxu0 %v6689
    %7185 = vmatprep.subr.mxu0 %v6682
    %7186 = vmatpush1.msra.mxu0 %v6681
    %7187 = vmatprep.subr.mxu0 %v6674
    %7188 = vmatpush1.msra.mxu0 %v6673
    %7189 = vmatprep.subr.mxu0 %v6666
    %7190 = vmatpush1.msra.mxu0 %v6665
    %7191 = vmatprep.subr.mxu0 %v6658
    %7192 = vmatpush1.msra.mxu0 %v6657
    %7193 = vmatprep.subr.mxu0 %v6650
    %7194 = vmatpush1.msra.mxu0 %v6649
    %7195 = vmatprep.subr.mxu0 %v6642
    %7196 = vmatpush1.msra.mxu0 %v6641
    %7197 = vmatprep.subr.mxu0 %v6634
    %7198 = vmatpush1.msra.mxu0 %v6633
    %7199 = vmatprep.subr.mxu0 %v6626
    %7200 = vmatpush1.msra.mxu0 %v6625
    %7201 = vmatprep.subr.mxu0 %v6618
    %7202 = vmatpush1.msra.mxu0 %v6617
    %7203 = vmatprep.subr.mxu0 %v6866
    %7204 = vmatpush2.msra.mxu0 %v6865
    %7205 = vmatprep.subr.mxu0 %v6858
    %7206 = vmatpush2.msra.mxu0 %v6857
    %7207 = vmatprep.subr.mxu0 %v6850
    %7208 = vmatpush2.msra.mxu0 %v6849
    %7209 = vmatprep.subr.mxu0 %v6842
    %7210 = vmatpush2.msra.mxu0 %v6841
    %7211 = vmatprep.subr.mxu0 %v6834
    %7212 = vmatpush2.msra.mxu0 %v6833
    %7213 = vmatprep.subr.mxu0 %v6826
    %7214 = vmatpush2.msra.mxu0 %v6825
    %7215 = vmatprep.subr.mxu0 %v6818
    %7216 = vmatpush2.msra.mxu0 %v6817
    %7217 = vmatprep.subr.mxu0 %v6810
    %7218 = vmatpush2.msra.mxu0 %v6809
    %7219 = vmatprep.subr.mxu0 %v6802
    %7220 = vmatpush2.msra.mxu0 %v6801
    %7221 = vmatprep.subr.mxu0 %v6794
    %7222 = vmatpush2.msra.mxu0 %v6793
    %7223 = vmatprep.subr.mxu0 %v6786
    %7224 = vmatpush2.msra.mxu0 %v6785
    %7225 = vmatprep.subr.mxu0 %v6778
    %7226 = vmatpush2.msra.mxu0 %v6777
    %7227 = vmatprep.subr.mxu0 %v6770
    %7228 = vmatpush2.msra.mxu0 %v6769
    %7229 = vmatprep.subr.mxu0 %v6762
    %7230 = vmatpush2.msra.mxu0 %v6761
    %7231 = vmatprep.subr.mxu0 %v6754
    %7232 = vmatpush2.msra.mxu0 %v6753
    %7233 = vmatprep.subr.mxu0 %v6746
    %7234 = vmatpush2.msra.mxu0 %v6745
    %7235 = vmatprep.mubr.f32.mxu0 %v6590
    %7236 = vmatmul.mubr.f32.gmra.mxu0 %v6589
    %v7237 = vpop.f32.mrf.mxu0
    %v7238 = vadd.f32 %v7134, %v7237
    %v7239 = vpop.f32.mrf.mxu0
    %v7240 = vadd.f32 %v7138, %v7239
    %7241 = vmatprep.mubr.f32.mxu0 %v6594
    %7242 = vmatmul.mubr.f32.gmra.mxu0 %v6593
    %v7243 = vpop.f32.mrf.mxu0
    %v7244 = vadd.f32 %v7134, %v7243
    %v7245 = vpop.f32.mrf.mxu0
    %v7246 = vadd.f32 %v7138, %v7245
    %7247 = vmatprep.mubr.f32.mxu0 %v6598
    %7248 = vmatmul.mubr.f32.gmra.mxu0 %v6597
    %v7249 = vpop.f32.mrf.mxu0
    %v7250 = vadd.f32 %v7134, %v7249
    %v7251 = vpop.f32.mrf.mxu0
    %v7252 = vadd.f32 %v7138, %v7251
    %7253 = vmatprep.mubr.f32.mxu0 %v6602
    %7254 = vmatmul.mubr.f32.gmra.mxu0 %v6601
    %v7255 = vpop.f32.mrf.mxu0
    %v7256 = vadd.f32 %v7134, %v7255
    %v7257 = vpop.f32.mrf.mxu0
    %v7258 = vadd.f32 %v7138, %v7257
    %7259 = vmatprep.mubr.f32.mxu0 %v6606
    %7260 = vmatmul.mubr.f32.gmra.mxu0 %v6605
    %v7261 = vpop.f32.mrf.mxu0
    %v7262 = vadd.f32 %v7134, %v7261
    %v7263 = vpop.f32.mrf.mxu0
    %v7264 = vadd.f32 %v7138, %v7263
    %7265 = vmatprep.mubr.f32.mxu0 %v6610
    %7266 = vmatmul.mubr.f32.gmra.mxu0 %v6609
    %v7267 = vpop.f32.mrf.mxu0
    %v7268 = vadd.f32 %v7134, %v7267
    %v7269 = vpop.f32.mrf.mxu0
    %v7270 = vadd.f32 %v7138, %v7269
    %7271 = vdwg.mxu0
    %7272 = vmatprep.subr.mxu0 %v6994
    %7273 = vmatpush1.msra.mxu0 %v6993
    %7274 = vmatprep.subr.mxu0 %v6986
    %7275 = vmatpush1.msra.mxu0 %v6985
    %7276 = vmatprep.subr.mxu0 %v6978
    %7277 = vmatpush1.msra.mxu0 %v6977
    %7278 = vmatprep.subr.mxu0 %v6970
    %7279 = vmatpush1.msra.mxu0 %v6969
    %7280 = vmatprep.subr.mxu0 %v6962
    %7281 = vmatpush1.msra.mxu0 %v6961
    %7282 = vmatprep.subr.mxu0 %v6954
    %7283 = vmatpush1.msra.mxu0 %v6953
    %7284 = vmatprep.subr.mxu0 %v6946
    %7285 = vmatpush1.msra.mxu0 %v6945
    %7286 = vmatprep.subr.mxu0 %v6938
    %7287 = vmatpush1.msra.mxu0 %v6937
    %7288 = vmatprep.subr.mxu0 %v6930
    %7289 = vmatpush1.msra.mxu0 %v6929
    %7290 = vmatprep.subr.mxu0 %v6922
    %7291 = vmatpush1.msra.mxu0 %v6921
    %7292 = vmatprep.subr.mxu0 %v6914
    %7293 = vmatpush1.msra.mxu0 %v6913
    %7294 = vmatprep.subr.mxu0 %v6906
    %7295 = vmatpush1.msra.mxu0 %v6905
    %7296 = vmatprep.subr.mxu0 %v6898
    %7297 = vmatpush1.msra.mxu0 %v6897
    %7298 = vmatprep.subr.mxu0 %v6890
    %7299 = vmatpush1.msra.mxu0 %v6889
    %7300 = vmatprep.subr.mxu0 %v6882
    %7301 = vmatpush1.msra.mxu0 %v6881
    %7302 = vmatprep.subr.mxu0 %v6874
    %7303 = vmatpush1.msra.mxu0 %v6873
    %7304 = vmatprep.subr.mxu0 %v7122
    %7305 = vmatpush2.msra.mxu0 %v7121
    %7306 = vmatprep.subr.mxu0 %v7114
    %7307 = vmatpush2.msra.mxu0 %v7113
    %7308 = vmatprep.subr.mxu0 %v7106
    %7309 = vmatpush2.msra.mxu0 %v7105
    %7310 = vmatprep.subr.mxu0 %v7098
    %7311 = vmatpush2.msra.mxu0 %v7097
    %7312 = vmatprep.subr.mxu0 %v7090
    %7313 = vmatpush2.msra.mxu0 %v7089
    %7314 = vmatprep.subr.mxu0 %v7082
    %7315 = vmatpush2.msra.mxu0 %v7081
    %7316 = vmatprep.subr.mxu0 %v7074
    %7317 = vmatpush2.msra.mxu0 %v7073
    %7318 = vmatprep.subr.mxu0 %v7066
    %7319 = vmatpush2.msra.mxu0 %v7065
    %7320 = vmatprep.subr.mxu0 %v7058
    %7321 = vmatpush2.msra.mxu0 %v7057
    %7322 = vmatprep.subr.mxu0 %v7050
    %7323 = vmatpush2.msra.mxu0 %v7049
    %7324 = vmatprep.subr.mxu0 %v7042
    %7325 = vmatpush2.msra.mxu0 %v7041
    %7326 = vmatprep.subr.mxu0 %v7034
    %7327 = vmatpush2.msra.mxu0 %v7033
    %7328 = vmatprep.subr.mxu0 %v7026
    %7329 = vmatpush2.msra.mxu0 %v7025
    %7330 = vmatprep.subr.mxu0 %v7018
    %7331 = vmatpush2.msra.mxu0 %v7017
    %7332 = vmatprep.subr.mxu0 %v7010
    %7333 = vmatpush2.msra.mxu0 %v7009
    %7334 = vmatprep.subr.mxu0 %v7002
    %7335 = vmatpush2.msra.mxu0 %v7001
    %7336 = vmatprep.mubr.f32.mxu0 %v6592
    %7337 = vmatmul.mubr.f32.gmra.mxu0 %v6591
    %v7338 = vpop.f32.mrf.mxu0
    %v7339 = vadd.f32 %v7238, %v7338
    %v7340 = vpop.f32.mrf.mxu0
    %v7341 = vadd.f32 %v7240, %v7340
    %7342 = vmatprep.mubr.f32.mxu0 %v6596
    %7343 = vmatmul.mubr.f32.gmra.mxu0 %v6595
    %v7344 = vpop.f32.mrf.mxu0
    %v7345 = vadd.f32 %v7244, %v7344
    %v7346 = vpop.f32.mrf.mxu0
    %v7347 = vadd.f32 %v7246, %v7346
    %7348 = vmatprep.mubr.f32.mxu0 %v6600
    %7349 = vmatmul.mubr.f32.gmra.mxu0 %v6599
    %v7350 = vpop.f32.mrf.mxu0
    %v7351 = vadd.f32 %v7250, %v7350
    %v7352 = vpop.f32.mrf.mxu0
    %v7353 = vadd.f32 %v7252, %v7352
    %7354 = vmatprep.mubr.f32.mxu0 %v6604
    %7355 = vmatmul.mubr.f32.gmra.mxu0 %v6603
    %v7356 = vpop.f32.mrf.mxu0
    %v7357 = vadd.f32 %v7256, %v7356
    %v7358 = vpop.f32.mrf.mxu0
    %v7359 = vadd.f32 %v7258, %v7358
    %7360 = vmatprep.mubr.f32.mxu0 %v6608
    %7361 = vmatmul.mubr.f32.gmra.mxu0 %v6607
    %v7362 = vpop.f32.mrf.mxu0
    %v7363 = vadd.f32 %v7262, %v7362
    %v7364 = vpop.f32.mrf.mxu0
    %v7365 = vadd.f32 %v7264, %v7364
    %7366 = vmatprep.mubr.f32.mxu0 %v6612
    %7367 = vmatmul.mubr.f32.gmra.mxu0 %v6611
    %v7368 = vpop.f32.mrf.mxu0
    %v7369 = vadd.f32 %v7268, %v7368
    %v7370 = vpop.f32.mrf.mxu0
    %v7371 = vadd.f32 %v7270, %v7370
    %7372 = vdwg.mxu0
    %7373 = vmatprep.subr.mxu0 %v6740
    %7374 = vmatpush1.msra.mxu0 %v6739
    %7375 = vmatprep.subr.mxu0 %v6732
    %7376 = vmatpush1.msra.mxu0 %v6731
    %7377 = vmatprep.subr.mxu0 %v6724
    %7378 = vmatpush1.msra.mxu0 %v6723
    %7379 = vmatprep.subr.mxu0 %v6716
    %7380 = vmatpush1.msra.mxu0 %v6715
    %7381 = vmatprep.subr.mxu0 %v6708
    %7382 = vmatpush1.msra.mxu0 %v6707
    %7383 = vmatprep.subr.mxu0 %v6700
    %7384 = vmatpush1.msra.mxu0 %v6699
    %7385 = vmatprep.subr.mxu0 %v6692
    %7386 = vmatpush1.msra.mxu0 %v6691
    %7387 = vmatprep.subr.mxu0 %v6684
    %7388 = vmatpush1.msra.mxu0 %v6683
    %7389 = vmatprep.subr.mxu0 %v6676
    %7390 = vmatpush1.msra.mxu0 %v6675
    %7391 = vmatprep.subr.mxu0 %v6668
    %7392 = vmatpush1.msra.mxu0 %v6667
    %7393 = vmatprep.subr.mxu0 %v6660
    %7394 = vmatpush1.msra.mxu0 %v6659
    %7395 = vmatprep.subr.mxu0 %v6652
    %7396 = vmatpush1.msra.mxu0 %v6651
    %7397 = vmatprep.subr.mxu0 %v6644
    %7398 = vmatpush1.msra.mxu0 %v6643
    %7399 = vmatprep.subr.mxu0 %v6636
    %7400 = vmatpush1.msra.mxu0 %v6635
    %7401 = vmatprep.subr.mxu0 %v6628
    %7402 = vmatpush1.msra.mxu0 %v6627
    %7403 = vmatprep.subr.mxu0 %v6620
    %7404 = vmatpush1.msra.mxu0 %v6619
    %7405 = vmatprep.subr.mxu0 %v6868
    %7406 = vmatpush2.msra.mxu0 %v6867
    %7407 = vmatprep.subr.mxu0 %v6860
    %7408 = vmatpush2.msra.mxu0 %v6859
    %7409 = vmatprep.subr.mxu0 %v6852
    %7410 = vmatpush2.msra.mxu0 %v6851
    %7411 = vmatprep.subr.mxu0 %v6844
    %7412 = vmatpush2.msra.mxu0 %v6843
    %7413 = vmatprep.subr.mxu0 %v6836
    %7414 = vmatpush2.msra.mxu0 %v6835
    %7415 = vmatprep.subr.mxu0 %v6828
    %7416 = vmatpush2.msra.mxu0 %v6827
    %7417 = vmatprep.subr.mxu0 %v6820
    %7418 = vmatpush2.msra.mxu0 %v6819
    %7419 = vmatprep.subr.mxu0 %v6812
    %7420 = vmatpush2.msra.mxu0 %v6811
    %7421 = vmatprep.subr.mxu0 %v6804
    %7422 = vmatpush2.msra.mxu0 %v6803
    %7423 = vmatprep.subr.mxu0 %v6796
    %7424 = vmatpush2.msra.mxu0 %v6795
    %7425 = vmatprep.subr.mxu0 %v6788
    %7426 = vmatpush2.msra.mxu0 %v6787
    %7427 = vmatprep.subr.mxu0 %v6780
    %7428 = vmatpush2.msra.mxu0 %v6779
    %7429 = vmatprep.subr.mxu0 %v6772
    %7430 = vmatpush2.msra.mxu0 %v6771
    %7431 = vmatprep.subr.mxu0 %v6764
    %7432 = vmatpush2.msra.mxu0 %v6763
    %7433 = vmatprep.subr.mxu0 %v6756
    %7434 = vmatpush2.msra.mxu0 %v6755
    %7435 = vmatprep.subr.mxu0 %v6748
    %7436 = vmatpush2.msra.mxu0 %v6747
    %7437 = vmatprep.mubr.f32.mxu0 %v6590
    %7438 = vmatmul.mubr.f32.gmra.mxu0 %v6589
    %v7439 = vpop.f32.mrf.mxu0
    %v7440 = vadd.f32 %v7142, %v7439
    %v7441 = vpop.f32.mrf.mxu0
    %v7442 = vadd.f32 %v7146, %v7441
    %7443 = vmatprep.mubr.f32.mxu0 %v6594
    %7444 = vmatmul.mubr.f32.gmra.mxu0 %v6593
    %v7445 = vpop.f32.mrf.mxu0
    %v7446 = vadd.f32 %v7142, %v7445
    %v7447 = vpop.f32.mrf.mxu0
    %v7448 = vadd.f32 %v7146, %v7447
    %7449 = vmatprep.mubr.f32.mxu0 %v6598
    %7450 = vmatmul.mubr.f32.gmra.mxu0 %v6597
    %v7451 = vpop.f32.mrf.mxu0
    %v7452 = vadd.f32 %v7142, %v7451
    %v7453 = vpop.f32.mrf.mxu0
    %v7454 = vadd.f32 %v7146, %v7453
    %7455 = vmatprep.mubr.f32.mxu0 %v6602
    %7456 = vmatmul.mubr.f32.gmra.mxu0 %v6601
    %v7457 = vpop.f32.mrf.mxu0
    %v7458 = vadd.f32 %v7142, %v7457
    %v7459 = vpop.f32.mrf.mxu0
    %v7460 = vadd.f32 %v7146, %v7459
    %7461 = vmatprep.mubr.f32.mxu0 %v6606
    %7462 = vmatmul.mubr.f32.gmra.mxu0 %v6605
    %v7463 = vpop.f32.mrf.mxu0
    %v7464 = vadd.f32 %v7142, %v7463
    %v7465 = vpop.f32.mrf.mxu0
    %v7466 = vadd.f32 %v7146, %v7465
    %7467 = vmatprep.mubr.f32.mxu0 %v6610
    %7468 = vmatmul.mubr.f32.gmra.mxu0 %v6609
    %v7469 = vpop.f32.mrf.mxu0
    %v7470 = vadd.f32 %v7142, %v7469
    %v7471 = vpop.f32.mrf.mxu0
    %v7472 = vadd.f32 %v7146, %v7471
    %7473 = vdwg.mxu0
    %7474 = vmatprep.subr.mxu0 %v6996
    %7475 = vmatpush1.msra.mxu0 %v6995
    %7476 = vmatprep.subr.mxu0 %v6988
    %7477 = vmatpush1.msra.mxu0 %v6987
    %7478 = vmatprep.subr.mxu0 %v6980
    %7479 = vmatpush1.msra.mxu0 %v6979
    %7480 = vmatprep.subr.mxu0 %v6972
    %7481 = vmatpush1.msra.mxu0 %v6971
    %7482 = vmatprep.subr.mxu0 %v6964
    %7483 = vmatpush1.msra.mxu0 %v6963
    %7484 = vmatprep.subr.mxu0 %v6956
    %7485 = vmatpush1.msra.mxu0 %v6955
    %7486 = vmatprep.subr.mxu0 %v6948
    %7487 = vmatpush1.msra.mxu0 %v6947
    %7488 = vmatprep.subr.mxu0 %v6940
    %7489 = vmatpush1.msra.mxu0 %v6939
    %7490 = vmatprep.subr.mxu0 %v6932
    %7491 = vmatpush1.msra.mxu0 %v6931
    %7492 = vmatprep.subr.mxu0 %v6924
    %7493 = vmatpush1.msra.mxu0 %v6923
    %7494 = vmatprep.subr.mxu0 %v6916
    %7495 = vmatpush1.msra.mxu0 %v6915
    %7496 = vmatprep.subr.mxu0 %v6908
    %7497 = vmatpush1.msra.mxu0 %v6907
    %7498 = vmatprep.subr.mxu0 %v6900
    %7499 = vmatpush1.msra.mxu0 %v6899
    %7500 = vmatprep.subr.mxu0 %v6892
    %7501 = vmatpush1.msra.mxu0 %v6891
    %7502 = vmatprep.subr.mxu0 %v6884
    %7503 = vmatpush1.msra.mxu0 %v6883
    %7504 = vmatprep.subr.mxu0 %v6876
    %7505 = vmatpush1.msra.mxu0 %v6875
    %7506 = vmatprep.subr.mxu0 %v7124
    %7507 = vmatpush2.msra.mxu0 %v7123
    %7508 = vmatprep.subr.mxu0 %v7116
    %7509 = vmatpush2.msra.mxu0 %v7115
    %7510 = vmatprep.subr.mxu0 %v7108
    %7511 = vmatpush2.msra.mxu0 %v7107
    %7512 = vmatprep.subr.mxu0 %v7100
    %7513 = vmatpush2.msra.mxu0 %v7099
    %7514 = vmatprep.subr.mxu0 %v7092
    %7515 = vmatpush2.msra.mxu0 %v7091
    %7516 = vmatprep.subr.mxu0 %v7084
    %7517 = vmatpush2.msra.mxu0 %v7083
    %7518 = vmatprep.subr.mxu0 %v7076
    %7519 = vmatpush2.msra.mxu0 %v7075
    %7520 = vmatprep.subr.mxu0 %v7068
    %7521 = vmatpush2.msra.mxu0 %v7067
    %7522 = vmatprep.subr.mxu0 %v7060
    %7523 = vmatpush2.msra.mxu0 %v7059
    %7524 = vmatprep.subr.mxu0 %v7052
    %7525 = vmatpush2.msra.mxu0 %v7051
    %7526 = vmatprep.subr.mxu0 %v7044
    %7527 = vmatpush2.msra.mxu0 %v7043
    %7528 = vmatprep.subr.mxu0 %v7036
    %7529 = vmatpush2.msra.mxu0 %v7035
    %7530 = vmatprep.subr.mxu0 %v7028
    %7531 = vmatpush2.msra.mxu0 %v7027
    %7532 = vmatprep.subr.mxu0 %v7020
    %7533 = vmatpush2.msra.mxu0 %v7019
    %7534 = vmatprep.subr.mxu0 %v7012
    %7535 = vmatpush2.msra.mxu0 %v7011
    %7536 = vmatprep.subr.mxu0 %v7004
    %7537 = vmatpush2.msra.mxu0 %v7003
    %7538 = vmatprep.mubr.f32.mxu0 %v6592
    %7539 = vmatmul.mubr.f32.gmra.mxu0 %v6591
    %v7540 = vpop.f32.mrf.mxu0
    %v7541 = vadd.f32 %v7440, %v7540
    %v7542 = vpop.f32.mrf.mxu0
    %v7543 = vadd.f32 %v7442, %v7542
    %7544 = vmatprep.mubr.f32.mxu0 %v6596
    %7545 = vmatmul.mubr.f32.gmra.mxu0 %v6595
    %v7546 = vpop.f32.mrf.mxu0
    %v7547 = vadd.f32 %v7446, %v7546
    %v7548 = vpop.f32.mrf.mxu0
    %v7549 = vadd.f32 %v7448, %v7548
    %7550 = vmatprep.mubr.f32.mxu0 %v6600
    %7551 = vmatmul.mubr.f32.gmra.mxu0 %v6599
    %v7552 = vpop.f32.mrf.mxu0
    %v7553 = vadd.f32 %v7452, %v7552
    %v7554 = vpop.f32.mrf.mxu0
    %v7555 = vadd.f32 %v7454, %v7554
    %7556 = vmatprep.mubr.f32.mxu0 %v6604
    %7557 = vmatmul.mubr.f32.gmra.mxu0 %v6603
    %v7558 = vpop.f32.mrf.mxu0
    %v7559 = vadd.f32 %v7458, %v7558
    %v7560 = vpop.f32.mrf.mxu0
    %v7561 = vadd.f32 %v7460, %v7560
    %7562 = vmatprep.mubr.f32.mxu0 %v6608
    %7563 = vmatmul.mubr.f32.gmra.mxu0 %v6607
    %v7564 = vpop.f32.mrf.mxu0
    %v7565 = vadd.f32 %v7464, %v7564
    %v7566 = vpop.f32.mrf.mxu0
    %v7567 = vadd.f32 %v7466, %v7566
    %7568 = vmatprep.mubr.f32.mxu0 %v6612
    %7569 = vmatmul.mubr.f32.gmra.mxu0 %v6611
    %v7570 = vpop.f32.mrf.mxu0
    %v7571 = vadd.f32 %v7470, %v7570
    %v7572 = vpop.f32.mrf.mxu0
    %v7573 = vadd.f32 %v7472, %v7572
    %7574 = vdwg.mxu0
    %7575 = vmatprep.subr.mxu0 %v6742
    %7576 = vmatpush1.msra.mxu0 %v6741
    %7577 = vmatprep.subr.mxu0 %v6734
    %7578 = vmatpush1.msra.mxu0 %v6733
    %7579 = vmatprep.subr.mxu0 %v6726
    %7580 = vmatpush1.msra.mxu0 %v6725
    %7581 = vmatprep.subr.mxu0 %v6718
    %7582 = vmatpush1.msra.mxu0 %v6717
    %7583 = vmatprep.subr.mxu0 %v6710
    %7584 = vmatpush1.msra.mxu0 %v6709
    %7585 = vmatprep.subr.mxu0 %v6702
    %7586 = vmatpush1.msra.mxu0 %v6701
    %7587 = vmatprep.subr.mxu0 %v6694
    %7588 = vmatpush1.msra.mxu0 %v6693
    %7589 = vmatprep.subr.mxu0 %v6686
    %7590 = vmatpush1.msra.mxu0 %v6685
    %7591 = vmatprep.subr.mxu0 %v6678
    %7592 = vmatpush1.msra.mxu0 %v6677
    %7593 = vmatprep.subr.mxu0 %v6670
    %7594 = vmatpush1.msra.mxu0 %v6669
    %7595 = vmatprep.subr.mxu0 %v6662
    %7596 = vmatpush1.msra.mxu0 %v6661
    %7597 = vmatprep.subr.mxu0 %v6654
    %7598 = vmatpush1.msra.mxu0 %v6653
    %7599 = vmatprep.subr.mxu0 %v6646
    %7600 = vmatpush1.msra.mxu0 %v6645
    %7601 = vmatprep.subr.mxu0 %v6638
    %7602 = vmatpush1.msra.mxu0 %v6637
    %7603 = vmatprep.subr.mxu0 %v6630
    %7604 = vmatpush1.msra.mxu0 %v6629
    %7605 = vmatprep.subr.mxu0 %v6622
    %7606 = vmatpush1.msra.mxu0 %v6621
    %7607 = vmatprep.subr.mxu0 %v6870
    %7608 = vmatpush2.msra.mxu0 %v6869
    %7609 = vmatprep.subr.mxu0 %v6862
    %7610 = vmatpush2.msra.mxu0 %v6861
    %7611 = vmatprep.subr.mxu0 %v6854
    %7612 = vmatpush2.msra.mxu0 %v6853
    %7613 = vmatprep.subr.mxu0 %v6846
    %7614 = vmatpush2.msra.mxu0 %v6845
    %7615 = vmatprep.subr.mxu0 %v6838
    %7616 = vmatpush2.msra.mxu0 %v6837
    %7617 = vmatprep.subr.mxu0 %v6830
    %7618 = vmatpush2.msra.mxu0 %v6829
    %7619 = vmatprep.subr.mxu0 %v6822
    %7620 = vmatpush2.msra.mxu0 %v6821
    %7621 = vmatprep.subr.mxu0 %v6814
    %7622 = vmatpush2.msra.mxu0 %v6813
    %7623 = vmatprep.subr.mxu0 %v6806
    %7624 = vmatpush2.msra.mxu0 %v6805
    %7625 = vmatprep.subr.mxu0 %v6798
    %7626 = vmatpush2.msra.mxu0 %v6797
    %7627 = vmatprep.subr.mxu0 %v6790
    %7628 = vmatpush2.msra.mxu0 %v6789
    %7629 = vmatprep.subr.mxu0 %v6782
    %7630 = vmatpush2.msra.mxu0 %v6781
    %7631 = vmatprep.subr.mxu0 %v6774
    %7632 = vmatpush2.msra.mxu0 %v6773
    %7633 = vmatprep.subr.mxu0 %v6766
    %7634 = vmatpush2.msra.mxu0 %v6765
    %7635 = vmatprep.subr.mxu0 %v6758
    %7636 = vmatpush2.msra.mxu0 %v6757
    %7637 = vmatprep.subr.mxu0 %v6750
    %7638 = vmatpush2.msra.mxu0 %v6749
    %7639 = vmatprep.mubr.f32.mxu0 %v6590
    %7640 = vmatmul.mubr.f32.gmra.mxu0 %v6589
    %v7641 = vpop.f32.mrf.mxu0
    %v7642 = vadd.f32 %v7150, %v7641
    %v7643 = vpop.f32.mrf.mxu0
    %v7644 = vadd.f32 %v7154, %v7643
    %7645 = vmatprep.mubr.f32.mxu0 %v6594
    %7646 = vmatmul.mubr.f32.gmra.mxu0 %v6593
    %v7647 = vpop.f32.mrf.mxu0
    %v7648 = vadd.f32 %v7150, %v7647
    %v7649 = vpop.f32.mrf.mxu0
    %v7650 = vadd.f32 %v7154, %v7649
    %7651 = vmatprep.mubr.f32.mxu0 %v6598
    %7652 = vmatmul.mubr.f32.gmra.mxu0 %v6597
    %v7653 = vpop.f32.mrf.mxu0
    %v7654 = vadd.f32 %v7150, %v7653
    %v7655 = vpop.f32.mrf.mxu0
    %v7656 = vadd.f32 %v7154, %v7655
    %7657 = vmatprep.mubr.f32.mxu0 %v6602
    %7658 = vmatmul.mubr.f32.gmra.mxu0 %v6601
    %v7659 = vpop.f32.mrf.mxu0
    %v7660 = vadd.f32 %v7150, %v7659
    %v7661 = vpop.f32.mrf.mxu0
    %v7662 = vadd.f32 %v7154, %v7661
    %7663 = vmatprep.mubr.f32.mxu0 %v6606
    %7664 = vmatmul.mubr.f32.gmra.mxu0 %v6605
    %v7665 = vpop.f32.mrf.mxu0
    %v7666 = vadd.f32 %v7150, %v7665
    %v7667 = vpop.f32.mrf.mxu0
    %v7668 = vadd.f32 %v7154, %v7667
    %7669 = vmatprep.mubr.f32.mxu0 %v6610
    %7670 = vmatmul.mubr.f32.gmra.mxu0 %v6609
    %v7671 = vpop.f32.mrf.mxu0
    %v7672 = vadd.f32 %v7150, %v7671
    %v7673 = vpop.f32.mrf.mxu0
    %v7674 = vadd.f32 %v7154, %v7673
    %7675 = vdwg.mxu0
    %7676 = vmatprep.subr.mxu0 %v6998
    %7677 = vmatpush1.msra.mxu0 %v6997
    %7678 = vmatprep.subr.mxu0 %v6990
    %7679 = vmatpush1.msra.mxu0 %v6989
    %7680 = vmatprep.subr.mxu0 %v6982
    %7681 = vmatpush1.msra.mxu0 %v6981
    %7682 = vmatprep.subr.mxu0 %v6974
    %7683 = vmatpush1.msra.mxu0 %v6973
    %7684 = vmatprep.subr.mxu0 %v6966
    %7685 = vmatpush1.msra.mxu0 %v6965
    %7686 = vmatprep.subr.mxu0 %v6958
    %7687 = vmatpush1.msra.mxu0 %v6957
    %7688 = vmatprep.subr.mxu0 %v6950
    %7689 = vmatpush1.msra.mxu0 %v6949
    %7690 = vmatprep.subr.mxu0 %v6942
    %7691 = vmatpush1.msra.mxu0 %v6941
    %7692 = vmatprep.subr.mxu0 %v6934
    %7693 = vmatpush1.msra.mxu0 %v6933
    %7694 = vmatprep.subr.mxu0 %v6926
    %7695 = vmatpush1.msra.mxu0 %v6925
    %7696 = vmatprep.subr.mxu0 %v6918
    %7697 = vmatpush1.msra.mxu0 %v6917
    %7698 = vmatprep.subr.mxu0 %v6910
    %7699 = vmatpush1.msra.mxu0 %v6909
    %7700 = vmatprep.subr.mxu0 %v6902
    %7701 = vmatpush1.msra.mxu0 %v6901
    %7702 = vmatprep.subr.mxu0 %v6894
    %7703 = vmatpush1.msra.mxu0 %v6893
    %7704 = vmatprep.subr.mxu0 %v6886
    %7705 = vmatpush1.msra.mxu0 %v6885
    %7706 = vmatprep.subr.mxu0 %v6878
    %7707 = vmatpush1.msra.mxu0 %v6877
    %7708 = vmatprep.subr.mxu0 %v7126
    %7709 = vmatpush2.msra.mxu0 %v7125
    %7710 = vmatprep.subr.mxu0 %v7118
    %7711 = vmatpush2.msra.mxu0 %v7117
    %7712 = vmatprep.subr.mxu0 %v7110
    %7713 = vmatpush2.msra.mxu0 %v7109
    %7714 = vmatprep.subr.mxu0 %v7102
    %7715 = vmatpush2.msra.mxu0 %v7101
    %7716 = vmatprep.subr.mxu0 %v7094
    %7717 = vmatpush2.msra.mxu0 %v7093
    %7718 = vmatprep.subr.mxu0 %v7086
    %7719 = vmatpush2.msra.mxu0 %v7085
    %7720 = vmatprep.subr.mxu0 %v7078
    %7721 = vmatpush2.msra.mxu0 %v7077
    %7722 = vmatprep.subr.mxu0 %v7070
    %7723 = vmatpush2.msra.mxu0 %v7069
    %7724 = vmatprep.subr.mxu0 %v7062
    %7725 = vmatpush2.msra.mxu0 %v7061
    %7726 = vmatprep.subr.mxu0 %v7054
    %7727 = vmatpush2.msra.mxu0 %v7053
    %7728 = vmatprep.subr.mxu0 %v7046
    %7729 = vmatpush2.msra.mxu0 %v7045
    %7730 = vmatprep.subr.mxu0 %v7038
    %7731 = vmatpush2.msra.mxu0 %v7037
    %7732 = vmatprep.subr.mxu0 %v7030
    %7733 = vmatpush2.msra.mxu0 %v7029
    %7734 = vmatprep.subr.mxu0 %v7022
    %7735 = vmatpush2.msra.mxu0 %v7021
    %7736 = vmatprep.subr.mxu0 %v7014
    %7737 = vmatpush2.msra.mxu0 %v7013
    %7738 = vmatprep.subr.mxu0 %v7006
    %7739 = vmatpush2.msra.mxu0 %v7005
    %7740 = vmatprep.mubr.f32.mxu0 %v6592
    %7741 = vmatmul.mubr.f32.gmra.mxu0 %v6591
    %v7742 = vpop.f32.mrf.mxu0
    %v7743 = vadd.f32 %v7642, %v7742
    %v7744 = vpop.f32.mrf.mxu0
    %v7745 = vadd.f32 %v7644, %v7744
    %7746 = vmatprep.mubr.f32.mxu0 %v6596
    %7747 = vmatmul.mubr.f32.gmra.mxu0 %v6595
    %v7748 = vpop.f32.mrf.mxu0
    %v7749 = vadd.f32 %v7648, %v7748
    %v7750 = vpop.f32.mrf.mxu0
    %v7751 = vadd.f32 %v7650, %v7750
    %7752 = vmatprep.mubr.f32.mxu0 %v6600
    %7753 = vmatmul.mubr.f32.gmra.mxu0 %v6599
    %v7754 = vpop.f32.mrf.mxu0
    %v7755 = vadd.f32 %v7654, %v7754
    %v7756 = vpop.f32.mrf.mxu0
    %v7757 = vadd.f32 %v7656, %v7756
    %7758 = vmatprep.mubr.f32.mxu0 %v6604
    %7759 = vmatmul.mubr.f32.gmra.mxu0 %v6603
    %v7760 = vpop.f32.mrf.mxu0
    %v7761 = vadd.f32 %v7660, %v7760
    %v7762 = vpop.f32.mrf.mxu0
    %v7763 = vadd.f32 %v7662, %v7762
    %7764 = vmatprep.mubr.f32.mxu0 %v6608
    %7765 = vmatmul.mubr.f32.gmra.mxu0 %v6607
    %v7766 = vpop.f32.mrf.mxu0
    %v7767 = vadd.f32 %v7666, %v7766
    %v7768 = vpop.f32.mrf.mxu0
    %v7769 = vadd.f32 %v7668, %v7768
    %7770 = vmatprep.mubr.f32.mxu0 %v6612
    %7771 = vmatmul.mubr.f32.gmra.mxu0 %v6611
    %v7772 = vpop.f32.mrf.mxu0
    %v7773 = vadd.f32 %v7672, %v7772
    %v7774 = vpop.f32.mrf.mxu0
    %v7775 = vadd.f32 %v7674, %v7774
    %7776 = vdwg.mxu0
    %7777 = vmatprep.subr.mxu0 %v6744
    %7778 = vmatpush1.msra.mxu0 %v6743
    %7779 = vmatprep.subr.mxu0 %v6736
    %7780 = vmatpush1.msra.mxu0 %v6735
    %7781 = vmatprep.subr.mxu0 %v6728
    %7782 = vmatpush1.msra.mxu0 %v6727
    %7783 = vmatprep.subr.mxu0 %v6720
    %7784 = vmatpush1.msra.mxu0 %v6719
    %7785 = vmatprep.subr.mxu0 %v6712
    %7786 = vmatpush1.msra.mxu0 %v6711
    %7787 = vmatprep.subr.mxu0 %v6704
    %7788 = vmatpush1.msra.mxu0 %v6703
    %7789 = vmatprep.subr.mxu0 %v6696
    %7790 = vmatpush1.msra.mxu0 %v6695
    %7791 = vmatprep.subr.mxu0 %v6688
    %7792 = vmatpush1.msra.mxu0 %v6687
    %7793 = vmatprep.subr.mxu0 %v6680
    %7794 = vmatpush1.msra.mxu0 %v6679
    %7795 = vmatprep.subr.mxu0 %v6672
    %7796 = vmatpush1.msra.mxu0 %v6671
    %7797 = vmatprep.subr.mxu0 %v6664
    %7798 = vmatpush1.msra.mxu0 %v6663
    %7799 = vmatprep.subr.mxu0 %v6656
    %7800 = vmatpush1.msra.mxu0 %v6655
    %7801 = vmatprep.subr.mxu0 %v6648
    %7802 = vmatpush1.msra.mxu0 %v6647
    %7803 = vmatprep.subr.mxu0 %v6640
    %7804 = vmatpush1.msra.mxu0 %v6639
    %7805 = vmatprep.subr.mxu0 %v6632
    %7806 = vmatpush1.msra.mxu0 %v6631
    %7807 = vmatprep.subr.mxu0 %v6624
    %7808 = vmatpush1.msra.mxu0 %v6623
    %7809 = vmatprep.subr.mxu0 %v6872
    %7810 = vmatpush2.msra.mxu0 %v6871
    %7811 = vmatprep.subr.mxu0 %v6864
    %7812 = vmatpush2.msra.mxu0 %v6863
    %7813 = vmatprep.subr.mxu0 %v6856
    %7814 = vmatpush2.msra.mxu0 %v6855
    %7815 = vmatprep.subr.mxu0 %v6848
    %7816 = vmatpush2.msra.mxu0 %v6847
    %7817 = vmatprep.subr.mxu0 %v6840
    %7818 = vmatpush2.msra.mxu0 %v6839
    %7819 = vmatprep.subr.mxu0 %v6832
    %7820 = vmatpush2.msra.mxu0 %v6831
    %7821 = vmatprep.subr.mxu0 %v6824
    %7822 = vmatpush2.msra.mxu0 %v6823
    %7823 = vmatprep.subr.mxu0 %v6816
    %7824 = vmatpush2.msra.mxu0 %v6815
    %7825 = vmatprep.subr.mxu0 %v6808
    %7826 = vmatpush2.msra.mxu0 %v6807
    %7827 = vmatprep.subr.mxu0 %v6800
    %7828 = vmatpush2.msra.mxu0 %v6799
    %7829 = vmatprep.subr.mxu0 %v6792
    %7830 = vmatpush2.msra.mxu0 %v6791
    %7831 = vmatprep.subr.mxu0 %v6784
    %7832 = vmatpush2.msra.mxu0 %v6783
    %7833 = vmatprep.subr.mxu0 %v6776
    %7834 = vmatpush2.msra.mxu0 %v6775
    %7835 = vmatprep.subr.mxu0 %v6768
    %7836 = vmatpush2.msra.mxu0 %v6767
    %7837 = vmatprep.subr.mxu0 %v6760
    %7838 = vmatpush2.msra.mxu0 %v6759
    %7839 = vmatprep.subr.mxu0 %v6752
    %7840 = vmatpush2.msra.mxu0 %v6751
    %7841 = vmatprep.mubr.f32.mxu0 %v6590
    %7842 = vmatmul.mubr.f32.gmra.mxu0 %v6589
    %v7843 = vpop.f32.mrf.mxu0
    %v7844 = vadd.f32 %v7158, %v7843
    %v7845 = vpop.f32.mrf.mxu0
    %v7846 = vadd.f32 %v7162, %v7845
    %7847 = vmatprep.mubr.f32.mxu0 %v6594
    %7848 = vmatmul.mubr.f32.gmra.mxu0 %v6593
    %v7849 = vpop.f32.mrf.mxu0
    %v7850 = vadd.f32 %v7158, %v7849
    %v7851 = vpop.f32.mrf.mxu0
    %v7852 = vadd.f32 %v7162, %v7851
    %7853 = vmatprep.mubr.f32.mxu0 %v6598
    %7854 = vmatmul.mubr.f32.gmra.mxu0 %v6597
    %v7855 = vpop.f32.mrf.mxu0
    %v7856 = vadd.f32 %v7158, %v7855
    %v7857 = vpop.f32.mrf.mxu0
    %v7858 = vadd.f32 %v7162, %v7857
    %7859 = vmatprep.mubr.f32.mxu0 %v6602
    %7860 = vmatmul.mubr.f32.gmra.mxu0 %v6601
    %v7861 = vpop.f32.mrf.mxu0
    %v7862 = vadd.f32 %v7158, %v7861
    %v7863 = vpop.f32.mrf.mxu0
    %v7864 = vadd.f32 %v7162, %v7863
    %7865 = vmatprep.mubr.f32.mxu0 %v6606
    %7866 = vmatmul.mubr.f32.gmra.mxu0 %v6605
    %v7867 = vpop.f32.mrf.mxu0
    %v7868 = vadd.f32 %v7158, %v7867
    %v7869 = vpop.f32.mrf.mxu0
    %v7870 = vadd.f32 %v7162, %v7869
    %7871 = vmatprep.mubr.f32.mxu0 %v6610
    %7872 = vmatmul.mubr.f32.gmra.mxu0 %v6609
    %v7873 = vpop.f32.mrf.mxu0
    %v7874 = vadd.f32 %v7158, %v7873
    %v7875 = vpop.f32.mrf.mxu0
    %v7876 = vadd.f32 %v7162, %v7875
    %7877 = vdwg.mxu0
    %7878 = vmatprep.subr.mxu0 %v7000
    %7879 = vmatpush1.msra.mxu0 %v6999
    %7880 = vmatprep.subr.mxu0 %v6992
    %7881 = vmatpush1.msra.mxu0 %v6991
    %7882 = vmatprep.subr.mxu0 %v6984
    %7883 = vmatpush1.msra.mxu0 %v6983
    %7884 = vmatprep.subr.mxu0 %v6976
    %7885 = vmatpush1.msra.mxu0 %v6975
    %7886 = vmatprep.subr.mxu0 %v6968
    %7887 = vmatpush1.msra.mxu0 %v6967
    %7888 = vmatprep.subr.mxu0 %v6960
    %7889 = vmatpush1.msra.mxu0 %v6959
    %7890 = vmatprep.subr.mxu0 %v6952
    %7891 = vmatpush1.msra.mxu0 %v6951
    %7892 = vmatprep.subr.mxu0 %v6944
    %7893 = vmatpush1.msra.mxu0 %v6943
    %7894 = vmatprep.subr.mxu0 %v6936
    %7895 = vmatpush1.msra.mxu0 %v6935
    %7896 = vmatprep.subr.mxu0 %v6928
    %7897 = vmatpush1.msra.mxu0 %v6927
    %7898 = vmatprep.subr.mxu0 %v6920
    %7899 = vmatpush1.msra.mxu0 %v6919
    %7900 = vmatprep.subr.mxu0 %v6912
    %7901 = vmatpush1.msra.mxu0 %v6911
    %7902 = vmatprep.subr.mxu0 %v6904
    %7903 = vmatpush1.msra.mxu0 %v6903
    %7904 = vmatprep.subr.mxu0 %v6896
    %7905 = vmatpush1.msra.mxu0 %v6895
    %7906 = vmatprep.subr.mxu0 %v6888
    %7907 = vmatpush1.msra.mxu0 %v6887
    %7908 = vmatprep.subr.mxu0 %v6880
    %7909 = vmatpush1.msra.mxu0 %v6879
    %7910 = vmatprep.subr.mxu0 %v7128
    %7911 = vmatpush2.msra.mxu0 %v7127
    %7912 = vmatprep.subr.mxu0 %v7120
    %7913 = vmatpush2.msra.mxu0 %v7119
    %7914 = vmatprep.subr.mxu0 %v7112
    %7915 = vmatpush2.msra.mxu0 %v7111
    %7916 = vmatprep.subr.mxu0 %v7104
    %7917 = vmatpush2.msra.mxu0 %v7103
    %7918 = vmatprep.subr.mxu0 %v7096
    %7919 = vmatpush2.msra.mxu0 %v7095
    %7920 = vmatprep.subr.mxu0 %v7088
    %7921 = vmatpush2.msra.mxu0 %v7087
    %7922 = vmatprep.subr.mxu0 %v7080
    %7923 = vmatpush2.msra.mxu0 %v7079
    %7924 = vmatprep.subr.mxu0 %v7072
    %7925 = vmatpush2.msra.mxu0 %v7071
    %7926 = vmatprep.subr.mxu0 %v7064
    %7927 = vmatpush2.msra.mxu0 %v7063
    %7928 = vmatprep.subr.mxu0 %v7056
    %7929 = vmatpush2.msra.mxu0 %v7055
    %7930 = vmatprep.subr.mxu0 %v7048
    %7931 = vmatpush2.msra.mxu0 %v7047
    %7932 = vmatprep.subr.mxu0 %v7040
    %7933 = vmatpush2.msra.mxu0 %v7039
    %7934 = vmatprep.subr.mxu0 %v7032
    %7935 = vmatpush2.msra.mxu0 %v7031
    %7936 = vmatprep.subr.mxu0 %v7024
    %7937 = vmatpush2.msra.mxu0 %v7023
    %7938 = vmatprep.subr.mxu0 %v7016
    %7939 = vmatpush2.msra.mxu0 %v7015
    %7940 = vmatprep.subr.mxu0 %v7008
    %7941 = vmatpush2.msra.mxu0 %v7007
    %7942 = vmatprep.mubr.f32.mxu0 %v6592
    %7943 = vmatmul.mubr.f32.gmra.mxu0 %v6591
    %v7944 = vpop.f32.mrf.mxu0
    %v7945 = vadd.f32 %v7844, %v7944
    %v7946 = vpop.f32.mrf.mxu0
    %v7947 = vadd.f32 %v7846, %v7946
    %7948 = vmatprep.mubr.f32.mxu0 %v6596
    %7949 = vmatmul.mubr.f32.gmra.mxu0 %v6595
    %v7950 = vpop.f32.mrf.mxu0
    %v7951 = vadd.f32 %v7850, %v7950
    %v7952 = vpop.f32.mrf.mxu0
    %v7953 = vadd.f32 %v7852, %v7952
    %7954 = vmatprep.mubr.f32.mxu0 %v6600
    %7955 = vmatmul.mubr.f32.gmra.mxu0 %v6599
    %v7956 = vpop.f32.mrf.mxu0
    %v7957 = vadd.f32 %v7856, %v7956
    %v7958 = vpop.f32.mrf.mxu0
    %v7959 = vadd.f32 %v7858, %v7958
    %7960 = vmatprep.mubr.f32.mxu0 %v6604
    %7961 = vmatmul.mubr.f32.gmra.mxu0 %v6603
    %v7962 = vpop.f32.mrf.mxu0
    %v7963 = vadd.f32 %v7862, %v7962
    %v7964 = vpop.f32.mrf.mxu0
    %v7965 = vadd.f32 %v7864, %v7964
    %7966 = vmatprep.mubr.f32.mxu0 %v6608
    %7967 = vmatmul.mubr.f32.gmra.mxu0 %v6607
    %v7968 = vpop.f32.mrf.mxu0
    %v7969 = vadd.f32 %v7868, %v7968
    %v7970 = vpop.f32.mrf.mxu0
    %v7971 = vadd.f32 %v7870, %v7970
    %7972 = vmatprep.mubr.f32.mxu0 %v6612
    %7973 = vmatmul.mubr.f32.gmra.mxu0 %v6611
    %v7974 = vpop.f32.mrf.mxu0
    %v7975 = vadd.f32 %v7874, %v7974
    %v7976 = vpop.f32.mrf.mxu0
    %v7977 = vadd.f32 %v7876, %v7976
    %7978 = vdwg.mxu0
    %s7979 = sshll.u32 %s5102, 4
    %7980 = dma.done %s1615, %s7979
    %v7981 = vld [vmem:[%s17] sm:$0xff]
    %v7982 = vld [vmem:[%s18] sm:$0xff]
    %v7983 = vadd.f32 %v7357, %v7363
    %v7984 = vadd.f32 %v7983, %v7369
    %v7985 = vrot.slane %v7984, 4
    %v7986 = vadd.f32 %v7984, %v7985
    %v7987 = vrot.slane %v7986, 2
    %v7988 = vadd.f32 %v7986, %v7987
    %v7989 = vrot.slane %v7988, 1
    %v7990 = vadd.f32 %v7988, %v7989
    %v7991 = vadd.f32 %v7359, %v7365
    %v7992 = vadd.f32 %v7991, %v7371
    %v7993 = vrot.slane %v7992, 4
    %v7994 = vadd.f32 %v7992, %v7993
    %v7995 = vrot.slane %v7994, 2
    %v7996 = vadd.f32 %v7994, %v7995
    %v7997 = vrot.slane %v7996, 1
    %v7998 = vadd.f32 %v7996, %v7997
    %v7999 = vadd.f32 %v7559, %v7565
    %v8000 = vadd.f32 %v7999, %v7571
    %v8001 = vrot.slane %v8000, 4
    %v8002 = vadd.f32 %v8000, %v8001
    %v8003 = vrot.slane %v8002, 2
    %v8004 = vadd.f32 %v8002, %v8003
    %v8005 = vrot.slane %v8004, 1
    %v8006 = vadd.f32 %v8004, %v8005
    %v8007 = vadd.f32 %v7561, %v7567
    %v8008 = vadd.f32 %v8007, %v7573
    %v8009 = vrot.slane %v8008, 4
    %v8010 = vadd.f32 %v8008, %v8009
    %v8011 = vrot.slane %v8010, 2
    %v8012 = vadd.f32 %v8010, %v8011
    %v8013 = vrot.slane %v8012, 1
    %v8014 = vadd.f32 %v8012, %v8013
    %v8015 = vadd.f32 %v7761, %v7767
    %v8016 = vadd.f32 %v8015, %v7773
    %v8017 = vrot.slane %v8016, 4
    %v8018 = vadd.f32 %v8016, %v8017
    %v8019 = vrot.slane %v8018, 2
    %v8020 = vadd.f32 %v8018, %v8019
    %v8021 = vrot.slane %v8020, 1
    %v8022 = vadd.f32 %v8020, %v8021
    %v8023 = vadd.f32 %v7763, %v7769
    %v8024 = vadd.f32 %v8023, %v7775
    %v8025 = vrot.slane %v8024, 4
    %v8026 = vadd.f32 %v8024, %v8025
    %v8027 = vrot.slane %v8026, 2
    %v8028 = vadd.f32 %v8026, %v8027
    %v8029 = vrot.slane %v8028, 1
    %v8030 = vadd.f32 %v8028, %v8029
    %v8031 = vadd.f32 %v7963, %v7969
    %v8032 = vadd.f32 %v8031, %v7975
    %v8033 = vrot.slane %v8032, 4
    %v8034 = vadd.f32 %v8032, %v8033
    %v8035 = vrot.slane %v8034, 2
    %v8036 = vadd.f32 %v8034, %v8035
    %v8037 = vrot.slane %v8036, 1
    %v8038 = vadd.f32 %v8036, %v8037
    %v8039 = vadd.f32 %v7965, %v7971
    %v8040 = vadd.f32 %v8039, %v7977
    %v8041 = vrot.slane %v8040, 4
    %v8042 = vadd.f32 %v8040, %v8041
    %v8043 = vrot.slane %v8042, 2
    %v8044 = vadd.f32 %v8042, %v8043
    %v8045 = vrot.slane %v8044, 1
    %v8046 = vadd.f32 %v8044, %v8045
    %v8047 = vmul.f32 %v7990, %v5171
    %v8048 = vmul.f32 %v7998, %v5171
    %v8049 = vmul.f32 %v8006, %v5171
    %v8050 = vmul.f32 %v8014, %v5171
    %v8051 = vmul.f32 %v8022, %v5171
    %v8052 = vmul.f32 %v8030, %v5171
    %v8053 = vmul.f32 %v8038, %v5171
    %v8054 = vmul.f32 %v8046, %v5171
    %v8055 = vmul.f32 %v7357, %v7357
    %v8056 = vmul.f32 %v7359, %v7359
    %v8057 = vmul.f32 %v7559, %v7559
    %v8058 = vmul.f32 %v7561, %v7561
    %v8059 = vmul.f32 %v7761, %v7761
    %v8060 = vmul.f32 %v7763, %v7763
    %v8061 = vmul.f32 %v7963, %v7963
    %v8062 = vmul.f32 %v7965, %v7965
    %v8063 = vmul.f32 %v7363, %v7363
    %v8064 = vmul.f32 %v7365, %v7365
    %v8065 = vmul.f32 %v7565, %v7565
    %v8066 = vmul.f32 %v7567, %v7567
    %v8067 = vmul.f32 %v7767, %v7767
    %v8068 = vmul.f32 %v7769, %v7769
    %v8069 = vmul.f32 %v7969, %v7969
    %v8070 = vmul.f32 %v7971, %v7971
    %v8071 = vmul.f32 %v7369, %v7369
    %v8072 = vmul.f32 %v7371, %v7371
    %v8073 = vmul.f32 %v7571, %v7571
    %v8074 = vmul.f32 %v7573, %v7573
    %v8075 = vmul.f32 %v7773, %v7773
    %v8076 = vmul.f32 %v7775, %v7775
    %v8077 = vmul.f32 %v7975, %v7975
    %v8078 = vmul.f32 %v7977, %v7977
    %v8079 = vadd.f32 %v8055, %v8063
    %v8080 = vadd.f32 %v8079, %v8071
    %v8081 = vrot.slane %v8080, 4
    %v8082 = vadd.f32 %v8080, %v8081
    %v8083 = vrot.slane %v8082, 2
    %v8084 = vadd.f32 %v8082, %v8083
    %v8085 = vrot.slane %v8084, 1
    %v8086 = vadd.f32 %v8084, %v8085
    %v8087 = vadd.f32 %v8056, %v8064
    %v8088 = vadd.f32 %v8087, %v8072
    %v8089 = vrot.slane %v8088, 4
    %v8090 = vadd.f32 %v8088, %v8089
    %v8091 = vrot.slane %v8090, 2
    %v8092 = vadd.f32 %v8090, %v8091
    %v8093 = vrot.slane %v8092, 1
    %v8094 = vadd.f32 %v8092, %v8093
    %v8095 = vadd.f32 %v8057, %v8065
    %v8096 = vadd.f32 %v8095, %v8073
    %v8097 = vrot.slane %v8096, 4
    %v8098 = vadd.f32 %v8096, %v8097
    %v8099 = vrot.slane %v8098, 2
    %v8100 = vadd.f32 %v8098, %v8099
    %v8101 = vrot.slane %v8100, 1
    %v8102 = vadd.f32 %v8100, %v8101
    %v8103 = vadd.f32 %v8058, %v8066
    %v8104 = vadd.f32 %v8103, %v8074
    %v8105 = vrot.slane %v8104, 4
    %v8106 = vadd.f32 %v8104, %v8105
    %v8107 = vrot.slane %v8106, 2
    %v8108 = vadd.f32 %v8106, %v8107
    %v8109 = vrot.slane %v8108, 1
    %v8110 = vadd.f32 %v8108, %v8109
    %v8111 = vadd.f32 %v8059, %v8067
    %v8112 = vadd.f32 %v8111, %v8075
    %v8113 = vrot.slane %v8112, 4
    %v8114 = vadd.f32 %v8112, %v8113
    %v8115 = vrot.slane %v8114, 2
    %v8116 = vadd.f32 %v8114, %v8115
    %v8117 = vrot.slane %v8116, 1
    %v8118 = vadd.f32 %v8116, %v8117
    %v8119 = vadd.f32 %v8060, %v8068
    %v8120 = vadd.f32 %v8119, %v8076
    %v8121 = vrot.slane %v8120, 4
    %v8122 = vadd.f32 %v8120, %v8121
    %v8123 = vrot.slane %v8122, 2
    %v8124 = vadd.f32 %v8122, %v8123
    %v8125 = vrot.slane %v8124, 1
    %v8126 = vadd.f32 %v8124, %v8125
    %v8127 = vadd.f32 %v8061, %v8069
    %v8128 = vadd.f32 %v8127, %v8077
    %v8129 = vrot.slane %v8128, 4
    %v8130 = vadd.f32 %v8128, %v8129
    %v8131 = vrot.slane %v8130, 2
    %v8132 = vadd.f32 %v8130, %v8131
    %v8133 = vrot.slane %v8132, 1
    %v8134 = vadd.f32 %v8132, %v8133
    %v8135 = vadd.f32 %v8062, %v8070
    %v8136 = vadd.f32 %v8135, %v8078
    %v8137 = vrot.slane %v8136, 4
    %v8138 = vadd.f32 %v8136, %v8137
    %v8139 = vrot.slane %v8138, 2
    %v8140 = vadd.f32 %v8138, %v8139
    %v8141 = vrot.slane %v8140, 1
    %v8142 = vadd.f32 %v8140, %v8141
    %v8143 = vmul.f32 %v8086, %v5171
    %v8144 = vmul.f32 %v8094, %v5171
    %v8145 = vmul.f32 %v8102, %v5171
    %v8146 = vmul.f32 %v8110, %v5171
    %v8147 = vmul.f32 %v8118, %v5171
    %v8148 = vmul.f32 %v8126, %v5171
    %v8149 = vmul.f32 %v8134, %v5171
    %v8150 = vmul.f32 %v8142, %v5171
    %v8151 = vmul.f32 %v8047, %v8047
    %v8152 = vmul.f32 %v8048, %v8048
    %v8153 = vmul.f32 %v8049, %v8049
    %v8154 = vmul.f32 %v8050, %v8050
    %v8155 = vmul.f32 %v8051, %v8051
    %v8156 = vmul.f32 %v8052, %v8052
    %v8157 = vmul.f32 %v8053, %v8053
    %v8158 = vmul.f32 %v8054, %v8054
    %v8159 = vsub.f32 %v8143, %v8151
    %v8160 = vsub.f32 %v8144, %v8152
    %v8161 = vsub.f32 %v8145, %v8153
    %v8162 = vsub.f32 %v8146, %v8154
    %v8163 = vsub.f32 %v8147, %v8155
    %v8164 = vsub.f32 %v8148, %v8156
    %v8165 = vsub.f32 %v8149, %v8157
    %v8166 = vsub.f32 %v8150, %v8158
    %v8167 = vmax.f32 %v8159, 0.0
    %v8168 = vmax.f32 %v8160, 0.0
    %v8169 = vmax.f32 %v8161, 0.0
    %v8170 = vmax.f32 %v8162, 0.0
    %v8171 = vmax.f32 %v8163, 0.0
    %v8172 = vmax.f32 %v8164, 0.0
    %v8173 = vmax.f32 %v8165, 0.0
    %v8174 = vmax.f32 %v8166, 0.0
    %v8175 = vsub.f32 %v7357, %v8047
    %v8176 = vsub.f32 %v7359, %v8048
    %v8177 = vsub.f32 %v7559, %v8049
    %v8178 = vsub.f32 %v7561, %v8050
    %v8179 = vsub.f32 %v7761, %v8051
    %v8180 = vsub.f32 %v7763, %v8052
    %v8181 = vsub.f32 %v7963, %v8053
    %v8182 = vsub.f32 %v7965, %v8054
    %v8183 = vsub.f32 %v7363, %v8047
    %v8184 = vsub.f32 %v7365, %v8048
    %v8185 = vsub.f32 %v7565, %v8049
    %v8186 = vsub.f32 %v7567, %v8050
    %v8187 = vsub.f32 %v7767, %v8051
    %v8188 = vsub.f32 %v7769, %v8052
    %v8189 = vsub.f32 %v7969, %v8053
    %v8190 = vsub.f32 %v7971, %v8054
    %v8191 = vsub.f32 %v7369, %v8047
    %v8192 = vsub.f32 %v7371, %v8048
    %v8193 = vsub.f32 %v7571, %v8049
    %v8194 = vsub.f32 %v7573, %v8050
    %v8195 = vsub.f32 %v7773, %v8051
    %v8196 = vsub.f32 %v7775, %v8052
    %v8197 = vsub.f32 %v7975, %v8053
    %v8198 = vsub.f32 %v7977, %v8054
    %v8199 = vadd.f32 %v8167, 1e-05
    %v8200 = vadd.f32 %v8168, 1e-05
    %v8201 = vadd.f32 %v8169, 1e-05
    %v8202 = vadd.f32 %v8170, 1e-05
    %v8203 = vadd.f32 %v8171, 1e-05
    %v8204 = vadd.f32 %v8172, 1e-05
    %v8205 = vadd.f32 %v8173, 1e-05
    %v8206 = vadd.f32 %v8174, 1e-05
    %v8207 = vrsqrt.pop %v8199
    %v8208 = vrsqrt.pop %v8200
    %v8209 = vrsqrt.pop %v8201
    %v8210 = vrsqrt.pop %v8202
    %v8211 = vrsqrt.pop %v8203
    %v8212 = vrsqrt.pop %v8204
    %v8213 = vrsqrt.pop %v8205
    %v8214 = vrsqrt.pop %v8206
    %v8215 = vmul.f32 %v8175, %v8207
    %v8216 = vmul.f32 %v8176, %v8208
    %v8217 = vmul.f32 %v8177, %v8209
    %v8218 = vmul.f32 %v8178, %v8210
    %v8219 = vmul.f32 %v8179, %v8211
    %v8220 = vmul.f32 %v8180, %v8212
    %v8221 = vmul.f32 %v8181, %v8213
    %v8222 = vmul.f32 %v8182, %v8214
    %v8223 = vmul.f32 %v8183, %v8207
    %v8224 = vmul.f32 %v8184, %v8208
    %v8225 = vmul.f32 %v8185, %v8209
    %v8226 = vmul.f32 %v8186, %v8210
    %v8227 = vmul.f32 %v8187, %v8211
    %v8228 = vmul.f32 %v8188, %v8212
    %v8229 = vmul.f32 %v8189, %v8213
    %v8230 = vmul.f32 %v8190, %v8214
    %v8231 = vmul.f32 %v8191, %v8207
    %v8232 = vmul.f32 %v8192, %v8208
    %v8233 = vmul.f32 %v8193, %v8209
    %v8234 = vmul.f32 %v8194, %v8210
    %v8235 = vmul.f32 %v8195, %v8211
    %v8236 = vmul.f32 %v8196, %v8212
    %v8237 = vmul.f32 %v8197, %v8213
    %v8238 = vmul.f32 %v8198, %v8214
    %v8240 = vlaneseq
    %v8241 = vshrl.u32 %v8240, 7
    %v8242 = vsub.s32 0, %v8241
    %v8243 = vrot.slane %v7981, %v8242
    %v8244 = vlaneseq
    %v8245 = vshrl.u32 %v8244, 7
    %v8246 = vsub.s32 1, %v8245
    %v8247 = vrot.slane %v7981, %v8246
    %v8248 = vlaneseq
    %v8249 = vshrl.u32 %v8248, 7
    %v8250 = vsub.s32 2, %v8249
    %v8251 = vrot.slane %v7981, %v8250
    %v8252 = vlaneseq
    %v8253 = vshrl.u32 %v8252, 7
    %v8254 = vsub.s32 3, %v8253
    %v8255 = vrot.slane %v7981, %v8254
    %v8256 = vlaneseq
    %v8257 = vshrl.u32 %v8256, 7
    %v8258 = vsub.s32 4, %v8257
    %v8259 = vrot.slane %v7981, %v8258
    %v8260 = vlaneseq
    %v8261 = vshrl.u32 %v8260, 7
    %v8262 = vsub.s32 5, %v8261
    %v8263 = vrot.slane %v7981, %v8262
    %v8264 = vlaneseq
    %v8265 = vshrl.u32 %v8264, 7
    %v8266 = vsub.s32 6, %v8265
    %v8267 = vrot.slane %v7981, %v8266
    %v8268 = vlaneseq
    %v8269 = vshrl.u32 %v8268, 7
    %v8270 = vsub.s32 7, %v8269
    %v8271 = vrot.slane %v7981, %v8270
    %v8280 = vmul.f32 %v8215, %v8243
    %v8281 = vmul.f32 %v8216, %v8247
    %v8282 = vmul.f32 %v8217, %v8251
    %v8283 = vmul.f32 %v8218, %v8255
    %v8284 = vmul.f32 %v8219, %v8259
    %v8285 = vmul.f32 %v8220, %v8263
    %v8286 = vmul.f32 %v8221, %v8267
    %v8287 = vmul.f32 %v8222, %v8271
    %v8288 = vmul.f32 %v8223, %v8243
    %v8289 = vmul.f32 %v8224, %v8247
    %v8290 = vmul.f32 %v8225, %v8251
    %v8291 = vmul.f32 %v8226, %v8255
    %v8292 = vmul.f32 %v8227, %v8259
    %v8293 = vmul.f32 %v8228, %v8263
    %v8294 = vmul.f32 %v8229, %v8267
    %v8295 = vmul.f32 %v8230, %v8271
    %v8296 = vmul.f32 %v8231, %v8243
    %v8297 = vmul.f32 %v8232, %v8247
    %v8298 = vmul.f32 %v8233, %v8251
    %v8299 = vmul.f32 %v8234, %v8255
    %v8300 = vmul.f32 %v8235, %v8259
    %v8301 = vmul.f32 %v8236, %v8263
    %v8302 = vmul.f32 %v8237, %v8267
    %v8303 = vmul.f32 %v8238, %v8271
    %v8305 = vlaneseq
    %v8306 = vshrl.u32 %v8305, 7
    %v8307 = vsub.s32 0, %v8306
    %v8308 = vrot.slane %v7982, %v8307
    %v8309 = vlaneseq
    %v8310 = vshrl.u32 %v8309, 7
    %v8311 = vsub.s32 1, %v8310
    %v8312 = vrot.slane %v7982, %v8311
    %v8313 = vlaneseq
    %v8314 = vshrl.u32 %v8313, 7
    %v8315 = vsub.s32 2, %v8314
    %v8316 = vrot.slane %v7982, %v8315
    %v8317 = vlaneseq
    %v8318 = vshrl.u32 %v8317, 7
    %v8319 = vsub.s32 3, %v8318
    %v8320 = vrot.slane %v7982, %v8319
    %v8321 = vlaneseq
    %v8322 = vshrl.u32 %v8321, 7
    %v8323 = vsub.s32 4, %v8322
    %v8324 = vrot.slane %v7982, %v8323
    %v8325 = vlaneseq
    %v8326 = vshrl.u32 %v8325, 7
    %v8327 = vsub.s32 5, %v8326
    %v8328 = vrot.slane %v7982, %v8327
    %v8329 = vlaneseq
    %v8330 = vshrl.u32 %v8329, 7
    %v8331 = vsub.s32 6, %v8330
    %v8332 = vrot.slane %v7982, %v8331
    %v8333 = vlaneseq
    %v8334 = vshrl.u32 %v8333, 7
    %v8335 = vsub.s32 7, %v8334
    %v8336 = vrot.slane %v7982, %v8335
    %v8345 = vadd.f32 %v8280, %v8308
    %v8346 = vadd.f32 %v8281, %v8312
    %v8347 = vadd.f32 %v8282, %v8316
    %v8348 = vadd.f32 %v8283, %v8320
    %v8349 = vadd.f32 %v8284, %v8324
    %v8350 = vadd.f32 %v8285, %v8328
    %v8351 = vadd.f32 %v8286, %v8332
    %v8352 = vadd.f32 %v8287, %v8336
    %v8353 = vadd.f32 %v8288, %v8308
    %v8354 = vadd.f32 %v8289, %v8312
    %v8355 = vadd.f32 %v8290, %v8316
    %v8356 = vadd.f32 %v8291, %v8320
    %v8357 = vadd.f32 %v8292, %v8324
    %v8358 = vadd.f32 %v8293, %v8328
    %v8359 = vadd.f32 %v8294, %v8332
    %v8360 = vadd.f32 %v8295, %v8336
    %v8361 = vadd.f32 %v8296, %v8308
    %v8362 = vadd.f32 %v8297, %v8312
    %v8363 = vadd.f32 %v8298, %v8316
    %v8364 = vadd.f32 %v8299, %v8320
    %v8365 = vadd.f32 %v8300, %v8324
    %v8366 = vadd.f32 %v8301, %v8328
    %v8367 = vadd.f32 %v8302, %v8332
    %v8368 = vadd.f32 %v8303, %v8336
    %v8369 = vld [vmem:[#allocation5] sm:$0xff]
    %v8370 = vld [vmem:[#allocation5 + $0x8] sm:$0xff]
    %v8371 = vld [vmem:[#allocation5 + $0x10] sm:$0xff]
    %v8372 = vld [vmem:[#allocation5 + $0x18] sm:$0xff]
    %v8373 = vld [vmem:[#allocation5 + $0x20] sm:$0xff]
    %v8374 = vld [vmem:[#allocation5 + $0x28] sm:$0xff]
    %v8375 = vld [vmem:[#allocation5 + $0x30] sm:$0xff]
    %v8376 = vld [vmem:[#allocation5 + $0x38] sm:$0xff]
    %v8377 = vld [vmem:[#allocation5 + $0x40] sm:$0xff]
    %v8378 = vld [vmem:[#allocation5 + $0x48] sm:$0xff]
    %v8379 = vld [vmem:[#allocation5 + $0x50] sm:$0xff]
    %v8380 = vld [vmem:[#allocation5 + $0x58] sm:$0xff]
    %v8381 = vld [vmem:[#allocation5 + $0x60] sm:$0xff]
    %v8382 = vld [vmem:[#allocation5 + $0x68] sm:$0xff]
    %v8383 = vld [vmem:[#allocation5 + $0x70] sm:$0xff]
    %v8384 = vld [vmem:[#allocation5 + $0x78] sm:$0xff]
    %v8385 = vld [vmem:[#allocation5 + $0x80] sm:$0xff]
    %v8386 = vld [vmem:[#allocation5 + $0x88] sm:$0xff]
    %v8387 = vld [vmem:[#allocation5 + $0x90] sm:$0xff]
    %v8388 = vld [vmem:[#allocation5 + $0x98] sm:$0xff]
    %v8389 = vld [vmem:[#allocation5 + $0xa0] sm:$0xff]
    %v8390 = vld [vmem:[#allocation5 + $0xa8] sm:$0xff]
    %v8391 = vld [vmem:[#allocation5 + $0xb0] sm:$0xff]
    %v8392 = vld [vmem:[#allocation5 + $0xb8] sm:$0xff]
    %v8393 = vld [vmem:[#allocation5 + $0xc0] sm:$0xff]
    %v8394 = vld [vmem:[#allocation5 + $0xc8] sm:$0xff]
    %v8395 = vld [vmem:[#allocation5 + $0xd0] sm:$0xff]
    %v8396 = vld [vmem:[#allocation5 + $0xd8] sm:$0xff]
    %v8397 = vld [vmem:[#allocation5 + $0xe0] sm:$0xff]
    %v8398 = vld [vmem:[#allocation5 + $0xe8] sm:$0xff]
    %v8399 = vld [vmem:[#allocation5 + $0xf0] sm:$0xff]
    %v8400 = vld [vmem:[#allocation5 + $0xf8] sm:$0xff]
    %v8401 = vld [vmem:[#allocation5 + $0x100] sm:$0xff]
    %v8402 = vld [vmem:[#allocation5 + $0x108] sm:$0xff]
    %v8403 = vld [vmem:[#allocation5 + $0x110] sm:$0xff]
    %v8404 = vld [vmem:[#allocation5 + $0x118] sm:$0xff]
    %v8405 = vld [vmem:[#allocation5 + $0x120] sm:$0xff]
    %v8406 = vld [vmem:[#allocation5 + $0x128] sm:$0xff]
    %v8407 = vld [vmem:[#allocation5 + $0x130] sm:$0xff]
    %v8408 = vld [vmem:[#allocation5 + $0x138] sm:$0xff]
    %v8409 = vld [vmem:[#allocation5 + $0x140] sm:$0xff]
    %v8410 = vld [vmem:[#allocation5 + $0x148] sm:$0xff]
    %v8411 = vld [vmem:[#allocation5 + $0x150] sm:$0xff]
    %v8412 = vld [vmem:[#allocation5 + $0x158] sm:$0xff]
    %v8413 = vld [vmem:[#allocation5 + $0x160] sm:$0xff]
    %v8414 = vld [vmem:[#allocation5 + $0x168] sm:$0xff]
    %v8415 = vld [vmem:[#allocation5 + $0x170] sm:$0xff]
    %v8416 = vld [vmem:[#allocation5 + $0x178] sm:$0xff]
    %v8417 = vld [vmem:[#allocation5 + $0x180] sm:$0xff]
    %v8418 = vld [vmem:[#allocation5 + $0x188] sm:$0xff]
    %v8419 = vld [vmem:[#allocation5 + $0x190] sm:$0xff]
    %v8420 = vld [vmem:[#allocation5 + $0x198] sm:$0xff]
    %v8421 = vld [vmem:[#allocation5 + $0x1a0] sm:$0xff]
    %v8422 = vld [vmem:[#allocation5 + $0x1a8] sm:$0xff]
    %v8423 = vld [vmem:[#allocation5 + $0x1b0] sm:$0xff]
    %v8424 = vld [vmem:[#allocation5 + $0x1b8] sm:$0xff]
    %v8425 = vld [vmem:[#allocation5 + $0x1c0] sm:$0xff]
    %v8426 = vld [vmem:[#allocation5 + $0x1c8] sm:$0xff]
    %v8427 = vld [vmem:[#allocation5 + $0x1d0] sm:$0xff]
    %v8428 = vld [vmem:[#allocation5 + $0x1d8] sm:$0xff]
    %v8429 = vld [vmem:[#allocation5 + $0x1e0] sm:$0xff]
    %v8430 = vld [vmem:[#allocation5 + $0x1e8] sm:$0xff]
    %v8431 = vld [vmem:[#allocation5 + $0x1f0] sm:$0xff]
    %v8432 = vld [vmem:[#allocation5 + $0x1f8] sm:$0xff]
    %v8433 = vld [vmem:[#allocation5 + $0x200] sm:$0xff]
    %v8434 = vld [vmem:[#allocation5 + $0x208] sm:$0xff]
    %v8435 = vld [vmem:[#allocation5 + $0x210] sm:$0xff]
    %v8436 = vld [vmem:[#allocation5 + $0x218] sm:$0xff]
    %v8437 = vld [vmem:[#allocation5 + $0x220] sm:$0xff]
    %v8438 = vld [vmem:[#allocation5 + $0x228] sm:$0xff]
    %v8439 = vld [vmem:[#allocation5 + $0x230] sm:$0xff]
    %v8440 = vld [vmem:[#allocation5 + $0x238] sm:$0xff]
    %v8441 = vld [vmem:[#allocation5 + $0x240] sm:$0xff]
    %v8442 = vld [vmem:[#allocation5 + $0x248] sm:$0xff]
    %v8443 = vld [vmem:[#allocation5 + $0x250] sm:$0xff]
    %v8444 = vld [vmem:[#allocation5 + $0x258] sm:$0xff]
    %v8445 = vld [vmem:[#allocation5 + $0x260] sm:$0xff]
    %v8446 = vld [vmem:[#allocation5 + $0x268] sm:$0xff]
    %v8447 = vld [vmem:[#allocation5 + $0x270] sm:$0xff]
    %v8448 = vld [vmem:[#allocation5 + $0x278] sm:$0xff]
    %v8449 = vld [vmem:[#allocation5 + $0x280] sm:$0xff]
    %v8450 = vld [vmem:[#allocation5 + $0x288] sm:$0xff]
    %v8451 = vld [vmem:[#allocation5 + $0x290] sm:$0xff]
    %v8452 = vld [vmem:[#allocation5 + $0x298] sm:$0xff]
    %v8453 = vld [vmem:[#allocation5 + $0x2a0] sm:$0xff]
    %v8454 = vld [vmem:[#allocation5 + $0x2a8] sm:$0xff]
    %v8455 = vld [vmem:[#allocation5 + $0x2b0] sm:$0xff]
    %v8456 = vld [vmem:[#allocation5 + $0x2b8] sm:$0xff]
    %v8457 = vld [vmem:[#allocation5 + $0x2c0] sm:$0xff]
    %v8458 = vld [vmem:[#allocation5 + $0x2c8] sm:$0xff]
    %v8459 = vld [vmem:[#allocation5 + $0x2d0] sm:$0xff]
    %v8460 = vld [vmem:[#allocation5 + $0x2d8] sm:$0xff]
    %v8461 = vld [vmem:[#allocation5 + $0x2e0] sm:$0xff]
    %v8462 = vld [vmem:[#allocation5 + $0x2e8] sm:$0xff]
    %v8463 = vld [vmem:[#allocation5 + $0x2f0] sm:$0xff]
    %v8464 = vld [vmem:[#allocation5 + $0x2f8] sm:$0xff]
    %v8465 = vld [vmem:[#allocation5 + $0x300] sm:$0xff]
    %v8466 = vld [vmem:[#allocation5 + $0x308] sm:$0xff]
    %v8467 = vld [vmem:[#allocation5 + $0x310] sm:$0xff]
    %v8468 = vld [vmem:[#allocation5 + $0x318] sm:$0xff]
    %v8469 = vld [vmem:[#allocation5 + $0x320] sm:$0xff]
    %v8470 = vld [vmem:[#allocation5 + $0x328] sm:$0xff]
    %v8471 = vld [vmem:[#allocation5 + $0x330] sm:$0xff]
    %v8472 = vld [vmem:[#allocation5 + $0x338] sm:$0xff]
    %v8473 = vld [vmem:[#allocation5 + $0x340] sm:$0xff]
    %v8474 = vld [vmem:[#allocation5 + $0x348] sm:$0xff]
    %v8475 = vld [vmem:[#allocation5 + $0x350] sm:$0xff]
    %v8476 = vld [vmem:[#allocation5 + $0x358] sm:$0xff]
    %v8477 = vld [vmem:[#allocation5 + $0x360] sm:$0xff]
    %v8478 = vld [vmem:[#allocation5 + $0x368] sm:$0xff]
    %v8479 = vld [vmem:[#allocation5 + $0x370] sm:$0xff]
    %v8480 = vld [vmem:[#allocation5 + $0x378] sm:$0xff]
    %v8481 = vld [vmem:[#allocation5 + $0x380] sm:$0xff]
    %v8482 = vld [vmem:[#allocation5 + $0x388] sm:$0xff]
    %v8483 = vld [vmem:[#allocation5 + $0x390] sm:$0xff]
    %v8484 = vld [vmem:[#allocation5 + $0x398] sm:$0xff]
    %v8485 = vld [vmem:[#allocation5 + $0x3a0] sm:$0xff]
    %v8486 = vld [vmem:[#allocation5 + $0x3a8] sm:$0xff]
    %v8487 = vld [vmem:[#allocation5 + $0x3b0] sm:$0xff]
    %v8488 = vld [vmem:[#allocation5 + $0x3b8] sm:$0xff]
    %v8489 = vld [vmem:[#allocation5 + $0x3c0] sm:$0xff]
    %v8490 = vld [vmem:[#allocation5 + $0x3c8] sm:$0xff]
    %v8491 = vld [vmem:[#allocation5 + $0x3d0] sm:$0xff]
    %v8492 = vld [vmem:[#allocation5 + $0x3d8] sm:$0xff]
    %v8493 = vld [vmem:[#allocation5 + $0x3e0] sm:$0xff]
    %v8494 = vld [vmem:[#allocation5 + $0x3e8] sm:$0xff]
    %v8495 = vld [vmem:[#allocation5 + $0x3f0] sm:$0xff]
    %v8496 = vld [vmem:[#allocation5 + $0x3f8] sm:$0xff]
    %v8497 = vld [vmem:[%s20] sm:$0x1]
    %v8499 = vlaneseq
    %v8500 = vshrl.u32 %v8499, 7
    %v8501 = vsub.s32 0, %v8500
    %v8502 = vrot.slane %v8497, %v8501
    %8504 = vmatprep.subr.mxu0 0.0
    %8505 = vmatpush1.msra.mxu0 %v8384
    %8506 = vmatprep.subr.mxu0 0.0
    %8507 = vmatpush1.msra.mxu0 %v8383
    %8508 = vmatprep.subr.mxu0 0.0
    %8509 = vmatpush1.msra.mxu0 %v8382
    %8510 = vmatprep.subr.mxu0 0.0
    %8511 = vmatpush1.msra.mxu0 %v8381
    %8512 = vmatprep.subr.mxu0 0.0
    %8513 = vmatpush1.msra.mxu0 %v8380
    %8514 = vmatprep.subr.mxu0 0.0
    %8515 = vmatpush1.msra.mxu0 %v8379
    %8516 = vmatprep.subr.mxu0 0.0
    %8517 = vmatpush1.msra.mxu0 %v8378
    %8518 = vmatprep.subr.mxu0 0.0
    %8519 = vmatpush1.msra.mxu0 %v8377
    %8520 = vmatprep.subr.mxu0 0.0
    %8521 = vmatpush1.msra.mxu0 %v8376
    %8522 = vmatprep.subr.mxu0 0.0
    %8523 = vmatpush1.msra.mxu0 %v8375
    %8524 = vmatprep.subr.mxu0 0.0
    %8525 = vmatpush1.msra.mxu0 %v8374
    %8526 = vmatprep.subr.mxu0 0.0
    %8527 = vmatpush1.msra.mxu0 %v8373
    %8528 = vmatprep.subr.mxu0 0.0
    %8529 = vmatpush1.msra.mxu0 %v8372
    %8530 = vmatprep.subr.mxu0 0.0
    %8531 = vmatpush1.msra.mxu0 %v8371
    %8532 = vmatprep.subr.mxu0 0.0
    %8533 = vmatpush1.msra.mxu0 %v8370
    %8534 = vmatprep.subr.mxu0 0.0
    %8535 = vmatpush1.msra.mxu0 %v8369
    %8536 = vmatprep.subr.mxu0 0.0
    %8537 = vmatpush2.msra.mxu0 %v8400
    %8538 = vmatprep.subr.mxu0 0.0
    %8539 = vmatpush2.msra.mxu0 %v8399
    %8540 = vmatprep.subr.mxu0 0.0
    %8541 = vmatpush2.msra.mxu0 %v8398
    %8542 = vmatprep.subr.mxu0 0.0
    %8543 = vmatpush2.msra.mxu0 %v8397
    %8544 = vmatprep.subr.mxu0 0.0
    %8545 = vmatpush2.msra.mxu0 %v8396
    %8546 = vmatprep.subr.mxu0 0.0
    %8547 = vmatpush2.msra.mxu0 %v8395
    %8548 = vmatprep.subr.mxu0 0.0
    %8549 = vmatpush2.msra.mxu0 %v8394
    %8550 = vmatprep.subr.mxu0 0.0
    %8551 = vmatpush2.msra.mxu0 %v8393
    %8552 = vmatprep.subr.mxu0 0.0
    %8553 = vmatpush2.msra.mxu0 %v8392
    %8554 = vmatprep.subr.mxu0 0.0
    %8555 = vmatpush2.msra.mxu0 %v8391
    %8556 = vmatprep.subr.mxu0 0.0
    %8557 = vmatpush2.msra.mxu0 %v8390
    %8558 = vmatprep.subr.mxu0 0.0
    %8559 = vmatpush2.msra.mxu0 %v8389
    %8560 = vmatprep.subr.mxu0 0.0
    %8561 = vmatpush2.msra.mxu0 %v8388
    %8562 = vmatprep.subr.mxu0 0.0
    %8563 = vmatpush2.msra.mxu0 %v8387
    %8564 = vmatprep.subr.mxu0 0.0
    %8565 = vmatpush2.msra.mxu0 %v8386
    %8566 = vmatprep.subr.mxu0 0.0
    %8567 = vmatpush2.msra.mxu0 %v8385
    %8568 = vmatprep.mubr.f32.mxu0 %v8346
    %8569 = vmatmul.mubr.f32.gmra.mxu0 %v8345
    %v8570 = vpop.f32.mrf.mxu0
    %v8571 = vadd.f32 %v8502, %v8570
    %v8572 = vpop.f32.mrf.mxu0
    %8573 = vmatprep.mubr.f32.mxu0 %v8354
    %8574 = vmatmul.mubr.f32.gmra.mxu0 %v8353
    %v8575 = vpop.f32.mrf.mxu0
    %v8576 = vadd.f32 %v8502, %v8575
    %v8577 = vpop.f32.mrf.mxu0
    %8578 = vmatprep.mubr.f32.mxu0 %v8362
    %8579 = vmatmul.mubr.f32.gmra.mxu0 %v8361
    %v8580 = vpop.f32.mrf.mxu0
    %v8581 = vadd.f32 %v8502, %v8580
    %v8582 = vpop.f32.mrf.mxu0
    %8583 = vdwg.mxu0
    %8584 = vmatprep.subr.mxu0 0.0
    %8585 = vmatpush1.msra.mxu0 %v8416
    %8586 = vmatprep.subr.mxu0 0.0
    %8587 = vmatpush1.msra.mxu0 %v8415
    %8588 = vmatprep.subr.mxu0 0.0
    %8589 = vmatpush1.msra.mxu0 %v8414
    %8590 = vmatprep.subr.mxu0 0.0
    %8591 = vmatpush1.msra.mxu0 %v8413
    %8592 = vmatprep.subr.mxu0 0.0
    %8593 = vmatpush1.msra.mxu0 %v8412
    %8594 = vmatprep.subr.mxu0 0.0
    %8595 = vmatpush1.msra.mxu0 %v8411
    %8596 = vmatprep.subr.mxu0 0.0
    %8597 = vmatpush1.msra.mxu0 %v8410
    %8598 = vmatprep.subr.mxu0 0.0
    %8599 = vmatpush1.msra.mxu0 %v8409
    %8600 = vmatprep.subr.mxu0 0.0
    %8601 = vmatpush1.msra.mxu0 %v8408
    %8602 = vmatprep.subr.mxu0 0.0
    %8603 = vmatpush1.msra.mxu0 %v8407
    %8604 = vmatprep.subr.mxu0 0.0
    %8605 = vmatpush1.msra.mxu0 %v8406
    %8606 = vmatprep.subr.mxu0 0.0
    %8607 = vmatpush1.msra.mxu0 %v8405
    %8608 = vmatprep.subr.mxu0 0.0
    %8609 = vmatpush1.msra.mxu0 %v8404
    %8610 = vmatprep.subr.mxu0 0.0
    %8611 = vmatpush1.msra.mxu0 %v8403
    %8612 = vmatprep.subr.mxu0 0.0
    %8613 = vmatpush1.msra.mxu0 %v8402
    %8614 = vmatprep.subr.mxu0 0.0
    %8615 = vmatpush1.msra.mxu0 %v8401
    %8616 = vmatprep.subr.mxu0 0.0
    %8617 = vmatpush2.msra.mxu0 %v8432
    %8618 = vmatprep.subr.mxu0 0.0
    %8619 = vmatpush2.msra.mxu0 %v8431
    %8620 = vmatprep.subr.mxu0 0.0
    %8621 = vmatpush2.msra.mxu0 %v8430
    %8622 = vmatprep.subr.mxu0 0.0
    %8623 = vmatpush2.msra.mxu0 %v8429
    %8624 = vmatprep.subr.mxu0 0.0
    %8625 = vmatpush2.msra.mxu0 %v8428
    %8626 = vmatprep.subr.mxu0 0.0
    %8627 = vmatpush2.msra.mxu0 %v8427
    %8628 = vmatprep.subr.mxu0 0.0
    %8629 = vmatpush2.msra.mxu0 %v8426
    %8630 = vmatprep.subr.mxu0 0.0
    %8631 = vmatpush2.msra.mxu0 %v8425
    %8632 = vmatprep.subr.mxu0 0.0
    %8633 = vmatpush2.msra.mxu0 %v8424
    %8634 = vmatprep.subr.mxu0 0.0
    %8635 = vmatpush2.msra.mxu0 %v8423
    %8636 = vmatprep.subr.mxu0 0.0
    %8637 = vmatpush2.msra.mxu0 %v8422
    %8638 = vmatprep.subr.mxu0 0.0
    %8639 = vmatpush2.msra.mxu0 %v8421
    %8640 = vmatprep.subr.mxu0 0.0
    %8641 = vmatpush2.msra.mxu0 %v8420
    %8642 = vmatprep.subr.mxu0 0.0
    %8643 = vmatpush2.msra.mxu0 %v8419
    %8644 = vmatprep.subr.mxu0 0.0
    %8645 = vmatpush2.msra.mxu0 %v8418
    %8646 = vmatprep.subr.mxu0 0.0
    %8647 = vmatpush2.msra.mxu0 %v8417
    %8648 = vmatprep.mubr.f32.mxu0 %v8348
    %8649 = vmatmul.mubr.f32.gmra.mxu0 %v8347
    %v8650 = vpop.f32.mrf.mxu0
    %v8651 = vadd.f32 %v8571, %v8650
    %v8652 = vpop.f32.mrf.mxu0
    %8653 = vmatprep.mubr.f32.mxu0 %v8356
    %8654 = vmatmul.mubr.f32.gmra.mxu0 %v8355
    %v8655 = vpop.f32.mrf.mxu0
    %v8656 = vadd.f32 %v8576, %v8655
    %v8657 = vpop.f32.mrf.mxu0
    %8658 = vmatprep.mubr.f32.mxu0 %v8364
    %8659 = vmatmul.mubr.f32.gmra.mxu0 %v8363
    %v8660 = vpop.f32.mrf.mxu0
    %v8661 = vadd.f32 %v8581, %v8660
    %v8662 = vpop.f32.mrf.mxu0
    %8663 = vdwg.mxu0
    %8664 = vmatprep.subr.mxu0 0.0
    %8665 = vmatpush1.msra.mxu0 %v8448
    %8666 = vmatprep.subr.mxu0 0.0
    %8667 = vmatpush1.msra.mxu0 %v8447
    %8668 = vmatprep.subr.mxu0 0.0
    %8669 = vmatpush1.msra.mxu0 %v8446
    %8670 = vmatprep.subr.mxu0 0.0
    %8671 = vmatpush1.msra.mxu0 %v8445
    %8672 = vmatprep.subr.mxu0 0.0
    %8673 = vmatpush1.msra.mxu0 %v8444
    %8674 = vmatprep.subr.mxu0 0.0
    %8675 = vmatpush1.msra.mxu0 %v8443
    %8676 = vmatprep.subr.mxu0 0.0
    %8677 = vmatpush1.msra.mxu0 %v8442
    %8678 = vmatprep.subr.mxu0 0.0
    %8679 = vmatpush1.msra.mxu0 %v8441
    %8680 = vmatprep.subr.mxu0 0.0
    %8681 = vmatpush1.msra.mxu0 %v8440
    %8682 = vmatprep.subr.mxu0 0.0
    %8683 = vmatpush1.msra.mxu0 %v8439
    %8684 = vmatprep.subr.mxu0 0.0
    %8685 = vmatpush1.msra.mxu0 %v8438
    %8686 = vmatprep.subr.mxu0 0.0
    %8687 = vmatpush1.msra.mxu0 %v8437
    %8688 = vmatprep.subr.mxu0 0.0
    %8689 = vmatpush1.msra.mxu0 %v8436
    %8690 = vmatprep.subr.mxu0 0.0
    %8691 = vmatpush1.msra.mxu0 %v8435
    %8692 = vmatprep.subr.mxu0 0.0
    %8693 = vmatpush1.msra.mxu0 %v8434
    %8694 = vmatprep.subr.mxu0 0.0
    %8695 = vmatpush1.msra.mxu0 %v8433
    %8696 = vmatprep.subr.mxu0 0.0
    %8697 = vmatpush2.msra.mxu0 %v8464
    %8698 = vmatprep.subr.mxu0 0.0
    %8699 = vmatpush2.msra.mxu0 %v8463
    %8700 = vmatprep.subr.mxu0 0.0
    %8701 = vmatpush2.msra.mxu0 %v8462
    %8702 = vmatprep.subr.mxu0 0.0
    %8703 = vmatpush2.msra.mxu0 %v8461
    %8704 = vmatprep.subr.mxu0 0.0
    %8705 = vmatpush2.msra.mxu0 %v8460
    %8706 = vmatprep.subr.mxu0 0.0
    %8707 = vmatpush2.msra.mxu0 %v8459
    %8708 = vmatprep.subr.mxu0 0.0
    %8709 = vmatpush2.msra.mxu0 %v8458
    %8710 = vmatprep.subr.mxu0 0.0
    %8711 = vmatpush2.msra.mxu0 %v8457
    %8712 = vmatprep.subr.mxu0 0.0
    %8713 = vmatpush2.msra.mxu0 %v8456
    %8714 = vmatprep.subr.mxu0 0.0
    %8715 = vmatpush2.msra.mxu0 %v8455
    %8716 = vmatprep.subr.mxu0 0.0
    %8717 = vmatpush2.msra.mxu0 %v8454
    %8718 = vmatprep.subr.mxu0 0.0
    %8719 = vmatpush2.msra.mxu0 %v8453
    %8720 = vmatprep.subr.mxu0 0.0
    %8721 = vmatpush2.msra.mxu0 %v8452
    %8722 = vmatprep.subr.mxu0 0.0
    %8723 = vmatpush2.msra.mxu0 %v8451
    %8724 = vmatprep.subr.mxu0 0.0
    %8725 = vmatpush2.msra.mxu0 %v8450
    %8726 = vmatprep.subr.mxu0 0.0
    %8727 = vmatpush2.msra.mxu0 %v8449
    %8728 = vmatprep.mubr.f32.mxu0 %v8350
    %8729 = vmatmul.mubr.f32.gmra.mxu0 %v8349
    %v8730 = vpop.f32.mrf.mxu0
    %v8731 = vadd.f32 %v8651, %v8730
    %v8732 = vpop.f32.mrf.mxu0
    %8733 = vmatprep.mubr.f32.mxu0 %v8358
    %8734 = vmatmul.mubr.f32.gmra.mxu0 %v8357
    %v8735 = vpop.f32.mrf.mxu0
    %v8736 = vadd.f32 %v8656, %v8735
    %v8737 = vpop.f32.mrf.mxu0
    %8738 = vmatprep.mubr.f32.mxu0 %v8366
    %8739 = vmatmul.mubr.f32.gmra.mxu0 %v8365
    %v8740 = vpop.f32.mrf.mxu0
    %v8741 = vadd.f32 %v8661, %v8740
    %v8742 = vpop.f32.mrf.mxu0
    %8743 = vdwg.mxu0
    %8744 = vmatprep.subr.mxu0 0.0
    %8745 = vmatpush1.msra.mxu0 %v8480
    %8746 = vmatprep.subr.mxu0 0.0
    %8747 = vmatpush1.msra.mxu0 %v8479
    %8748 = vmatprep.subr.mxu0 0.0
    %8749 = vmatpush1.msra.mxu0 %v8478
    %8750 = vmatprep.subr.mxu0 0.0
    %8751 = vmatpush1.msra.mxu0 %v8477
    %8752 = vmatprep.subr.mxu0 0.0
    %8753 = vmatpush1.msra.mxu0 %v8476
    %8754 = vmatprep.subr.mxu0 0.0
    %8755 = vmatpush1.msra.mxu0 %v8475
    %8756 = vmatprep.subr.mxu0 0.0
    %8757 = vmatpush1.msra.mxu0 %v8474
    %8758 = vmatprep.subr.mxu0 0.0
    %8759 = vmatpush1.msra.mxu0 %v8473
    %8760 = vmatprep.subr.mxu0 0.0
    %8761 = vmatpush1.msra.mxu0 %v8472
    %8762 = vmatprep.subr.mxu0 0.0
    %8763 = vmatpush1.msra.mxu0 %v8471
    %8764 = vmatprep.subr.mxu0 0.0
    %8765 = vmatpush1.msra.mxu0 %v8470
    %8766 = vmatprep.subr.mxu0 0.0
    %8767 = vmatpush1.msra.mxu0 %v8469
    %8768 = vmatprep.subr.mxu0 0.0
    %8769 = vmatpush1.msra.mxu0 %v8468
    %8770 = vmatprep.subr.mxu0 0.0
    %8771 = vmatpush1.msra.mxu0 %v8467
    %8772 = vmatprep.subr.mxu0 0.0
    %8773 = vmatpush1.msra.mxu0 %v8466
    %8774 = vmatprep.subr.mxu0 0.0
    %8775 = vmatpush1.msra.mxu0 %v8465
    %8776 = vmatprep.subr.mxu0 0.0
    %8777 = vmatpush2.msra.mxu0 %v8496
    %8778 = vmatprep.subr.mxu0 0.0
    %8779 = vmatpush2.msra.mxu0 %v8495
    %8780 = vmatprep.subr.mxu0 0.0
    %8781 = vmatpush2.msra.mxu0 %v8494
    %8782 = vmatprep.subr.mxu0 0.0
    %8783 = vmatpush2.msra.mxu0 %v8493
    %8784 = vmatprep.subr.mxu0 0.0
    %8785 = vmatpush2.msra.mxu0 %v8492
    %8786 = vmatprep.subr.mxu0 0.0
    %8787 = vmatpush2.msra.mxu0 %v8491
    %8788 = vmatprep.subr.mxu0 0.0
    %8789 = vmatpush2.msra.mxu0 %v8490
    %8790 = vmatprep.subr.mxu0 0.0
    %8791 = vmatpush2.msra.mxu0 %v8489
    %8792 = vmatprep.subr.mxu0 0.0
    %8793 = vmatpush2.msra.mxu0 %v8488
    %8794 = vmatprep.subr.mxu0 0.0
    %8795 = vmatpush2.msra.mxu0 %v8487
    %8796 = vmatprep.subr.mxu0 0.0
    %8797 = vmatpush2.msra.mxu0 %v8486
    %8798 = vmatprep.subr.mxu0 0.0
    %8799 = vmatpush2.msra.mxu0 %v8485
    %8800 = vmatprep.subr.mxu0 0.0
    %8801 = vmatpush2.msra.mxu0 %v8484
    %8802 = vmatprep.subr.mxu0 0.0
    %8803 = vmatpush2.msra.mxu0 %v8483
    %8804 = vmatprep.subr.mxu0 0.0
    %8805 = vmatpush2.msra.mxu0 %v8482
    %8806 = vmatprep.subr.mxu0 0.0
    %8807 = vmatpush2.msra.mxu0 %v8481
    %8808 = vmatprep.mubr.f32.mxu0 %v8352
    %8809 = vmatmul.mubr.f32.gmra.mxu0 %v8351
    %v8810 = vpop.f32.mrf.mxu0
    %v8811 = vadd.f32 %v8731, %v8810
    %v8812 = vpop.f32.mrf.mxu0
    %8813 = vmatprep.mubr.f32.mxu0 %v8360
    %8814 = vmatmul.mubr.f32.gmra.mxu0 %v8359
    %v8815 = vpop.f32.mrf.mxu0
    %v8816 = vadd.f32 %v8736, %v8815
    %v8817 = vpop.f32.mrf.mxu0
    %8818 = vmatprep.mubr.f32.mxu0 %v8368
    %8819 = vmatmul.mubr.f32.gmra.mxu0 %v8367
    %v8820 = vpop.f32.mrf.mxu0
    %v8821 = vadd.f32 %v8741, %v8820
    %v8822 = vpop.f32.mrf.mxu0
    %8823 = vdwg.mxu0
    %v8824 = vsub.f32 %v8811, %v8816
    %v8825 = vmul.f32 %v8824, %v8824
    %8826 = vadd.xlane.f32.xlu0 %v8825
    %v8827 = vpop.xlane.xlu0 %8826
    %v8828 = vsub.f32 %v8811, %v8821
    %v8829 = vmul.f32 %v8828, %v8828
    %8830 = vadd.xlane.f32.xlu0 %v8829
    %v8831 = vpop.xlane.xlu0 %8830
    %v8832 = vsub.f32 %v8827, %v8831
    %v8833 = vadd.f32 %v8832, 1.0
    %v8834 = vmax.f32 %v8833, 0.0
    %v8835 = vsel %vm5963, %v8834, 0.0
    %8836 = vadd.xlane.f32.xlu0 %v8835
    %v8837 = vpop.xlane.xlu0 %8836
    %v8838 = vrot.slane %v8837, 4
    %v8839 = vadd.f32 %v8837, %v8838
    %v8840 = vrot.slane %v8839, 2
    %v8841 = vadd.f32 %v8839, %v8840
    %v8842 = vrot.slane %v8841, 1
    %v8843 = vadd.f32 %v8841, %v8842
    %s8844 = vtos %v8843
    %v8845 = vstv %s8844
    %v8846 = vmul.f32 %v8845, %v5975
    %v8847 = vstv %s81
    %v8848 = vrcp.pop %v8847
    %v8849 = vmul.f32 -10000.0, %v8848
    %v8850 = vmul.f32 %v8849, 1.442695
    %v8851 = vpow.pop %v8850
    %v8852 = vsub.f32 1.0, %v8851
    %v8853 = vmul.f32 %v8852, %v8846
    %v8854 = vmul.f32 %v8851, %v5976
    %v8855 = vadd.f32 %v8854, %v8853
    %s8856 = sshll.u32 %s5102, 4
    %8857 = dma.done %s1913, %s8856
    %v8858 = vld [vmem:[#allocation6] sm:$0xff]
    %v8859 = vld [vmem:[#allocation6 + $0x8] sm:$0xff]
    %v8860 = vld [vmem:[#allocation6 + $0x10] sm:$0xff]
    %v8861 = vld [vmem:[#allocation6 + $0x18] sm:$0xff]
    %v8862 = vld [vmem:[#allocation6 + $0x20] sm:$0xff]
    %v8863 = vld [vmem:[#allocation6 + $0x28] sm:$0xff]
    %v8864 = vld [vmem:[#allocation6 + $0x30] sm:$0xff]
    %v8865 = vld [vmem:[#allocation6 + $0x38] sm:$0xff]
    %v8866 = vld [vmem:[#allocation6 + $0x40] sm:$0xff]
    %v8867 = vld [vmem:[#allocation6 + $0x48] sm:$0xff]
    %v8868 = vld [vmem:[#allocation6 + $0x50] sm:$0xff]
    %v8869 = vld [vmem:[#allocation6 + $0x58] sm:$0xff]
    %v8870 = vld [vmem:[#allocation6 + $0x60] sm:$0xff]
    %v8871 = vld [vmem:[#allocation6 + $0x68] sm:$0xff]
    %v8872 = vld [vmem:[#allocation6 + $0x70] sm:$0xff]
    %v8873 = vld [vmem:[#allocation6 + $0x78] sm:$0xff]
    %v8874 = vld [vmem:[#allocation6 + $0x80] sm:$0xff]
    %v8875 = vld [vmem:[#allocation6 + $0x88] sm:$0xff]
    %v8876 = vld [vmem:[#allocation6 + $0x90] sm:$0xff]
    %v8877 = vld [vmem:[#allocation6 + $0x98] sm:$0xff]
    %v8878 = vld [vmem:[#allocation6 + $0xa0] sm:$0xff]
    %v8879 = vld [vmem:[#allocation6 + $0xa8] sm:$0xff]
    %v8880 = vld [vmem:[#allocation6 + $0xb0] sm:$0xff]
    %v8881 = vld [vmem:[#allocation6 + $0xb8] sm:$0xff]
    %v8882 = vld [vmem:[#allocation6 + $0xc0] sm:$0xff]
    %v8883 = vld [vmem:[#allocation6 + $0xc8] sm:$0xff]
    %v8884 = vld [vmem:[#allocation6 + $0xd0] sm:$0xff]
    %v8885 = vld [vmem:[#allocation6 + $0xd8] sm:$0xff]
    %v8886 = vld [vmem:[#allocation6 + $0xe0] sm:$0xff]
    %v8887 = vld [vmem:[#allocation6 + $0xe8] sm:$0xff]
    %v8888 = vld [vmem:[#allocation6 + $0xf0] sm:$0xff]
    %v8889 = vld [vmem:[#allocation6 + $0xf8] sm:$0xff]
    %v8890 = vld [vmem:[#allocation6 + $0x100] sm:$0xff]
    %v8891 = vld [vmem:[#allocation6 + $0x108] sm:$0xff]
    %v8892 = vld [vmem:[#allocation6 + $0x110] sm:$0xff]
    %v8893 = vld [vmem:[#allocation6 + $0x118] sm:$0xff]
    %v8894 = vld [vmem:[#allocation6 + $0x120] sm:$0xff]
    %v8895 = vld [vmem:[#allocation6 + $0x128] sm:$0xff]
    %v8896 = vld [vmem:[#allocation6 + $0x130] sm:$0xff]
    %v8897 = vld [vmem:[#allocation6 + $0x138] sm:$0xff]
    %v8898 = vld [vmem:[#allocation6 + $0x140] sm:$0xff]
    %v8899 = vld [vmem:[#allocation6 + $0x148] sm:$0xff]
    %v8900 = vld [vmem:[#allocation6 + $0x150] sm:$0xff]
    %v8901 = vld [vmem:[#allocation6 + $0x158] sm:$0xff]
    %v8902 = vld [vmem:[#allocation6 + $0x160] sm:$0xff]
    %v8903 = vld [vmem:[#allocation6 + $0x168] sm:$0xff]
    %v8904 = vld [vmem:[#allocation6 + $0x170] sm:$0xff]
    %v8905 = vld [vmem:[#allocation6 + $0x178] sm:$0xff]
    %v8906 = vld [vmem:[#allocation6 + $0x180] sm:$0xff]
    %v8907 = vld [vmem:[#allocation6 + $0x188] sm:$0xff]
    %v8908 = vld [vmem:[#allocation6 + $0x190] sm:$0xff]
    %v8909 = vld [vmem:[#allocation6 + $0x198] sm:$0xff]
    %v8910 = vld [vmem:[#allocation6 + $0x1a0] sm:$0xff]
    %v8911 = vld [vmem:[#allocation6 + $0x1a8] sm:$0xff]
    %v8912 = vld [vmem:[#allocation6 + $0x1b0] sm:$0xff]
    %v8913 = vld [vmem:[#allocation6 + $0x1b8] sm:$0xff]
    %v8914 = vld [vmem:[#allocation6 + $0x1c0] sm:$0xff]
    %v8915 = vld [vmem:[#allocation6 + $0x1c8] sm:$0xff]
    %v8916 = vld [vmem:[#allocation6 + $0x1d0] sm:$0xff]
    %v8917 = vld [vmem:[#allocation6 + $0x1d8] sm:$0xff]
    %v8918 = vld [vmem:[#allocation6 + $0x1e0] sm:$0xff]
    %v8919 = vld [vmem:[#allocation6 + $0x1e8] sm:$0xff]
    %v8920 = vld [vmem:[#allocation6 + $0x1f0] sm:$0xff]
    %v8921 = vld [vmem:[#allocation6 + $0x1f8] sm:$0xff]
    %v8922 = vld [vmem:[#allocation6 + $0x200] sm:$0xff]
    %v8923 = vld [vmem:[#allocation6 + $0x208] sm:$0xff]
    %v8924 = vld [vmem:[#allocation6 + $0x210] sm:$0xff]
    %v8925 = vld [vmem:[#allocation6 + $0x218] sm:$0xff]
    %v8926 = vld [vmem:[#allocation6 + $0x220] sm:$0xff]
    %v8927 = vld [vmem:[#allocation6 + $0x228] sm:$0xff]
    %v8928 = vld [vmem:[#allocation6 + $0x230] sm:$0xff]
    %v8929 = vld [vmem:[#allocation6 + $0x238] sm:$0xff]
    %v8930 = vld [vmem:[#allocation6 + $0x240] sm:$0xff]
    %v8931 = vld [vmem:[#allocation6 + $0x248] sm:$0xff]
    %v8932 = vld [vmem:[#allocation6 + $0x250] sm:$0xff]
    %v8933 = vld [vmem:[#allocation6 + $0x258] sm:$0xff]
    %v8934 = vld [vmem:[#allocation6 + $0x260] sm:$0xff]
    %v8935 = vld [vmem:[#allocation6 + $0x268] sm:$0xff]
    %v8936 = vld [vmem:[#allocation6 + $0x270] sm:$0xff]
    %v8937 = vld [vmem:[#allocation6 + $0x278] sm:$0xff]
    %v8938 = vld [vmem:[#allocation6 + $0x280] sm:$0xff]
    %v8939 = vld [vmem:[#allocation6 + $0x288] sm:$0xff]
    %v8940 = vld [vmem:[#allocation6 + $0x290] sm:$0xff]
    %v8941 = vld [vmem:[#allocation6 + $0x298] sm:$0xff]
    %v8942 = vld [vmem:[#allocation6 + $0x2a0] sm:$0xff]
    %v8943 = vld [vmem:[#allocation6 + $0x2a8] sm:$0xff]
    %v8944 = vld [vmem:[#allocation6 + $0x2b0] sm:$0xff]
    %v8945 = vld [vmem:[#allocation6 + $0x2b8] sm:$0xff]
    %v8946 = vld [vmem:[#allocation6 + $0x2c0] sm:$0xff]
    %v8947 = vld [vmem:[#allocation6 + $0x2c8] sm:$0xff]
    %v8948 = vld [vmem:[#allocation6 + $0x2d0] sm:$0xff]
    %v8949 = vld [vmem:[#allocation6 + $0x2d8] sm:$0xff]
    %v8950 = vld [vmem:[#allocation6 + $0x2e0] sm:$0xff]
    %v8951 = vld [vmem:[#allocation6 + $0x2e8] sm:$0xff]
    %v8952 = vld [vmem:[#allocation6 + $0x2f0] sm:$0xff]
    %v8953 = vld [vmem:[#allocation6 + $0x2f8] sm:$0xff]
    %v8954 = vld [vmem:[#allocation6 + $0x300] sm:$0xff]
    %v8955 = vld [vmem:[#allocation6 + $0x308] sm:$0xff]
    %v8956 = vld [vmem:[#allocation6 + $0x310] sm:$0xff]
    %v8957 = vld [vmem:[#allocation6 + $0x318] sm:$0xff]
    %v8958 = vld [vmem:[#allocation6 + $0x320] sm:$0xff]
    %v8959 = vld [vmem:[#allocation6 + $0x328] sm:$0xff]
    %v8960 = vld [vmem:[#allocation6 + $0x330] sm:$0xff]
    %v8961 = vld [vmem:[#allocation6 + $0x338] sm:$0xff]
    %v8962 = vld [vmem:[#allocation6 + $0x340] sm:$0xff]
    %v8963 = vld [vmem:[#allocation6 + $0x348] sm:$0xff]
    %v8964 = vld [vmem:[#allocation6 + $0x350] sm:$0xff]
    %v8965 = vld [vmem:[#allocation6 + $0x358] sm:$0xff]
    %v8966 = vld [vmem:[#allocation6 + $0x360] sm:$0xff]
    %v8967 = vld [vmem:[#allocation6 + $0x368] sm:$0xff]
    %v8968 = vld [vmem:[#allocation6 + $0x370] sm:$0xff]
    %v8969 = vld [vmem:[#allocation6 + $0x378] sm:$0xff]
    %v8970 = vld [vmem:[#allocation6 + $0x380] sm:$0xff]
    %v8971 = vld [vmem:[#allocation6 + $0x388] sm:$0xff]
    %v8972 = vld [vmem:[#allocation6 + $0x390] sm:$0xff]
    %v8973 = vld [vmem:[#allocation6 + $0x398] sm:$0xff]
    %v8974 = vld [vmem:[#allocation6 + $0x3a0] sm:$0xff]
    %v8975 = vld [vmem:[#allocation6 + $0x3a8] sm:$0xff]
    %v8976 = vld [vmem:[#allocation6 + $0x3b0] sm:$0xff]
    %v8977 = vld [vmem:[#allocation6 + $0x3b8] sm:$0xff]
    %v8978 = vld [vmem:[#allocation6 + $0x3c0] sm:$0xff]
    %v8979 = vld [vmem:[#allocation6 + $0x3c8] sm:$0xff]
    %v8980 = vld [vmem:[#allocation6 + $0x3d0] sm:$0xff]
    %v8981 = vld [vmem:[#allocation6 + $0x3d8] sm:$0xff]
    %v8982 = vld [vmem:[#allocation6 + $0x3e0] sm:$0xff]
    %v8983 = vld [vmem:[#allocation6 + $0x3e8] sm:$0xff]
    %v8984 = vld [vmem:[#allocation6 + $0x3f0] sm:$0xff]
    %v8985 = vld [vmem:[#allocation6 + $0x3f8] sm:$0xff]
    %v8986 = vld [vmem:[%s22] sm:$0x1]
    %v8988 = vlaneseq
    %v8989 = vshrl.u32 %v8988, 7
    %v8990 = vsub.s32 0, %v8989
    %v8991 = vrot.slane %v8986, %v8990
    %8993 = vmatprep.subr.mxu0 0.0
    %8994 = vmatpush1.msra.mxu0 %v8873
    %8995 = vmatprep.subr.mxu0 0.0
    %8996 = vmatpush1.msra.mxu0 %v8872
    %8997 = vmatprep.subr.mxu0 0.0
    %8998 = vmatpush1.msra.mxu0 %v8871
    %8999 = vmatprep.subr.mxu0 0.0
    %9000 = vmatpush1.msra.mxu0 %v8870
    %9001 = vmatprep.subr.mxu0 0.0
    %9002 = vmatpush1.msra.mxu0 %v8869
    %9003 = vmatprep.subr.mxu0 0.0
    %9004 = vmatpush1.msra.mxu0 %v8868
    %9005 = vmatprep.subr.mxu0 0.0
    %9006 = vmatpush1.msra.mxu0 %v8867
    %9007 = vmatprep.subr.mxu0 0.0
    %9008 = vmatpush1.msra.mxu0 %v8866
    %9009 = vmatprep.subr.mxu0 0.0
    %9010 = vmatpush1.msra.mxu0 %v8865
    %9011 = vmatprep.subr.mxu0 0.0
    %9012 = vmatpush1.msra.mxu0 %v8864
    %9013 = vmatprep.subr.mxu0 0.0
    %9014 = vmatpush1.msra.mxu0 %v8863
    %9015 = vmatprep.subr.mxu0 0.0
    %9016 = vmatpush1.msra.mxu0 %v8862
    %9017 = vmatprep.subr.mxu0 0.0
    %9018 = vmatpush1.msra.mxu0 %v8861
    %9019 = vmatprep.subr.mxu0 0.0
    %9020 = vmatpush1.msra.mxu0 %v8860
    %9021 = vmatprep.subr.mxu0 0.0
    %9022 = vmatpush1.msra.mxu0 %v8859
    %9023 = vmatprep.subr.mxu0 0.0
    %9024 = vmatpush1.msra.mxu0 %v8858
    %9025 = vmatprep.subr.mxu0 0.0
    %9026 = vmatpush2.msra.mxu0 %v8889
    %9027 = vmatprep.subr.mxu0 0.0
    %9028 = vmatpush2.msra.mxu0 %v8888
    %9029 = vmatprep.subr.mxu0 0.0
    %9030 = vmatpush2.msra.mxu0 %v8887
    %9031 = vmatprep.subr.mxu0 0.0
    %9032 = vmatpush2.msra.mxu0 %v8886
    %9033 = vmatprep.subr.mxu0 0.0
    %9034 = vmatpush2.msra.mxu0 %v8885
    %9035 = vmatprep.subr.mxu0 0.0
    %9036 = vmatpush2.msra.mxu0 %v8884
    %9037 = vmatprep.subr.mxu0 0.0
    %9038 = vmatpush2.msra.mxu0 %v8883
    %9039 = vmatprep.subr.mxu0 0.0
    %9040 = vmatpush2.msra.mxu0 %v8882
    %9041 = vmatprep.subr.mxu0 0.0
    %9042 = vmatpush2.msra.mxu0 %v8881
    %9043 = vmatprep.subr.mxu0 0.0
    %9044 = vmatpush2.msra.mxu0 %v8880
    %9045 = vmatprep.subr.mxu0 0.0
    %9046 = vmatpush2.msra.mxu0 %v8879
    %9047 = vmatprep.subr.mxu0 0.0
    %9048 = vmatpush2.msra.mxu0 %v8878
    %9049 = vmatprep.subr.mxu0 0.0
    %9050 = vmatpush2.msra.mxu0 %v8877
    %9051 = vmatprep.subr.mxu0 0.0
    %9052 = vmatpush2.msra.mxu0 %v8876
    %9053 = vmatprep.subr.mxu0 0.0
    %9054 = vmatpush2.msra.mxu0 %v8875
    %9055 = vmatprep.subr.mxu0 0.0
    %9056 = vmatpush2.msra.mxu0 %v8874
    %9057 = vmatprep.mubr.f32.mxu0 %v4839
    %9058 = vmatmul.mubr.f32.gmra.mxu0 %v4837
    %v9059 = vpop.f32.mrf.mxu0
    %v9060 = vadd.f32 %v8991, %v9059
    %v9061 = vpop.f32.mrf.mxu0
    %9062 = vmatprep.mubr.f32.mxu0 %v4845
    %9063 = vmatmul.mubr.f32.gmra.mxu0 %v4843
    %v9064 = vpop.f32.mrf.mxu0
    %v9065 = vadd.f32 %v8991, %v9064
    %v9066 = vpop.f32.mrf.mxu0
    %9067 = vmatprep.mubr.f32.mxu0 %v4851
    %9068 = vmatmul.mubr.f32.gmra.mxu0 %v4849
    %v9069 = vpop.f32.mrf.mxu0
    %v9070 = vadd.f32 %v8991, %v9069
    %v9071 = vpop.f32.mrf.mxu0
    %9072 = vmatprep.mubr.f32.mxu0 %v7359
    %9073 = vmatmul.mubr.f32.gmra.mxu0 %v7357
    %v9074 = vpop.f32.mrf.mxu0
    %v9075 = vadd.f32 %v8991, %v9074
    %v9076 = vpop.f32.mrf.mxu0
    %9077 = vmatprep.mubr.f32.mxu0 %v7365
    %9078 = vmatmul.mubr.f32.gmra.mxu0 %v7363
    %v9079 = vpop.f32.mrf.mxu0
    %v9080 = vadd.f32 %v8991, %v9079
    %v9081 = vpop.f32.mrf.mxu0
    %9082 = vmatprep.mubr.f32.mxu0 %v7371
    %9083 = vmatmul.mubr.f32.gmra.mxu0 %v7369
    %v9084 = vpop.f32.mrf.mxu0
    %v9085 = vadd.f32 %v8991, %v9084
    %v9086 = vpop.f32.mrf.mxu0
    %9087 = vdwg.mxu0
    %9088 = vmatprep.subr.mxu0 0.0
    %9089 = vmatpush1.msra.mxu0 %v8905
    %9090 = vmatprep.subr.mxu0 0.0
    %9091 = vmatpush1.msra.mxu0 %v8904
    %9092 = vmatprep.subr.mxu0 0.0
    %9093 = vmatpush1.msra.mxu0 %v8903
    %9094 = vmatprep.subr.mxu0 0.0
    %9095 = vmatpush1.msra.mxu0 %v8902
    %9096 = vmatprep.subr.mxu0 0.0
    %9097 = vmatpush1.msra.mxu0 %v8901
    %9098 = vmatprep.subr.mxu0 0.0
    %9099 = vmatpush1.msra.mxu0 %v8900
    %9100 = vmatprep.subr.mxu0 0.0
    %9101 = vmatpush1.msra.mxu0 %v8899
    %9102 = vmatprep.subr.mxu0 0.0
    %9103 = vmatpush1.msra.mxu0 %v8898
    %9104 = vmatprep.subr.mxu0 0.0
    %9105 = vmatpush1.msra.mxu0 %v8897
    %9106 = vmatprep.subr.mxu0 0.0
    %9107 = vmatpush1.msra.mxu0 %v8896
    %9108 = vmatprep.subr.mxu0 0.0
    %9109 = vmatpush1.msra.mxu0 %v8895
    %9110 = vmatprep.subr.mxu0 0.0
    %9111 = vmatpush1.msra.mxu0 %v8894
    %9112 = vmatprep.subr.mxu0 0.0
    %9113 = vmatpush1.msra.mxu0 %v8893
    %9114 = vmatprep.subr.mxu0 0.0
    %9115 = vmatpush1.msra.mxu0 %v8892
    %9116 = vmatprep.subr.mxu0 0.0
    %9117 = vmatpush1.msra.mxu0 %v8891
    %9118 = vmatprep.subr.mxu0 0.0
    %9119 = vmatpush1.msra.mxu0 %v8890
    %9120 = vmatprep.subr.mxu0 0.0
    %9121 = vmatpush2.msra.mxu0 %v8921
    %9122 = vmatprep.subr.mxu0 0.0
    %9123 = vmatpush2.msra.mxu0 %v8920
    %9124 = vmatprep.subr.mxu0 0.0
    %9125 = vmatpush2.msra.mxu0 %v8919
    %9126 = vmatprep.subr.mxu0 0.0
    %9127 = vmatpush2.msra.mxu0 %v8918
    %9128 = vmatprep.subr.mxu0 0.0
    %9129 = vmatpush2.msra.mxu0 %v8917
    %9130 = vmatprep.subr.mxu0 0.0
    %9131 = vmatpush2.msra.mxu0 %v8916
    %9132 = vmatprep.subr.mxu0 0.0
    %9133 = vmatpush2.msra.mxu0 %v8915
    %9134 = vmatprep.subr.mxu0 0.0
    %9135 = vmatpush2.msra.mxu0 %v8914
    %9136 = vmatprep.subr.mxu0 0.0
    %9137 = vmatpush2.msra.mxu0 %v8913
    %9138 = vmatprep.subr.mxu0 0.0
    %9139 = vmatpush2.msra.mxu0 %v8912
    %9140 = vmatprep.subr.mxu0 0.0
    %9141 = vmatpush2.msra.mxu0 %v8911
    %9142 = vmatprep.subr.mxu0 0.0
    %9143 = vmatpush2.msra.mxu0 %v8910
    %9144 = vmatprep.subr.mxu0 0.0
    %9145 = vmatpush2.msra.mxu0 %v8909
    %9146 = vmatprep.subr.mxu0 0.0
    %9147 = vmatpush2.msra.mxu0 %v8908
    %9148 = vmatprep.subr.mxu0 0.0
    %9149 = vmatpush2.msra.mxu0 %v8907
    %9150 = vmatprep.subr.mxu0 0.0
    %9151 = vmatpush2.msra.mxu0 %v8906
    %9152 = vmatprep.mubr.f32.mxu0 %v4922
    %9153 = vmatmul.mubr.f32.gmra.mxu0 %v4920
    %v9154 = vpop.f32.mrf.mxu0
    %v9155 = vadd.f32 %v9060, %v9154
    %v9156 = vpop.f32.mrf.mxu0
    %9157 = vmatprep.mubr.f32.mxu0 %v4928
    %9158 = vmatmul.mubr.f32.gmra.mxu0 %v4926
    %v9159 = vpop.f32.mrf.mxu0
    %v9160 = vadd.f32 %v9065, %v9159
    %v9161 = vpop.f32.mrf.mxu0
    %9162 = vmatprep.mubr.f32.mxu0 %v4934
    %9163 = vmatmul.mubr.f32.gmra.mxu0 %v4932
    %v9164 = vpop.f32.mrf.mxu0
    %v9165 = vadd.f32 %v9070, %v9164
    %v9166 = vpop.f32.mrf.mxu0
    %9167 = vmatprep.mubr.f32.mxu0 %v7561
    %9168 = vmatmul.mubr.f32.gmra.mxu0 %v7559
    %v9169 = vpop.f32.mrf.mxu0
    %v9170 = vadd.f32 %v9075, %v9169
    %v9171 = vpop.f32.mrf.mxu0
    %9172 = vmatprep.mubr.f32.mxu0 %v7567
    %9173 = vmatmul.mubr.f32.gmra.mxu0 %v7565
    %v9174 = vpop.f32.mrf.mxu0
    %v9175 = vadd.f32 %v9080, %v9174
    %v9176 = vpop.f32.mrf.mxu0
    %9177 = vmatprep.mubr.f32.mxu0 %v7573
    %9178 = vmatmul.mubr.f32.gmra.mxu0 %v7571
    %v9179 = vpop.f32.mrf.mxu0
    %v9180 = vadd.f32 %v9085, %v9179
    %v9181 = vpop.f32.mrf.mxu0
    %9182 = vdwg.mxu0
    %9183 = vmatprep.subr.mxu0 0.0
    %9184 = vmatpush1.msra.mxu0 %v8937
    %9185 = vmatprep.subr.mxu0 0.0
    %9186 = vmatpush1.msra.mxu0 %v8936
    %9187 = vmatprep.subr.mxu0 0.0
    %9188 = vmatpush1.msra.mxu0 %v8935
    %9189 = vmatprep.subr.mxu0 0.0
    %9190 = vmatpush1.msra.mxu0 %v8934
    %9191 = vmatprep.subr.mxu0 0.0
    %9192 = vmatpush1.msra.mxu0 %v8933
    %9193 = vmatprep.subr.mxu0 0.0
    %9194 = vmatpush1.msra.mxu0 %v8932
    %9195 = vmatprep.subr.mxu0 0.0
    %9196 = vmatpush1.msra.mxu0 %v8931
    %9197 = vmatprep.subr.mxu0 0.0
    %9198 = vmatpush1.msra.mxu0 %v8930
    %9199 = vmatprep.subr.mxu0 0.0
    %9200 = vmatpush1.msra.mxu0 %v8929
    %9201 = vmatprep.subr.mxu0 0.0
    %9202 = vmatpush1.msra.mxu0 %v8928
    %9203 = vmatprep.subr.mxu0 0.0
    %9204 = vmatpush1.msra.mxu0 %v8927
    %9205 = vmatprep.subr.mxu0 0.0
    %9206 = vmatpush1.msra.mxu0 %v8926
    %9207 = vmatprep.subr.mxu0 0.0
    %9208 = vmatpush1.msra.mxu0 %v8925
    %9209 = vmatprep.subr.mxu0 0.0
    %9210 = vmatpush1.msra.mxu0 %v8924
    %9211 = vmatprep.subr.mxu0 0.0
    %9212 = vmatpush1.msra.mxu0 %v8923
    %9213 = vmatprep.subr.mxu0 0.0
    %9214 = vmatpush1.msra.mxu0 %v8922
    %9215 = vmatprep.subr.mxu0 0.0
    %9216 = vmatpush2.msra.mxu0 %v8953
    %9217 = vmatprep.subr.mxu0 0.0
    %9218 = vmatpush2.msra.mxu0 %v8952
    %9219 = vmatprep.subr.mxu0 0.0
    %9220 = vmatpush2.msra.mxu0 %v8951
    %9221 = vmatprep.subr.mxu0 0.0
    %9222 = vmatpush2.msra.mxu0 %v8950
    %9223 = vmatprep.subr.mxu0 0.0
    %9224 = vmatpush2.msra.mxu0 %v8949
    %9225 = vmatprep.subr.mxu0 0.0
    %9226 = vmatpush2.msra.mxu0 %v8948
    %9227 = vmatprep.subr.mxu0 0.0
    %9228 = vmatpush2.msra.mxu0 %v8947
    %9229 = vmatprep.subr.mxu0 0.0
    %9230 = vmatpush2.msra.mxu0 %v8946
    %9231 = vmatprep.subr.mxu0 0.0
    %9232 = vmatpush2.msra.mxu0 %v8945
    %9233 = vmatprep.subr.mxu0 0.0
    %9234 = vmatpush2.msra.mxu0 %v8944
    %9235 = vmatprep.subr.mxu0 0.0
    %9236 = vmatpush2.msra.mxu0 %v8943
    %9237 = vmatprep.subr.mxu0 0.0
    %9238 = vmatpush2.msra.mxu0 %v8942
    %9239 = vmatprep.subr.mxu0 0.0
    %9240 = vmatpush2.msra.mxu0 %v8941
    %9241 = vmatprep.subr.mxu0 0.0
    %9242 = vmatpush2.msra.mxu0 %v8940
    %9243 = vmatprep.subr.mxu0 0.0
    %9244 = vmatpush2.msra.mxu0 %v8939
    %9245 = vmatprep.subr.mxu0 0.0
    %9246 = vmatpush2.msra.mxu0 %v8938
    %9247 = vmatprep.mubr.f32.mxu0 %v5005
    %9248 = vmatmul.mubr.f32.gmra.mxu0 %v5003
    %v9249 = vpop.f32.mrf.mxu0
    %v9250 = vadd.f32 %v9155, %v9249
    %v9251 = vpop.f32.mrf.mxu0
    %9252 = vmatprep.mubr.f32.mxu0 %v5011
    %9253 = vmatmul.mubr.f32.gmra.mxu0 %v5009
    %v9254 = vpop.f32.mrf.mxu0
    %v9255 = vadd.f32 %v9160, %v9254
    %v9256 = vpop.f32.mrf.mxu0
    %9257 = vmatprep.mubr.f32.mxu0 %v5017
    %9258 = vmatmul.mubr.f32.gmra.mxu0 %v5015
    %v9259 = vpop.f32.mrf.mxu0
    %v9260 = vadd.f32 %v9165, %v9259
    %v9261 = vpop.f32.mrf.mxu0
    %9262 = vmatprep.mubr.f32.mxu0 %v7763
    %9263 = vmatmul.mubr.f32.gmra.mxu0 %v7761
    %v9264 = vpop.f32.mrf.mxu0
    %v9265 = vadd.f32 %v9170, %v9264
    %v9266 = vpop.f32.mrf.mxu0
    %9267 = vmatprep.mubr.f32.mxu0 %v7769
    %9268 = vmatmul.mubr.f32.gmra.mxu0 %v7767
    %v9269 = vpop.f32.mrf.mxu0
    %v9270 = vadd.f32 %v9175, %v9269
    %v9271 = vpop.f32.mrf.mxu0
    %9272 = vmatprep.mubr.f32.mxu0 %v7775
    %9273 = vmatmul.mubr.f32.gmra.mxu0 %v7773
    %v9274 = vpop.f32.mrf.mxu0
    %v9275 = vadd.f32 %v9180, %v9274
    %v9276 = vpop.f32.mrf.mxu0
    %9277 = vdwg.mxu0
    %9278 = vmatprep.subr.mxu0 0.0
    %9279 = vmatpush1.msra.mxu0 %v8969
    %9280 = vmatprep.subr.mxu0 0.0
    %9281 = vmatpush1.msra.mxu0 %v8968
    %9282 = vmatprep.subr.mxu0 0.0
    %9283 = vmatpush1.msra.mxu0 %v8967
    %9284 = vmatprep.subr.mxu0 0.0
    %9285 = vmatpush1.msra.mxu0 %v8966
    %9286 = vmatprep.subr.mxu0 0.0
    %9287 = vmatpush1.msra.mxu0 %v8965
    %9288 = vmatprep.subr.mxu0 0.0
    %9289 = vmatpush1.msra.mxu0 %v8964
    %9290 = vmatprep.subr.mxu0 0.0
    %9291 = vmatpush1.msra.mxu0 %v8963
    %9292 = vmatprep.subr.mxu0 0.0
    %9293 = vmatpush1.msra.mxu0 %v8962
    %9294 = vmatprep.subr.mxu0 0.0
    %9295 = vmatpush1.msra.mxu0 %v8961
    %9296 = vmatprep.subr.mxu0 0.0
    %9297 = vmatpush1.msra.mxu0 %v8960
    %9298 = vmatprep.subr.mxu0 0.0
    %9299 = vmatpush1.msra.mxu0 %v8959
    %9300 = vmatprep.subr.mxu0 0.0
    %9301 = vmatpush1.msra.mxu0 %v8958
    %9302 = vmatprep.subr.mxu0 0.0
    %9303 = vmatpush1.msra.mxu0 %v8957
    %9304 = vmatprep.subr.mxu0 0.0
    %9305 = vmatpush1.msra.mxu0 %v8956
    %9306 = vmatprep.subr.mxu0 0.0
    %9307 = vmatpush1.msra.mxu0 %v8955
    %9308 = vmatprep.subr.mxu0 0.0
    %9309 = vmatpush1.msra.mxu0 %v8954
    %9310 = vmatprep.subr.mxu0 0.0
    %9311 = vmatpush2.msra.mxu0 %v8985
    %9312 = vmatprep.subr.mxu0 0.0
    %9313 = vmatpush2.msra.mxu0 %v8984
    %9314 = vmatprep.subr.mxu0 0.0
    %9315 = vmatpush2.msra.mxu0 %v8983
    %9316 = vmatprep.subr.mxu0 0.0
    %9317 = vmatpush2.msra.mxu0 %v8982
    %9318 = vmatprep.subr.mxu0 0.0
    %9319 = vmatpush2.msra.mxu0 %v8981
    %9320 = vmatprep.subr.mxu0 0.0
    %9321 = vmatpush2.msra.mxu0 %v8980
    %9322 = vmatprep.subr.mxu0 0.0
    %9323 = vmatpush2.msra.mxu0 %v8979
    %9324 = vmatprep.subr.mxu0 0.0
    %9325 = vmatpush2.msra.mxu0 %v8978
    %9326 = vmatprep.subr.mxu0 0.0
    %9327 = vmatpush2.msra.mxu0 %v8977
    %9328 = vmatprep.subr.mxu0 0.0
    %9329 = vmatpush2.msra.mxu0 %v8976
    %9330 = vmatprep.subr.mxu0 0.0
    %9331 = vmatpush2.msra.mxu0 %v8975
    %9332 = vmatprep.subr.mxu0 0.0
    %9333 = vmatpush2.msra.mxu0 %v8974
    %9334 = vmatprep.subr.mxu0 0.0
    %9335 = vmatpush2.msra.mxu0 %v8973
    %9336 = vmatprep.subr.mxu0 0.0
    %9337 = vmatpush2.msra.mxu0 %v8972
    %9338 = vmatprep.subr.mxu0 0.0
    %9339 = vmatpush2.msra.mxu0 %v8971
    %9340 = vmatprep.subr.mxu0 0.0
    %9341 = vmatpush2.msra.mxu0 %v8970
    %9342 = vmatprep.mubr.f32.mxu0 %v5088
    %9343 = vmatmul.mubr.f32.gmra.mxu0 %v5086
    %v9344 = vpop.f32.mrf.mxu0
    %v9345 = vadd.f32 %v9250, %v9344
    %v9346 = vpop.f32.mrf.mxu0
    %9347 = vmatprep.mubr.f32.mxu0 %v5094
    %9348 = vmatmul.mubr.f32.gmra.mxu0 %v5092
    %v9349 = vpop.f32.mrf.mxu0
    %v9350 = vadd.f32 %v9255, %v9349
    %v9351 = vpop.f32.mrf.mxu0
    %9352 = vmatprep.mubr.f32.mxu0 %v5100
    %9353 = vmatmul.mubr.f32.gmra.mxu0 %v5098
    %v9354 = vpop.f32.mrf.mxu0
    %v9355 = vadd.f32 %v9260, %v9354
    %v9356 = vpop.f32.mrf.mxu0
    %9357 = vmatprep.mubr.f32.mxu0 %v7965
    %9358 = vmatmul.mubr.f32.gmra.mxu0 %v7963
    %v9359 = vpop.f32.mrf.mxu0
    %v9360 = vadd.f32 %v9265, %v9359
    %v9361 = vpop.f32.mrf.mxu0
    %9362 = vmatprep.mubr.f32.mxu0 %v7971
    %9363 = vmatmul.mubr.f32.gmra.mxu0 %v7969
    %v9364 = vpop.f32.mrf.mxu0
    %v9365 = vadd.f32 %v9270, %v9364
    %v9366 = vpop.f32.mrf.mxu0
    %9367 = vmatprep.mubr.f32.mxu0 %v7977
    %9368 = vmatmul.mubr.f32.gmra.mxu0 %v7975
    %v9369 = vpop.f32.mrf.mxu0
    %v9370 = vadd.f32 %v9275, %v9369
    %v9371 = vpop.f32.mrf.mxu0
    %9372 = vdwg.mxu0
    %v9373 = vlaneseq
    %v9374 = vand.u32 %v9373, 127
    %v9375 = vld [vmem:[%s1] sm:$0xff]
    %v9376 = vld [vmem:[%s1 + $0x8] sm:$0xff]
    %v9377 = vld [vmem:[%s1 + $0x10] sm:$0xff]
    %9378 = vset.pattern.permute.xlu0 0
    %9379 = vperm.xlu0 %9378, %v9375
    %v9380 = vpop.permute.xlu0 %9379
    %9381 = vset.pattern.permute.xlu0 0
    %9382 = vperm.xlu0 %9381, %v9376
    %v9383 = vpop.permute.xlu0 %9382
    %9384 = vset.pattern.permute.xlu0 0
    %9385 = vperm.xlu0 %9384, %v9377
    %v9386 = vpop.permute.xlu0 %9385
    %vm9387 = vcmp.eq.s32.totalorder %v9374, %v9380
    %vm9388 = vcmp.eq.s32.totalorder %v9374, %v9383
    %vm9389 = vcmp.eq.s32.totalorder %v9374, %v9386
    %v9390 = vsel %vm9387, 1, 0
    %v9391 = vsel %vm9388, 1, 0
    %v9392 = vsel %vm9389, 1, 0
    %v9393 = vcvt.s32.f32 %v9390
    %v9394 = vcvt.s32.f32 %v9391
    %v9395 = vcvt.s32.f32 %v9392
    %9396 = vmax.xlane.f32.xlu0 %v9345
    %v9397 = vpop.xlane.xlu0 %9396
    %9398 = vmax.xlane.f32.xlu0 %v9350
    %v9399 = vpop.xlane.xlu0 %9398
    %9400 = vmax.xlane.f32.xlu0 %v9355
    %v9401 = vpop.xlane.xlu0 %9400
    %9402 = vmax.xlane.f32.xlu0 %v9360
    %v9403 = vpop.xlane.xlu0 %9402
    %9404 = vmax.xlane.f32.xlu0 %v9365
    %v9405 = vpop.xlane.xlu0 %9404
    %9406 = vmax.xlane.f32.xlu0 %v9370
    %v9407 = vpop.xlane.xlu0 %9406
    %v9408 = vsub.f32 %v9345, %v9397
    %v9409 = vsub.f32 %v9350, %v9399
    %v9410 = vsub.f32 %v9355, %v9401
    %v9411 = vsub.f32 %v9360, %v9403
    %v9412 = vsub.f32 %v9365, %v9405
    %v9413 = vsub.f32 %v9370, %v9407
    %v9414 = vmul.f32 %v9408, 1.442695
    %v9415 = vpow.pop %v9414
    %v9416 = vmul.f32 %v9409, 1.442695
    %v9417 = vpow.pop %v9416
    %v9418 = vmul.f32 %v9410, 1.442695
    %v9419 = vpow.pop %v9418
    %v9420 = vmul.f32 %v9411, 1.442695
    %v9421 = vpow.pop %v9420
    %v9422 = vmul.f32 %v9412, 1.442695
    %v9423 = vpow.pop %v9422
    %v9424 = vmul.f32 %v9413, 1.442695
    %v9425 = vpow.pop %v9424
    %9426 = vadd.xlane.f32.xlu0 %v9415
    %v9427 = vpop.xlane.xlu0 %9426
    %9428 = vadd.xlane.f32.xlu0 %v9417
    %v9429 = vpop.xlane.xlu0 %9428
    %9430 = vadd.xlane.f32.xlu0 %v9419
    %v9431 = vpop.xlane.xlu0 %9430
    %9432 = vadd.xlane.f32.xlu0 %v9421
    %v9433 = vpop.xlane.xlu0 %9432
    %9434 = vadd.xlane.f32.xlu0 %v9423
    %v9435 = vpop.xlane.xlu0 %9434
    %9436 = vadd.xlane.f32.xlu0 %v9425
    %v9437 = vpop.xlane.xlu0 %9436
    %v9438 = vlog2.pop %v9427
    %v9439 = vmul.f32 %v9438, 0.6931472
    %v9440 = vlog2.pop %v9429
    %v9441 = vmul.f32 %v9440, 0.6931472
    %v9442 = vlog2.pop %v9431
    %v9443 = vmul.f32 %v9442, 0.6931472
    %v9444 = vlog2.pop %v9433
    %v9445 = vmul.f32 %v9444, 0.6931472
    %v9446 = vlog2.pop %v9435
    %v9447 = vmul.f32 %v9446, 0.6931472
    %v9448 = vlog2.pop %v9437
    %v9449 = vmul.f32 %v9448, 0.6931472
    %v9450 = vadd.f32 %v9397, %v9439
    %v9451 = vadd.f32 %v9399, %v9441
    %v9452 = vadd.f32 %v9401, %v9443
    %v9453 = vadd.f32 %v9403, %v9445
    %v9454 = vadd.f32 %v9405, %v9447
    %v9455 = vadd.f32 %v9407, %v9449
    %v9456 = vmul.f32 %v9393, %v9345
    %v9457 = vmul.f32 %v9394, %v9350
    %v9458 = vmul.f32 %v9395, %v9355
    %v9459 = vmul.f32 %v9393, %v9360
    %v9460 = vmul.f32 %v9394, %v9365
    %v9461 = vmul.f32 %v9395, %v9370
    %9462 = vadd.xlane.f32.xlu0 %v9456
    %v9463 = vpop.xlane.xlu0 %9462
    %9464 = vadd.xlane.f32.xlu0 %v9457
    %v9465 = vpop.xlane.xlu0 %9464
    %9466 = vadd.xlane.f32.xlu0 %v9458
    %v9467 = vpop.xlane.xlu0 %9466
    %9468 = vadd.xlane.f32.xlu0 %v9459
    %v9469 = vpop.xlane.xlu0 %9468
    %9470 = vadd.xlane.f32.xlu0 %v9460
    %v9471 = vpop.xlane.xlu0 %9470
    %9472 = vadd.xlane.f32.xlu0 %v9461
    %v9473 = vpop.xlane.xlu0 %9472
    %v9474 = vsub.f32 %v9450, %v9463
    %v9475 = vsub.f32 %v9451, %v9465
    %v9476 = vsub.f32 %v9452, %v9467
    %v9477 = vsub.f32 %v9453, %v9469
    %v9478 = vsub.f32 %v9454, %v9471
    %v9479 = vsub.f32 %v9455, %v9473
    %v9480 = vsel %vm5963, %v9474, 0.0
    %v9481 = vsel %vm5963, %v9475, 0.0
    %v9482 = vadd.f32 %v9480, %v9481
    %v9483 = vsel %vm5963, %v9476, 0.0
    %v9484 = vadd.f32 %v9482, %v9483
    %9485 = vadd.xlane.f32.xlu0 %v9484
    %v9486 = vpop.xlane.xlu0 %9485
    %v9487 = vrot.slane %v9486, 4
    %v9488 = vadd.f32 %v9486, %v9487
    %v9489 = vrot.slane %v9488, 2
    %v9490 = vadd.f32 %v9488, %v9489
    %v9491 = vrot.slane %v9490, 1
    %v9492 = vadd.f32 %v9490, %v9491
    %s9493 = vtos %v9492
    %v9494 = vstv %s9493
    %v9495 = vmul.f32 %v9494, %v5171
    %v9496 = vsel %vm5963, %v9477, 0.0
    %v9497 = vsel %vm5963, %v9478, 0.0
    %v9498 = vadd.f32 %v9496, %v9497
    %v9499 = vsel %vm5963, %v9479, 0.0
    %v9500 = vadd.f32 %v9498, %v9499
    %9501 = vadd.xlane.f32.xlu0 %v9500
    %v9502 = vpop.xlane.xlu0 %9501
    %v9503 = vrot.slane %v9502, 4
    %v9504 = vadd.f32 %v9502, %v9503
    %v9505 = vrot.slane %v9504, 2
    %v9506 = vadd.f32 %v9504, %v9505
    %v9507 = vrot.slane %v9506, 1
    %v9508 = vadd.f32 %v9506, %v9507
    %s9509 = vtos %v9508
    %v9510 = vstv %s9509
    %v9511 = vmul.f32 %v9510, %v5171
    %v9512 = vsub.f32 %v7339, %v4837
    %v9513 = vsub.f32 %v7341, %v4839
    %v9514 = vsub.f32 %v7541, %v4920
    %v9515 = vsub.f32 %v7543, %v4922
    %v9516 = vsub.f32 %v7743, %v5003
    %v9517 = vsub.f32 %v7745, %v5005
    %v9518 = vsub.f32 %v7945, %v5086
    %v9519 = vsub.f32 %v7947, %v5088
    %v9520 = vsub.f32 %v7345, %v4843
    %v9521 = vsub.f32 %v7347, %v4845
    %v9522 = vsub.f32 %v7547, %v4926
    %v9523 = vsub.f32 %v7549, %v4928
    %v9524 = vsub.f32 %v7749, %v5009
    %v9525 = vsub.f32 %v7751, %v5011
    %v9526 = vsub.f32 %v7951, %v5092
    %v9527 = vsub.f32 %v7953, %v5094
    %v9528 = vsub.f32 %v7351, %v4849
    %v9529 = vsub.f32 %v7353, %v4851
    %v9530 = vsub.f32 %v7553, %v4932
    %v9531 = vsub.f32 %v7555, %v4934
    %v9532 = vsub.f32 %v7755, %v5015
    %v9533 = vsub.f32 %v7757, %v5017
    %v9534 = vsub.f32 %v7957, %v5098
    %v9535 = vsub.f32 %v7959, %v5100
    %v9536 = vmul.f32 %v9512, %v9512
    %v9537 = vmul.f32 %v9513, %v9513
    %v9538 = vmul.f32 %v9514, %v9514
    %v9539 = vmul.f32 %v9515, %v9515
    %v9540 = vmul.f32 %v9516, %v9516
    %v9541 = vmul.f32 %v9517, %v9517
    %v9542 = vmul.f32 %v9518, %v9518
    %v9543 = vmul.f32 %v9519, %v9519
    %v9544 = vmul.f32 %v9520, %v9520
    %v9545 = vmul.f32 %v9521, %v9521
    %v9546 = vmul.f32 %v9522, %v9522
    %v9547 = vmul.f32 %v9523, %v9523
    %v9548 = vmul.f32 %v9524, %v9524
    %v9549 = vmul.f32 %v9525, %v9525
    %v9550 = vmul.f32 %v9526, %v9526
    %v9551 = vmul.f32 %v9527, %v9527
    %v9552 = vmul.f32 %v9528, %v9528
    %v9553 = vmul.f32 %v9529, %v9529
    %v9554 = vmul.f32 %v9530, %v9530
    %v9555 = vmul.f32 %v9531, %v9531
    %v9556 = vmul.f32 %v9532, %v9532
    %v9557 = vmul.f32 %v9533, %v9533
    %v9558 = vmul.f32 %v9534, %v9534
    %v9559 = vmul.f32 %v9535, %v9535
    %v9560 = vadd.f32 %v9536, %v9537
    %v9561 = vadd.f32 %v9560, %v9538
    %v9562 = vadd.f32 %v9561, %v9539
    %v9563 = vadd.f32 %v9562, %v9540
    %v9564 = vadd.f32 %v9563, %v9541
    %v9565 = vadd.f32 %v9564, %v9542
    %v9566 = vadd.f32 %v9565, %v9543
    %v9567 = vadd.f32 %v9566, %v9544
    %v9568 = vadd.f32 %v9567, %v9545
    %v9569 = vadd.f32 %v9568, %v9546
    %v9570 = vadd.f32 %v9569, %v9547
    %v9571 = vadd.f32 %v9570, %v9548
    %v9572 = vadd.f32 %v9571, %v9549
    %v9573 = vadd.f32 %v9572, %v9550
    %v9574 = vadd.f32 %v9573, %v9551
    %v9575 = vadd.f32 %v9574, %v9552
    %v9576 = vadd.f32 %v9575, %v9553
    %v9577 = vadd.f32 %v9576, %v9554
    %v9578 = vadd.f32 %v9577, %v9555
    %v9579 = vadd.f32 %v9578, %v9556
    %v9580 = vadd.f32 %v9579, %v9557
    %v9581 = vadd.f32 %v9580, %v9558
    %v9582 = vadd.f32 %v9581, %v9559
    %9583 = vadd.xlane.f32.xlu0 %v9582
    %v9584 = vpop.xlane.xlu0 %9583
    %v9585 = vrot.slane %v9584, 4
    %v9586 = vadd.f32 %v9584, %v9585
    %v9587 = vrot.slane %v9586, 2
    %v9588 = vadd.f32 %v9586, %v9587
    %v9589 = vrot.slane %v9588, 1
    %v9590 = vadd.f32 %v9588, %v9589
    %s9591 = vtos %v9590
    %v9592 = vstv %s9591
    %v9593 = vmul.f32 %v9592, 0.5
    %v9594 = vmul.f32 %v9511, 5000.0
    %v9595 = vadd.f32 %v9593, %v9594
    %vm9596 = vcmp.eq.s32.totalorder %v9374, 0
    %v9597 = vsel %vm9596, %v9595, 0.0
    %vm9598 = vcmp.eq.s32.totalorder %v9374, 1
    %v9599 = vsel %vm9598, %v8855, 0.0
    %v9600 = vadd.f32 %v9597, %v9599
    %vm9601 = vcmp.eq.s32.totalorder %v9374, 2
    %v9602 = vsel %vm9601, %v8854, 0.0
    %v9603 = vadd.f32 %v9600, %v9602
    %vm9604 = vcmp.eq.s32.totalorder %v9374, 3
    %v9605 = vsel %vm9604, %v9495, 0.0
    %v9606 = vadd.f32 %v9603, %v9605
    %vm9607 = vcmask 57344
    %9608 = vst.msk [vmem:[%s23] sm:$0x1] %vm9607, %v9606
    // Predicated region
    $region248: #{triplet_hdml_forward.1} parent=1 // pred_check
      _
    $region249: #{triplet_hdml_forward.1} parent=1 // pred_check_branch
      %9610 = sbr.rel (0) target = $region251
    $region250: #{triplet_hdml_forward.1} parent=1 // pred_region
      _
    $region251: #{triplet_hdml_forward.1} parent=1 // pred_fallthru
      _
    // Predicated region
    $region252: #{triplet_hdml_forward.1} parent=1 // pred_check
      _
    $region253: #{triplet_hdml_forward.1} parent=1 // pred_check_branch
      %9612 = sbr.rel (0) target = $region255
    $region254: #{triplet_hdml_forward.1} parent=1 // pred_region
      %s9614 = ssub.s32 384, 384
      %9615 = vsyncadd [#allocation9], %s9614
      %s9616 = sshll.u32 [#allocation11], 4
      %s9617 = int_to_ptr.vmem [resolvable:$true] %s9616
      %9622 = dma.vmem_to_hbm [thread:$0]  %s9617, 384, %s24, [#allocation9], 128, 128, 8
    $region255: #{triplet_hdml_forward.1} parent=1 // pred_fallthru
      _
    // Predicated region
    $region256: #{triplet_hdml_forward.1} parent=1 // pred_check
      _
    $region257: #{triplet_hdml_forward.1} parent=1 // pred_check_branch
      %9624 = sbr.rel (0) target = $region259
    $region258: #{triplet_hdml_forward.1} parent=1 // pred_region
      _
    $region259: #{triplet_hdml_forward.1} parent=1 // pred_fallthru
      _
    // Predicated region
    $region260: #{triplet_hdml_forward.1} parent=1 // pred_check
      _
    $region261: #{triplet_hdml_forward.1} parent=1 // pred_check_branch
      %9626 = sbr.rel (0) target = $region263
    $region262: #{triplet_hdml_forward.1} parent=1 // pred_region
      %9627 = dma.done [#allocation9], 384
    $region263: #{triplet_hdml_forward.1} parent=1 // pred_fallthru
      _
    %9628 = vsyncpa [#allocation9], 1
    %9629 = vsyncpa [#allocation10], 1
  %9630 = vsyncmov [#allocation7]
  %s9631 = vpop.sfrf %9630
  %p9632 = scmp.eq.s32.totalorder %s9631, 0
  %p9633 = pneg %p9632
  %9635 = shalt.err (%p9633)
  %s9636 = scalar_lea.sflag [#allocation7], 1
  %9637 = vsyncmov %s9636
  %s9638 = vpop.sfrf %9637
  %p9639 = scmp.eq.s32.totalorder %s9638, 0
  %p9640 = pneg %p9639
  %9642 = shalt.err (%p9640)
  %s9643 = scalar_lea.sflag [#allocation7], 2
  %9644 = vsyncmov %s9643
  %s9645 = vpop.sfrf %9644
  %p9646 = scmp.eq.s32.totalorder %s9645, 0
  %p9647 = pneg %p9646
  %9649 = shalt.err (%p9647)
  %s9650 = scalar_lea.sflag [#allocation7], 3
  %9651 = vsyncmov %s9650
  %s9652 = vpop.sfrf %9651
  %p9653 = scmp.eq.s32.totalorder %s9652, 0
  %p9654 = pneg %p9653
  %9656 = shalt.err (%p9654)
  %s9657 = scalar_lea.sflag [#allocation7], 4
  %9658 = vsyncmov %s9657
  %s9659 = vpop.sfrf %9658
  %p9660 = scmp.eq.s32.totalorder %s9659, 0
  %p9661 = pneg %p9660
  %9663 = shalt.err (%p9661)

</llo_original>
